<compile_context>
chip_gen: v5e
topology: v5e:2x2
jax: 0.10.0
libtpu: 0.0.40
codegen_flags: <defaults>
</compile_context>

<pallas_src>
import math
import functools

import jax
import jax.numpy as jnp
from jax.experimental import pallas as pl
from jax.experimental.pallas import tpu as pltpu


# --------------------------- in-kernel helpers -------------------------------
def _bf16(x):
    return x.astype(jnp.bfloat16)


def _layer_norm(x, g, b, eps=1e-5):
    mean = jnp.mean(x, axis=-1, keepdims=True)
    var = jnp.mean(jnp.square(x - mean), axis=-1, keepdims=True)
    return (x - mean) * jax.lax.rsqrt(var + eps) * g + b


def _mha_core(qp, kp, vp, keep, wo, bo, *, heads, head_dim):
    """Per-head attention on already-projected q/k/v (Lq,E)/(Lk,E)/(Lk,E).
    `keep` is a bool (1, Lk) key-padding mask or (Lq, Lk) causal mask.
    The 1/sqrt(embed) scale is already folded into the Wq used to build qp.
    Head outputs are folded straight into the (E)-wide output projection."""
    acc = bo                                               # (1, E) f32, broadcasts
    for h in range(heads):                                 # static unroll (small H)
        lo = h * head_dim
        hi = lo + head_dim
        # q @ k^T without materializing a transpose
        e = jax.lax.dot_general(qp[:, lo:hi], kp[:, lo:hi],
                                (((1,), (1,)), ((), ())),
                                preferred_element_type=jnp.float32)   # (Lq, Lk)
        e = jnp.where(keep, e, jnp.float32(-1e20))         # masked_fill(mask==0, -1e20)
        e = e - jnp.max(e, axis=-1, keepdims=True)
        p = jnp.exp(e)
        p = p * pl.reciprocal(jnp.sum(p, axis=-1, keepdims=True), approx=True)
        oh = jnp.dot(p, vp[:, lo:hi], preferred_element_type=jnp.float32)   # (Lq, d)
        acc = acc + jnp.dot(oh, wo[lo:hi, :], preferred_element_type=jnp.float32)
    return acc                                             # (Lq, E)


def _ffn_ln(attn_out, residual, ln1g, ln1b, ln2g, ln2b, w1, b1, w2, b2):
    x1 = _layer_norm(attn_out + residual, ln1g, ln1b)
    h = jnp.maximum(
        jnp.dot(_bf16(x1), w1, preferred_element_type=jnp.float32) + b1, 0.0)
    ff = jnp.dot(_bf16(h), w2, preferred_element_type=jnp.float32) + b2
    return _layer_norm(ff + x1, ln2g, ln2b)


def _self_attn_ffn_block(x, keep, wqkv, wo, bo, ln1g, ln1b, ln2g, ln2b,
                         w1, b1, w2, b2, *, heads, head_dim, embed):
    """Encoder TransformerBlock: self-attn (one (E,3E) QKV matmul) -> out proj
    -> add+LN -> FFN -> add+LN."""
    qkv = jnp.dot(_bf16(x), wqkv, preferred_element_type=jnp.float32)     # (L, 3E)
    qp = qkv[:, :embed]
    kp = qkv[:, embed:2 * embed]
    vp = qkv[:, 2 * embed:]
    attn = _mha_core(qp, kp, vp, keep, wo, bo, heads=heads, head_dim=head_dim)
    return _ffn_ln(attn, x, ln1g, ln1b, ln2g, ln2b, w1, b1, w2, b2)


def _causal_self_attn_ln(x, causal_keep, wqkv, wo, bo, lng, lnb,
                         *, heads, head_dim, embed):
    """Decoder self-attention (causal) -> out proj -> add+LN."""
    qkv = jnp.dot(_bf16(x), wqkv, preferred_element_type=jnp.float32)     # (Lt, 3E)
    qp = qkv[:, :embed]
    kp = qkv[:, embed:2 * embed]
    vp = qkv[:, 2 * embed:]
    attn = _mha_core(qp, kp, vp, causal_keep, wo, bo, heads=heads, head_dim=head_dim)
    return _layer_norm(attn + x, lng, lnb)


def _cross_attn_ffn_block(q_in, kv_in, keep, wq, wkv, wo, bo,
                          ln1g, ln1b, ln2g, ln2b, w1, b1, w2, b2,
                          *, heads, head_dim, embed):
    """Decoder cross-attention TransformerBlock: q from decoder stream, k/v
    from encoder output (one (E,2E) KV matmul)."""
    qp = jnp.dot(_bf16(q_in), wq, preferred_element_type=jnp.float32)     # (Lt, E)
    kv = jnp.dot(_bf16(kv_in), wkv, preferred_element_type=jnp.float32)   # (Ls, 2E)
    kp = kv[:, :embed]
    vp = kv[:, embed:]
    attn = _mha_core(qp, kp, vp, keep, wo, bo, heads=heads, head_dim=head_dim)
    return _ffn_ln(attn, q_in, ln1g, ln1b, ln2g, ln2b, w1, b1, w2, b2)


# --------------------------- fused Pallas kernels ----------------------------
def _encoder_kernel(x_ref, keep_ref,
                    wqkv_ref, wo_ref, bo_ref, ln1g_ref, ln1b_ref, ln2g_ref, ln2b_ref,
                    w1_ref, b1_ref, w2_ref, b2_ref,
                    o_ref, *, layers, heads, head_dim, embed):
    x = x_ref[...]                                  # (Ls, E)
    keep = keep_ref[...] > 0.0                      # (1, Ls) key-padding keep mask
    for l in range(layers):                         # static unroll over stacked weights
        x = _self_attn_ffn_block(
            x, keep, wqkv_ref[l], wo_ref[l], bo_ref[l],
            ln1g_ref[l], ln1b_ref[l], ln2g_ref[l], ln2b_ref[l],
            w1_ref[l], b1_ref[l], w2_ref[l], b2_ref[l],
            heads=heads, head_dim=head_dim, embed=embed)
    o_ref[...] = x


def _decoder_kernel(y_ref, enc_ref, skeep_ref,
                    s_wqkv_ref, s_wo_ref, s_bo_ref, s_lng_ref, s_lnb_ref,
                    c_wq_ref, c_wkv_ref, c_wo_ref, c_bo_ref,
                    ln1g_ref, ln1b_ref, ln2g_ref, ln2b_ref,
                    w1_ref, b1_ref, w2_ref, b2_ref,
                    wout_ref, bout_ref,
                    o_ref, *, layers, heads, head_dim, embed):
    x = y_ref[...]                                  # (Lt, E)
    enc = enc_ref[...]                              # (Ls, E)
    skeep = skeep_ref[...] > 0.0                    # (1, Ls)
    lt = x.shape[0]
    row = jax.lax.broadcasted_iota(jnp.int32, (lt, lt), 0)
    col = jax.lax.broadcasted_iota(jnp.int32, (lt, lt), 1)
    causal = col <= row                             # tril mask, built in-kernel

    for l in range(layers):                         # static unroll over stacked weights
        q = _causal_self_attn_ln(
            x, causal, s_wqkv_ref[l], s_wo_ref[l], s_bo_ref[l],
            s_lng_ref[l], s_lnb_ref[l],
            heads=heads, head_dim=head_dim, embed=embed)
        x = _cross_attn_ffn_block(
            q, enc, skeep, c_wq_ref[l], c_wkv_ref[l], c_wo_ref[l], c_bo_ref[l],
            ln1g_ref[l], ln1b_ref[l], ln2g_ref[l], ln2b_ref[l],
            w1_ref[l], b1_ref[l], w2_ref[l], b2_ref[l],
            heads=heads, head_dim=head_dim, embed=embed)

    # Folded output projection; stores are lane-dense (vocab padded to 128n).
    o_ref[...] = (jnp.dot(_bf16(x), wout_ref[...],
                          preferred_element_type=jnp.float32) + bout_ref[...])


# --------------------------- pallas_call wrappers ----------------------------
_ENC_W = ('wqkv', 'wo', 'bo', 'ln1g', 'ln1b', 'ln2g', 'ln2b',
          'w1', 'b1', 'w2', 'b2')
_DEC_W = ('s_wqkv', 's_wo', 's_bo', 's_lng', 's_lnb',
          'c_wq', 'c_wkv', 'c_wo', 'c_bo',
          'ln1g', 'ln1b', 'ln2g', 'ln2b',
          'w1', 'b1', 'w2', 'b2', 'wout', 'bout')


def _full_spec(arr):
    nd = arr.ndim
    return pl.BlockSpec(arr.shape, lambda i, _nd=nd: (0,) * _nd)


def pallas_encoder(ep, x, src_keep3, *, embed, heads):
    """Entire encoder stack (all layers) in one fused pallas_call."""
    n, ls, e = x.shape
    layers = ep['wqkv'].shape[0]
    kern = functools.partial(_encoder_kernel, layers=layers, heads=heads,
                             head_dim=e // heads, embed=e)
    return pl.pallas_call(
        kern,
        out_shape=jax.ShapeDtypeStruct((n, ls, e), jnp.float32),
        grid=(n,),
        in_specs=[pl.BlockSpec((None, ls, e), lambda i: (i, 0, 0)),    # embedded src
                  pl.BlockSpec((None, 1, ls), lambda i: (i, 0, 0))]    # key-pad keep
                 + [_full_spec(ep[k]) for k in _ENC_W],
        out_specs=pl.BlockSpec((None, ls, e), lambda i: (i, 0, 0)),
        compiler_params=pltpu.CompilerParams(dimension_semantics=("parallel",)),
    )(x, src_keep3, *[ep[k] for k in _ENC_W])


def pallas_decoder(dp, y, enc_out, src_keep3, *, embed, heads):
    """Entire decoder stack + folded vocab projection in one fused pallas_call.
    Returns padded logits (N, Lt, Vpad) so the only store is lane-dense."""
    n, lt, e = y.shape
    ls = enc_out.shape[1]
    layers = dp['s_wqkv'].shape[0]
    v_pad = dp['wout'].shape[1]
    kern = functools.partial(_decoder_kernel, layers=layers, heads=heads,
                             head_dim=e // heads, embed=e)
    return pl.pallas_call(
        kern,
        out_shape=jax.ShapeDtypeStruct((n, lt, v_pad), jnp.float32),
        grid=(n,),
        in_specs=[pl.BlockSpec((None, lt, e), lambda i: (i, 0, 0)),    # embedded trg
                  pl.BlockSpec((None, ls, e), lambda i: (i, 0, 0)),    # encoder out
                  pl.BlockSpec((None, 1, ls), lambda i: (i, 0, 0))]    # src keep
                 + [_full_spec(dp[k]) for k in _DEC_W],
        out_specs=pl.BlockSpec((None, lt, v_pad), lambda i: (i, 0, 0)),
        compiler_params=pltpu.CompilerParams(dimension_semantics=("parallel",)),
    )(y, enc_out, src_keep3, *[dp[k] for k in _DEC_W])


# --------------------------- model forward (glue + kernels) ------------------
@functools.partial(jax.jit,
                   static_argnames=('embed', 'heads', 'src_pad', 'trg_pad', 'trg_vocab'))
def transformer_forward(params, src, trg, *, embed, heads, src_pad, trg_pad, trg_vocab):
    n, ls = src.shape
    _, lt = trg.shape
    # Only the tiny (N,1,Ls) keep vector leaves JAX; causal mask is built in-kernel.
    src_keep3 = (src != src_pad).astype(jnp.float32).reshape(n, 1, ls)

    enc = params['encoder']
    dec = params['decoder']
    enc_in = enc['word_emb'][src] + enc['pos_emb'][:ls][None, :, :]
    enc_out = pallas_encoder(enc, enc_in, src_keep3, embed=embed, heads=heads)

    dec_in = dec['word_emb'][trg] + dec['pos_emb'][:lt][None, :, :]
    logits_pad = pallas_decoder(dec, dec_in, enc_out, src_keep3,
                                embed=embed, heads=heads)
    # Tiny slice back to the true vocab; downstream consumers could keep the
    # padded slab instead to avoid this copy.
    return logits_pad[:, :, :trg_vocab]


# --------------------------- parameter prep (run once, outside jit) ----------
def _block_diag(w, heads):
    # shared per-head (d,d) weight applied to each head  ==  x @ kron(I_H, W)
    return jnp.kron(jnp.eye(heads, dtype=w.dtype), w)


def prepare_params(raw, *, embed, heads):
    """Precompute block-diagonal QKV concat weights (scale folded into Wq),
    vocab-padded output weights, and stack everything per layer — all done
    once here so the jitted forward does zero weight preprocessing."""
    scale = 1.0 / math.sqrt(float(embed))   # tutorial-faithful 1/sqrt(embed_size)
    bf = jnp.bfloat16

    def prep_tblock(lp):
        a = lp['attn']
        wqkv = jnp.concatenate(
            [_block_diag(a['Wq'], heads) * scale,
             _block_diag(a['Wk'], heads),
             _block_diag(a['Wv'], heads)], axis=1)
        return dict(
            wqkv=wqkv.astype(bf),
            wo=a['Wo'].astype(jnp.float32),
            bo=a['bo'].reshape(1, embed).astype(jnp.float32),
            ln1g=lp['ln1_g'].reshape(1, embed), ln1b=lp['ln1_b'].reshape(1, embed),
            ln2g=lp['ln2_g'].reshape(1, embed), ln2b=lp['ln2_b'].reshape(1, embed),
            w1=lp['W1'].astype(bf), b1=lp['b1'].reshape(1, -1),
            w2=lp['W2'].astype(bf), b2=lp['b2'].reshape(1, embed),
        )

    def stack(dicts):
        return jax.tree_util.tree_map(lambda *xs: jnp.stack(xs, axis=0), *dicts)

    enc_raw = raw['encoder']
    encoder = dict(word_emb=enc_raw['word_emb'], pos_emb=enc_raw['pos_emb'],
                   **stack([prep_tblock(lp) for lp in enc_raw['layers']]))

    dec_raw = raw['decoder']

    def prep_dec_layer(lp):
        a = lp['attn']                       # causal self-attention
        t = prep_tblock(lp['tblock'])        # cross-attention transformer block
        ta = lp['tblock']['attn']
        return dict(
            s_wqkv=jnp.concatenate(
                [_block_diag(a['Wq'], heads) * scale,
                 _block_diag(a['Wk'], heads),
                 _block_diag(a['Wv'], heads)], axis=1).astype(bf),
            s_wo=a['Wo'].astype(jnp.float32),
            s_bo=a['bo'].reshape(1, embed).astype(jnp.float32),
            s_lng=lp['ln_g'].reshape(1, embed), s_lnb=lp['ln_b'].reshape(1, embed),
            c_wq=(_block_diag(ta['Wq'], heads) * scale).astype(bf),
            c_wkv=jnp.concatenate(
                [_block_diag(ta['Wk'], heads),
                 _block_diag(ta['Wv'], heads)], axis=1).astype(bf),
            c_wo=t['wo'], c_bo=t['bo'],
            ln1g=t['ln1g'], ln1b=t['ln1b'], ln2g=t['ln2g'], ln2b=t['ln2b'],
            w1=t['w1'], b1=t['b1'], w2=t['w2'], b2=t['b2'],
        )

    v = dec_raw['Wout'].shape[1]
    v_pad = max(128, ((v + 127) // 128) * 128)
    wout = jnp.zeros((embed, v_pad), jnp.float32).at[:, :v].set(dec_raw['Wout'])
    bout = jnp.zeros((1, v_pad), jnp.float32).at[:, :v].set(dec_raw['bout'].reshape(1, v))
    decoder = dict(word_emb=dec_raw['word_emb'], pos_emb=dec_raw['pos_emb'],
                   wout=wout.astype(bf), bout=bout,
                   **stack([prep_dec_layer(lp) for lp in dec_raw['layers']]))
    return dict(encoder=encoder, decoder=decoder)


# --------------------------- deterministic parameter init --------------------
class KeyGen:
    def __init__(self, key):
        self.key = key

    def __call__(self):
        self.key, sub = jax.random.split(self.key)
        return sub


def _nrm(kg, shape, scale=0.05):
    return jax.random.normal(kg(), shape, jnp.float32) * scale


def init_self_attention(kg, embed, heads):
    d = embed // heads
    return dict(
        Wv=_nrm(kg, (d, d)), Wk=_nrm(kg, (d, d)), Wq=_nrm(kg, (d, d)),
        Wo=_nrm(kg, (embed, embed)), bo=_nrm(kg, (embed,)),
    )


def init_transformer_block(kg, embed, heads, fexp):
    return dict(
        attn=init_self_attention(kg, embed, heads),
        ln1_g=jnp.ones((embed,), jnp.float32), ln1_b=jnp.zeros((embed,), jnp.float32),
        ln2_g=jnp.ones((embed,), jnp.float32), ln2_b=jnp.zeros((embed,), jnp.float32),
        W1=_nrm(kg, (embed, fexp * embed)), b1=jnp.zeros((fexp * embed,), jnp.float32),
        W2=_nrm(kg, (fexp * embed, embed)), b2=jnp.zeros((embed,), jnp.float32),
    )


def init_decoder_block(kg, embed, heads, fexp):
    return dict(
        attn=init_self_attention(kg, embed, heads),
        ln_g=jnp.ones((embed,), jnp.float32), ln_b=jnp.zeros((embed,), jnp.float32),
        tblock=init_transformer_block(kg, embed, heads, fexp),
    )


def init_transformer(key, src_vocab, trg_vocab, embed, num_layers, heads, fexp, max_len):
    kg = KeyGen(key)
    enc = dict(
        word_emb=_nrm(kg, (src_vocab, embed)),
        pos_emb=_nrm(kg, (max_len, embed)),
        layers=[init_transformer_block(kg, embed, heads, fexp) for _ in range(num_layers)],
    )
    dec = dict(
        word_emb=_nrm(kg, (trg_vocab, embed)),
        pos_emb=_nrm(kg, (max_len, embed)),
        layers=[init_decoder_block(kg, embed, heads, fexp) for _ in range(num_layers)],
        Wout=_nrm(kg, (embed, trg_vocab)),
        bout=jnp.zeros((trg_vocab,), jnp.float32),
    )
    return dict(encoder=enc, decoder=dec)


# --------------------------- main ---------------------------------------------
if __name__ == "__main__":
    SRC_VOCAB, TRG_VOCAB = 16, 16
    SRC_PAD, TRG_PAD = 0, 0
    EMBED, LAYERS, FEXP, HEADS, MAXLEN = 32, 2, 2, 4, 16
    N, LS, LT = 2, 8, 8

    root = jax.random.PRNGKey(0)
    kp, ks, kt = jax.random.split(root, 3)
    raw = init_transformer(kp, SRC_VOCAB, TRG_VOCAB, EMBED, LAYERS, HEADS, FEXP, MAXLEN)
    params = prepare_params(raw, embed=EMBED, heads=HEADS)   # one-time prep, outside jit
    src = jax.random.randint(ks, (N, LS), 0, SRC_VOCAB, dtype=jnp.int32)
    trg = jax.random.randint(kt, (N, LT), 0, TRG_VOCAB, dtype=jnp.int32)

    out = transformer_forward(params, src, trg, embed=EMBED, heads=HEADS,
                              src_pad=SRC_PAD, trg_pad=TRG_PAD, trg_vocab=TRG_VOCAB)
    out = jax.block_until_ready(out)

    assert out.shape == (N, LT, TRG_VOCAB), out.shape
    assert bool(jnp.all(jnp.isfinite(out)))
    print("KERNEL_OK")
</pallas_src>

<mosaic_0001>
module attributes {stable_mosaic.version = 11 : i64} {
  func.func @_encoder_kernel(%arg0: i32, %arg1: memref<1x8x32xf32, #tpu.memory_space<vmem>>, %arg2: memref<1x1x8xf32, #tpu.memory_space<vmem>>, %arg3: memref<2x32x96xbf16, #tpu.memory_space<vmem>>, %arg4: memref<2x32x32xf32, #tpu.memory_space<vmem>>, %arg5: memref<2x1x32xf32, #tpu.memory_space<vmem>>, %arg6: memref<2x1x32xf32, #tpu.memory_space<vmem>>, %arg7: memref<2x1x32xf32, #tpu.memory_space<vmem>>, %arg8: memref<2x1x32xf32, #tpu.memory_space<vmem>>, %arg9: memref<2x1x32xf32, #tpu.memory_space<vmem>>, %arg10: memref<2x32x64xbf16, #tpu.memory_space<vmem>>, %arg11: memref<2x1x64xf32, #tpu.memory_space<vmem>>, %arg12: memref<2x64x32xbf16, #tpu.memory_space<vmem>>, %arg13: memref<2x1x32xf32, #tpu.memory_space<vmem>>, %arg14: memref<1x8x32xf32, #tpu.memory_space<vmem>>) attributes {dimension_semantics = [#tpu.dimension_semantics<parallel>], iteration_bounds = array<i64: 2>, scalar_prefetch = 0 : i64, scratch_operands = 0 : i64, tpu.core_type = #tpu.core_type<tc>, window_params = [{transform_indices = @transform_0, window_bounds = array<i64: 1, 8, 32>}, {transform_indices = @transform_1, window_bounds = array<i64: 1, 1, 8>}, {pipeline_mode = #tpu.pipeline_mode<synchronous>, transform_indices = @transform_2, window_bounds = array<i64: 2, 32, 96>}, {pipeline_mode = #tpu.pipeline_mode<synchronous>, transform_indices = @transform_3, window_bounds = array<i64: 2, 32, 32>}, {pipeline_mode = #tpu.pipeline_mode<synchronous>, transform_indices = @transform_4, window_bounds = array<i64: 2, 1, 32>}, {pipeline_mode = #tpu.pipeline_mode<synchronous>, transform_indices = @transform_5, window_bounds = array<i64: 2, 1, 32>}, {pipeline_mode = #tpu.pipeline_mode<synchronous>, transform_indices = @transform_6, window_bounds = array<i64: 2, 1, 32>}, {pipeline_mode = #tpu.pipeline_mode<synchronous>, transform_indices = @transform_7, window_bounds = array<i64: 2, 1, 32>}, {pipeline_mode = #tpu.pipeline_mode<synchronous>, transform_indices = @transform_8, window_bounds = array<i64: 2, 1, 32>}, {pipeline_mode = #tpu.pipeline_mode<synchronous>, transform_indices = @transform_9, window_bounds = array<i64: 2, 32, 64>}, {pipeline_mode = #tpu.pipeline_mode<synchronous>, transform_indices = @transform_10, window_bounds = array<i64: 2, 1, 64>}, {pipeline_mode = #tpu.pipeline_mode<synchronous>, transform_indices = @transform_11, window_bounds = array<i64: 2, 64, 32>}, {pipeline_mode = #tpu.pipeline_mode<synchronous>, transform_indices = @transform_12, window_bounds = array<i64: 2, 1, 32>}, {transform_indices = @transform_13, window_bounds = array<i64: 1, 8, 32>}]} {
    %c0 = arith.constant 0 : index
    %c0_0 = arith.constant 0 : index
    %c0_1 = arith.constant 0 : index
    %0 = vector.load %arg1[%c0, %c0_0, %c0_1] : memref<1x8x32xf32, #tpu.memory_space<vmem>>, vector<1x8x32xf32>
    %1 = vector.shape_cast %0 : vector<1x8x32xf32> to vector<8x32xf32>
    %c0_2 = arith.constant 0 : index
    %c0_3 = arith.constant 0 : index
    %c0_4 = arith.constant 0 : index
    %2 = vector.load %arg2[%c0_2, %c0_3, %c0_4] : memref<1x1x8xf32, #tpu.memory_space<vmem>>, vector<1x1x8xf32>
    %3 = vector.shape_cast %2 : vector<1x1x8xf32> to vector<1x8xf32>
    %cst = arith.constant 0.000000e+00 : f32
    %4 = vector.broadcast %cst : f32 to vector<1x8xf32>
    %5 = arith.cmpf ogt, %3, %4 : vector<1x8xf32>
    %c0_5 = arith.constant 0 : index
    %c0_6 = arith.constant 0 : index
    %c0_7 = arith.constant 0 : index
    %6 = vector.load %arg3[%c0_5, %c0_6, %c0_7] : memref<2x32x96xbf16, #tpu.memory_space<vmem>>, vector<1x32x96xbf16>
    %7 = vector.shape_cast %6 : vector<1x32x96xbf16> to vector<32x96xbf16>
    %c0_8 = arith.constant 0 : index
    %c0_9 = arith.constant 0 : index
    %c0_10 = arith.constant 0 : index
    %8 = vector.load %arg4[%c0_8, %c0_9, %c0_10] : memref<2x32x32xf32, #tpu.memory_space<vmem>>, vector<1x32x32xf32>
    %9 = vector.shape_cast %8 : vector<1x32x32xf32> to vector<32x32xf32>
    %c0_11 = arith.constant 0 : index
    %c0_12 = arith.constant 0 : index
    %c0_13 = arith.constant 0 : index
    %10 = vector.load %arg5[%c0_11, %c0_12, %c0_13] : memref<2x1x32xf32, #tpu.memory_space<vmem>>, vector<1x1x32xf32>
    %11 = vector.shape_cast %10 : vector<1x1x32xf32> to vector<1x32xf32>
    %c0_14 = arith.constant 0 : index
    %c0_15 = arith.constant 0 : index
    %c0_16 = arith.constant 0 : index
    %12 = vector.load %arg6[%c0_14, %c0_15, %c0_16] : memref<2x1x32xf32, #tpu.memory_space<vmem>>, vector<1x1x32xf32>
    %13 = vector.shape_cast %12 : vector<1x1x32xf32> to vector<1x32xf32>
    %c0_17 = arith.constant 0 : index
    %c0_18 = arith.constant 0 : index
    %c0_19 = arith.constant 0 : index
    %14 = vector.load %arg7[%c0_17, %c0_18, %c0_19] : memref<2x1x32xf32, #tpu.memory_space<vmem>>, vector<1x1x32xf32>
    %15 = vector.shape_cast %14 : vector<1x1x32xf32> to vector<1x32xf32>
    %c0_20 = arith.constant 0 : index
    %c0_21 = arith.constant 0 : index
    %c0_22 = arith.constant 0 : index
    %16 = vector.load %arg8[%c0_20, %c0_21, %c0_22] : memref<2x1x32xf32, #tpu.memory_space<vmem>>, vector<1x1x32xf32>
    %17 = vector.shape_cast %16 : vector<1x1x32xf32> to vector<1x32xf32>
    %c0_23 = arith.constant 0 : index
    %c0_24 = arith.constant 0 : index
    %c0_25 = arith.constant 0 : index
    %18 = vector.load %arg9[%c0_23, %c0_24, %c0_25] : memref<2x1x32xf32, #tpu.memory_space<vmem>>, vector<1x1x32xf32>
    %19 = vector.shape_cast %18 : vector<1x1x32xf32> to vector<1x32xf32>
    %c0_26 = arith.constant 0 : index
    %c0_27 = arith.constant 0 : index
    %c0_28 = arith.constant 0 : index
    %20 = vector.load %arg10[%c0_26, %c0_27, %c0_28] : memref<2x32x64xbf16, #tpu.memory_space<vmem>>, vector<1x32x64xbf16>
    %21 = vector.shape_cast %20 : vector<1x32x64xbf16> to vector<32x64xbf16>
    %c0_29 = arith.constant 0 : index
    %c0_30 = arith.constant 0 : index
    %c0_31 = arith.constant 0 : index
    %22 = vector.load %arg11[%c0_29, %c0_30, %c0_31] : memref<2x1x64xf32, #tpu.memory_space<vmem>>, vector<1x1x64xf32>
    %23 = vector.shape_cast %22 : vector<1x1x64xf32> to vector<1x64xf32>
    %c0_32 = arith.constant 0 : index
    %c0_33 = arith.constant 0 : index
    %c0_34 = arith.constant 0 : index
    %24 = vector.load %arg12[%c0_32, %c0_33, %c0_34] : memref<2x64x32xbf16, #tpu.memory_space<vmem>>, vector<1x64x32xbf16>
    %25 = vector.shape_cast %24 : vector<1x64x32xbf16> to vector<64x32xbf16>
    %c0_35 = arith.constant 0 : index
    %c0_36 = arith.constant 0 : index
    %c0_37 = arith.constant 0 : index
    %26 = vector.load %arg13[%c0_35, %c0_36, %c0_37] : memref<2x1x32xf32, #tpu.memory_space<vmem>>, vector<1x1x32xf32>
    %27 = vector.shape_cast %26 : vector<1x1x32xf32> to vector<1x32xf32>
    %28 = arith.truncf %1 : vector<8x32xf32> to vector<8x32xbf16>
    %cst_38 = arith.constant dense<0.000000e+00> : vector<8x96xf32>
    %29 = tpu.matmul %28, %7, %cst_38 {dimension_numbers = #tpu.dot_dimension_numbers<[1], [0], [0], [1], [0, 0, 1, 1], [], []>} : vector<8x32xbf16>, vector<32x96xbf16>, vector<8x96xf32> -> vector<8x96xf32>
    %30 = vector.extract_strided_slice %29 {offsets = [0, 0], sizes = [8, 32], strides = [1, 1]} : vector<8x96xf32> to vector<8x32xf32>
    %31 = vector.extract_strided_slice %29 {offsets = [0, 32], sizes = [8, 32], strides = [1, 1]} : vector<8x96xf32> to vector<8x32xf32>
    %32 = vector.extract_strided_slice %29 {offsets = [0, 64], sizes = [8, 32], strides = [1, 1]} : vector<8x96xf32> to vector<8x32xf32>
    %33 = vector.extract_strided_slice %30 {offsets = [0, 0], sizes = [8, 8], strides = [1, 1]} : vector<8x32xf32> to vector<8x8xf32>
    %34 = vector.extract_strided_slice %31 {offsets = [0, 0], sizes = [8, 8], strides = [1, 1]} : vector<8x32xf32> to vector<8x8xf32>
    %cst_39 = arith.constant dense<0.000000e+00> : vector<8x8xf32>
    %35 = tpu.matmul %33, %34, %cst_39 {dimension_numbers = #tpu.dot_dimension_numbers<[1], [1], [0], [0], [0, 0, 1, 0], [], []>} : vector<8x8xf32>, vector<8x8xf32>, vector<8x8xf32> -> vector<8x8xf32>
    %cst_40 = arith.constant -1.000000e+20 : f32
    %36 = vector.shape_cast %5 : vector<1x8xi1> to vector<1x8xi1>
    %37 = vector.broadcast %36 : vector<1x8xi1> to vector<8x8xi1>
    %38 = vector.broadcast %cst_40 : f32 to vector<8x8xf32>
    %39 = arith.select %37, %35, %38 : vector<8x8xi1>, vector<8x8xf32>
    %cst_41 = arith.constant dense<0xFF800000> : vector<8xf32>
    %40 = vector.multi_reduction <maximumf>, %39, %cst_41 [1] : vector<8x8xf32> to vector<8xf32>
    %41 = vector.shape_cast %40 : vector<8xf32> to vector<8x1xf32>
    %42 = vector.broadcast %41 : vector<8x1xf32> to vector<8x8xf32>
    %43 = arith.subf %39, %42 : vector<8x8xf32>
    %44 = math.exp %43 : vector<8x8xf32>
    %cst_42 = arith.constant dense<0.000000e+00> : vector<8xf32>
    %45 = vector.multi_reduction <add>, %44, %cst_42 [1] : vector<8x8xf32> to vector<8xf32>
    %46 = vector.shape_cast %45 : vector<8xf32> to vector<8x1xf32>
    %47 = tpu.reciprocal %46 {approx = true} : vector<8x1xf32> -> vector<8x1xf32>
    %48 = vector.broadcast %47 : vector<8x1xf32> to vector<8x8xf32>
    %49 = arith.mulf %44, %48 : vector<8x8xf32>
    %50 = vector.extract_strided_slice %32 {offsets = [0, 0], sizes = [8, 8], strides = [1, 1]} : vector<8x32xf32> to vector<8x8xf32>
    %cst_43 = arith.constant dense<0.000000e+00> : vector<8x8xf32>
    %51 = tpu.matmul %49, %50, %cst_43 {dimension_numbers = #tpu.dot_dimension_numbers<[1], [0], [0], [1], [0, 0, 1, 1], [], []>} : vector<8x8xf32>, vector<8x8xf32>, vector<8x8xf32> -> vector<8x8xf32>
    %52 = vector.extract_strided_slice %9 {offsets = [0, 0], sizes = [8, 32], strides = [1, 1]} : vector<32x32xf32> to vector<8x32xf32>
    %cst_44 = arith.constant dense<0.000000e+00> : vector<8x32xf32>
    %53 = tpu.matmul %51, %52, %cst_44 {dimension_numbers = #tpu.dot_dimension_numbers<[1], [0], [0], [1], [0, 0, 1, 1], [], []>} : vector<8x8xf32>, vector<8x32xf32>, vector<8x32xf32> -> vector<8x32xf32>
    %54 = vector.broadcast %11 : vector<1x32xf32> to vector<8x32xf32>
    %55 = arith.addf %54, %53 : vector<8x32xf32>
    %56 = vector.extract_strided_slice %30 {offsets = [0, 8], sizes = [8, 8], strides = [1, 1]} : vector<8x32xf32> to vector<8x8xf32>
    %57 = vector.extract_strided_slice %31 {offsets = [0, 8], sizes = [8, 8], strides = [1, 1]} : vector<8x32xf32> to vector<8x8xf32>
    %cst_45 = arith.constant dense<0.000000e+00> : vector<8x8xf32>
    %58 = tpu.matmul %56, %57, %cst_45 {dimension_numbers = #tpu.dot_dimension_numbers<[1], [1], [0], [0], [0, 0, 1, 0], [], []>} : vector<8x8xf32>, vector<8x8xf32>, vector<8x8xf32> -> vector<8x8xf32>
    %cst_46 = arith.constant -1.000000e+20 : f32
    %59 = vector.shape_cast %5 : vector<1x8xi1> to vector<1x8xi1>
    %60 = vector.broadcast %59 : vector<1x8xi1> to vector<8x8xi1>
    %61 = vector.broadcast %cst_46 : f32 to vector<8x8xf32>
    %62 = arith.select %60, %58, %61 : vector<8x8xi1>, vector<8x8xf32>
    %cst_47 = arith.constant dense<0xFF800000> : vector<8xf32>
    %63 = vector.multi_reduction <maximumf>, %62, %cst_47 [1] : vector<8x8xf32> to vector<8xf32>
    %64 = vector.shape_cast %63 : vector<8xf32> to vector<8x1xf32>
    %65 = vector.broadcast %64 : vector<8x1xf32> to vector<8x8xf32>
    %66 = arith.subf %62, %65 : vector<8x8xf32>
    %67 = math.exp %66 : vector<8x8xf32>
    %cst_48 = arith.constant dense<0.000000e+00> : vector<8xf32>
    %68 = vector.multi_reduction <add>, %67, %cst_48 [1] : vector<8x8xf32> to vector<8xf32>
    %69 = vector.shape_cast %68 : vector<8xf32> to vector<8x1xf32>
    %70 = tpu.reciprocal %69 {approx = true} : vector<8x1xf32> -> vector<8x1xf32>
    %71 = vector.broadcast %70 : vector<8x1xf32> to vector<8x8xf32>
    %72 = arith.mulf %67, %71 : vector<8x8xf32>
    %73 = vector.extract_strided_slice %32 {offsets = [0, 8], sizes = [8, 8], strides = [1, 1]} : vector<8x32xf32> to vector<8x8xf32>
    %cst_49 = arith.constant dense<0.000000e+00> : vector<8x8xf32>
    %74 = tpu.matmul %72, %73, %cst_49 {dimension_numbers = #tpu.dot_dimension_numbers<[1], [0], [0], [1], [0, 0, 1, 1], [], []>} : vector<8x8xf32>, vector<8x8xf32>, vector<8x8xf32> -> vector<8x8xf32>
    %75 = vector.extract_strided_slice %9 {offsets = [8, 0], sizes = [8, 32], strides = [1, 1]} : vector<32x32xf32> to vector<8x32xf32>
    %cst_50 = arith.constant dense<0.000000e+00> : vector<8x32xf32>
    %76 = tpu.matmul %74, %75, %cst_50 {dimension_numbers = #tpu.dot_dimension_numbers<[1], [0], [0], [1], [0, 0, 1, 1], [], []>} : vector<8x8xf32>, vector<8x32xf32>, vector<8x32xf32> -> vector<8x32xf32>
    %77 = arith.addf %55, %76 : vector<8x32xf32>
    %78 = vector.extract_strided_slice %30 {offsets = [0, 16], sizes = [8, 8], strides = [1, 1]} : vector<8x32xf32> to vector<8x8xf32>
    %79 = vector.extract_strided_slice %31 {offsets = [0, 16], sizes = [8, 8], strides = [1, 1]} : vector<8x32xf32> to vector<8x8xf32>
    %cst_51 = arith.constant dense<0.000000e+00> : vector<8x8xf32>
    %80 = tpu.matmul %78, %79, %cst_51 {dimension_numbers = #tpu.dot_dimension_numbers<[1], [1], [0], [0], [0, 0, 1, 0], [], []>} : vector<8x8xf32>, vector<8x8xf32>, vector<8x8xf32> -> vector<8x8xf32>
    %cst_52 = arith.constant -1.000000e+20 : f32
    %81 = vector.shape_cast %5 : vector<1x8xi1> to vector<1x8xi1>
    %82 = vector.broadcast %81 : vector<1x8xi1> to vector<8x8xi1>
    %83 = vector.broadcast %cst_52 : f32 to vector<8x8xf32>
    %84 = arith.select %82, %80, %83 : vector<8x8xi1>, vector<8x8xf32>
    %cst_53 = arith.constant dense<0xFF800000> : vector<8xf32>
    %85 = vector.multi_reduction <maximumf>, %84, %cst_53 [1] : vector<8x8xf32> to vector<8xf32>
    %86 = vector.shape_cast %85 : vector<8xf32> to vector<8x1xf32>
    %87 = vector.broadcast %86 : vector<8x1xf32> to vector<8x8xf32>
    %88 = arith.subf %84, %87 : vector<8x8xf32>
    %89 = math.exp %88 : vector<8x8xf32>
    %cst_54 = arith.constant dense<0.000000e+00> : vector<8xf32>
    %90 = vector.multi_reduction <add>, %89, %cst_54 [1] : vector<8x8xf32> to vector<8xf32>
    %91 = vector.shape_cast %90 : vector<8xf32> to vector<8x1xf32>
    %92 = tpu.reciprocal %91 {approx = true} : vector<8x1xf32> -> vector<8x1xf32>
    %93 = vector.broadcast %92 : vector<8x1xf32> to vector<8x8xf32>
    %94 = arith.mulf %89, %93 : vector<8x8xf32>
    %95 = vector.extract_strided_slice %32 {offsets = [0, 16], sizes = [8, 8], strides = [1, 1]} : vector<8x32xf32> to vector<8x8xf32>
    %cst_55 = arith.constant dense<0.000000e+00> : vector<8x8xf32>
    %96 = tpu.matmul %94, %95, %cst_55 {dimension_numbers = #tpu.dot_dimension_numbers<[1], [0], [0], [1], [0, 0, 1, 1], [], []>} : vector<8x8xf32>, vector<8x8xf32>, vector<8x8xf32> -> vector<8x8xf32>
    %97 = vector.extract_strided_slice %9 {offsets = [16, 0], sizes = [8, 32], strides = [1, 1]} : vector<32x32xf32> to vector<8x32xf32>
    %cst_56 = arith.constant dense<0.000000e+00> : vector<8x32xf32>
    %98 = tpu.matmul %96, %97, %cst_56 {dimension_numbers = #tpu.dot_dimension_numbers<[1], [0], [0], [1], [0, 0, 1, 1], [], []>} : vector<8x8xf32>, vector<8x32xf32>, vector<8x32xf32> -> vector<8x32xf32>
    %99 = arith.addf %77, %98 : vector<8x32xf32>
    %100 = vector.extract_strided_slice %30 {offsets = [0, 24], sizes = [8, 8], strides = [1, 1]} : vector<8x32xf32> to vector<8x8xf32>
    %101 = vector.extract_strided_slice %31 {offsets = [0, 24], sizes = [8, 8], strides = [1, 1]} : vector<8x32xf32> to vector<8x8xf32>
    %cst_57 = arith.constant dense<0.000000e+00> : vector<8x8xf32>
    %102 = tpu.matmul %100, %101, %cst_57 {dimension_numbers = #tpu.dot_dimension_numbers<[1], [1], [0], [0], [0, 0, 1, 0], [], []>} : vector<8x8xf32>, vector<8x8xf32>, vector<8x8xf32> -> vector<8x8xf32>
    %cst_58 = arith.constant -1.000000e+20 : f32
    %103 = vector.shape_cast %5 : vector<1x8xi1> to vector<1x8xi1>
    %104 = vector.broadcast %103 : vector<1x8xi1> to vector<8x8xi1>
    %105 = vector.broadcast %cst_58 : f32 to vector<8x8xf32>
    %106 = arith.select %104, %102, %105 : vector<8x8xi1>, vector<8x8xf32>
    %cst_59 = arith.constant dense<0xFF800000> : vector<8xf32>
    %107 = vector.multi_reduction <maximumf>, %106, %cst_59 [1] : vector<8x8xf32> to vector<8xf32>
    %108 = vector.shape_cast %107 : vector<8xf32> to vector<8x1xf32>
    %109 = vector.broadcast %108 : vector<8x1xf32> to vector<8x8xf32>
    %110 = arith.subf %106, %109 : vector<8x8xf32>
    %111 = math.exp %110 : vector<8x8xf32>
    %cst_60 = arith.constant dense<0.000000e+00> : vector<8xf32>
    %112 = vector.multi_reduction <add>, %111, %cst_60 [1] : vector<8x8xf32> to vector<8xf32>
    %113 = vector.shape_cast %112 : vector<8xf32> to vector<8x1xf32>
    %114 = tpu.reciprocal %113 {approx = true} : vector<8x1xf32> -> vector<8x1xf32>
    %115 = vector.broadcast %114 : vector<8x1xf32> to vector<8x8xf32>
    %116 = arith.mulf %111, %115 : vector<8x8xf32>
    %117 = vector.extract_strided_slice %32 {offsets = [0, 24], sizes = [8, 8], strides = [1, 1]} : vector<8x32xf32> to vector<8x8xf32>
    %cst_61 = arith.constant dense<0.000000e+00> : vector<8x8xf32>
    %118 = tpu.matmul %116, %117, %cst_61 {dimension_numbers = #tpu.dot_dimension_numbers<[1], [0], [0], [1], [0, 0, 1, 1], [], []>} : vector<8x8xf32>, vector<8x8xf32>, vector<8x8xf32> -> vector<8x8xf32>
    %119 = vector.extract_strided_slice %9 {offsets = [24, 0], sizes = [8, 32], strides = [1, 1]} : vector<32x32xf32> to vector<8x32xf32>
    %cst_62 = arith.constant dense<0.000000e+00> : vector<8x32xf32>
    %120 = tpu.matmul %118, %119, %cst_62 {dimension_numbers = #tpu.dot_dimension_numbers<[1], [0], [0], [1], [0, 0, 1, 1], [], []>} : vector<8x8xf32>, vector<8x32xf32>, vector<8x32xf32> -> vector<8x32xf32>
    %121 = arith.addf %99, %120 : vector<8x32xf32>
    %122 = arith.addf %121, %1 : vector<8x32xf32>
    %cst_63 = arith.constant dense<0.000000e+00> : vector<8xf32>
    %123 = vector.multi_reduction <add>, %122, %cst_63 [1] : vector<8x32xf32> to vector<8xf32>
    %124 = vector.shape_cast %123 : vector<8xf32> to vector<8x1xf32>
    %cst_64 = arith.constant 3.200000e+01 : f32
    %125 = vector.broadcast %cst_64 : f32 to vector<8x1xf32>
    %126 = arith.divf %124, %125 : vector<8x1xf32>
    %127 = vector.broadcast %126 : vector<8x1xf32> to vector<8x32xf32>
    %128 = arith.subf %122, %127 : vector<8x32xf32>
    %129 = arith.mulf %128, %128 : vector<8x32xf32>
    %cst_65 = arith.constant dense<0.000000e+00> : vector<8xf32>
    %130 = vector.multi_reduction <add>, %129, %cst_65 [1] : vector<8x32xf32> to vector<8xf32>
    %131 = vector.shape_cast %130 : vector<8xf32> to vector<8x1xf32>
    %cst_66 = arith.constant 3.200000e+01 : f32
    %132 = vector.broadcast %cst_66 : f32 to vector<8x1xf32>
    %133 = arith.divf %131, %132 : vector<8x1xf32>
    %134 = vector.broadcast %126 : vector<8x1xf32> to vector<8x32xf32>
    %135 = arith.subf %122, %134 : vector<8x32xf32>
    %cst_67 = arith.constant 9.99999974E-6 : f32
    %136 = vector.broadcast %cst_67 : f32 to vector<8x1xf32>
    %137 = arith.addf %133, %136 : vector<8x1xf32>
    %138 = math.rsqrt %137 : vector<8x1xf32>
    %139 = vector.broadcast %138 : vector<8x1xf32> to vector<8x32xf32>
    %140 = arith.mulf %135, %139 : vector<8x32xf32>
    %141 = vector.broadcast %13 : vector<1x32xf32> to vector<8x32xf32>
    %142 = arith.mulf %140, %141 : vector<8x32xf32>
    %143 = vector.broadcast %15 : vector<1x32xf32> to vector<8x32xf32>
    %144 = arith.addf %142, %143 : vector<8x32xf32>
    %145 = arith.truncf %144 : vector<8x32xf32> to vector<8x32xbf16>
    %cst_68 = arith.constant dense<0.000000e+00> : vector<8x64xf32>
    %146 = tpu.matmul %145, %21, %cst_68 {dimension_numbers = #tpu.dot_dimension_numbers<[1], [0], [0], [1], [0, 0, 1, 1], [], []>} : vector<8x32xbf16>, vector<32x64xbf16>, vector<8x64xf32> -> vector<8x64xf32>
    %147 = vector.broadcast %23 : vector<1x64xf32> to vector<8x64xf32>
    %148 = arith.addf %146, %147 : vector<8x64xf32>
    %cst_69 = arith.constant 0.000000e+00 : f32
    %149 = vector.broadcast %cst_69 : f32 to vector<8x64xf32>
    %150 = arith.maximumf %148, %149 : vector<8x64xf32>
    %151 = arith.truncf %150 : vector<8x64xf32> to vector<8x64xbf16>
    %cst_70 = arith.constant dense<0.000000e+00> : vector<8x32xf32>
    %152 = tpu.matmul %151, %25, %cst_70 {dimension_numbers = #tpu.dot_dimension_numbers<[1], [0], [0], [1], [0, 0, 1, 1], [], []>} : vector<8x64xbf16>, vector<64x32xbf16>, vector<8x32xf32> -> vector<8x32xf32>
    %153 = vector.broadcast %27 : vector<1x32xf32> to vector<8x32xf32>
    %154 = arith.addf %152, %153 : vector<8x32xf32>
    %155 = arith.addf %154, %144 : vector<8x32xf32>
    %cst_71 = arith.constant dense<0.000000e+00> : vector<8xf32>
    %156 = vector.multi_reduction <add>, %155, %cst_71 [1] : vector<8x32xf32> to vector<8xf32>
    %157 = vector.shape_cast %156 : vector<8xf32> to vector<8x1xf32>
    %cst_72 = arith.constant 3.200000e+01 : f32
    %158 = vector.broadcast %cst_72 : f32 to vector<8x1xf32>
    %159 = arith.divf %157, %158 : vector<8x1xf32>
    %160 = vector.broadcast %159 : vector<8x1xf32> to vector<8x32xf32>
    %161 = arith.subf %155, %160 : vector<8x32xf32>
    %162 = arith.mulf %161, %161 : vector<8x32xf32>
    %cst_73 = arith.constant dense<0.000000e+00> : vector<8xf32>
    %163 = vector.multi_reduction <add>, %162, %cst_73 [1] : vector<8x32xf32> to vector<8xf32>
    %164 = vector.shape_cast %163 : vector<8xf32> to vector<8x1xf32>
    %cst_74 = arith.constant 3.200000e+01 : f32
    %165 = vector.broadcast %cst_74 : f32 to vector<8x1xf32>
    %166 = arith.divf %164, %165 : vector<8x1xf32>
    %167 = vector.broadcast %159 : vector<8x1xf32> to vector<8x32xf32>
    %168 = arith.subf %155, %167 : vector<8x32xf32>
    %cst_75 = arith.constant 9.99999974E-6 : f32
    %169 = vector.broadcast %cst_75 : f32 to vector<8x1xf32>
    %170 = arith.addf %166, %169 : vector<8x1xf32>
    %171 = math.rsqrt %170 : vector<8x1xf32>
    %172 = vector.broadcast %171 : vector<8x1xf32> to vector<8x32xf32>
    %173 = arith.mulf %168, %172 : vector<8x32xf32>
    %174 = vector.broadcast %17 : vector<1x32xf32> to vector<8x32xf32>
    %175 = arith.mulf %173, %174 : vector<8x32xf32>
    %176 = vector.broadcast %19 : vector<1x32xf32> to vector<8x32xf32>
    %177 = arith.addf %175, %176 : vector<8x32xf32>
    %c1 = arith.constant 1 : index
    %c0_76 = arith.constant 0 : index
    %c0_77 = arith.constant 0 : index
    %178 = vector.load %arg3[%c1, %c0_76, %c0_77] : memref<2x32x96xbf16, #tpu.memory_space<vmem>>, vector<1x32x96xbf16>
    %179 = vector.shape_cast %178 : vector<1x32x96xbf16> to vector<32x96xbf16>
    %c1_78 = arith.constant 1 : index
    %c0_79 = arith.constant 0 : index
    %c0_80 = arith.constant 0 : index
    %180 = vector.load %arg4[%c1_78, %c0_79, %c0_80] : memref<2x32x32xf32, #tpu.memory_space<vmem>>, vector<1x32x32xf32>
    %181 = vector.shape_cast %180 : vector<1x32x32xf32> to vector<32x32xf32>
    %c1_81 = arith.constant 1 : index
    %c0_82 = arith.constant 0 : index
    %c0_83 = arith.constant 0 : index
    %182 = vector.load %arg5[%c1_81, %c0_82, %c0_83] : memref<2x1x32xf32, #tpu.memory_space<vmem>>, vector<1x1x32xf32>
    %183 = vector.shape_cast %182 : vector<1x1x32xf32> to vector<1x32xf32>
    %c1_84 = arith.constant 1 : index
    %c0_85 = arith.constant 0 : index
    %c0_86 = arith.constant 0 : index
    %184 = vector.load %arg6[%c1_84, %c0_85, %c0_86] : memref<2x1x32xf32, #tpu.memory_space<vmem>>, vector<1x1x32xf32>
    %185 = vector.shape_cast %184 : vector<1x1x32xf32> to vector<1x32xf32>
    %c1_87 = arith.constant 1 : index
    %c0_88 = arith.constant 0 : index
    %c0_89 = arith.constant 0 : index
    %186 = vector.load %arg7[%c1_87, %c0_88, %c0_89] : memref<2x1x32xf32, #tpu.memory_space<vmem>>, vector<1x1x32xf32>
    %187 = vector.shape_cast %186 : vector<1x1x32xf32> to vector<1x32xf32>
    %c1_90 = arith.constant 1 : index
    %c0_91 = arith.constant 0 : index
    %c0_92 = arith.constant 0 : index
    %188 = vector.load %arg8[%c1_90, %c0_91, %c0_92] : memref<2x1x32xf32, #tpu.memory_space<vmem>>, vector<1x1x32xf32>
    %189 = vector.shape_cast %188 : vector<1x1x32xf32> to vector<1x32xf32>
    %c1_93 = arith.constant 1 : index
    %c0_94 = arith.constant 0 : index
    %c0_95 = arith.constant 0 : index
    %190 = vector.load %arg9[%c1_93, %c0_94, %c0_95] : memref<2x1x32xf32, #tpu.memory_space<vmem>>, vector<1x1x32xf32>
    %191 = vector.shape_cast %190 : vector<1x1x32xf32> to vector<1x32xf32>
    %c1_96 = arith.constant 1 : index
    %c0_97 = arith.constant 0 : index
    %c0_98 = arith.constant 0 : index
    %192 = vector.load %arg10[%c1_96, %c0_97, %c0_98] : memref<2x32x64xbf16, #tpu.memory_space<vmem>>, vector<1x32x64xbf16>
    %193 = vector.shape_cast %192 : vector<1x32x64xbf16> to vector<32x64xbf16>
    %c1_99 = arith.constant 1 : index
    %c0_100 = arith.constant 0 : index
    %c0_101 = arith.constant 0 : index
    %194 = vector.load %arg11[%c1_99, %c0_100, %c0_101] : memref<2x1x64xf32, #tpu.memory_space<vmem>>, vector<1x1x64xf32>
    %195 = vector.shape_cast %194 : vector<1x1x64xf32> to vector<1x64xf32>
    %c1_102 = arith.constant 1 : index
    %c0_103 = arith.constant 0 : index
    %c0_104 = arith.constant 0 : index
    %196 = vector.load %arg12[%c1_102, %c0_103, %c0_104] : memref<2x64x32xbf16, #tpu.memory_space<vmem>>, vector<1x64x32xbf16>
    %197 = vector.shape_cast %196 : vector<1x64x32xbf16> to vector<64x32xbf16>
    %c1_105 = arith.constant 1 : index
    %c0_106 = arith.constant 0 : index
    %c0_107 = arith.constant 0 : index
    %198 = vector.load %arg13[%c1_105, %c0_106, %c0_107] : memref<2x1x32xf32, #tpu.memory_space<vmem>>, vector<1x1x32xf32>
    %199 = vector.shape_cast %198 : vector<1x1x32xf32> to vector<1x32xf32>
    %200 = arith.truncf %177 : vector<8x32xf32> to vector<8x32xbf16>
    %cst_108 = arith.constant dense<0.000000e+00> : vector<8x96xf32>
    %201 = tpu.matmul %200, %179, %cst_108 {dimension_numbers = #tpu.dot_dimension_numbers<[1], [0], [0], [1], [0, 0, 1, 1], [], []>} : vector<8x32xbf16>, vector<32x96xbf16>, vector<8x96xf32> -> vector<8x96xf32>
    %202 = vector.extract_strided_slice %201 {offsets = [0, 0], sizes = [8, 32], strides = [1, 1]} : vector<8x96xf32> to vector<8x32xf32>
    %203 = vector.extract_strided_slice %201 {offsets = [0, 32], sizes = [8, 32], strides = [1, 1]} : vector<8x96xf32> to vector<8x32xf32>
    %204 = vector.extract_strided_slice %201 {offsets = [0, 64], sizes = [8, 32], strides = [1, 1]} : vector<8x96xf32> to vector<8x32xf32>
    %205 = vector.extract_strided_slice %202 {offsets = [0, 0], sizes = [8, 8], strides = [1, 1]} : vector<8x32xf32> to vector<8x8xf32>
    %206 = vector.extract_strided_slice %203 {offsets = [0, 0], sizes = [8, 8], strides = [1, 1]} : vector<8x32xf32> to vector<8x8xf32>
    %cst_109 = arith.constant dense<0.000000e+00> : vector<8x8xf32>
    %207 = tpu.matmul %205, %206, %cst_109 {dimension_numbers = #tpu.dot_dimension_numbers<[1], [1], [0], [0], [0, 0, 1, 0], [], []>} : vector<8x8xf32>, vector<8x8xf32>, vector<8x8xf32> -> vector<8x8xf32>
    %cst_110 = arith.constant -1.000000e+20 : f32
    %208 = vector.shape_cast %5 : vector<1x8xi1> to vector<1x8xi1>
    %209 = vector.broadcast %208 : vector<1x8xi1> to vector<8x8xi1>
    %210 = vector.broadcast %cst_110 : f32 to vector<8x8xf32>
    %211 = arith.select %209, %207, %210 : vector<8x8xi1>, vector<8x8xf32>
    %cst_111 = arith.constant dense<0xFF800000> : vector<8xf32>
    %212 = vector.multi_reduction <maximumf>, %211, %cst_111 [1] : vector<8x8xf32> to vector<8xf32>
    %213 = vector.shape_cast %212 : vector<8xf32> to vector<8x1xf32>
    %214 = vector.broadcast %213 : vector<8x1xf32> to vector<8x8xf32>
    %215 = arith.subf %211, %214 : vector<8x8xf32>
    %216 = math.exp %215 : vector<8x8xf32>
    %cst_112 = arith.constant dense<0.000000e+00> : vector<8xf32>
    %217 = vector.multi_reduction <add>, %216, %cst_112 [1] : vector<8x8xf32> to vector<8xf32>
    %218 = vector.shape_cast %217 : vector<8xf32> to vector<8x1xf32>
    %219 = tpu.reciprocal %218 {approx = true} : vector<8x1xf32> -> vector<8x1xf32>
    %220 = vector.broadcast %219 : vector<8x1xf32> to vector<8x8xf32>
    %221 = arith.mulf %216, %220 : vector<8x8xf32>
    %222 = vector.extract_strided_slice %204 {offsets = [0, 0], sizes = [8, 8], strides = [1, 1]} : vector<8x32xf32> to vector<8x8xf32>
    %cst_113 = arith.constant dense<0.000000e+00> : vector<8x8xf32>
    %223 = tpu.matmul %221, %222, %cst_113 {dimension_numbers = #tpu.dot_dimension_numbers<[1], [0], [0], [1], [0, 0, 1, 1], [], []>} : vector<8x8xf32>, vector<8x8xf32>, vector<8x8xf32> -> vector<8x8xf32>
    %224 = vector.extract_strided_slice %181 {offsets = [0, 0], sizes = [8, 32], strides = [1, 1]} : vector<32x32xf32> to vector<8x32xf32>
    %cst_114 = arith.constant dense<0.000000e+00> : vector<8x32xf32>
    %225 = tpu.matmul %223, %224, %cst_114 {dimension_numbers = #tpu.dot_dimension_numbers<[1], [0], [0], [1], [0, 0, 1, 1], [], []>} : vector<8x8xf32>, vector<8x32xf32>, vector<8x32xf32> -> vector<8x32xf32>
    %226 = vector.broadcast %183 : vector<1x32xf32> to vector<8x32xf32>
    %227 = arith.addf %226, %225 : vector<8x32xf32>
    %228 = vector.extract_strided_slice %202 {offsets = [0, 8], sizes = [8, 8], strides = [1, 1]} : vector<8x32xf32> to vector<8x8xf32>
    %229 = vector.extract_strided_slice %203 {offsets = [0, 8], sizes = [8, 8], strides = [1, 1]} : vector<8x32xf32> to vector<8x8xf32>
    %cst_115 = arith.constant dense<0.000000e+00> : vector<8x8xf32>
    %230 = tpu.matmul %228, %229, %cst_115 {dimension_numbers = #tpu.dot_dimension_numbers<[1], [1], [0], [0], [0, 0, 1, 0], [], []>} : vector<8x8xf32>, vector<8x8xf32>, vector<8x8xf32> -> vector<8x8xf32>
    %cst_116 = arith.constant -1.000000e+20 : f32
    %231 = vector.shape_cast %5 : vector<1x8xi1> to vector<1x8xi1>
    %232 = vector.broadcast %231 : vector<1x8xi1> to vector<8x8xi1>
    %233 = vector.broadcast %cst_116 : f32 to vector<8x8xf32>
    %234 = arith.select %232, %230, %233 : vector<8x8xi1>, vector<8x8xf32>
    %cst_117 = arith.constant dense<0xFF800000> : vector<8xf32>
    %235 = vector.multi_reduction <maximumf>, %234, %cst_117 [1] : vector<8x8xf32> to vector<8xf32>
    %236 = vector.shape_cast %235 : vector<8xf32> to vector<8x1xf32>
    %237 = vector.broadcast %236 : vector<8x1xf32> to vector<8x8xf32>
    %238 = arith.subf %234, %237 : vector<8x8xf32>
    %239 = math.exp %238 : vector<8x8xf32>
    %cst_118 = arith.constant dense<0.000000e+00> : vector<8xf32>
    %240 = vector.multi_reduction <add>, %239, %cst_118 [1] : vector<8x8xf32> to vector<8xf32>
    %241 = vector.shape_cast %240 : vector<8xf32> to vector<8x1xf32>
    %242 = tpu.reciprocal %241 {approx = true} : vector<8x1xf32> -> vector<8x1xf32>
    %243 = vector.broadcast %242 : vector<8x1xf32> to vector<8x8xf32>
    %244 = arith.mulf %239, %243 : vector<8x8xf32>
    %245 = vector.extract_strided_slice %204 {offsets = [0, 8], sizes = [8, 8], strides = [1, 1]} : vector<8x32xf32> to vector<8x8xf32>
    %cst_119 = arith.constant dense<0.000000e+00> : vector<8x8xf32>
    %246 = tpu.matmul %244, %245, %cst_119 {dimension_numbers = #tpu.dot_dimension_numbers<[1], [0], [0], [1], [0, 0, 1, 1], [], []>} : vector<8x8xf32>, vector<8x8xf32>, vector<8x8xf32> -> vector<8x8xf32>
    %247 = vector.extract_strided_slice %181 {offsets = [8, 0], sizes = [8, 32], strides = [1, 1]} : vector<32x32xf32> to vector<8x32xf32>
    %cst_120 = arith.constant dense<0.000000e+00> : vector<8x32xf32>
    %248 = tpu.matmul %246, %247, %cst_120 {dimension_numbers = #tpu.dot_dimension_numbers<[1], [0], [0], [1], [0, 0, 1, 1], [], []>} : vector<8x8xf32>, vector<8x32xf32>, vector<8x32xf32> -> vector<8x32xf32>
    %249 = arith.addf %227, %248 : vector<8x32xf32>
    %250 = vector.extract_strided_slice %202 {offsets = [0, 16], sizes = [8, 8], strides = [1, 1]} : vector<8x32xf32> to vector<8x8xf32>
    %251 = vector.extract_strided_slice %203 {offsets = [0, 16], sizes = [8, 8], strides = [1, 1]} : vector<8x32xf32> to vector<8x8xf32>
    %cst_121 = arith.constant dense<0.000000e+00> : vector<8x8xf32>
    %252 = tpu.matmul %250, %251, %cst_121 {dimension_numbers = #tpu.dot_dimension_numbers<[1], [1], [0], [0], [0, 0, 1, 0], [], []>} : vector<8x8xf32>, vector<8x8xf32>, vector<8x8xf32> -> vector<8x8xf32>
    %cst_122 = arith.constant -1.000000e+20 : f32
    %253 = vector.shape_cast %5 : vector<1x8xi1> to vector<1x8xi1>
    %254 = vector.broadcast %253 : vector<1x8xi1> to vector<8x8xi1>
    %255 = vector.broadcast %cst_122 : f32 to vector<8x8xf32>
    %256 = arith.select %254, %252, %255 : vector<8x8xi1>, vector<8x8xf32>
    %cst_123 = arith.constant dense<0xFF800000> : vector<8xf32>
    %257 = vector.multi_reduction <maximumf>, %256, %cst_123 [1] : vector<8x8xf32> to vector<8xf32>
    %258 = vector.shape_cast %257 : vector<8xf32> to vector<8x1xf32>
    %259 = vector.broadcast %258 : vector<8x1xf32> to vector<8x8xf32>
    %260 = arith.subf %256, %259 : vector<8x8xf32>
    %261 = math.exp %260 : vector<8x8xf32>
    %cst_124 = arith.constant dense<0.000000e+00> : vector<8xf32>
    %262 = vector.multi_reduction <add>, %261, %cst_124 [1] : vector<8x8xf32> to vector<8xf32>
    %263 = vector.shape_cast %262 : vector<8xf32> to vector<8x1xf32>
    %264 = tpu.reciprocal %263 {approx = true} : vector<8x1xf32> -> vector<8x1xf32>
    %265 = vector.broadcast %264 : vector<8x1xf32> to vector<8x8xf32>
    %266 = arith.mulf %261, %265 : vector<8x8xf32>
    %267 = vector.extract_strided_slice %204 {offsets = [0, 16], sizes = [8, 8], strides = [1, 1]} : vector<8x32xf32> to vector<8x8xf32>
    %cst_125 = arith.constant dense<0.000000e+00> : vector<8x8xf32>
    %268 = tpu.matmul %266, %267, %cst_125 {dimension_numbers = #tpu.dot_dimension_numbers<[1], [0], [0], [1], [0, 0, 1, 1], [], []>} : vector<8x8xf32>, vector<8x8xf32>, vector<8x8xf32> -> vector<8x8xf32>
    %269 = vector.extract_strided_slice %181 {offsets = [16, 0], sizes = [8, 32], strides = [1, 1]} : vector<32x32xf32> to vector<8x32xf32>
    %cst_126 = arith.constant dense<0.000000e+00> : vector<8x32xf32>
    %270 = tpu.matmul %268, %269, %cst_126 {dimension_numbers = #tpu.dot_dimension_numbers<[1], [0], [0], [1], [0, 0, 1, 1], [], []>} : vector<8x8xf32>, vector<8x32xf32>, vector<8x32xf32> -> vector<8x32xf32>
    %271 = arith.addf %249, %270 : vector<8x32xf32>
    %272 = vector.extract_strided_slice %202 {offsets = [0, 24], sizes = [8, 8], strides = [1, 1]} : vector<8x32xf32> to vector<8x8xf32>
    %273 = vector.extract_strided_slice %203 {offsets = [0, 24], sizes = [8, 8], strides = [1, 1]} : vector<8x32xf32> to vector<8x8xf32>
    %cst_127 = arith.constant dense<0.000000e+00> : vector<8x8xf32>
    %274 = tpu.matmul %272, %273, %cst_127 {dimension_numbers = #tpu.dot_dimension_numbers<[1], [1], [0], [0], [0, 0, 1, 0], [], []>} : vector<8x8xf32>, vector<8x8xf32>, vector<8x8xf32> -> vector<8x8xf32>
    %cst_128 = arith.constant -1.000000e+20 : f32
    %275 = vector.shape_cast %5 : vector<1x8xi1> to vector<1x8xi1>
    %276 = vector.broadcast %275 : vector<1x8xi1> to vector<8x8xi1>
    %277 = vector.broadcast %cst_128 : f32 to vector<8x8xf32>
    %278 = arith.select %276, %274, %277 : vector<8x8xi1>, vector<8x8xf32>
    %cst_129 = arith.constant dense<0xFF800000> : vector<8xf32>
    %279 = vector.multi_reduction <maximumf>, %278, %cst_129 [1] : vector<8x8xf32> to vector<8xf32>
    %280 = vector.shape_cast %279 : vector<8xf32> to vector<8x1xf32>
    %281 = vector.broadcast %280 : vector<8x1xf32> to vector<8x8xf32>
    %282 = arith.subf %278, %281 : vector<8x8xf32>
    %283 = math.exp %282 : vector<8x8xf32>
    %cst_130 = arith.constant dense<0.000000e+00> : vector<8xf32>
    %284 = vector.multi_reduction <add>, %283, %cst_130 [1] : vector<8x8xf32> to vector<8xf32>
    %285 = vector.shape_cast %284 : vector<8xf32> to vector<8x1xf32>
    %286 = tpu.reciprocal %285 {approx = true} : vector<8x1xf32> -> vector<8x1xf32>
    %287 = vector.broadcast %286 : vector<8x1xf32> to vector<8x8xf32>
    %288 = arith.mulf %283, %287 : vector<8x8xf32>
    %289 = vector.extract_strided_slice %204 {offsets = [0, 24], sizes = [8, 8], strides = [1, 1]} : vector<8x32xf32> to vector<8x8xf32>
    %cst_131 = arith.constant dense<0.000000e+00> : vector<8x8xf32>
    %290 = tpu.matmul %288, %289, %cst_131 {dimension_numbers = #tpu.dot_dimension_numbers<[1], [0], [0], [1], [0, 0, 1, 1], [], []>} : vector<8x8xf32>, vector<8x8xf32>, vector<8x8xf32> -> vector<8x8xf32>
    %291 = vector.extract_strided_slice %181 {offsets = [24, 0], sizes = [8, 32], strides = [1, 1]} : vector<32x32xf32> to vector<8x32xf32>
    %cst_132 = arith.constant dense<0.000000e+00> : vector<8x32xf32>
    %292 = tpu.matmul %290, %291, %cst_132 {dimension_numbers = #tpu.dot_dimension_numbers<[1], [0], [0], [1], [0, 0, 1, 1], [], []>} : vector<8x8xf32>, vector<8x32xf32>, vector<8x32xf32> -> vector<8x32xf32>
    %293 = arith.addf %271, %292 : vector<8x32xf32>
    %294 = arith.addf %293, %177 : vector<8x32xf32>
    %cst_133 = arith.constant dense<0.000000e+00> : vector<8xf32>
    %295 = vector.multi_reduction <add>, %294, %cst_133 [1] : vector<8x32xf32> to vector<8xf32>
    %296 = vector.shape_cast %295 : vector<8xf32> to vector<8x1xf32>
    %cst_134 = arith.constant 3.200000e+01 : f32
    %297 = vector.broadcast %cst_134 : f32 to vector<8x1xf32>
    %298 = arith.divf %296, %297 : vector<8x1xf32>
    %299 = vector.broadcast %298 : vector<8x1xf32> to vector<8x32xf32>
    %300 = arith.subf %294, %299 : vector<8x32xf32>
    %301 = arith.mulf %300, %300 : vector<8x32xf32>
    %cst_135 = arith.constant dense<0.000000e+00> : vector<8xf32>
    %302 = vector.multi_reduction <add>, %301, %cst_135 [1] : vector<8x32xf32> to vector<8xf32>
    %303 = vector.shape_cast %302 : vector<8xf32> to vector<8x1xf32>
    %cst_136 = arith.constant 3.200000e+01 : f32
    %304 = vector.broadcast %cst_136 : f32 to vector<8x1xf32>
    %305 = arith.divf %303, %304 : vector<8x1xf32>
    %306 = vector.broadcast %298 : vector<8x1xf32> to vector<8x32xf32>
    %307 = arith.subf %294, %306 : vector<8x32xf32>
    %cst_137 = arith.constant 9.99999974E-6 : f32
    %308 = vector.broadcast %cst_137 : f32 to vector<8x1xf32>
    %309 = arith.addf %305, %308 : vector<8x1xf32>
    %310 = math.rsqrt %309 : vector<8x1xf32>
    %311 = vector.broadcast %310 : vector<8x1xf32> to vector<8x32xf32>
    %312 = arith.mulf %307, %311 : vector<8x32xf32>
    %313 = vector.broadcast %185 : vector<1x32xf32> to vector<8x32xf32>
    %314 = arith.mulf %312, %313 : vector<8x32xf32>
    %315 = vector.broadcast %187 : vector<1x32xf32> to vector<8x32xf32>
    %316 = arith.addf %314, %315 : vector<8x32xf32>
    %317 = arith.truncf %316 : vector<8x32xf32> to vector<8x32xbf16>
    %cst_138 = arith.constant dense<0.000000e+00> : vector<8x64xf32>
    %318 = tpu.matmul %317, %193, %cst_138 {dimension_numbers = #tpu.dot_dimension_numbers<[1], [0], [0], [1], [0, 0, 1, 1], [], []>} : vector<8x32xbf16>, vector<32x64xbf16>, vector<8x64xf32> -> vector<8x64xf32>
    %319 = vector.broadcast %195 : vector<1x64xf32> to vector<8x64xf32>
    %320 = arith.addf %318, %319 : vector<8x64xf32>
    %cst_139 = arith.constant 0.000000e+00 : f32
    %321 = vector.broadcast %cst_139 : f32 to vector<8x64xf32>
    %322 = arith.maximumf %320, %321 : vector<8x64xf32>
    %323 = arith.truncf %322 : vector<8x64xf32> to vector<8x64xbf16>
    %cst_140 = arith.constant dense<0.000000e+00> : vector<8x32xf32>
    %324 = tpu.matmul %323, %197, %cst_140 {dimension_numbers = #tpu.dot_dimension_numbers<[1], [0], [0], [1], [0, 0, 1, 1], [], []>} : vector<8x64xbf16>, vector<64x32xbf16>, vector<8x32xf32> -> vector<8x32xf32>
    %325 = vector.broadcast %199 : vector<1x32xf32> to vector<8x32xf32>
    %326 = arith.addf %324, %325 : vector<8x32xf32>
    %327 = arith.addf %326, %316 : vector<8x32xf32>
    %cst_141 = arith.constant dense<0.000000e+00> : vector<8xf32>
    %328 = vector.multi_reduction <add>, %327, %cst_141 [1] : vector<8x32xf32> to vector<8xf32>
    %329 = vector.shape_cast %328 : vector<8xf32> to vector<8x1xf32>
    %cst_142 = arith.constant 3.200000e+01 : f32
    %330 = vector.broadcast %cst_142 : f32 to vector<8x1xf32>
    %331 = arith.divf %329, %330 : vector<8x1xf32>
    %332 = vector.broadcast %331 : vector<8x1xf32> to vector<8x32xf32>
    %333 = arith.subf %327, %332 : vector<8x32xf32>
    %334 = arith.mulf %333, %333 : vector<8x32xf32>
    %cst_143 = arith.constant dense<0.000000e+00> : vector<8xf32>
    %335 = vector.multi_reduction <add>, %334, %cst_143 [1] : vector<8x32xf32> to vector<8xf32>
    %336 = vector.shape_cast %335 : vector<8xf32> to vector<8x1xf32>
    %cst_144 = arith.constant 3.200000e+01 : f32
    %337 = vector.broadcast %cst_144 : f32 to vector<8x1xf32>
    %338 = arith.divf %336, %337 : vector<8x1xf32>
    %339 = vector.broadcast %331 : vector<8x1xf32> to vector<8x32xf32>
    %340 = arith.subf %327, %339 : vector<8x32xf32>
    %cst_145 = arith.constant 9.99999974E-6 : f32
    %341 = vector.broadcast %cst_145 : f32 to vector<8x1xf32>
    %342 = arith.addf %338, %341 : vector<8x1xf32>
    %343 = math.rsqrt %342 : vector<8x1xf32>
    %344 = vector.broadcast %343 : vector<8x1xf32> to vector<8x32xf32>
    %345 = arith.mulf %340, %344 : vector<8x32xf32>
    %346 = vector.broadcast %189 : vector<1x32xf32> to vector<8x32xf32>
    %347 = arith.mulf %345, %346 : vector<8x32xf32>
    %348 = vector.broadcast %191 : vector<1x32xf32> to vector<8x32xf32>
    %349 = arith.addf %347, %348 : vector<8x32xf32>
    %c0_146 = arith.constant 0 : index
    %c0_147 = arith.constant 0 : index
    %c0_148 = arith.constant 0 : index
    %350 = vector.load %arg14[%c0_146, %c0_147, %c0_148] : memref<1x8x32xf32, #tpu.memory_space<vmem>>, vector<1x8x32xf32>
    %351 = vector.shape_cast %350 : vector<1x8x32xf32> to vector<8x32xf32>
    %352 = vector.shape_cast %349 : vector<8x32xf32> to vector<1x8x32xf32>
    tpu.vector_store %arg14[%c0_146, %c0_147, %c0_148], %352 {strides = array<i32>} : memref<1x8x32xf32, #tpu.memory_space<vmem>>, vector<1x8x32xf32>,
    return
  }
  func.func @transform_0(%arg0: i32) -> (i32, i32, i32) {
    %c0_i32 = arith.constant 0 : i32
    %c0_i32_0 = arith.constant 0 : i32
    %c0_i32_1 = arith.constant 0 : i32
    return %arg0, %c0_i32, %c0_i32_0 : i32, i32, i32
  }
  func.func @transform_1(%arg0: i32) -> (i32, i32, i32) {
    %c0_i32 = arith.constant 0 : i32
    %c0_i32_0 = arith.constant 0 : i32
    %c0_i32_1 = arith.constant 0 : i32
    return %arg0, %c0_i32, %c0_i32_0 : i32, i32, i32
  }
  func.func @transform_2(%arg0: i32) -> (i32, i32, i32) {
    %c0_i32 = arith.constant 0 : i32
    %c0_i32_0 = arith.constant 0 : i32
    %c0_i32_1 = arith.constant 0 : i32
    %c0_i32_2 = arith.constant 0 : i32
    return %c0_i32, %c0_i32_0, %c0_i32_1 : i32, i32, i32
  }
  func.func @transform_3(%arg0: i32) -> (i32, i32, i32) {
    %c0_i32 = arith.constant 0 : i32
    %c0_i32_0 = arith.constant 0 : i32
    %c0_i32_1 = arith.constant 0 : i32
    %c0_i32_2 = arith.constant 0 : i32
    return %c0_i32, %c0_i32_0, %c0_i32_1 : i32, i32, i32
  }
  func.func @transform_4(%arg0: i32) -> (i32, i32, i32) {
    %c0_i32 = arith.constant 0 : i32
    %c0_i32_0 = arith.constant 0 : i32
    %c0_i32_1 = arith.constant 0 : i32
    %c0_i32_2 = arith.constant 0 : i32
    return %c0_i32, %c0_i32_0, %c0_i32_1 : i32, i32, i32
  }
  func.func @transform_5(%arg0: i32) -> (i32, i32, i32) {
    %c0_i32 = arith.constant 0 : i32
    %c0_i32_0 = arith.constant 0 : i32
    %c0_i32_1 = arith.constant 0 : i32
    %c0_i32_2 = arith.constant 0 : i32
    return %c0_i32, %c0_i32_0, %c0_i32_1 : i32, i32, i32
  }
  func.func @transform_6(%arg0: i32) -> (i32, i32, i32) {
    %c0_i32 = arith.constant 0 : i32
    %c0_i32_0 = arith.constant 0 : i32
    %c0_i32_1 = arith.constant 0 : i32
    %c0_i32_2 = arith.constant 0 : i32
    return %c0_i32, %c0_i32_0, %c0_i32_1 : i32, i32, i32
  }
  func.func @transform_7(%arg0: i32) -> (i32, i32, i32) {
    %c0_i32 = arith.constant 0 : i32
    %c0_i32_0 = arith.constant 0 : i32
    %c0_i32_1 = arith.constant 0 : i32
    %c0_i32_2 = arith.constant 0 : i32
    return %c0_i32, %c0_i32_0, %c0_i32_1 : i32, i32, i32
  }
  func.func @transform_8(%arg0: i32) -> (i32, i32, i32) {
    %c0_i32 = arith.constant 0 : i32
    %c0_i32_0 = arith.constant 0 : i32
    %c0_i32_1 = arith.constant 0 : i32
    %c0_i32_2 = arith.constant 0 : i32
    return %c0_i32, %c0_i32_0, %c0_i32_1 : i32, i32, i32
  }
  func.func @transform_9(%arg0: i32) -> (i32, i32, i32) {
    %c0_i32 = arith.constant 0 : i32
    %c0_i32_0 = arith.constant 0 : i32
    %c0_i32_1 = arith.constant 0 : i32
    %c0_i32_2 = arith.constant 0 : i32
    return %c0_i32, %c0_i32_0, %c0_i32_1 : i32, i32, i32
  }
  func.func @transform_10(%arg0: i32) -> (i32, i32, i32) {
    %c0_i32 = arith.constant 0 : i32
    %c0_i32_0 = arith.constant 0 : i32
    %c0_i32_1 = arith.constant 0 : i32
    %c0_i32_2 = arith.constant 0 : i32
    return %c0_i32, %c0_i32_0, %c0_i32_1 : i32, i32, i32
  }
  func.func @transform_11(%arg0: i32) -> (i32, i32, i32) {
    %c0_i32 = arith.constant 0 : i32
    %c0_i32_0 = arith.constant 0 : i32
    %c0_i32_1 = arith.constant 0 : i32
    %c0_i32_2 = arith.constant 0 : i32
    return %c0_i32, %c0_i32_0, %c0_i32_1 : i32, i32, i32
  }
  func.func @transform_12(%arg0: i32) -> (i32, i32, i32) {
    %c0_i32 = arith.constant 0 : i32
    %c0_i32_0 = arith.constant 0 : i32
    %c0_i32_1 = arith.constant 0 : i32
    %c0_i32_2 = arith.constant 0 : i32
    return %c0_i32, %c0_i32_0, %c0_i32_1 : i32, i32, i32
  }
  func.func @transform_13(%arg0: i32) -> (i32, i32, i32) {
    %c0_i32 = arith.constant 0 : i32
    %c0_i32_0 = arith.constant 0 : i32
    %c0_i32_1 = arith.constant 0 : i32
    return %arg0, %c0_i32, %c0_i32_0 : i32, i32, i32
  }
}

module attributes {stable_mosaic.version = 11 : i64} {
  func.func @_decoder_kernel(%arg0: i32, %arg1: memref<1x8x32xf32, #tpu.memory_space<vmem>>, %arg2: memref<1x8x32xf32, #tpu.memory_space<vmem>>, %arg3: memref<1x1x8xf32, #tpu.memory_space<vmem>>, %arg4: memref<2x32x96xbf16, #tpu.memory_space<vmem>>, %arg5: memref<2x32x32xf32, #tpu.memory_space<vmem>>, %arg6: memref<2x1x32xf32, #tpu.memory_space<vmem>>, %arg7: memref<2x1x32xf32, #tpu.memory_space<vmem>>, %arg8: memref<2x1x32xf32, #tpu.memory_space<vmem>>, %arg9: memref<2x32x32xbf16, #tpu.memory_space<vmem>>, %arg10: memref<2x32x64xbf16, #tpu.memory_space<vmem>>, %arg11: memref<2x32x32xf32, #tpu.memory_space<vmem>>, %arg12: memref<2x1x32xf32, #tpu.memory_space<vmem>>, %arg13: memref<2x1x32xf32, #tpu.memory_space<vmem>>, %arg14: memref<2x1x32xf32, #tpu.memory_space<vmem>>, %arg15: memref<2x1x32xf32, #tpu.memory_space<vmem>>, %arg16: memref<2x1x32xf32, #tpu.memory_space<vmem>>, %arg17: memref<2x32x64xbf16, #tpu.memory_space<vmem>>, %arg18: memref<2x1x64xf32, #tpu.memory_space<vmem>>, %arg19: memref<2x64x32xbf16, #tpu.memory_space<vmem>>, %arg20: memref<2x1x32xf32, #tpu.memory_space<vmem>>, %arg21: memref<32x128xbf16, #tpu.memory_space<vmem>>, %arg22: memref<1x128xf32, #tpu.memory_space<vmem>>, %arg23: memref<1x8x128xf32, #tpu.memory_space<vmem>>) attributes {dimension_semantics = [#tpu.dimension_semantics<parallel>], iteration_bounds = array<i64: 2>, scalar_prefetch = 0 : i64, scratch_operands = 0 : i64, tpu.core_type = #tpu.core_type<tc>, window_params = [{transform_indices = @transform_0, window_bounds = array<i64: 1, 8, 32>}, {transform_indices = @transform_1, window_bounds = array<i64: 1, 8, 32>}, {transform_indices = @transform_2, window_bounds = array<i64: 1, 1, 8>}, {pipeline_mode = #tpu.pipeline_mode<synchronous>, transform_indices = @transform_3, window_bounds = array<i64: 2, 32, 96>}, {pipeline_mode = #tpu.pipeline_mode<synchronous>, transform_indices = @transform_4, window_bounds = array<i64: 2, 32, 32>}, {pipeline_mode = #tpu.pipeline_mode<synchronous>, transform_indices = @transform_5, window_bounds = array<i64: 2, 1, 32>}, {pipeline_mode = #tpu.pipeline_mode<synchronous>, transform_indices = @transform_6, window_bounds = array<i64: 2, 1, 32>}, {pipeline_mode = #tpu.pipeline_mode<synchronous>, transform_indices = @transform_7, window_bounds = array<i64: 2, 1, 32>}, {pipeline_mode = #tpu.pipeline_mode<synchronous>, transform_indices = @transform_8, window_bounds = array<i64: 2, 32, 32>}, {pipeline_mode = #tpu.pipeline_mode<synchronous>, transform_indices = @transform_9, window_bounds = array<i64: 2, 32, 64>}, {pipeline_mode = #tpu.pipeline_mode<synchronous>, transform_indices = @transform_10, window_bounds = array<i64: 2, 32, 32>}, {pipeline_mode = #tpu.pipeline_mode<synchronous>, transform_indices = @transform_11, window_bounds = array<i64: 2, 1, 32>}, {pipeline_mode = #tpu.pipeline_mode<synchronous>, transform_indices = @transform_12, window_bounds = array<i64: 2, 1, 32>}, {pipeline_mode = #tpu.pipeline_mode<synchronous>, transform_indices = @transform_13, window_bounds = array<i64: 2, 1, 32>}, {pipeline_mode = #tpu.pipeline_mode<synchronous>, transform_indices = @transform_14, window_bounds = array<i64: 2, 1, 32>}, {pipeline_mode = #tpu.pipeline_mode<synchronous>, transform_indices = @transform_15, window_bounds = array<i64: 2, 1, 32>}, {pipeline_mode = #tpu.pipeline_mode<synchronous>, transform_indices = @transform_16, window_bounds = array<i64: 2, 32, 64>}, {pipeline_mode = #tpu.pipeline_mode<synchronous>, transform_indices = @transform_17, window_bounds = array<i64: 2, 1, 64>}, {pipeline_mode = #tpu.pipeline_mode<synchronous>, transform_indices = @transform_18, window_bounds = array<i64: 2, 64, 32>}, {pipeline_mode = #tpu.pipeline_mode<synchronous>, transform_indices = @transform_19, window_bounds = array<i64: 2, 1, 32>}, {pipeline_mode = #tpu.pipeline_mode<synchronous>, transform_indices = @transform_20, window_bounds = array<i64: 32, 128>}, {pipeline_mode = #tpu.pipeline_mode<synchronous>, transform_indices = @transform_21, window_bounds = array<i64: 1, 128>}, {transform_indices = @transform_22, window_bounds = array<i64: 1, 8, 128>}]} {
    %c0 = arith.constant 0 : index
    %c0_0 = arith.constant 0 : index
    %c0_1 = arith.constant 0 : index
    %0 = vector.load %arg1[%c0, %c0_0, %c0_1] : memref<1x8x32xf32, #tpu.memory_space<vmem>>, vector<1x8x32xf32>
    %1 = vector.shape_cast %0 : vector<1x8x32xf32> to vector<8x32xf32>
    %c0_2 = arith.constant 0 : index
    %c0_3 = arith.constant 0 : index
    %c0_4 = arith.constant 0 : index
    %2 = vector.load %arg2[%c0_2, %c0_3, %c0_4] : memref<1x8x32xf32, #tpu.memory_space<vmem>>, vector<1x8x32xf32>
    %3 = vector.shape_cast %2 : vector<1x8x32xf32> to vector<8x32xf32>
    %c0_5 = arith.constant 0 : index
    %c0_6 = arith.constant 0 : index
    %c0_7 = arith.constant 0 : index
    %4 = vector.load %arg3[%c0_5, %c0_6, %c0_7] : memref<1x1x8xf32, #tpu.memory_space<vmem>>, vector<1x1x8xf32>
    %5 = vector.shape_cast %4 : vector<1x1x8xf32> to vector<1x8xf32>
    %cst = arith.constant 0.000000e+00 : f32
    %6 = vector.broadcast %cst : f32 to vector<1x8xf32>
    %7 = arith.cmpf ogt, %5, %6 : vector<1x8xf32>
    %8 = tpu.iota {dimensions = array<i32: 0>} : vector<8x8xi32>
    %9 = tpu.iota {dimensions = array<i32: 1>} : vector<8x8xi32>
    %10 = arith.cmpi sle, %9, %8 : vector<8x8xi32>
    %c0_8 = arith.constant 0 : index
    %c0_9 = arith.constant 0 : index
    %c0_10 = arith.constant 0 : index
    %11 = vector.load %arg4[%c0_8, %c0_9, %c0_10] : memref<2x32x96xbf16, #tpu.memory_space<vmem>>, vector<1x32x96xbf16>
    %12 = vector.shape_cast %11 : vector<1x32x96xbf16> to vector<32x96xbf16>
    %c0_11 = arith.constant 0 : index
    %c0_12 = arith.constant 0 : index
    %c0_13 = arith.constant 0 : index
    %13 = vector.load %arg5[%c0_11, %c0_12, %c0_13] : memref<2x32x32xf32, #tpu.memory_space<vmem>>, vector<1x32x32xf32>
    %14 = vector.shape_cast %13 : vector<1x32x32xf32> to vector<32x32xf32>
    %c0_14 = arith.constant 0 : index
    %c0_15 = arith.constant 0 : index
    %c0_16 = arith.constant 0 : index
    %15 = vector.load %arg6[%c0_14, %c0_15, %c0_16] : memref<2x1x32xf32, #tpu.memory_space<vmem>>, vector<1x1x32xf32>
    %16 = vector.shape_cast %15 : vector<1x1x32xf32> to vector<1x32xf32>
    %c0_17 = arith.constant 0 : index
    %c0_18 = arith.constant 0 : index
    %c0_19 = arith.constant 0 : index
    %17 = vector.load %arg7[%c0_17, %c0_18, %c0_19] : memref<2x1x32xf32, #tpu.memory_space<vmem>>, vector<1x1x32xf32>
    %18 = vector.shape_cast %17 : vector<1x1x32xf32> to vector<1x32xf32>
    %c0_20 = arith.constant 0 : index
    %c0_21 = arith.constant 0 : index
    %c0_22 = arith.constant 0 : index
    %19 = vector.load %arg8[%c0_20, %c0_21, %c0_22] : memref<2x1x32xf32, #tpu.memory_space<vmem>>, vector<1x1x32xf32>
    %20 = vector.shape_cast %19 : vector<1x1x32xf32> to vector<1x32xf32>
    %21 = arith.truncf %1 : vector<8x32xf32> to vector<8x32xbf16>
    %cst_23 = arith.constant dense<0.000000e+00> : vector<8x96xf32>
    %22 = tpu.matmul %21, %12, %cst_23 {dimension_numbers = #tpu.dot_dimension_numbers<[1], [0], [0], [1], [0, 0, 1, 1], [], []>} : vector<8x32xbf16>, vector<32x96xbf16>, vector<8x96xf32> -> vector<8x96xf32>
    %23 = vector.extract_strided_slice %22 {offsets = [0, 0], sizes = [8, 32], strides = [1, 1]} : vector<8x96xf32> to vector<8x32xf32>
    %24 = vector.extract_strided_slice %22 {offsets = [0, 32], sizes = [8, 32], strides = [1, 1]} : vector<8x96xf32> to vector<8x32xf32>
    %25 = vector.extract_strided_slice %22 {offsets = [0, 64], sizes = [8, 32], strides = [1, 1]} : vector<8x96xf32> to vector<8x32xf32>
    %26 = vector.extract_strided_slice %23 {offsets = [0, 0], sizes = [8, 8], strides = [1, 1]} : vector<8x32xf32> to vector<8x8xf32>
    %27 = vector.extract_strided_slice %24 {offsets = [0, 0], sizes = [8, 8], strides = [1, 1]} : vector<8x32xf32> to vector<8x8xf32>
    %cst_24 = arith.constant dense<0.000000e+00> : vector<8x8xf32>
    %28 = tpu.matmul %26, %27, %cst_24 {dimension_numbers = #tpu.dot_dimension_numbers<[1], [1], [0], [0], [0, 0, 1, 0], [], []>} : vector<8x8xf32>, vector<8x8xf32>, vector<8x8xf32> -> vector<8x8xf32>
    %cst_25 = arith.constant -1.000000e+20 : f32
    %29 = vector.broadcast %cst_25 : f32 to vector<8x8xf32>
    %30 = arith.select %10, %28, %29 : vector<8x8xi1>, vector<8x8xf32>
    %cst_26 = arith.constant dense<0xFF800000> : vector<8xf32>
    %31 = vector.multi_reduction <maximumf>, %30, %cst_26 [1] : vector<8x8xf32> to vector<8xf32>
    %32 = vector.shape_cast %31 : vector<8xf32> to vector<8x1xf32>
    %33 = vector.broadcast %32 : vector<8x1xf32> to vector<8x8xf32>
    %34 = arith.subf %30, %33 : vector<8x8xf32>
    %35 = math.exp %34 : vector<8x8xf32>
    %cst_27 = arith.constant dense<0.000000e+00> : vector<8xf32>
    %36 = vector.multi_reduction <add>, %35, %cst_27 [1] : vector<8x8xf32> to vector<8xf32>
    %37 = vector.shape_cast %36 : vector<8xf32> to vector<8x1xf32>
    %38 = tpu.reciprocal %37 {approx = true} : vector<8x1xf32> -> vector<8x1xf32>
    %39 = vector.broadcast %38 : vector<8x1xf32> to vector<8x8xf32>
    %40 = arith.mulf %35, %39 : vector<8x8xf32>
    %41 = vector.extract_strided_slice %25 {offsets = [0, 0], sizes = [8, 8], strides = [1, 1]} : vector<8x32xf32> to vector<8x8xf32>
    %cst_28 = arith.constant dense<0.000000e+00> : vector<8x8xf32>
    %42 = tpu.matmul %40, %41, %cst_28 {dimension_numbers = #tpu.dot_dimension_numbers<[1], [0], [0], [1], [0, 0, 1, 1], [], []>} : vector<8x8xf32>, vector<8x8xf32>, vector<8x8xf32> -> vector<8x8xf32>
    %43 = vector.extract_strided_slice %14 {offsets = [0, 0], sizes = [8, 32], strides = [1, 1]} : vector<32x32xf32> to vector<8x32xf32>
    %cst_29 = arith.constant dense<0.000000e+00> : vector<8x32xf32>
    %44 = tpu.matmul %42, %43, %cst_29 {dimension_numbers = #tpu.dot_dimension_numbers<[1], [0], [0], [1], [0, 0, 1, 1], [], []>} : vector<8x8xf32>, vector<8x32xf32>, vector<8x32xf32> -> vector<8x32xf32>
    %45 = vector.broadcast %16 : vector<1x32xf32> to vector<8x32xf32>
    %46 = arith.addf %45, %44 : vector<8x32xf32>
    %47 = vector.extract_strided_slice %23 {offsets = [0, 8], sizes = [8, 8], strides = [1, 1]} : vector<8x32xf32> to vector<8x8xf32>
    %48 = vector.extract_strided_slice %24 {offsets = [0, 8], sizes = [8, 8], strides = [1, 1]} : vector<8x32xf32> to vector<8x8xf32>
    %cst_30 = arith.constant dense<0.000000e+00> : vector<8x8xf32>
    %49 = tpu.matmul %47, %48, %cst_30 {dimension_numbers = #tpu.dot_dimension_numbers<[1], [1], [0], [0], [0, 0, 1, 0], [], []>} : vector<8x8xf32>, vector<8x8xf32>, vector<8x8xf32> -> vector<8x8xf32>
    %cst_31 = arith.constant -1.000000e+20 : f32
    %50 = vector.broadcast %cst_31 : f32 to vector<8x8xf32>
    %51 = arith.select %10, %49, %50 : vector<8x8xi1>, vector<8x8xf32>
    %cst_32 = arith.constant dense<0xFF800000> : vector<8xf32>
    %52 = vector.multi_reduction <maximumf>, %51, %cst_32 [1] : vector<8x8xf32> to vector<8xf32>
    %53 = vector.shape_cast %52 : vector<8xf32> to vector<8x1xf32>
    %54 = vector.broadcast %53 : vector<8x1xf32> to vector<8x8xf32>
    %55 = arith.subf %51, %54 : vector<8x8xf32>
    %56 = math.exp %55 : vector<8x8xf32>
    %cst_33 = arith.constant dense<0.000000e+00> : vector<8xf32>
    %57 = vector.multi_reduction <add>, %56, %cst_33 [1] : vector<8x8xf32> to vector<8xf32>
    %58 = vector.shape_cast %57 : vector<8xf32> to vector<8x1xf32>
    %59 = tpu.reciprocal %58 {approx = true} : vector<8x1xf32> -> vector<8x1xf32>
    %60 = vector.broadcast %59 : vector<8x1xf32> to vector<8x8xf32>
    %61 = arith.mulf %56, %60 : vector<8x8xf32>
    %62 = vector.extract_strided_slice %25 {offsets = [0, 8], sizes = [8, 8], strides = [1, 1]} : vector<8x32xf32> to vector<8x8xf32>
    %cst_34 = arith.constant dense<0.000000e+00> : vector<8x8xf32>
    %63 = tpu.matmul %61, %62, %cst_34 {dimension_numbers = #tpu.dot_dimension_numbers<[1], [0], [0], [1], [0, 0, 1, 1], [], []>} : vector<8x8xf32>, vector<8x8xf32>, vector<8x8xf32> -> vector<8x8xf32>
    %64 = vector.extract_strided_slice %14 {offsets = [8, 0], sizes = [8, 32], strides = [1, 1]} : vector<32x32xf32> to vector<8x32xf32>
    %cst_35 = arith.constant dense<0.000000e+00> : vector<8x32xf32>
    %65 = tpu.matmul %63, %64, %cst_35 {dimension_numbers = #tpu.dot_dimension_numbers<[1], [0], [0], [1], [0, 0, 1, 1], [], []>} : vector<8x8xf32>, vector<8x32xf32>, vector<8x32xf32> -> vector<8x32xf32>
    %66 = arith.addf %46, %65 : vector<8x32xf32>
    %67 = vector.extract_strided_slice %23 {offsets = [0, 16], sizes = [8, 8], strides = [1, 1]} : vector<8x32xf32> to vector<8x8xf32>
    %68 = vector.extract_strided_slice %24 {offsets = [0, 16], sizes = [8, 8], strides = [1, 1]} : vector<8x32xf32> to vector<8x8xf32>
    %cst_36 = arith.constant dense<0.000000e+00> : vector<8x8xf32>
    %69 = tpu.matmul %67, %68, %cst_36 {dimension_numbers = #tpu.dot_dimension_numbers<[1], [1], [0], [0], [0, 0, 1, 0], [], []>} : vector<8x8xf32>, vector<8x8xf32>, vector<8x8xf32> -> vector<8x8xf32>
    %cst_37 = arith.constant -1.000000e+20 : f32
    %70 = vector.broadcast %cst_37 : f32 to vector<8x8xf32>
    %71 = arith.select %10, %69, %70 : vector<8x8xi1>, vector<8x8xf32>
    %cst_38 = arith.constant dense<0xFF800000> : vector<8xf32>
    %72 = vector.multi_reduction <maximumf>, %71, %cst_38 [1] : vector<8x8xf32> to vector<8xf32>
    %73 = vector.shape_cast %72 : vector<8xf32> to vector<8x1xf32>
    %74 = vector.broadcast %73 : vector<8x1xf32> to vector<8x8xf32>
    %75 = arith.subf %71, %74 : vector<8x8xf32>
    %76 = math.exp %75 : vector<8x8xf32>
    %cst_39 = arith.constant dense<0.000000e+00> : vector<8xf32>
    %77 = vector.multi_reduction <add>, %76, %cst_39 [1] : vector<8x8xf32> to vector<8xf32>
    %78 = vector.shape_cast %77 : vector<8xf32> to vector<8x1xf32>
    %79 = tpu.reciprocal %78 {approx = true} : vector<8x1xf32> -> vector<8x1xf32>
    %80 = vector.broadcast %79 : vector<8x1xf32> to vector<8x8xf32>
    %81 = arith.mulf %76, %80 : vector<8x8xf32>
    %82 = vector.extract_strided_slice %25 {offsets = [0, 16], sizes = [8, 8], strides = [1, 1]} : vector<8x32xf32> to vector<8x8xf32>
    %cst_40 = arith.constant dense<0.000000e+00> : vector<8x8xf32>
    %83 = tpu.matmul %81, %82, %cst_40 {dimension_numbers = #tpu.dot_dimension_numbers<[1], [0], [0], [1], [0, 0, 1, 1], [], []>} : vector<8x8xf32>, vector<8x8xf32>, vector<8x8xf32> -> vector<8x8xf32>
    %84 = vector.extract_strided_slice %14 {offsets = [16, 0], sizes = [8, 32], strides = [1, 1]} : vector<32x32xf32> to vector<8x32xf32>
    %cst_41 = arith.constant dense<0.000000e+00> : vector<8x32xf32>
    %85 = tpu.matmul %83, %84, %cst_41 {dimension_numbers = #tpu.dot_dimension_numbers<[1], [0], [0], [1], [0, 0, 1, 1], [], []>} : vector<8x8xf32>, vector<8x32xf32>, vector<8x32xf32> -> vector<8x32xf32>
    %86 = arith.addf %66, %85 : vector<8x32xf32>
    %87 = vector.extract_strided_slice %23 {offsets = [0, 24], sizes = [8, 8], strides = [1, 1]} : vector<8x32xf32> to vector<8x8xf32>
    %88 = vector.extract_strided_slice %24 {offsets = [0, 24], sizes = [8, 8], strides = [1, 1]} : vector<8x32xf32> to vector<8x8xf32>
    %cst_42 = arith.constant dense<0.000000e+00> : vector<8x8xf32>
    %89 = tpu.matmul %87, %88, %cst_42 {dimension_numbers = #tpu.dot_dimension_numbers<[1], [1], [0], [0], [0, 0, 1, 0], [], []>} : vector<8x8xf32>, vector<8x8xf32>, vector<8x8xf32> -> vector<8x8xf32>
    %cst_43 = arith.constant -1.000000e+20 : f32
    %90 = vector.broadcast %cst_43 : f32 to vector<8x8xf32>
    %91 = arith.select %10, %89, %90 : vector<8x8xi1>, vector<8x8xf32>
    %cst_44 = arith.constant dense<0xFF800000> : vector<8xf32>
    %92 = vector.multi_reduction <maximumf>, %91, %cst_44 [1] : vector<8x8xf32> to vector<8xf32>
    %93 = vector.shape_cast %92 : vector<8xf32> to vector<8x1xf32>
    %94 = vector.broadcast %93 : vector<8x1xf32> to vector<8x8xf32>
    %95 = arith.subf %91, %94 : vector<8x8xf32>
    %96 = math.exp %95 : vector<8x8xf32>
    %cst_45 = arith.constant dense<0.000000e+00> : vector<8xf32>
    %97 = vector.multi_reduction <add>, %96, %cst_45 [1] : vector<8x8xf32> to vector<8xf32>
    %98 = vector.shape_cast %97 : vector<8xf32> to vector<8x1xf32>
    %99 = tpu.reciprocal %98 {approx = true} : vector<8x1xf32> -> vector<8x1xf32>
    %100 = vector.broadcast %99 : vector<8x1xf32> to vector<8x8xf32>
    %101 = arith.mulf %96, %100 : vector<8x8xf32>
    %102 = vector.extract_strided_slice %25 {offsets = [0, 24], sizes = [8, 8], strides = [1, 1]} : vector<8x32xf32> to vector<8x8xf32>
    %cst_46 = arith.constant dense<0.000000e+00> : vector<8x8xf32>
    %103 = tpu.matmul %101, %102, %cst_46 {dimension_numbers = #tpu.dot_dimension_numbers<[1], [0], [0], [1], [0, 0, 1, 1], [], []>} : vector<8x8xf32>, vector<8x8xf32>, vector<8x8xf32> -> vector<8x8xf32>
    %104 = vector.extract_strided_slice %14 {offsets = [24, 0], sizes = [8, 32], strides = [1, 1]} : vector<32x32xf32> to vector<8x32xf32>
    %cst_47 = arith.constant dense<0.000000e+00> : vector<8x32xf32>
    %105 = tpu.matmul %103, %104, %cst_47 {dimension_numbers = #tpu.dot_dimension_numbers<[1], [0], [0], [1], [0, 0, 1, 1], [], []>} : vector<8x8xf32>, vector<8x32xf32>, vector<8x32xf32> -> vector<8x32xf32>
    %106 = arith.addf %86, %105 : vector<8x32xf32>
    %107 = arith.addf %106, %1 : vector<8x32xf32>
    %cst_48 = arith.constant dense<0.000000e+00> : vector<8xf32>
    %108 = vector.multi_reduction <add>, %107, %cst_48 [1] : vector<8x32xf32> to vector<8xf32>
    %109 = vector.shape_cast %108 : vector<8xf32> to vector<8x1xf32>
    %cst_49 = arith.constant 3.200000e+01 : f32
    %110 = vector.broadcast %cst_49 : f32 to vector<8x1xf32>
    %111 = arith.divf %109, %110 : vector<8x1xf32>
    %112 = vector.broadcast %111 : vector<8x1xf32> to vector<8x32xf32>
    %113 = arith.subf %107, %112 : vector<8x32xf32>
    %114 = arith.mulf %113, %113 : vector<8x32xf32>
    %cst_50 = arith.constant dense<0.000000e+00> : vector<8xf32>
    %115 = vector.multi_reduction <add>, %114, %cst_50 [1] : vector<8x32xf32> to vector<8xf32>
    %116 = vector.shape_cast %115 : vector<8xf32> to vector<8x1xf32>
    %cst_51 = arith.constant 3.200000e+01 : f32
    %117 = vector.broadcast %cst_51 : f32 to vector<8x1xf32>
    %118 = arith.divf %116, %117 : vector<8x1xf32>
    %119 = vector.broadcast %111 : vector<8x1xf32> to vector<8x32xf32>
    %120 = arith.subf %107, %119 : vector<8x32xf32>
    %cst_52 = arith.constant 9.99999974E-6 : f32
    %121 = vector.broadcast %cst_52 : f32 to vector<8x1xf32>
    %122 = arith.addf %118, %121 : vector<8x1xf32>
    %123 = math.rsqrt %122 : vector<8x1xf32>
    %124 = vector.broadcast %123 : vector<8x1xf32> to vector<8x32xf32>
    %125 = arith.mulf %120, %124 : vector<8x32xf32>
    %126 = vector.broadcast %18 : vector<1x32xf32> to vector<8x32xf32>
    %127 = arith.mulf %125, %126 : vector<8x32xf32>
    %128 = vector.broadcast %20 : vector<1x32xf32> to vector<8x32xf32>
    %129 = arith.addf %127, %128 : vector<8x32xf32>
    %c0_53 = arith.constant 0 : index
    %c0_54 = arith.constant 0 : index
    %c0_55 = arith.constant 0 : index
    %130 = vector.load %arg9[%c0_53, %c0_54, %c0_55] : memref<2x32x32xbf16, #tpu.memory_space<vmem>>, vector<1x32x32xbf16>
    %131 = vector.shape_cast %130 : vector<1x32x32xbf16> to vector<32x32xbf16>
    %c0_56 = arith.constant 0 : index
    %c0_57 = arith.constant 0 : index
    %c0_58 = arith.constant 0 : index
    %132 = vector.load %arg10[%c0_56, %c0_57, %c0_58] : memref<2x32x64xbf16, #tpu.memory_space<vmem>>, vector<1x32x64xbf16>
    %133 = vector.shape_cast %132 : vector<1x32x64xbf16> to vector<32x64xbf16>
    %c0_59 = arith.constant 0 : index
    %c0_60 = arith.constant 0 : index
    %c0_61 = arith.constant 0 : index
    %134 = vector.load %arg11[%c0_59, %c0_60, %c0_61] : memref<2x32x32xf32, #tpu.memory_space<vmem>>, vector<1x32x32xf32>
    %135 = vector.shape_cast %134 : vector<1x32x32xf32> to vector<32x32xf32>
    %c0_62 = arith.constant 0 : index
    %c0_63 = arith.constant 0 : index
    %c0_64 = arith.constant 0 : index
    %136 = vector.load %arg12[%c0_62, %c0_63, %c0_64] : memref<2x1x32xf32, #tpu.memory_space<vmem>>, vector<1x1x32xf32>
    %137 = vector.shape_cast %136 : vector<1x1x32xf32> to vector<1x32xf32>
    %c0_65 = arith.constant 0 : index
    %c0_66 = arith.constant 0 : index
    %c0_67 = arith.constant 0 : index
    %138 = vector.load %arg13[%c0_65, %c0_66, %c0_67] : memref<2x1x32xf32, #tpu.memory_space<vmem>>, vector<1x1x32xf32>
    %139 = vector.shape_cast %138 : vector<1x1x32xf32> to vector<1x32xf32>
    %c0_68 = arith.constant 0 : index
    %c0_69 = arith.constant 0 : index
    %c0_70 = arith.constant 0 : index
    %140 = vector.load %arg14[%c0_68, %c0_69, %c0_70] : memref<2x1x32xf32, #tpu.memory_space<vmem>>, vector<1x1x32xf32>
    %141 = vector.shape_cast %140 : vector<1x1x32xf32> to vector<1x32xf32>
    %c0_71 = arith.constant 0 : index
    %c0_72 = arith.constant 0 : index
    %c0_73 = arith.constant 0 : index
    %142 = vector.load %arg15[%c0_71, %c0_72, %c0_73] : memref<2x1x32xf32, #tpu.memory_space<vmem>>, vector<1x1x32xf32>
    %143 = vector.shape_cast %142 : vector<1x1x32xf32> to vector<1x32xf32>
    %c0_74 = arith.constant 0 : index
    %c0_75 = arith.constant 0 : index
    %c0_76 = arith.constant 0 : index
    %144 = vector.load %arg16[%c0_74, %c0_75, %c0_76] : memref<2x1x32xf32, #tpu.memory_space<vmem>>, vector<1x1x32xf32>
    %145 = vector.shape_cast %144 : vector<1x1x32xf32> to vector<1x32xf32>
    %c0_77 = arith.constant 0 : index
    %c0_78 = arith.constant 0 : index
    %c0_79 = arith.constant 0 : index
    %146 = vector.load %arg17[%c0_77, %c0_78, %c0_79] : memref<2x32x64xbf16, #tpu.memory_space<vmem>>, vector<1x32x64xbf16>
    %147 = vector.shape_cast %146 : vector<1x32x64xbf16> to vector<32x64xbf16>
    %c0_80 = arith.constant 0 : index
    %c0_81 = arith.constant 0 : index
    %c0_82 = arith.constant 0 : index
    %148 = vector.load %arg18[%c0_80, %c0_81, %c0_82] : memref<2x1x64xf32, #tpu.memory_space<vmem>>, vector<1x1x64xf32>
    %149 = vector.shape_cast %148 : vector<1x1x64xf32> to vector<1x64xf32>
    %c0_83 = arith.constant 0 : index
    %c0_84 = arith.constant 0 : index
    %c0_85 = arith.constant 0 : index
    %150 = vector.load %arg19[%c0_83, %c0_84, %c0_85] : memref<2x64x32xbf16, #tpu.memory_space<vmem>>, vector<1x64x32xbf16>
    %151 = vector.shape_cast %150 : vector<1x64x32xbf16> to vector<64x32xbf16>
    %c0_86 = arith.constant 0 : index
    %c0_87 = arith.constant 0 : index
    %c0_88 = arith.constant 0 : index
    %152 = vector.load %arg20[%c0_86, %c0_87, %c0_88] : memref<2x1x32xf32, #tpu.memory_space<vmem>>, vector<1x1x32xf32>
    %153 = vector.shape_cast %152 : vector<1x1x32xf32> to vector<1x32xf32>
    %154 = arith.truncf %129 : vector<8x32xf32> to vector<8x32xbf16>
    %cst_89 = arith.constant dense<0.000000e+00> : vector<8x32xf32>
    %155 = tpu.matmul %154, %131, %cst_89 {dimension_numbers = #tpu.dot_dimension_numbers<[1], [0], [0], [1], [0, 0, 1, 1], [], []>} : vector<8x32xbf16>, vector<32x32xbf16>, vector<8x32xf32> -> vector<8x32xf32>
    %156 = arith.truncf %3 : vector<8x32xf32> to vector<8x32xbf16>
    %cst_90 = arith.constant dense<0.000000e+00> : vector<8x64xf32>
    %157 = tpu.matmul %156, %133, %cst_90 {dimension_numbers = #tpu.dot_dimension_numbers<[1], [0], [0], [1], [0, 0, 1, 1], [], []>} : vector<8x32xbf16>, vector<32x64xbf16>, vector<8x64xf32> -> vector<8x64xf32>
    %158 = vector.extract_strided_slice %157 {offsets = [0, 0], sizes = [8, 32], strides = [1, 1]} : vector<8x64xf32> to vector<8x32xf32>
    %159 = vector.extract_strided_slice %157 {offsets = [0, 32], sizes = [8, 32], strides = [1, 1]} : vector<8x64xf32> to vector<8x32xf32>
    %160 = vector.extract_strided_slice %155 {offsets = [0, 0], sizes = [8, 8], strides = [1, 1]} : vector<8x32xf32> to vector<8x8xf32>
    %161 = vector.extract_strided_slice %158 {offsets = [0, 0], sizes = [8, 8], strides = [1, 1]} : vector<8x32xf32> to vector<8x8xf32>
    %cst_91 = arith.constant dense<0.000000e+00> : vector<8x8xf32>
    %162 = tpu.matmul %160, %161, %cst_91 {dimension_numbers = #tpu.dot_dimension_numbers<[1], [1], [0], [0], [0, 0, 1, 0], [], []>} : vector<8x8xf32>, vector<8x8xf32>, vector<8x8xf32> -> vector<8x8xf32>
    %cst_92 = arith.constant -1.000000e+20 : f32
    %163 = vector.shape_cast %7 : vector<1x8xi1> to vector<1x8xi1>
    %164 = vector.broadcast %163 : vector<1x8xi1> to vector<8x8xi1>
    %165 = vector.broadcast %cst_92 : f32 to vector<8x8xf32>
    %166 = arith.select %164, %162, %165 : vector<8x8xi1>, vector<8x8xf32>
    %cst_93 = arith.constant dense<0xFF800000> : vector<8xf32>
    %167 = vector.multi_reduction <maximumf>, %166, %cst_93 [1] : vector<8x8xf32> to vector<8xf32>
    %168 = vector.shape_cast %167 : vector<8xf32> to vector<8x1xf32>
    %169 = vector.broadcast %168 : vector<8x1xf32> to vector<8x8xf32>
    %170 = arith.subf %166, %169 : vector<8x8xf32>
    %171 = math.exp %170 : vector<8x8xf32>
    %cst_94 = arith.constant dense<0.000000e+00> : vector<8xf32>
    %172 = vector.multi_reduction <add>, %171, %cst_94 [1] : vector<8x8xf32> to vector<8xf32>
    %173 = vector.shape_cast %172 : vector<8xf32> to vector<8x1xf32>
    %174 = tpu.reciprocal %173 {approx = true} : vector<8x1xf32> -> vector<8x1xf32>
    %175 = vector.broadcast %174 : vector<8x1xf32> to vector<8x8xf32>
    %176 = arith.mulf %171, %175 : vector<8x8xf32>
    %177 = vector.extract_strided_slice %159 {offsets = [0, 0], sizes = [8, 8], strides = [1, 1]} : vector<8x32xf32> to vector<8x8xf32>
    %cst_95 = arith.constant dense<0.000000e+00> : vector<8x8xf32>
    %178 = tpu.matmul %176, %177, %cst_95 {dimension_numbers = #tpu.dot_dimension_numbers<[1], [0], [0], [1], [0, 0, 1, 1], [], []>} : vector<8x8xf32>, vector<8x8xf32>, vector<8x8xf32> -> vector<8x8xf32>
    %179 = vector.extract_strided_slice %135 {offsets = [0, 0], sizes = [8, 32], strides = [1, 1]} : vector<32x32xf32> to vector<8x32xf32>
    %cst_96 = arith.constant dense<0.000000e+00> : vector<8x32xf32>
    %180 = tpu.matmul %178, %179, %cst_96 {dimension_numbers = #tpu.dot_dimension_numbers<[1], [0], [0], [1], [0, 0, 1, 1], [], []>} : vector<8x8xf32>, vector<8x32xf32>, vector<8x32xf32> -> vector<8x32xf32>
    %181 = vector.broadcast %137 : vector<1x32xf32> to vector<8x32xf32>
    %182 = arith.addf %181, %180 : vector<8x32xf32>
    %183 = vector.extract_strided_slice %155 {offsets = [0, 8], sizes = [8, 8], strides = [1, 1]} : vector<8x32xf32> to vector<8x8xf32>
    %184 = vector.extract_strided_slice %158 {offsets = [0, 8], sizes = [8, 8], strides = [1, 1]} : vector<8x32xf32> to vector<8x8xf32>
    %cst_97 = arith.constant dense<0.000000e+00> : vector<8x8xf32>
    %185 = tpu.matmul %183, %184, %cst_97 {dimension_numbers = #tpu.dot_dimension_numbers<[1], [1], [0], [0], [0, 0, 1, 0], [], []>} : vector<8x8xf32>, vector<8x8xf32>, vector<8x8xf32> -> vector<8x8xf32>
    %cst_98 = arith.constant -1.000000e+20 : f32
    %186 = vector.shape_cast %7 : vector<1x8xi1> to vector<1x8xi1>
    %187 = vector.broadcast %186 : vector<1x8xi1> to vector<8x8xi1>
    %188 = vector.broadcast %cst_98 : f32 to vector<8x8xf32>
    %189 = arith.select %187, %185, %188 : vector<8x8xi1>, vector<8x8xf32>
    %cst_99 = arith.constant dense<0xFF800000> : vector<8xf32>
    %190 = vector.multi_reduction <maximumf>, %189, %cst_99 [1] : vector<8x8xf32> to vector<8xf32>
    %191 = vector.shape_cast %190 : vector<8xf32> to vector<8x1xf32>
    %192 = vector.broadcast %191 : vector<8x1xf32> to vector<8x8xf32>
    %193 = arith.subf %189, %192 : vector<8x8xf32>
    %194 = math.exp %193 : vector<8x8xf32>
    %cst_100 = arith.constant dense<0.000000e+00> : vector<8xf32>
    %195 = vector.multi_reduction <add>, %194, %cst_100 [1] : vector<8x8xf32> to vector<8xf32>
    %196 = vector.shape_cast %195 : vector<8xf32> to vector<8x1xf32>
    %197 = tpu.reciprocal %196 {approx = true} : vector<8x1xf32> -> vector<8x1xf32>
    %198 = vector.broadcast %197 : vector<8x1xf32> to vector<8x8xf32>
    %199 = arith.mulf %194, %198 : vector<8x8xf32>
    %200 = vector.extract_strided_slice %159 {offsets = [0, 8], sizes = [8, 8], strides = [1, 1]} : vector<8x32xf32> to vector<8x8xf32>
    %cst_101 = arith.constant dense<0.000000e+00> : vector<8x8xf32>
    %201 = tpu.matmul %199, %200, %cst_101 {dimension_numbers = #tpu.dot_dimension_numbers<[1], [0], [0], [1], [0, 0, 1, 1], [], []>} : vector<8x8xf32>, vector<8x8xf32>, vector<8x8xf32> -> vector<8x8xf32>
    %202 = vector.extract_strided_slice %135 {offsets = [8, 0], sizes = [8, 32], strides = [1, 1]} : vector<32x32xf32> to vector<8x32xf32>
    %cst_102 = arith.constant dense<0.000000e+00> : vector<8x32xf32>
    %203 = tpu.matmul %201, %202, %cst_102 {dimension_numbers = #tpu.dot_dimension_numbers<[1], [0], [0], [1], [0, 0, 1, 1], [], []>} : vector<8x8xf32>, vector<8x32xf32>, vector<8x32xf32> -> vector<8x32xf32>
    %204 = arith.addf %182, %203 : vector<8x32xf32>
    %205 = vector.extract_strided_slice %155 {offsets = [0, 16], sizes = [8, 8], strides = [1, 1]} : vector<8x32xf32> to vector<8x8xf32>
    %206 = vector.extract_strided_slice %158 {offsets = [0, 16], sizes = [8, 8], strides = [1, 1]} : vector<8x32xf32> to vector<8x8xf32>
    %cst_103 = arith.constant dense<0.000000e+00> : vector<8x8xf32>
    %207 = tpu.matmul %205, %206, %cst_103 {dimension_numbers = #tpu.dot_dimension_numbers<[1], [1], [0], [0], [0, 0, 1, 0], [], []>} : vector<8x8xf32>, vector<8x8xf32>, vector<8x8xf32> -> vector<8x8xf32>
    %cst_104 = arith.constant -1.000000e+20 : f32
    %208 = vector.shape_cast %7 : vector<1x8xi1> to vector<1x8xi1>
    %209 = vector.broadcast %208 : vector<1x8xi1> to vector<8x8xi1>
    %210 = vector.broadcast %cst_104 : f32 to vector<8x8xf32>
    %211 = arith.select %209, %207, %210 : vector<8x8xi1>, vector<8x8xf32>
    %cst_105 = arith.constant dense<0xFF800000> : vector<8xf32>
    %212 = vector.multi_reduction <maximumf>, %211, %cst_105 [1] : vector<8x8xf32> to vector<8xf32>
    %213 = vector.shape_cast %212 : vector<8xf32> to vector<8x1xf32>
    %214 = vector.broadcast %213 : vector<8x1xf32> to vector<8x8xf32>
    %215 = arith.subf %211, %214 : vector<8x8xf32>
    %216 = math.exp %215 : vector<8x8xf32>
    %cst_106 = arith.constant dense<0.000000e+00> : vector<8xf32>
    %217 = vector.multi_reduction <add>, %216, %cst_106 [1] : vector<8x8xf32> to vector<8xf32>
    %218 = vector.shape_cast %217 : vector<8xf32> to vector<8x1xf32>
    %219 = tpu.reciprocal %218 {approx = true} : vector<8x1xf32> -> vector<8x1xf32>
    %220 = vector.broadcast %219 : vector<8x1xf32> to vector<8x8xf32>
    %221 = arith.mulf %216, %220 : vector<8x8xf32>
    %222 = vector.extract_strided_slice %159 {offsets = [0, 16], sizes = [8, 8], strides = [1, 1]} : vector<8x32xf32> to vector<8x8xf32>
    %cst_107 = arith.constant dense<0.000000e+00> : vector<8x8xf32>
    %223 = tpu.matmul %221, %222, %cst_107 {dimension_numbers = #tpu.dot_dimension_numbers<[1], [0], [0], [1], [0, 0, 1, 1], [], []>} : vector<8x8xf32>, vector<8x8xf32>, vector<8x8xf32> -> vector<8x8xf32>
    %224 = vector.extract_strided_slice %135 {offsets = [16, 0], sizes = [8, 32], strides = [1, 1]} : vector<32x32xf32> to vector<8x32xf32>
    %cst_108 = arith.constant dense<0.000000e+00> : vector<8x32xf32>
    %225 = tpu.matmul %223, %224, %cst_108 {dimension_numbers = #tpu.dot_dimension_numbers<[1], [0], [0], [1], [0, 0, 1, 1], [], []>} : vector<8x8xf32>, vector<8x32xf32>, vector<8x32xf32> -> vector<8x32xf32>
    %226 = arith.addf %204, %225 : vector<8x32xf32>
    %227 = vector.extract_strided_slice %155 {offsets = [0, 24], sizes = [8, 8], strides = [1, 1]} : vector<8x32xf32> to vector<8x8xf32>
    %228 = vector.extract_strided_slice %158 {offsets = [0, 24], sizes = [8, 8], strides = [1, 1]} : vector<8x32xf32> to vector<8x8xf32>
    %cst_109 = arith.constant dense<0.000000e+00> : vector<8x8xf32>
    %229 = tpu.matmul %227, %228, %cst_109 {dimension_numbers = #tpu.dot_dimension_numbers<[1], [1], [0], [0], [0, 0, 1, 0], [], []>} : vector<8x8xf32>, vector<8x8xf32>, vector<8x8xf32> -> vector<8x8xf32>
    %cst_110 = arith.constant -1.000000e+20 : f32
    %230 = vector.shape_cast %7 : vector<1x8xi1> to vector<1x8xi1>
    %231 = vector.broadcast %230 : vector<1x8xi1> to vector<8x8xi1>
    %232 = vector.broadcast %cst_110 : f32 to vector<8x8xf32>
    %233 = arith.select %231, %229, %232 : vector<8x8xi1>, vector<8x8xf32>
    %cst_111 = arith.constant dense<0xFF800000> : vector<8xf32>
    %234 = vector.multi_reduction <maximumf>, %233, %cst_111 [1] : vector<8x8xf32> to vector<8xf32>
    %235 = vector.shape_cast %234 : vector<8xf32> to vector<8x1xf32>
    %236 = vector.broadcast %235 : vector<8x1xf32> to vector<8x8xf32>
    %237 = arith.subf %233, %236 : vector<8x8xf32>
    %238 = math.exp %237 : vector<8x8xf32>
    %cst_112 = arith.constant dense<0.000000e+00> : vector<8xf32>
    %239 = vector.multi_reduction <add>, %238, %cst_112 [1] : vector<8x8xf32> to vector<8xf32>
    %240 = vector.shape_cast %239 : vector<8xf32> to vector<8x1xf32>
    %241 = tpu.reciprocal %240 {approx = true} : vector<8x1xf32> -> vector<8x1xf32>
    %242 = vector.broadcast %241 : vector<8x1xf32> to vector<8x8xf32>
    %243 = arith.mulf %238, %242 : vector<8x8xf32>
    %244 = vector.extract_strided_slice %159 {offsets = [0, 24], sizes = [8, 8], strides = [1, 1]} : vector<8x32xf32> to vector<8x8xf32>
    %cst_113 = arith.constant dense<0.000000e+00> : vector<8x8xf32>
    %245 = tpu.matmul %243, %244, %cst_113 {dimension_numbers = #tpu.dot_dimension_numbers<[1], [0], [0], [1], [0, 0, 1, 1], [], []>} : vector<8x8xf32>, vector<8x8xf32>, vector<8x8xf32> -> vector<8x8xf32>
    %246 = vector.extract_strided_slice %135 {offsets = [24, 0], sizes = [8, 32], strides = [1, 1]} : vector<32x32xf32> to vector<8x32xf32>
    %cst_114 = arith.constant dense<0.000000e+00> : vector<8x32xf32>
    %247 = tpu.matmul %245, %246, %cst_114 {dimension_numbers = #tpu.dot_dimension_numbers<[1], [0], [0], [1], [0, 0, 1, 1], [], []>} : vector<8x8xf32>, vector<8x32xf32>, vector<8x32xf32> -> vector<8x32xf32>
    %248 = arith.addf %226, %247 : vector<8x32xf32>
    %249 = arith.addf %248, %129 : vector<8x32xf32>
    %cst_115 = arith.constant dense<0.000000e+00> : vector<8xf32>
    %250 = vector.multi_reduction <add>, %249, %cst_115 [1] : vector<8x32xf32> to vector<8xf32>
    %251 = vector.shape_cast %250 : vector<8xf32> to vector<8x1xf32>
    %cst_116 = arith.constant 3.200000e+01 : f32
    %252 = vector.broadcast %cst_116 : f32 to vector<8x1xf32>
    %253 = arith.divf %251, %252 : vector<8x1xf32>
    %254 = vector.broadcast %253 : vector<8x1xf32> to vector<8x32xf32>
    %255 = arith.subf %249, %254 : vector<8x32xf32>
    %256 = arith.mulf %255, %255 : vector<8x32xf32>
    %cst_117 = arith.constant dense<0.000000e+00> : vector<8xf32>
    %257 = vector.multi_reduction <add>, %256, %cst_117 [1] : vector<8x32xf32> to vector<8xf32>
    %258 = vector.shape_cast %257 : vector<8xf32> to vector<8x1xf32>
    %cst_118 = arith.constant 3.200000e+01 : f32
    %259 = vector.broadcast %cst_118 : f32 to vector<8x1xf32>
    %260 = arith.divf %258, %259 : vector<8x1xf32>
    %261 = vector.broadcast %253 : vector<8x1xf32> to vector<8x32xf32>
    %262 = arith.subf %249, %261 : vector<8x32xf32>
    %cst_119 = arith.constant 9.99999974E-6 : f32
    %263 = vector.broadcast %cst_119 : f32 to vector<8x1xf32>
    %264 = arith.addf %260, %263 : vector<8x1xf32>
    %265 = math.rsqrt %264 : vector<8x1xf32>
    %266 = vector.broadcast %265 : vector<8x1xf32> to vector<8x32xf32>
    %267 = arith.mulf %262, %266 : vector<8x32xf32>
    %268 = vector.broadcast %139 : vector<1x32xf32> to vector<8x32xf32>
    %269 = arith.mulf %267, %268 : vector<8x32xf32>
    %270 = vector.broadcast %141 : vector<1x32xf32> to vector<8x32xf32>
    %271 = arith.addf %269, %270 : vector<8x32xf32>
    %272 = arith.truncf %271 : vector<8x32xf32> to vector<8x32xbf16>
    %cst_120 = arith.constant dense<0.000000e+00> : vector<8x64xf32>
    %273 = tpu.matmul %272, %147, %cst_120 {dimension_numbers = #tpu.dot_dimension_numbers<[1], [0], [0], [1], [0, 0, 1, 1], [], []>} : vector<8x32xbf16>, vector<32x64xbf16>, vector<8x64xf32> -> vector<8x64xf32>
    %274 = vector.broadcast %149 : vector<1x64xf32> to vector<8x64xf32>
    %275 = arith.addf %273, %274 : vector<8x64xf32>
    %cst_121 = arith.constant 0.000000e+00 : f32
    %276 = vector.broadcast %cst_121 : f32 to vector<8x64xf32>
    %277 = arith.maximumf %275, %276 : vector<8x64xf32>
    %278 = arith.truncf %277 : vector<8x64xf32> to vector<8x64xbf16>
    %cst_122 = arith.constant dense<0.000000e+00> : vector<8x32xf32>
    %279 = tpu.matmul %278, %151, %cst_122 {dimension_numbers = #tpu.dot_dimension_numbers<[1], [0], [0], [1], [0, 0, 1, 1], [], []>} : vector<8x64xbf16>, vector<64x32xbf16>, vector<8x32xf32> -> vector<8x32xf32>
    %280 = vector.broadcast %153 : vector<1x32xf32> to vector<8x32xf32>
    %281 = arith.addf %279, %280 : vector<8x32xf32>
    %282 = arith.addf %281, %271 : vector<8x32xf32>
    %cst_123 = arith.constant dense<0.000000e+00> : vector<8xf32>
    %283 = vector.multi_reduction <add>, %282, %cst_123 [1] : vector<8x32xf32> to vector<8xf32>
    %284 = vector.shape_cast %283 : vector<8xf32> to vector<8x1xf32>
    %cst_124 = arith.constant 3.200000e+01 : f32
    %285 = vector.broadcast %cst_124 : f32 to vector<8x1xf32>
    %286 = arith.divf %284, %285 : vector<8x1xf32>
    %287 = vector.broadcast %286 : vector<8x1xf32> to vector<8x32xf32>
    %288 = arith.subf %282, %287 : vector<8x32xf32>
    %289 = arith.mulf %288, %288 : vector<8x32xf32>
    %cst_125 = arith.constant dense<0.000000e+00> : vector<8xf32>
    %290 = vector.multi_reduction <add>, %289, %cst_125 [1] : vector<8x32xf32> to vector<8xf32>
    %291 = vector.shape_cast %290 : vector<8xf32> to vector<8x1xf32>
    %cst_126 = arith.constant 3.200000e+01 : f32
    %292 = vector.broadcast %cst_126 : f32 to vector<8x1xf32>
    %293 = arith.divf %291, %292 : vector<8x1xf32>
    %294 = vector.broadcast %286 : vector<8x1xf32> to vector<8x32xf32>
    %295 = arith.subf %282, %294 : vector<8x32xf32>
    %cst_127 = arith.constant 9.99999974E-6 : f32
    %296 = vector.broadcast %cst_127 : f32 to vector<8x1xf32>
    %297 = arith.addf %293, %296 : vector<8x1xf32>
    %298 = math.rsqrt %297 : vector<8x1xf32>
    %299 = vector.broadcast %298 : vector<8x1xf32> to vector<8x32xf32>
    %300 = arith.mulf %295, %299 : vector<8x32xf32>
    %301 = vector.broadcast %143 : vector<1x32xf32> to vector<8x32xf32>
    %302 = arith.mulf %300, %301 : vector<8x32xf32>
    %303 = vector.broadcast %145 : vector<1x32xf32> to vector<8x32xf32>
    %304 = arith.addf %302, %303 : vector<8x32xf32>
    %c1 = arith.constant 1 : index
    %c0_128 = arith.constant 0 : index
    %c0_129 = arith.constant 0 : index
    %305 = vector.load %arg4[%c1, %c0_128, %c0_129] : memref<2x32x96xbf16, #tpu.memory_space<vmem>>, vector<1x32x96xbf16>
    %306 = vector.shape_cast %305 : vector<1x32x96xbf16> to vector<32x96xbf16>
    %c1_130 = arith.constant 1 : index
    %c0_131 = arith.constant 0 : index
    %c0_132 = arith.constant 0 : index
    %307 = vector.load %arg5[%c1_130, %c0_131, %c0_132] : memref<2x32x32xf32, #tpu.memory_space<vmem>>, vector<1x32x32xf32>
    %308 = vector.shape_cast %307 : vector<1x32x32xf32> to vector<32x32xf32>
    %c1_133 = arith.constant 1 : index
    %c0_134 = arith.constant 0 : index
    %c0_135 = arith.constant 0 : index
    %309 = vector.load %arg6[%c1_133, %c0_134, %c0_135] : memref<2x1x32xf32, #tpu.memory_space<vmem>>, vector<1x1x32xf32>
    %310 = vector.shape_cast %309 : vector<1x1x32xf32> to vector<1x32xf32>
    %c1_136 = arith.constant 1 : index
    %c0_137 = arith.constant 0 : index
    %c0_138 = arith.constant 0 : index
    %311 = vector.load %arg7[%c1_136, %c0_137, %c0_138] : memref<2x1x32xf32, #tpu.memory_space<vmem>>, vector<1x1x32xf32>
    %312 = vector.shape_cast %311 : vector<1x1x32xf32> to vector<1x32xf32>
    %c1_139 = arith.constant 1 : index
    %c0_140 = arith.constant 0 : index
    %c0_141 = arith.constant 0 : index
    %313 = vector.load %arg8[%c1_139, %c0_140, %c0_141] : memref<2x1x32xf32, #tpu.memory_space<vmem>>, vector<1x1x32xf32>
    %314 = vector.shape_cast %313 : vector<1x1x32xf32> to vector<1x32xf32>
    %315 = arith.truncf %304 : vector<8x32xf32> to vector<8x32xbf16>
    %cst_142 = arith.constant dense<0.000000e+00> : vector<8x96xf32>
    %316 = tpu.matmul %315, %306, %cst_142 {dimension_numbers = #tpu.dot_dimension_numbers<[1], [0], [0], [1], [0, 0, 1, 1], [], []>} : vector<8x32xbf16>, vector<32x96xbf16>, vector<8x96xf32> -> vector<8x96xf32>
    %317 = vector.extract_strided_slice %316 {offsets = [0, 0], sizes = [8, 32], strides = [1, 1]} : vector<8x96xf32> to vector<8x32xf32>
    %318 = vector.extract_strided_slice %316 {offsets = [0, 32], sizes = [8, 32], strides = [1, 1]} : vector<8x96xf32> to vector<8x32xf32>
    %319 = vector.extract_strided_slice %316 {offsets = [0, 64], sizes = [8, 32], strides = [1, 1]} : vector<8x96xf32> to vector<8x32xf32>
    %320 = vector.extract_strided_slice %317 {offsets = [0, 0], sizes = [8, 8], strides = [1, 1]} : vector<8x32xf32> to vector<8x8xf32>
    %321 = vector.extract_strided_slice %318 {offsets = [0, 0], sizes = [8, 8], strides = [1, 1]} : vector<8x32xf32> to vector<8x8xf32>
    %cst_143 = arith.constant dense<0.000000e+00> : vector<8x8xf32>
    %322 = tpu.matmul %320, %321, %cst_143 {dimension_numbers = #tpu.dot_dimension_numbers<[1], [1], [0], [0], [0, 0, 1, 0], [], []>} : vector<8x8xf32>, vector<8x8xf32>, vector<8x8xf32> -> vector<8x8xf32>
    %cst_144 = arith.constant -1.000000e+20 : f32
    %323 = vector.broadcast %cst_144 : f32 to vector<8x8xf32>
    %324 = arith.select %10, %322, %323 : vector<8x8xi1>, vector<8x8xf32>
    %cst_145 = arith.constant dense<0xFF800000> : vector<8xf32>
    %325 = vector.multi_reduction <maximumf>, %324, %cst_145 [1] : vector<8x8xf32> to vector<8xf32>
    %326 = vector.shape_cast %325 : vector<8xf32> to vector<8x1xf32>
    %327 = vector.broadcast %326 : vector<8x1xf32> to vector<8x8xf32>
    %328 = arith.subf %324, %327 : vector<8x8xf32>
    %329 = math.exp %328 : vector<8x8xf32>
    %cst_146 = arith.constant dense<0.000000e+00> : vector<8xf32>
    %330 = vector.multi_reduction <add>, %329, %cst_146 [1] : vector<8x8xf32> to vector<8xf32>
    %331 = vector.shape_cast %330 : vector<8xf32> to vector<8x1xf32>
    %332 = tpu.reciprocal %331 {approx = true} : vector<8x1xf32> -> vector<8x1xf32>
    %333 = vector.broadcast %332 : vector<8x1xf32> to vector<8x8xf32>
    %334 = arith.mulf %329, %333 : vector<8x8xf32>
    %335 = vector.extract_strided_slice %319 {offsets = [0, 0], sizes = [8, 8], strides = [1, 1]} : vector<8x32xf32> to vector<8x8xf32>
    %cst_147 = arith.constant dense<0.000000e+00> : vector<8x8xf32>
    %336 = tpu.matmul %334, %335, %cst_147 {dimension_numbers = #tpu.dot_dimension_numbers<[1], [0], [0], [1], [0, 0, 1, 1], [], []>} : vector<8x8xf32>, vector<8x8xf32>, vector<8x8xf32> -> vector<8x8xf32>
    %337 = vector.extract_strided_slice %308 {offsets = [0, 0], sizes = [8, 32], strides = [1, 1]} : vector<32x32xf32> to vector<8x32xf32>
    %cst_148 = arith.constant dense<0.000000e+00> : vector<8x32xf32>
    %338 = tpu.matmul %336, %337, %cst_148 {dimension_numbers = #tpu.dot_dimension_numbers<[1], [0], [0], [1], [0, 0, 1, 1], [], []>} : vector<8x8xf32>, vector<8x32xf32>, vector<8x32xf32> -> vector<8x32xf32>
    %339 = vector.broadcast %310 : vector<1x32xf32> to vector<8x32xf32>
    %340 = arith.addf %339, %338 : vector<8x32xf32>
    %341 = vector.extract_strided_slice %317 {offsets = [0, 8], sizes = [8, 8], strides = [1, 1]} : vector<8x32xf32> to vector<8x8xf32>
    %342 = vector.extract_strided_slice %318 {offsets = [0, 8], sizes = [8, 8], strides = [1, 1]} : vector<8x32xf32> to vector<8x8xf32>
    %cst_149 = arith.constant dense<0.000000e+00> : vector<8x8xf32>
    %343 = tpu.matmul %341, %342, %cst_149 {dimension_numbers = #tpu.dot_dimension_numbers<[1], [1], [0], [0], [0, 0, 1, 0], [], []>} : vector<8x8xf32>, vector<8x8xf32>, vector<8x8xf32> -> vector<8x8xf32>
    %cst_150 = arith.constant -1.000000e+20 : f32
    %344 = vector.broadcast %cst_150 : f32 to vector<8x8xf32>
    %345 = arith.select %10, %343, %344 : vector<8x8xi1>, vector<8x8xf32>
    %cst_151 = arith.constant dense<0xFF800000> : vector<8xf32>
    %346 = vector.multi_reduction <maximumf>, %345, %cst_151 [1] : vector<8x8xf32> to vector<8xf32>
    %347 = vector.shape_cast %346 : vector<8xf32> to vector<8x1xf32>
    %348 = vector.broadcast %347 : vector<8x1xf32> to vector<8x8xf32>
    %349 = arith.subf %345, %348 : vector<8x8xf32>
    %350 = math.exp %349 : vector<8x8xf32>
    %cst_152 = arith.constant dense<0.000000e+00> : vector<8xf32>
    %351 = vector.multi_reduction <add>, %350, %cst_152 [1] : vector<8x8xf32> to vector<8xf32>
    %352 = vector.shape_cast %351 : vector<8xf32> to vector<8x1xf32>
    %353 = tpu.reciprocal %352 {approx = true} : vector<8x1xf32> -> vector<8x1xf32>
    %354 = vector.broadcast %353 : vector<8x1xf32> to vector<8x8xf32>
    %355 = arith.mulf %350, %354 : vector<8x8xf32>
    %356 = vector.extract_strided_slice %319 {offsets = [0, 8], sizes = [8, 8], strides = [1, 1]} : vector<8x32xf32> to vector<8x8xf32>
    %cst_153 = arith.constant dense<0.000000e+00> : vector<8x8xf32>
    %357 = tpu.matmul %355, %356, %cst_153 {dimension_numbers = #tpu.dot_dimension_numbers<[1], [0], [0], [1], [0, 0, 1, 1], [], []>} : vector<8x8xf32>, vector<8x8xf32>, vector<8x8xf32> -> vector<8x8xf32>
    %358 = vector.extract_strided_slice %308 {offsets = [8, 0], sizes = [8, 32], strides = [1, 1]} : vector<32x32xf32> to vector<8x32xf32>
    %cst_154 = arith.constant dense<0.000000e+00> : vector<8x32xf32>
    %359 = tpu.matmul %357, %358, %cst_154 {dimension_numbers = #tpu.dot_dimension_numbers<[1], [0], [0], [1], [0, 0, 1, 1], [], []>} : vector<8x8xf32>, vector<8x32xf32>, vector<8x32xf32> -> vector<8x32xf32>
    %360 = arith.addf %340, %359 : vector<8x32xf32>
    %361 = vector.extract_strided_slice %317 {offsets = [0, 16], sizes = [8, 8], strides = [1, 1]} : vector<8x32xf32> to vector<8x8xf32>
    %362 = vector.extract_strided_slice %318 {offsets = [0, 16], sizes = [8, 8], strides = [1, 1]} : vector<8x32xf32> to vector<8x8xf32>
    %cst_155 = arith.constant dense<0.000000e+00> : vector<8x8xf32>
    %363 = tpu.matmul %361, %362, %cst_155 {dimension_numbers = #tpu.dot_dimension_numbers<[1], [1], [0], [0], [0, 0, 1, 0], [], []>} : vector<8x8xf32>, vector<8x8xf32>, vector<8x8xf32> -> vector<8x8xf32>
    %cst_156 = arith.constant -1.000000e+20 : f32
    %364 = vector.broadcast %cst_156 : f32 to vector<8x8xf32>
    %365 = arith.select %10, %363, %364 : vector<8x8xi1>, vector<8x8xf32>
    %cst_157 = arith.constant dense<0xFF800000> : vector<8xf32>
    %366 = vector.multi_reduction <maximumf>, %365, %cst_157 [1] : vector<8x8xf32> to vector<8xf32>
    %367 = vector.shape_cast %366 : vector<8xf32> to vector<8x1xf32>
    %368 = vector.broadcast %367 : vector<8x1xf32> to vector<8x8xf32>
    %369 = arith.subf %365, %368 : vector<8x8xf32>
    %370 = math.exp %369 : vector<8x8xf32>
    %cst_158 = arith.constant dense<0.000000e+00> : vector<8xf32>
    %371 = vector.multi_reduction <add>, %370, %cst_158 [1] : vector<8x8xf32> to vector<8xf32>
    %372 = vector.shape_cast %371 : vector<8xf32> to vector<8x1xf32>
    %373 = tpu.reciprocal %372 {approx = true} : vector<8x1xf32> -> vector<8x1xf32>
    %374 = vector.broadcast %373 : vector<8x1xf32> to vector<8x8xf32>
    %375 = arith.mulf %370, %374 : vector<8x8xf32>
    %376 = vector.extract_strided_slice %319 {offsets = [0, 16], sizes = [8, 8], strides = [1, 1]} : vector<8x32xf32> to vector<8x8xf32>
    %cst_159 = arith.constant dense<0.000000e+00> : vector<8x8xf32>
    %377 = tpu.matmul %375, %376, %cst_159 {dimension_numbers = #tpu.dot_dimension_numbers<[1], [0], [0], [1], [0, 0, 1, 1], [], []>} : vector<8x8xf32>, vector<8x8xf32>, vector<8x8xf32> -> vector<8x8xf32>
    %378 = vector.extract_strided_slice %308 {offsets = [16, 0], sizes = [8, 32], strides = [1, 1]} : vector<32x32xf32> to vector<8x32xf32>
    %cst_160 = arith.constant dense<0.000000e+00> : vector<8x32xf32>
    %379 = tpu.matmul %377, %378, %cst_160 {dimension_numbers = #tpu.dot_dimension_numbers<[1], [0], [0], [1], [0, 0, 1, 1], [], []>} : vector<8x8xf32>, vector<8x32xf32>, vector<8x32xf32> -> vector<8x32xf32>
    %380 = arith.addf %360, %379 : vector<8x32xf32>
    %381 = vector.extract_strided_slice %317 {offsets = [0, 24], sizes = [8, 8], strides = [1, 1]} : vector<8x32xf32> to vector<8x8xf32>
    %382 = vector.extract_strided_slice %318 {offsets = [0, 24], sizes = [8, 8], strides = [1, 1]} : vector<8x32xf32> to vector<8x8xf32>
    %cst_161 = arith.constant dense<0.000000e+00> : vector<8x8xf32>
    %383 = tpu.matmul %381, %382, %cst_161 {dimension_numbers = #tpu.dot_dimension_numbers<[1], [1], [0], [0], [0, 0, 1, 0], [], []>} : vector<8x8xf32>, vector<8x8xf32>, vector<8x8xf32> -> vector<8x8xf32>
    %cst_162 = arith.constant -1.000000e+20 : f32
    %384 = vector.broadcast %cst_162 : f32 to vector<8x8xf32>
    %385 = arith.select %10, %383, %384 : vector<8x8xi1>, vector<8x8xf32>
    %cst_163 = arith.constant dense<0xFF800000> : vector<8xf32>
    %386 = vector.multi_reduction <maximumf>, %385, %cst_163 [1] : vector<8x8xf32> to vector<8xf32>
    %387 = vector.shape_cast %386 : vector<8xf32> to vector<8x1xf32>
    %388 = vector.broadcast %387 : vector<8x1xf32> to vector<8x8xf32>
    %389 = arith.subf %385, %388 : vector<8x8xf32>
    %390 = math.exp %389 : vector<8x8xf32>
    %cst_164 = arith.constant dense<0.000000e+00> : vector<8xf32>
    %391 = vector.multi_reduction <add>, %390, %cst_164 [1] : vector<8x8xf32> to vector<8xf32>
    %392 = vector.shape_cast %391 : vector<8xf32> to vector<8x1xf32>
    %393 = tpu.reciprocal %392 {approx = true} : vector<8x1xf32> -> vector<8x1xf32>
    %394 = vector.broadcast %393 : vector<8x1xf32> to vector<8x8xf32>
    %395 = arith.mulf %390, %394 : vector<8x8xf32>
    %396 = vector.extract_strided_slice %319 {offsets = [0, 24], sizes = [8, 8], strides = [1, 1]} : vector<8x32xf32> to vector<8x8xf32>
    %cst_165 = arith.constant dense<0.000000e+00> : vector<8x8xf32>
    %397 = tpu.matmul %395, %396, %cst_165 {dimension_numbers = #tpu.dot_dimension_numbers<[1], [0], [0], [1], [0, 0, 1, 1], [], []>} : vector<8x8xf32>, vector<8x8xf32>, vector<8x8xf32> -> vector<8x8xf32>
    %398 = vector.extract_strided_slice %308 {offsets = [24, 0], sizes = [8, 32], strides = [1, 1]} : vector<32x32xf32> to vector<8x32xf32>
    %cst_166 = arith.constant dense<0.000000e+00> : vector<8x32xf32>
    %399 = tpu.matmul %397, %398, %cst_166 {dimension_numbers = #tpu.dot_dimension_numbers<[1], [0], [0], [1], [0, 0, 1, 1], [], []>} : vector<8x8xf32>, vector<8x32xf32>, vector<8x32xf32> -> vector<8x32xf32>
    %400 = arith.addf %380, %399 : vector<8x32xf32>
    %401 = arith.addf %400, %304 : vector<8x32xf32>
    %cst_167 = arith.constant dense<0.000000e+00> : vector<8xf32>
    %402 = vector.multi_reduction <add>, %401, %cst_167 [1] : vector<8x32xf32> to vector<8xf32>
    %403 = vector.shape_cast %402 : vector<8xf32> to vector<8x1xf32>
    %cst_168 = arith.constant 3.200000e+01 : f32
    %404 = vector.broadcast %cst_168 : f32 to vector<8x1xf32>
    %405 = arith.divf %403, %404 : vector<8x1xf32>
    %406 = vector.broadcast %405 : vector<8x1xf32> to vector<8x32xf32>
    %407 = arith.subf %401, %406 : vector<8x32xf32>
    %408 = arith.mulf %407, %407 : vector<8x32xf32>
    %cst_169 = arith.constant dense<0.000000e+00> : vector<8xf32>
    %409 = vector.multi_reduction <add>, %408, %cst_169 [1] : vector<8x32xf32> to vector<8xf32>
    %410 = vector.shape_cast %409 : vector<8xf32> to vector<8x1xf32>
    %cst_170 = arith.constant 3.200000e+01 : f32
    %411 = vector.broadcast %cst_170 : f32 to vector<8x1xf32>
    %412 = arith.divf %410, %411 : vector<8x1xf32>
    %413 = vector.broadcast %405 : vector<8x1xf32> to vector<8x32xf32>
    %414 = arith.subf %401, %413 : vector<8x32xf32>
    %cst_171 = arith.constant 9.99999974E-6 : f32
    %415 = vector.broadcast %cst_171 : f32 to vector<8x1xf32>
    %416 = arith.addf %412, %415 : vector<8x1xf32>
    %417 = math.rsqrt %416 : vector<8x1xf32>
    %418 = vector.broadcast %417 : vector<8x1xf32> to vector<8x32xf32>
    %419 = arith.mulf %414, %418 : vector<8x32xf32>
    %420 = vector.broadcast %312 : vector<1x32xf32> to vector<8x32xf32>
    %421 = arith.mulf %419, %420 : vector<8x32xf32>
    %422 = vector.broadcast %314 : vector<1x32xf32> to vector<8x32xf32>
    %423 = arith.addf %421, %422 : vector<8x32xf32>
    %c1_172 = arith.constant 1 : index
    %c0_173 = arith.constant 0 : index
    %c0_174 = arith.constant 0 : index
    %424 = vector.load %arg9[%c1_172, %c0_173, %c0_174] : memref<2x32x32xbf16, #tpu.memory_space<vmem>>, vector<1x32x32xbf16>
    %425 = vector.shape_cast %424 : vector<1x32x32xbf16> to vector<32x32xbf16>
    %c1_175 = arith.constant 1 : index
    %c0_176 = arith.constant 0 : index
    %c0_177 = arith.constant 0 : index
    %426 = vector.load %arg10[%c1_175, %c0_176, %c0_177] : memref<2x32x64xbf16, #tpu.memory_space<vmem>>, vector<1x32x64xbf16>
    %427 = vector.shape_cast %426 : vector<1x32x64xbf16> to vector<32x64xbf16>
    %c1_178 = arith.constant 1 : index
    %c0_179 = arith.constant 0 : index
    %c0_180 = arith.constant 0 : index
    %428 = vector.load %arg11[%c1_178, %c0_179, %c0_180] : memref<2x32x32xf32, #tpu.memory_space<vmem>>, vector<1x32x32xf32>
    %429 = vector.shape_cast %428 : vector<1x32x32xf32> to vector<32x32xf32>
    %c1_181 = arith.constant 1 : index
    %c0_182 = arith.constant 0 : index
    %c0_183 = arith.constant 0 : index
    %430 = vector.load %arg12[%c1_181, %c0_182, %c0_183] : memref<2x1x32xf32, #tpu.memory_space<vmem>>, vector<1x1x32xf32>
    %431 = vector.shape_cast %430 : vector<1x1x32xf32> to vector<1x32xf32>
    %c1_184 = arith.constant 1 : index
    %c0_185 = arith.constant 0 : index
    %c0_186 = arith.constant 0 : index
    %432 = vector.load %arg13[%c1_184, %c0_185, %c0_186] : memref<2x1x32xf32, #tpu.memory_space<vmem>>, vector<1x1x32xf32>
    %433 = vector.shape_cast %432 : vector<1x1x32xf32> to vector<1x32xf32>
    %c1_187 = arith.constant 1 : index
    %c0_188 = arith.constant 0 : index
    %c0_189 = arith.constant 0 : index
    %434 = vector.load %arg14[%c1_187, %c0_188, %c0_189] : memref<2x1x32xf32, #tpu.memory_space<vmem>>, vector<1x1x32xf32>
    %435 = vector.shape_cast %434 : vector<1x1x32xf32> to vector<1x32xf32>
    %c1_190 = arith.constant 1 : index
    %c0_191 = arith.constant 0 : index
    %c0_192 = arith.constant 0 : index
    %436 = vector.load %arg15[%c1_190, %c0_191, %c0_192] : memref<2x1x32xf32, #tpu.memory_space<vmem>>, vector<1x1x32xf32>
    %437 = vector.shape_cast %436 : vector<1x1x32xf32> to vector<1x32xf32>
    %c1_193 = arith.constant 1 : index
    %c0_194 = arith.constant 0 : index
    %c0_195 = arith.constant 0 : index
    %438 = vector.load %arg16[%c1_193, %c0_194, %c0_195] : memref<2x1x32xf32, #tpu.memory_space<vmem>>, vector<1x1x32xf32>
    %439 = vector.shape_cast %438 : vector<1x1x32xf32> to vector<1x32xf32>
    %c1_196 = arith.constant 1 : index
    %c0_197 = arith.constant 0 : index
    %c0_198 = arith.constant 0 : index
    %440 = vector.load %arg17[%c1_196, %c0_197, %c0_198] : memref<2x32x64xbf16, #tpu.memory_space<vmem>>, vector<1x32x64xbf16>
    %441 = vector.shape_cast %440 : vector<1x32x64xbf16> to vector<32x64xbf16>
    %c1_199 = arith.constant 1 : index
    %c0_200 = arith.constant 0 : index
    %c0_201 = arith.constant 0 : index
    %442 = vector.load %arg18[%c1_199, %c0_200, %c0_201] : memref<2x1x64xf32, #tpu.memory_space<vmem>>, vector<1x1x64xf32>
    %443 = vector.shape_cast %442 : vector<1x1x64xf32> to vector<1x64xf32>
    %c1_202 = arith.constant 1 : index
    %c0_203 = arith.constant 0 : index
    %c0_204 = arith.constant 0 : index
    %444 = vector.load %arg19[%c1_202, %c0_203, %c0_204] : memref<2x64x32xbf16, #tpu.memory_space<vmem>>, vector<1x64x32xbf16>
    %445 = vector.shape_cast %444 : vector<1x64x32xbf16> to vector<64x32xbf16>
    %c1_205 = arith.constant 1 : index
    %c0_206 = arith.constant 0 : index
    %c0_207 = arith.constant 0 : index
    %446 = vector.load %arg20[%c1_205, %c0_206, %c0_207] : memref<2x1x32xf32, #tpu.memory_space<vmem>>, vector<1x1x32xf32>
    %447 = vector.shape_cast %446 : vector<1x1x32xf32> to vector<1x32xf32>
    %448 = arith.truncf %423 : vector<8x32xf32> to vector<8x32xbf16>
    %cst_208 = arith.constant dense<0.000000e+00> : vector<8x32xf32>
    %449 = tpu.matmul %448, %425, %cst_208 {dimension_numbers = #tpu.dot_dimension_numbers<[1], [0], [0], [1], [0, 0, 1, 1], [], []>} : vector<8x32xbf16>, vector<32x32xbf16>, vector<8x32xf32> -> vector<8x32xf32>
    %450 = arith.truncf %3 : vector<8x32xf32> to vector<8x32xbf16>
    %cst_209 = arith.constant dense<0.000000e+00> : vector<8x64xf32>
    %451 = tpu.matmul %450, %427, %cst_209 {dimension_numbers = #tpu.dot_dimension_numbers<[1], [0], [0], [1], [0, 0, 1, 1], [], []>} : vector<8x32xbf16>, vector<32x64xbf16>, vector<8x64xf32> -> vector<8x64xf32>
    %452 = vector.extract_strided_slice %451 {offsets = [0, 0], sizes = [8, 32], strides = [1, 1]} : vector<8x64xf32> to vector<8x32xf32>
    %453 = vector.extract_strided_slice %451 {offsets = [0, 32], sizes = [8, 32], strides = [1, 1]} : vector<8x64xf32> to vector<8x32xf32>
    %454 = vector.extract_strided_slice %449 {offsets = [0, 0], sizes = [8, 8], strides = [1, 1]} : vector<8x32xf32> to vector<8x8xf32>
    %455 = vector.extract_strided_slice %452 {offsets = [0, 0], sizes = [8, 8], strides = [1, 1]} : vector<8x32xf32> to vector<8x8xf32>
    %cst_210 = arith.constant dense<0.000000e+00> : vector<8x8xf32>
    %456 = tpu.matmul %454, %455, %cst_210 {dimension_numbers = #tpu.dot_dimension_numbers<[1], [1], [0], [0], [0, 0, 1, 0], [], []>} : vector<8x8xf32>, vector<8x8xf32>, vector<8x8xf32> -> vector<8x8xf32>
    %cst_211 = arith.constant -1.000000e+20 : f32
    %457 = vector.shape_cast %7 : vector<1x8xi1> to vector<1x8xi1>
    %458 = vector.broadcast %457 : vector<1x8xi1> to vector<8x8xi1>
    %459 = vector.broadcast %cst_211 : f32 to vector<8x8xf32>
    %460 = arith.select %458, %456, %459 : vector<8x8xi1>, vector<8x8xf32>
    %cst_212 = arith.constant dense<0xFF800000> : vector<8xf32>
    %461 = vector.multi_reduction <maximumf>, %460, %cst_212 [1] : vector<8x8xf32> to vector<8xf32>
    %462 = vector.shape_cast %461 : vector<8xf32> to vector<8x1xf32>
    %463 = vector.broadcast %462 : vector<8x1xf32> to vector<8x8xf32>
    %464 = arith.subf %460, %463 : vector<8x8xf32>
    %465 = math.exp %464 : vector<8x8xf32>
    %cst_213 = arith.constant dense<0.000000e+00> : vector<8xf32>
    %466 = vector.multi_reduction <add>, %465, %cst_213 [1] : vector<8x8xf32> to vector<8xf32>
    %467 = vector.shape_cast %466 : vector<8xf32> to vector<8x1xf32>
    %468 = tpu.reciprocal %467 {approx = true} : vector<8x1xf32> -> vector<8x1xf32>
    %469 = vector.broadcast %468 : vector<8x1xf32> to vector<8x8xf32>
    %470 = arith.mulf %465, %469 : vector<8x8xf32>
    %471 = vector.extract_strided_slice %453 {offsets = [0, 0], sizes = [8, 8], strides = [1, 1]} : vector<8x32xf32> to vector<8x8xf32>
    %cst_214 = arith.constant dense<0.000000e+00> : vector<8x8xf32>
    %472 = tpu.matmul %470, %471, %cst_214 {dimension_numbers = #tpu.dot_dimension_numbers<[1], [0], [0], [1], [0, 0, 1, 1], [], []>} : vector<8x8xf32>, vector<8x8xf32>, vector<8x8xf32> -> vector<8x8xf32>
    %473 = vector.extract_strided_slice %429 {offsets = [0, 0], sizes = [8, 32], strides = [1, 1]} : vector<32x32xf32> to vector<8x32xf32>
    %cst_215 = arith.constant dense<0.000000e+00> : vector<8x32xf32>
    %474 = tpu.matmul %472, %473, %cst_215 {dimension_numbers = #tpu.dot_dimension_numbers<[1], [0], [0], [1], [0, 0, 1, 1], [], []>} : vector<8x8xf32>, vector<8x32xf32>, vector<8x32xf32> -> vector<8x32xf32>
    %475 = vector.broadcast %431 : vector<1x32xf32> to vector<8x32xf32>
    %476 = arith.addf %475, %474 : vector<8x32xf32>
    %477 = vector.extract_strided_slice %449 {offsets = [0, 8], sizes = [8, 8], strides = [1, 1]} : vector<8x32xf32> to vector<8x8xf32>
    %478 = vector.extract_strided_slice %452 {offsets = [0, 8], sizes = [8, 8], strides = [1, 1]} : vector<8x32xf32> to vector<8x8xf32>
    %cst_216 = arith.constant dense<0.000000e+00> : vector<8x8xf32>
    %479 = tpu.matmul %477, %478, %cst_216 {dimension_numbers = #tpu.dot_dimension_numbers<[1], [1], [0], [0], [0, 0, 1, 0], [], []>} : vector<8x8xf32>, vector<8x8xf32>, vector<8x8xf32> -> vector<8x8xf32>
    %cst_217 = arith.constant -1.000000e+20 : f32
    %480 = vector.shape_cast %7 : vector<1x8xi1> to vector<1x8xi1>
    %481 = vector.broadcast %480 : vector<1x8xi1> to vector<8x8xi1>
    %482 = vector.broadcast %cst_217 : f32 to vector<8x8xf32>
    %483 = arith.select %481, %479, %482 : vector<8x8xi1>, vector<8x8xf32>
    %cst_218 = arith.constant dense<0xFF800000> : vector<8xf32>
    %484 = vector.multi_reduction <maximumf>, %483, %cst_218 [1] : vector<8x8xf32> to vector<8xf32>
    %485 = vector.shape_cast %484 : vector<8xf32> to vector<8x1xf32>
    %486 = vector.broadcast %485 : vector<8x1xf32> to vector<8x8xf32>
    %487 = arith.subf %483, %486 : vector<8x8xf32>
    %488 = math.exp %487 : vector<8x8xf32>
    %cst_219 = arith.constant dense<0.000000e+00> : vector<8xf32>
    %489 = vector.multi_reduction <add>, %488, %cst_219 [1] : vector<8x8xf32> to vector<8xf32>
    %490 = vector.shape_cast %489 : vector<8xf32> to vector<8x1xf32>
    %491 = tpu.reciprocal %490 {approx = true} : vector<8x1xf32> -> vector<8x1xf32>
    %492 = vector.broadcast %491 : vector<8x1xf32> to vector<8x8xf32>
    %493 = arith.mulf %488, %492 : vector<8x8xf32>
    %494 = vector.extract_strided_slice %453 {offsets = [0, 8], sizes = [8, 8], strides = [1, 1]} : vector<8x32xf32> to vector<8x8xf32>
    %cst_220 = arith.constant dense<0.000000e+00> : vector<8x8xf32>
    %495 = tpu.matmul %493, %494, %cst_220 {dimension_numbers = #tpu.dot_dimension_numbers<[1], [0], [0], [1], [0, 0, 1, 1], [], []>} : vector<8x8xf32>, vector<8x8xf32>, vector<8x8xf32> -> vector<8x8xf32>
    %496 = vector.extract_strided_slice %429 {offsets = [8, 0], sizes = [8, 32], strides = [1, 1]} : vector<32x32xf32> to vector<8x32xf32>
    %cst_221 = arith.constant dense<0.000000e+00> : vector<8x32xf32>
    %497 = tpu.matmul %495, %496, %cst_221 {dimension_numbers = #tpu.dot_dimension_numbers<[1], [0], [0], [1], [0, 0, 1, 1], [], []>} : vector<8x8xf32>, vector<8x32xf32>, vector<8x32xf32> -> vector<8x32xf32>
    %498 = arith.addf %476, %497 : vector<8x32xf32>
    %499 = vector.extract_strided_slice %449 {offsets = [0, 16], sizes = [8, 8], strides = [1, 1]} : vector<8x32xf32> to vector<8x8xf32>
    %500 = vector.extract_strided_slice %452 {offsets = [0, 16], sizes = [8, 8], strides = [1, 1]} : vector<8x32xf32> to vector<8x8xf32>
    %cst_222 = arith.constant dense<0.000000e+00> : vector<8x8xf32>
    %501 = tpu.matmul %499, %500, %cst_222 {dimension_numbers = #tpu.dot_dimension_numbers<[1], [1], [0], [0], [0, 0, 1, 0], [], []>} : vector<8x8xf32>, vector<8x8xf32>, vector<8x8xf32> -> vector<8x8xf32>
    %cst_223 = arith.constant -1.000000e+20 : f32
    %502 = vector.shape_cast %7 : vector<1x8xi1> to vector<1x8xi1>
    %503 = vector.broadcast %502 : vector<1x8xi1> to vector<8x8xi1>
    %504 = vector.broadcast %cst_223 : f32 to vector<8x8xf32>
    %505 = arith.select %503, %501, %504 : vector<8x8xi1>, vector<8x8xf32>
    %cst_224 = arith.constant dense<0xFF800000> : vector<8xf32>
    %506 = vector.multi_reduction <maximumf>, %505, %cst_224 [1] : vector<8x8xf32> to vector<8xf32>
    %507 = vector.shape_cast %506 : vector<8xf32> to vector<8x1xf32>
    %508 = vector.broadcast %507 : vector<8x1xf32> to vector<8x8xf32>
    %509 = arith.subf %505, %508 : vector<8x8xf32>
    %510 = math.exp %509 : vector<8x8xf32>
    %cst_225 = arith.constant dense<0.000000e+00> : vector<8xf32>
    %511 = vector.multi_reduction <add>, %510, %cst_225 [1] : vector<8x8xf32> to vector<8xf32>
    %512 = vector.shape_cast %511 : vector<8xf32> to vector<8x1xf32>
    %513 = tpu.reciprocal %512 {approx = true} : vector<8x1xf32> -> vector<8x1xf32>
    %514 = vector.broadcast %513 : vector<8x1xf32> to vector<8x8xf32>
    %515 = arith.mulf %510, %514 : vector<8x8xf32>
    %516 = vector.extract_strided_slice %453 {offsets = [0, 16], sizes = [8, 8], strides = [1, 1]} : vector<8x32xf32> to vector<8x8xf32>
    %cst_226 = arith.constant dense<0.000000e+00> : vector<8x8xf32>
    %517 = tpu.matmul %515, %516, %cst_226 {dimension_numbers = #tpu.dot_dimension_numbers<[1], [0], [0], [1], [0, 0, 1, 1], [], []>} : vector<8x8xf32>, vector<8x8xf32>, vector<8x8xf32> -> vector<8x8xf32>
    %518 = vector.extract_strided_slice %429 {offsets = [16, 0], sizes = [8, 32], strides = [1, 1]} : vector<32x32xf32> to vector<8x32xf32>
    %cst_227 = arith.constant dense<0.000000e+00> : vector<8x32xf32>
    %519 = tpu.matmul %517, %518, %cst_227 {dimension_numbers = #tpu.dot_dimension_numbers<[1], [0], [0], [1], [0, 0, 1, 1], [], []>} : vector<8x8xf32>, vector<8x32xf32>, vector<8x32xf32> -> vector<8x32xf32>
    %520 = arith.addf %498, %519 : vector<8x32xf32>
    %521 = vector.extract_strided_slice %449 {offsets = [0, 24], sizes = [8, 8], strides = [1, 1]} : vector<8x32xf32> to vector<8x8xf32>
    %522 = vector.extract_strided_slice %452 {offsets = [0, 24], sizes = [8, 8], strides = [1, 1]} : vector<8x32xf32> to vector<8x8xf32>
    %cst_228 = arith.constant dense<0.000000e+00> : vector<8x8xf32>
    %523 = tpu.matmul %521, %522, %cst_228 {dimension_numbers = #tpu.dot_dimension_numbers<[1], [1], [0], [0], [0, 0, 1, 0], [], []>} : vector<8x8xf32>, vector<8x8xf32>, vector<8x8xf32> -> vector<8x8xf32>
    %cst_229 = arith.constant -1.000000e+20 : f32
    %524 = vector.shape_cast %7 : vector<1x8xi1> to vector<1x8xi1>
    %525 = vector.broadcast %524 : vector<1x8xi1> to vector<8x8xi1>
    %526 = vector.broadcast %cst_229 : f32 to vector<8x8xf32>
    %527 = arith.select %525, %523, %526 : vector<8x8xi1>, vector<8x8xf32>
    %cst_230 = arith.constant dense<0xFF800000> : vector<8xf32>
    %528 = vector.multi_reduction <maximumf>, %527, %cst_230 [1] : vector<8x8xf32> to vector<8xf32>
    %529 = vector.shape_cast %528 : vector<8xf32> to vector<8x1xf32>
    %530 = vector.broadcast %529 : vector<8x1xf32> to vector<8x8xf32>
    %531 = arith.subf %527, %530 : vector<8x8xf32>
    %532 = math.exp %531 : vector<8x8xf32>
    %cst_231 = arith.constant dense<0.000000e+00> : vector<8xf32>
    %533 = vector.multi_reduction <add>, %532, %cst_231 [1] : vector<8x8xf32> to vector<8xf32>
    %534 = vector.shape_cast %533 : vector<8xf32> to vector<8x1xf32>
    %535 = tpu.reciprocal %534 {approx = true} : vector<8x1xf32> -> vector<8x1xf32>
    %536 = vector.broadcast %535 : vector<8x1xf32> to vector<8x8xf32>
    %537 = arith.mulf %532, %536 : vector<8x8xf32>
    %538 = vector.extract_strided_slice %453 {offsets = [0, 24], sizes = [8, 8], strides = [1, 1]} : vector<8x32xf32> to vector<8x8xf32>
    %cst_232 = arith.constant dense<0.000000e+00> : vector<8x8xf32>
    %539 = tpu.matmul %537, %538, %cst_232 {dimension_numbers = #tpu.dot_dimension_numbers<[1], [0], [0], [1], [0, 0, 1, 1], [], []>} : vector<8x8xf32>, vector<8x8xf32>, vector<8x8xf32> -> vector<8x8xf32>
    %540 = vector.extract_strided_slice %429 {offsets = [24, 0], sizes = [8, 32], strides = [1, 1]} : vector<32x32xf32> to vector<8x32xf32>
    %cst_233 = arith.constant dense<0.000000e+00> : vector<8x32xf32>
    %541 = tpu.matmul %539, %540, %cst_233 {dimension_numbers = #tpu.dot_dimension_numbers<[1], [0], [0], [1], [0, 0, 1, 1], [], []>} : vector<8x8xf32>, vector<8x32xf32>, vector<8x32xf32> -> vector<8x32xf32>
    %542 = arith.addf %520, %541 : vector<8x32xf32>
    %543 = arith.addf %542, %423 : vector<8x32xf32>
    %cst_234 = arith.constant dense<0.000000e+00> : vector<8xf32>
    %544 = vector.multi_reduction <add>, %543, %cst_234 [1] : vector<8x32xf32> to vector<8xf32>
    %545 = vector.shape_cast %544 : vector<8xf32> to vector<8x1xf32>
    %cst_235 = arith.constant 3.200000e+01 : f32
    %546 = vector.broadcast %cst_235 : f32 to vector<8x1xf32>
    %547 = arith.divf %545, %546 : vector<8x1xf32>
    %548 = vector.broadcast %547 : vector<8x1xf32> to vector<8x32xf32>
    %549 = arith.subf %543, %548 : vector<8x32xf32>
    %550 = arith.mulf %549, %549 : vector<8x32xf32>
    %cst_236 = arith.constant dense<0.000000e+00> : vector<8xf32>
    %551 = vector.multi_reduction <add>, %550, %cst_236 [1] : vector<8x32xf32> to vector<8xf32>
    %552 = vector.shape_cast %551 : vector<8xf32> to vector<8x1xf32>
    %cst_237 = arith.constant 3.200000e+01 : f32
    %553 = vector.broadcast %cst_237 : f32 to vector<8x1xf32>
    %554 = arith.divf %552, %553 : vector<8x1xf32>
    %555 = vector.broadcast %547 : vector<8x1xf32> to vector<8x32xf32>
    %556 = arith.subf %543, %555 : vector<8x32xf32>
    %cst_238 = arith.constant 9.99999974E-6 : f32
    %557 = vector.broadcast %cst_238 : f32 to vector<8x1xf32>
    %558 = arith.addf %554, %557 : vector<8x1xf32>
    %559 = math.rsqrt %558 : vector<8x1xf32>
    %560 = vector.broadcast %559 : vector<8x1xf32> to vector<8x32xf32>
    %561 = arith.mulf %556, %560 : vector<8x32xf32>
    %562 = vector.broadcast %433 : vector<1x32xf32> to vector<8x32xf32>
    %563 = arith.mulf %561, %562 : vector<8x32xf32>
    %564 = vector.broadcast %435 : vector<1x32xf32> to vector<8x32xf32>
    %565 = arith.addf %563, %564 : vector<8x32xf32>
    %566 = arith.truncf %565 : vector<8x32xf32> to vector<8x32xbf16>
    %cst_239 = arith.constant dense<0.000000e+00> : vector<8x64xf32>
    %567 = tpu.matmul %566, %441, %cst_239 {dimension_numbers = #tpu.dot_dimension_numbers<[1], [0], [0], [1], [0, 0, 1, 1], [], []>} : vector<8x32xbf16>, vector<32x64xbf16>, vector<8x64xf32> -> vector<8x64xf32>
    %568 = vector.broadcast %443 : vector<1x64xf32> to vector<8x64xf32>
    %569 = arith.addf %567, %568 : vector<8x64xf32>
    %cst_240 = arith.constant 0.000000e+00 : f32
    %570 = vector.broadcast %cst_240 : f32 to vector<8x64xf32>
    %571 = arith.maximumf %569, %570 : vector<8x64xf32>
    %572 = arith.truncf %571 : vector<8x64xf32> to vector<8x64xbf16>
    %cst_241 = arith.constant dense<0.000000e+00> : vector<8x32xf32>
    %573 = tpu.matmul %572, %445, %cst_241 {dimension_numbers = #tpu.dot_dimension_numbers<[1], [0], [0], [1], [0, 0, 1, 1], [], []>} : vector<8x64xbf16>, vector<64x32xbf16>, vector<8x32xf32> -> vector<8x32xf32>
    %574 = vector.broadcast %447 : vector<1x32xf32> to vector<8x32xf32>
    %575 = arith.addf %573, %574 : vector<8x32xf32>
    %576 = arith.addf %575, %565 : vector<8x32xf32>
    %cst_242 = arith.constant dense<0.000000e+00> : vector<8xf32>
    %577 = vector.multi_reduction <add>, %576, %cst_242 [1] : vector<8x32xf32> to vector<8xf32>
    %578 = vector.shape_cast %577 : vector<8xf32> to vector<8x1xf32>
    %cst_243 = arith.constant 3.200000e+01 : f32
    %579 = vector.broadcast %cst_243 : f32 to vector<8x1xf32>
    %580 = arith.divf %578, %579 : vector<8x1xf32>
    %581 = vector.broadcast %580 : vector<8x1xf32> to vector<8x32xf32>
    %582 = arith.subf %576, %581 : vector<8x32xf32>
    %583 = arith.mulf %582, %582 : vector<8x32xf32>
    %cst_244 = arith.constant dense<0.000000e+00> : vector<8xf32>
    %584 = vector.multi_reduction <add>, %583, %cst_244 [1] : vector<8x32xf32> to vector<8xf32>
    %585 = vector.shape_cast %584 : vector<8xf32> to vector<8x1xf32>
    %cst_245 = arith.constant 3.200000e+01 : f32
    %586 = vector.broadcast %cst_245 : f32 to vector<8x1xf32>
    %587 = arith.divf %585, %586 : vector<8x1xf32>
    %588 = vector.broadcast %580 : vector<8x1xf32> to vector<8x32xf32>
    %589 = arith.subf %576, %588 : vector<8x32xf32>
    %cst_246 = arith.constant 9.99999974E-6 : f32
    %590 = vector.broadcast %cst_246 : f32 to vector<8x1xf32>
    %591 = arith.addf %587, %590 : vector<8x1xf32>
    %592 = math.rsqrt %591 : vector<8x1xf32>
    %593 = vector.broadcast %592 : vector<8x1xf32> to vector<8x32xf32>
    %594 = arith.mulf %589, %593 : vector<8x32xf32>
    %595 = vector.broadcast %437 : vector<1x32xf32> to vector<8x32xf32>
    %596 = arith.mulf %594, %595 : vector<8x32xf32>
    %597 = vector.broadcast %439 : vector<1x32xf32> to vector<8x32xf32>
    %598 = arith.addf %596, %597 : vector<8x32xf32>
    %599 = arith.truncf %598 : vector<8x32xf32> to vector<8x32xbf16>
    %c0_247 = arith.constant 0 : index
    %c0_248 = arith.constant 0 : index
    %600 = vector.load %arg21[%c0_247, %c0_248] : memref<32x128xbf16, #tpu.memory_space<vmem>>, vector<32x128xbf16>
    %cst_249 = arith.constant dense<0.000000e+00> : vector<8x128xf32>
    %601 = tpu.matmul %599, %600, %cst_249 {dimension_numbers = #tpu.dot_dimension_numbers<[1], [0], [0], [1], [0, 0, 1, 1], [], []>} : vector<8x32xbf16>, vector<32x128xbf16>, vector<8x128xf32> -> vector<8x128xf32>
    %c0_250 = arith.constant 0 : index
    %c0_251 = arith.constant 0 : index
    %602 = vector.load %arg22[%c0_250, %c0_251] : memref<1x128xf32, #tpu.memory_space<vmem>>, vector<1x128xf32>
    %603 = vector.broadcast %602 : vector<1x128xf32> to vector<8x128xf32>
    %604 = arith.addf %601, %603 : vector<8x128xf32>
    %c0_252 = arith.constant 0 : index
    %c0_253 = arith.constant 0 : index
    %c0_254 = arith.constant 0 : index
    %605 = vector.load %arg23[%c0_252, %c0_253, %c0_254] : memref<1x8x128xf32, #tpu.memory_space<vmem>>, vector<1x8x128xf32>
    %606 = vector.shape_cast %605 : vector<1x8x128xf32> to vector<8x128xf32>
    %607 = vector.shape_cast %604 : vector<8x128xf32> to vector<1x8x128xf32>
    tpu.vector_store %arg23[%c0_252, %c0_253, %c0_254], %607 {strides = array<i32>} : memref<1x8x128xf32, #tpu.memory_space<vmem>>, vector<1x8x128xf32>,
    return
  }
  func.func @transform_0(%arg0: i32) -> (i32, i32, i32) {
    %c0_i32 = arith.constant 0 : i32
    %c0_i32_0 = arith.constant 0 : i32
    %c0_i32_1 = arith.constant 0 : i32
    return %arg0, %c0_i32, %c0_i32_0 : i32, i32, i32
  }
  func.func @transform_1(%arg0: i32) -> (i32, i32, i32) {
    %c0_i32 = arith.constant 0 : i32
    %c0_i32_0 = arith.constant 0 : i32
    %c0_i32_1 = arith.constant 0 : i32
    return %arg0, %c0_i32, %c0_i32_0 : i32, i32, i32
  }
  func.func @transform_2(%arg0: i32) -> (i32, i32, i32) {
    %c0_i32 = arith.constant 0 : i32
    %c0_i32_0 = arith.constant 0 : i32
    %c0_i32_1 = arith.constant 0 : i32
    return %arg0, %c0_i32, %c0_i32_0 : i32, i32, i32
  }
  func.func @transform_3(%arg0: i32) -> (i32, i32, i32) {
    %c0_i32 = arith.constant 0 : i32
    %c0_i32_0 = arith.constant 0 : i32
    %c0_i32_1 = arith.constant 0 : i32
    %c0_i32_2 = arith.constant 0 : i32
    return %c0_i32, %c0_i32_0, %c0_i32_1 : i32, i32, i32
  }
  func.func @transform_4(%arg0: i32) -> (i32, i32, i32) {
    %c0_i32 = arith.constant 0 : i32
    %c0_i32_0 = arith.constant 0 : i32
    %c0_i32_1 = arith.constant 0 : i32
    %c0_i32_2 = arith.constant 0 : i32
    return %c0_i32, %c0_i32_0, %c0_i32_1 : i32, i32, i32
  }
  func.func @transform_5(%arg0: i32) -> (i32, i32, i32) {
    %c0_i32 = arith.constant 0 : i32
    %c0_i32_0 = arith.constant 0 : i32
    %c0_i32_1 = arith.constant 0 : i32
    %c0_i32_2 = arith.constant 0 : i32
    return %c0_i32, %c0_i32_0, %c0_i32_1 : i32, i32, i32
  }
  func.func @transform_6(%arg0: i32) -> (i32, i32, i32) {
    %c0_i32 = arith.constant 0 : i32
    %c0_i32_0 = arith.constant 0 : i32
    %c0_i32_1 = arith.constant 0 : i32
    %c0_i32_2 = arith.constant 0 : i32
    return %c0_i32, %c0_i32_0, %c0_i32_1 : i32, i32, i32
  }
  func.func @transform_7(%arg0: i32) -> (i32, i32, i32) {
    %c0_i32 = arith.constant 0 : i32
    %c0_i32_0 = arith.constant 0 : i32
    %c0_i32_1 = arith.constant 0 : i32
    %c0_i32_2 = arith.constant 0 : i32
    return %c0_i32, %c0_i32_0, %c0_i32_1 : i32, i32, i32
  }
  func.func @transform_8(%arg0: i32) -> (i32, i32, i32) {
    %c0_i32 = arith.constant 0 : i32
    %c0_i32_0 = arith.constant 0 : i32
    %c0_i32_1 = arith.constant 0 : i32
    %c0_i32_2 = arith.constant 0 : i32
    return %c0_i32, %c0_i32_0, %c0_i32_1 : i32, i32, i32
  }
  func.func @transform_9(%arg0: i32) -> (i32, i32, i32) {
    %c0_i32 = arith.constant 0 : i32
    %c0_i32_0 = arith.constant 0 : i32
    %c0_i32_1 = arith.constant 0 : i32
    %c0_i32_2 = arith.constant 0 : i32
    return %c0_i32, %c0_i32_0, %c0_i32_1 : i32, i32, i32
  }
  func.func @transform_10(%arg0: i32) -> (i32, i32, i32) {
    %c0_i32 = arith.constant 0 : i32
    %c0_i32_0 = arith.constant 0 : i32
    %c0_i32_1 = arith.constant 0 : i32
    %c0_i32_2 = arith.constant 0 : i32
    return %c0_i32, %c0_i32_0, %c0_i32_1 : i32, i32, i32
  }
  func.func @transform_11(%arg0: i32) -> (i32, i32, i32) {
    %c0_i32 = arith.constant 0 : i32
    %c0_i32_0 = arith.constant 0 : i32
    %c0_i32_1 = arith.constant 0 : i32
    %c0_i32_2 = arith.constant 0 : i32
    return %c0_i32, %c0_i32_0, %c0_i32_1 : i32, i32, i32
  }
  func.func @transform_12(%arg0: i32) -> (i32, i32, i32) {
    %c0_i32 = arith.constant 0 : i32
    %c0_i32_0 = arith.constant 0 : i32
    %c0_i32_1 = arith.constant 0 : i32
    %c0_i32_2 = arith.constant 0 : i32
    return %c0_i32, %c0_i32_0, %c0_i32_1 : i32, i32, i32
  }
  func.func @transform_13(%arg0: i32) -> (i32, i32, i32) {
    %c0_i32 = arith.constant 0 : i32
    %c0_i32_0 = arith.constant 0 : i32
    %c0_i32_1 = arith.constant 0 : i32
    %c0_i32_2 = arith.constant 0 : i32
    return %c0_i32, %c0_i32_0, %c0_i32_1 : i32, i32, i32
  }
  func.func @transform_14(%arg0: i32) -> (i32, i32, i32) {
    %c0_i32 = arith.constant 0 : i32
    %c0_i32_0 = arith.constant 0 : i32
    %c0_i32_1 = arith.constant 0 : i32
    %c0_i32_2 = arith.constant 0 : i32
    return %c0_i32, %c0_i32_0, %c0_i32_1 : i32, i32, i32
  }
  func.func @transform_15(%arg0: i32) -> (i32, i32, i32) {
    %c0_i32 = arith.constant 0 : i32
    %c0_i32_0 = arith.constant 0 : i32
    %c0_i32_1 = arith.constant 0 : i32
    %c0_i32_2 = arith.constant 0 : i32
    return %c0_i32, %c0_i32_0, %c0_i32_1 : i32, i32, i32
  }
  func.func @transform_16(%arg0: i32) -> (i32, i32, i32) {
    %c0_i32 = arith.constant 0 : i32
    %c0_i32_0 = arith.constant 0 : i32
    %c0_i32_1 = arith.constant 0 : i32
    %c0_i32_2 = arith.constant 0 : i32
    return %c0_i32, %c0_i32_0, %c0_i32_1 : i32, i32, i32
  }
  func.func @transform_17(%arg0: i32) -> (i32, i32, i32) {
    %c0_i32 = arith.constant 0 : i32
    %c0_i32_0 = arith.constant 0 : i32
    %c0_i32_1 = arith.constant 0 : i32
    %c0_i32_2 = arith.constant 0 : i32
    return %c0_i32, %c0_i32_0, %c0_i32_1 : i32, i32, i32
  }
  func.func @transform_18(%arg0: i32) -> (i32, i32, i32) {
    %c0_i32 = arith.constant 0 : i32
    %c0_i32_0 = arith.constant 0 : i32
    %c0_i32_1 = arith.constant 0 : i32
    %c0_i32_2 = arith.constant 0 : i32
    return %c0_i32, %c0_i32_0, %c0_i32_1 : i32, i32, i32
  }
  func.func @transform_19(%arg0: i32) -> (i32, i32, i32) {
    %c0_i32 = arith.constant 0 : i32
    %c0_i32_0 = arith.constant 0 : i32
    %c0_i32_1 = arith.constant 0 : i32
    %c0_i32_2 = arith.constant 0 : i32
    return %c0_i32, %c0_i32_0, %c0_i32_1 : i32, i32, i32
  }
  func.func @transform_20(%arg0: i32) -> (i32, i32) {
    %c0_i32 = arith.constant 0 : i32
    %c0_i32_0 = arith.constant 0 : i32
    %c0_i32_1 = arith.constant 0 : i32
    return %c0_i32, %c0_i32_0 : i32, i32
  }
  func.func @transform_21(%arg0: i32) -> (i32, i32) {
    %c0_i32 = arith.constant 0 : i32
    %c0_i32_0 = arith.constant 0 : i32
    %c0_i32_1 = arith.constant 0 : i32
    return %c0_i32, %c0_i32_0 : i32, i32
  }
  func.func @transform_22(%arg0: i32) -> (i32, i32, i32) {
    %c0_i32 = arith.constant 0 : i32
    %c0_i32_0 = arith.constant 0 : i32
    %c0_i32_1 = arith.constant 0 : i32
    return %arg0, %c0_i32, %c0_i32_0 : i32, i32, i32
  }
}

</mosaic_0001>

<llo_original>
// kernel: transformer_forward.2
$region0: #{transformer_forward.2}
  #allocation0 [shape = 'u32[]', space=smem, size = 0x4, offset = 0x4, fixed_abs, tag = 'smem constant byte address 0x4 - core index']
  #allocation1 [shape = 'u32[72,128]{1,0:T(1,128)}', space=vmem, size = 0x9000, scoped, tag = 'internal scratch']
  %s0 = inlined_call_operand.vmem [shape: f32[2,8,32], index: 0, kind: input, shape index: {}]
  %s1 = inlined_call_operand.vmem [shape: f32[2,1,8], index: 1, kind: input, shape index: {}]
  %s2 = inlined_call_operand.vmem [shape: bf16[2,32,96], index: 2, kind: input, shape index: {}]
  %s3 = inlined_call_operand.vmem [shape: f32[2,32,32], index: 3, kind: input, shape index: {}]
  %s4 = inlined_call_operand.vmem [shape: f32[2,1,32], index: 4, kind: input, shape index: {}]
  %s5 = inlined_call_operand.vmem [shape: f32[2,1,32], index: 5, kind: input, shape index: {}]
  %s6 = inlined_call_operand.vmem [shape: f32[2,1,32], index: 6, kind: input, shape index: {}]
  %s7 = inlined_call_operand.vmem [shape: f32[2,1,32], index: 7, kind: input, shape index: {}]
  %s8 = inlined_call_operand.vmem [shape: f32[2,1,32], index: 8, kind: input, shape index: {}]
  %s9 = inlined_call_operand.vmem [shape: bf16[2,32,64], index: 9, kind: input, shape index: {}]
  %s10 = inlined_call_operand.vmem [shape: f32[2,1,64], index: 10, kind: input, shape index: {}]
  %s11 = inlined_call_operand.vmem [shape: bf16[2,64,32], index: 11, kind: input, shape index: {}]
  %s12 = inlined_call_operand.vmem [shape: f32[2,1,32], index: 12, kind: input, shape index: {}]
  %s13 = inlined_call_operand.vmem [shape: f32[2,8,32], index: 13, kind: output, shape index: {}]
  %s14 = sld [smem:[#allocation0]]
  $region85: #{transformer_forward.2} parent=0
    _
  %s16 = ssub.s32 1, %s14
  %s17 = scalar_select 0, %s16, %s14
  loop: start=0, step=1, limit=4
  $region2: #{transformer_forward.2} parent=0 // loop_pre_header
    _
  $region3: #{transformer_forward.2} parent=0 // loop_header
    %s19 = sphi 0, %s23
    %p20 = scmp.ge.s32.totalorder %s19, 4
    %s29 = sphi 0, %s31
    %s32 = sphi 0, %s29
    %s33 = sphi 0, %s32
    %s49 = sphi 0, %s33
    %s55 = sphi 0, %s57
    %s58 = sphi 0, %s55
    %s59 = sphi 0, %s58
    %s75 = sphi 0, %s59
    %s79 = sphi 0, %s79
    %s81 = sphi 0, %s79
    %s82 = sphi 0, %s81
    %s96 = sphi 0, %s82
    %s100 = sphi 0, %s100
    %s102 = sphi 0, %s100
    %s103 = sphi 0, %s102
    %s117 = sphi 0, %s103
    %s121 = sphi 0, %s121
    %s123 = sphi 0, %s121
    %s124 = sphi 0, %s123
    %s138 = sphi 0, %s124
    %s142 = sphi 0, %s142
    %s144 = sphi 0, %s142
    %s145 = sphi 0, %s144
    %s159 = sphi 0, %s145
    %s163 = sphi 0, %s163
    %s165 = sphi 0, %s163
    %s166 = sphi 0, %s165
    %s180 = sphi 0, %s166
    %s184 = sphi 0, %s184
    %s186 = sphi 0, %s184
    %s187 = sphi 0, %s186
    %s201 = sphi 0, %s187
    %s205 = sphi 0, %s205
    %s207 = sphi 0, %s205
    %s208 = sphi 0, %s207
    %s222 = sphi 0, %s208
    %s226 = sphi 0, %s226
    %s228 = sphi 0, %s226
    %s229 = sphi 0, %s228
    %s243 = sphi 0, %s229
    %s247 = sphi 0, %s247
    %s249 = sphi 0, %s247
    %s250 = sphi 0, %s249
    %s264 = sphi 0, %s250
    %s268 = sphi 0, %s268
    %s270 = sphi 0, %s268
    %s271 = sphi 0, %s270
    %s285 = sphi 0, %s271
    %s289 = sphi 0, %s289
    %s291 = sphi 0, %s289
    %s292 = sphi 0, %s291
    %s306 = sphi 0, %s292
    %s312 = sphi 0, %s314
    %s315 = sphi 0, %s312
    %s316 = sphi 0, %s315
    %s332 = sphi 0, %s316
  $region4: #{transformer_forward.2} parent=0 // loop_header_branch
    %22 = sbr.rel (%p20) target = $region8
  $region5: #{transformer_forward.2} parent=0 // loop_body
    %s24 = ssub.s32 %s19, 1
    %s25 = ssub.s32 %s19, 2
    %s26 = sadd.s32 %s19, 1
    %s27 = ssub.s32 %s19, %s26
    %p28 = scmp.eq.s32.totalorder %s27, 0
    %s30 = sadd.s32 %s29, 1
    %s31 = scalar_select %p28, %s29, %s30
    %p34 = pneg %p28
    %p35 = scmp.eq.s32.totalorder %s19, 1
    %p36 = por %p34, %p35
    %p37 = scmp.ne.s32.totalorder %s29, %s32
    %p38 = scmp.eq.s32.totalorder %s19, 0
    %p39 = por %p37, %p38
    %p40 = scmp.ne.s32.totalorder %s29, %s32
    %p41 = scmp.eq.s32.totalorder %s24, 1
    %p42 = por %p40, %p41
    %p43 = scmp.ne.s32.totalorder %s32, %s33
    %p44 = scmp.eq.s32.totalorder %s24, 0
    %p45 = por %p43, %p44
    %p46 = scmp.ne.s32.totalorder %s32, %s33
    %p47 = scmp.eq.s32.totalorder %s25, 1
    %p48 = por %p46, %p47
    %p50 = scmp.ne.s32.totalorder %s33, %s49
    %p51 = scmp.eq.s32.totalorder %s25, 0
    %p52 = por %p50, %p51
    %s53 = ssub.s32 %s19, %s26
    %p54 = scmp.eq.s32.totalorder %s53, 0
    %s56 = sadd.s32 %s55, 1
    %s57 = scalar_select %p54, %s55, %s56
    %p60 = pneg %p54
    %p61 = scmp.eq.s32.totalorder %s19, 1
    %p62 = por %p60, %p61
    %p63 = scmp.ne.s32.totalorder %s55, %s58
    %p64 = scmp.eq.s32.totalorder %s19, 0
    %p65 = por %p63, %p64
    %p66 = scmp.ne.s32.totalorder %s55, %s58
    %p67 = scmp.eq.s32.totalorder %s24, 1
    %p68 = por %p66, %p67
    %p69 = scmp.ne.s32.totalorder %s58, %s59
    %p70 = scmp.eq.s32.totalorder %s24, 0
    %p71 = por %p69, %p70
    %p72 = scmp.ne.s32.totalorder %s58, %s59
    %p73 = scmp.eq.s32.totalorder %s25, 1
    %p74 = por %p72, %p73
    %p76 = scmp.ne.s32.totalorder %s59, %s75
    %p77 = scmp.eq.s32.totalorder %s25, 0
    %p78 = por %p76, %p77
    %s80 = sadd.s32 %s79, 1
    %p83 = scmp.eq.s32.totalorder %s19, 1
    %p84 = scmp.ne.s32.totalorder %s79, %s81
    %p85 = scmp.eq.s32.totalorder %s19, 0
    %p86 = por %p84, %p85
    %p87 = scmp.ne.s32.totalorder %s79, %s81
    %p88 = scmp.eq.s32.totalorder %s24, 1
    %p89 = por %p87, %p88
    %p90 = scmp.ne.s32.totalorder %s81, %s82
    %p91 = scmp.eq.s32.totalorder %s24, 0
    %p92 = por %p90, %p91
    %p93 = scmp.ne.s32.totalorder %s81, %s82
    %p94 = scmp.eq.s32.totalorder %s25, 1
    %p95 = por %p93, %p94
    %p97 = scmp.ne.s32.totalorder %s82, %s96
    %p98 = scmp.eq.s32.totalorder %s25, 0
    %p99 = por %p97, %p98
    %s101 = sadd.s32 %s100, 1
    %p104 = scmp.eq.s32.totalorder %s19, 1
    %p105 = scmp.ne.s32.totalorder %s100, %s102
    %p106 = scmp.eq.s32.totalorder %s19, 0
    %p107 = por %p105, %p106
    %p108 = scmp.ne.s32.totalorder %s100, %s102
    %p109 = scmp.eq.s32.totalorder %s24, 1
    %p110 = por %p108, %p109
    %p111 = scmp.ne.s32.totalorder %s102, %s103
    %p112 = scmp.eq.s32.totalorder %s24, 0
    %p113 = por %p111, %p112
    %p114 = scmp.ne.s32.totalorder %s102, %s103
    %p115 = scmp.eq.s32.totalorder %s25, 1
    %p116 = por %p114, %p115
    %p118 = scmp.ne.s32.totalorder %s103, %s117
    %p119 = scmp.eq.s32.totalorder %s25, 0
    %p120 = por %p118, %p119
    %s122 = sadd.s32 %s121, 1
    %p125 = scmp.eq.s32.totalorder %s19, 1
    %p126 = scmp.ne.s32.totalorder %s121, %s123
    %p127 = scmp.eq.s32.totalorder %s19, 0
    %p128 = por %p126, %p127
    %p129 = scmp.ne.s32.totalorder %s121, %s123
    %p130 = scmp.eq.s32.totalorder %s24, 1
    %p131 = por %p129, %p130
    %p132 = scmp.ne.s32.totalorder %s123, %s124
    %p133 = scmp.eq.s32.totalorder %s24, 0
    %p134 = por %p132, %p133
    %p135 = scmp.ne.s32.totalorder %s123, %s124
    %p136 = scmp.eq.s32.totalorder %s25, 1
    %p137 = por %p135, %p136
    %p139 = scmp.ne.s32.totalorder %s124, %s138
    %p140 = scmp.eq.s32.totalorder %s25, 0
    %p141 = por %p139, %p140
    %s143 = sadd.s32 %s142, 1
    %p146 = scmp.eq.s32.totalorder %s19, 1
    %p147 = scmp.ne.s32.totalorder %s142, %s144
    %p148 = scmp.eq.s32.totalorder %s19, 0
    %p149 = por %p147, %p148
    %p150 = scmp.ne.s32.totalorder %s142, %s144
    %p151 = scmp.eq.s32.totalorder %s24, 1
    %p152 = por %p150, %p151
    %p153 = scmp.ne.s32.totalorder %s144, %s145
    %p154 = scmp.eq.s32.totalorder %s24, 0
    %p155 = por %p153, %p154
    %p156 = scmp.ne.s32.totalorder %s144, %s145
    %p157 = scmp.eq.s32.totalorder %s25, 1
    %p158 = por %p156, %p157
    %p160 = scmp.ne.s32.totalorder %s145, %s159
    %p161 = scmp.eq.s32.totalorder %s25, 0
    %p162 = por %p160, %p161
    %s164 = sadd.s32 %s163, 1
    %p167 = scmp.eq.s32.totalorder %s19, 1
    %p168 = scmp.ne.s32.totalorder %s163, %s165
    %p169 = scmp.eq.s32.totalorder %s19, 0
    %p170 = por %p168, %p169
    %p171 = scmp.ne.s32.totalorder %s163, %s165
    %p172 = scmp.eq.s32.totalorder %s24, 1
    %p173 = por %p171, %p172
    %p174 = scmp.ne.s32.totalorder %s165, %s166
    %p175 = scmp.eq.s32.totalorder %s24, 0
    %p176 = por %p174, %p175
    %p177 = scmp.ne.s32.totalorder %s165, %s166
    %p178 = scmp.eq.s32.totalorder %s25, 1
    %p179 = por %p177, %p178
    %p181 = scmp.ne.s32.totalorder %s166, %s180
    %p182 = scmp.eq.s32.totalorder %s25, 0
    %p183 = por %p181, %p182
    %s185 = sadd.s32 %s184, 1
    %p188 = scmp.eq.s32.totalorder %s19, 1
    %p189 = scmp.ne.s32.totalorder %s184, %s186
    %p190 = scmp.eq.s32.totalorder %s19, 0
    %p191 = por %p189, %p190
    %p192 = scmp.ne.s32.totalorder %s184, %s186
    %p193 = scmp.eq.s32.totalorder %s24, 1
    %p194 = por %p192, %p193
    %p195 = scmp.ne.s32.totalorder %s186, %s187
    %p196 = scmp.eq.s32.totalorder %s24, 0
    %p197 = por %p195, %p196
    %p198 = scmp.ne.s32.totalorder %s186, %s187
    %p199 = scmp.eq.s32.totalorder %s25, 1
    %p200 = por %p198, %p199
    %p202 = scmp.ne.s32.totalorder %s187, %s201
    %p203 = scmp.eq.s32.totalorder %s25, 0
    %p204 = por %p202, %p203
    %s206 = sadd.s32 %s205, 1
    %p209 = scmp.eq.s32.totalorder %s19, 1
    %p210 = scmp.ne.s32.totalorder %s205, %s207
    %p211 = scmp.eq.s32.totalorder %s19, 0
    %p212 = por %p210, %p211
    %p213 = scmp.ne.s32.totalorder %s205, %s207
    %p214 = scmp.eq.s32.totalorder %s24, 1
    %p215 = por %p213, %p214
    %p216 = scmp.ne.s32.totalorder %s207, %s208
    %p217 = scmp.eq.s32.totalorder %s24, 0
    %p218 = por %p216, %p217
    %p219 = scmp.ne.s32.totalorder %s207, %s208
    %p220 = scmp.eq.s32.totalorder %s25, 1
    %p221 = por %p219, %p220
    %p223 = scmp.ne.s32.totalorder %s208, %s222
    %p224 = scmp.eq.s32.totalorder %s25, 0
    %p225 = por %p223, %p224
    %s227 = sadd.s32 %s226, 1
    %p230 = scmp.eq.s32.totalorder %s19, 1
    %p231 = scmp.ne.s32.totalorder %s226, %s228
    %p232 = scmp.eq.s32.totalorder %s19, 0
    %p233 = por %p231, %p232
    %p234 = scmp.ne.s32.totalorder %s226, %s228
    %p235 = scmp.eq.s32.totalorder %s24, 1
    %p236 = por %p234, %p235
    %p237 = scmp.ne.s32.totalorder %s228, %s229
    %p238 = scmp.eq.s32.totalorder %s24, 0
    %p239 = por %p237, %p238
    %p240 = scmp.ne.s32.totalorder %s228, %s229
    %p241 = scmp.eq.s32.totalorder %s25, 1
    %p242 = por %p240, %p241
    %p244 = scmp.ne.s32.totalorder %s229, %s243
    %p245 = scmp.eq.s32.totalorder %s25, 0
    %p246 = por %p244, %p245
    %s248 = sadd.s32 %s247, 1
    %p251 = scmp.eq.s32.totalorder %s19, 1
    %p252 = scmp.ne.s32.totalorder %s247, %s249
    %p253 = scmp.eq.s32.totalorder %s19, 0
    %p254 = por %p252, %p253
    %p255 = scmp.ne.s32.totalorder %s247, %s249
    %p256 = scmp.eq.s32.totalorder %s24, 1
    %p257 = por %p255, %p256
    %p258 = scmp.ne.s32.totalorder %s249, %s250
    %p259 = scmp.eq.s32.totalorder %s24, 0
    %p260 = por %p258, %p259
    %p261 = scmp.ne.s32.totalorder %s249, %s250
    %p262 = scmp.eq.s32.totalorder %s25, 1
    %p263 = por %p261, %p262
    %p265 = scmp.ne.s32.totalorder %s250, %s264
    %p266 = scmp.eq.s32.totalorder %s25, 0
    %p267 = por %p265, %p266
    %s269 = sadd.s32 %s268, 1
    %p272 = scmp.eq.s32.totalorder %s19, 1
    %p273 = scmp.ne.s32.totalorder %s268, %s270
    %p274 = scmp.eq.s32.totalorder %s19, 0
    %p275 = por %p273, %p274
    %p276 = scmp.ne.s32.totalorder %s268, %s270
    %p277 = scmp.eq.s32.totalorder %s24, 1
    %p278 = por %p276, %p277
    %p279 = scmp.ne.s32.totalorder %s270, %s271
    %p280 = scmp.eq.s32.totalorder %s24, 0
    %p281 = por %p279, %p280
    %p282 = scmp.ne.s32.totalorder %s270, %s271
    %p283 = scmp.eq.s32.totalorder %s25, 1
    %p284 = por %p282, %p283
    %p286 = scmp.ne.s32.totalorder %s271, %s285
    %p287 = scmp.eq.s32.totalorder %s25, 0
    %p288 = por %p286, %p287
    %s290 = sadd.s32 %s289, 1
    %p293 = scmp.eq.s32.totalorder %s19, 1
    %p294 = scmp.ne.s32.totalorder %s289, %s291
    %p295 = scmp.eq.s32.totalorder %s19, 0
    %p296 = por %p294, %p295
    %p297 = scmp.ne.s32.totalorder %s289, %s291
    %p298 = scmp.eq.s32.totalorder %s24, 1
    %p299 = por %p297, %p298
    %p300 = scmp.ne.s32.totalorder %s291, %s292
    %p301 = scmp.eq.s32.totalorder %s24, 0
    %p302 = por %p300, %p301
    %p303 = scmp.ne.s32.totalorder %s291, %s292
    %p304 = scmp.eq.s32.totalorder %s25, 1
    %p305 = por %p303, %p304
    %p307 = scmp.ne.s32.totalorder %s292, %s306
    %p308 = scmp.eq.s32.totalorder %s25, 0
    %p309 = por %p307, %p308
    %s310 = ssub.s32 %s19, %s26
    %p311 = scmp.eq.s32.totalorder %s310, 0
    %s313 = sadd.s32 %s312, 1
    %s314 = scalar_select %p311, %s312, %s313
    %p317 = pneg %p311
    %p318 = scmp.eq.s32.totalorder %s19, 1
    %p319 = por %p317, %p318
    %p320 = scmp.ne.s32.totalorder %s312, %s315
    %p321 = scmp.eq.s32.totalorder %s19, 0
    %p322 = por %p320, %p321
    %p323 = scmp.ne.s32.totalorder %s312, %s315
    %p324 = scmp.eq.s32.totalorder %s24, 1
    %p325 = por %p323, %p324
    %p326 = scmp.ne.s32.totalorder %s315, %s316
    %p327 = scmp.eq.s32.totalorder %s24, 0
    %p328 = por %p326, %p327
    %p329 = scmp.ne.s32.totalorder %s315, %s316
    %p330 = scmp.eq.s32.totalorder %s25, 1
    %p331 = por %p329, %p330
    %p333 = scmp.ne.s32.totalorder %s316, %s332
    %p334 = scmp.eq.s32.totalorder %s25, 0
    %p335 = por %p333, %p334
    %p336 = scmp.le.s32.totalorder 1, %s19
    %p337 = scmp.lt.s32.totalorder %s19, 3
    %p338 = pnand %p336, %p337
    %p339 = pneg %p338
    // Predicated region
    $region9: #{transformer_forward.2} parent=5 // pred_check
      _
    $region10: #{transformer_forward.2} parent=5 // pred_check_branch
      %341 = sbr.rel (%p338) target = $region12
    $region11: #{transformer_forward.2} parent=5 // pred_region
      %s342 = ssub.s32 %s19, 1
      // Predicated region
      $region13: #{transformer_forward.2} parent=11 // pred_check
        %p343 = pneg %p92
      $region14: #{transformer_forward.2} parent=11 // pred_check_branch
        %345 = sbr.rel (%p343) target = $region16
      $region15: #{transformer_forward.2} parent=11 // pred_region
        _
      $region16: #{transformer_forward.2} parent=11 // pred_fallthru
        _
      // Predicated region
      $region17: #{transformer_forward.2} parent=11 // pred_check
        %p346 = pneg %p113
      $region18: #{transformer_forward.2} parent=11 // pred_check_branch
        %348 = sbr.rel (%p346) target = $region20
      $region19: #{transformer_forward.2} parent=11 // pred_region
        _
      $region20: #{transformer_forward.2} parent=11 // pred_fallthru
        _
      // Predicated region
      $region21: #{transformer_forward.2} parent=11 // pred_check
        %p349 = pneg %p134
      $region22: #{transformer_forward.2} parent=11 // pred_check_branch
        %351 = sbr.rel (%p349) target = $region24
      $region23: #{transformer_forward.2} parent=11 // pred_region
        _
      $region24: #{transformer_forward.2} parent=11 // pred_fallthru
        _
      // Predicated region
      $region25: #{transformer_forward.2} parent=11 // pred_check
        %p352 = pneg %p155
      $region26: #{transformer_forward.2} parent=11 // pred_check_branch
        %354 = sbr.rel (%p352) target = $region28
      $region27: #{transformer_forward.2} parent=11 // pred_region
        _
      $region28: #{transformer_forward.2} parent=11 // pred_fallthru
        _
      // Predicated region
      $region29: #{transformer_forward.2} parent=11 // pred_check
        %p355 = pneg %p176
      $region30: #{transformer_forward.2} parent=11 // pred_check_branch
        %357 = sbr.rel (%p355) target = $region32
      $region31: #{transformer_forward.2} parent=11 // pred_region
        _
      $region32: #{transformer_forward.2} parent=11 // pred_fallthru
        _
      // Predicated region
      $region33: #{transformer_forward.2} parent=11 // pred_check
        %p358 = pneg %p197
      $region34: #{transformer_forward.2} parent=11 // pred_check_branch
        %360 = sbr.rel (%p358) target = $region36
      $region35: #{transformer_forward.2} parent=11 // pred_region
        _
      $region36: #{transformer_forward.2} parent=11 // pred_fallthru
        _
      // Predicated region
      $region37: #{transformer_forward.2} parent=11 // pred_check
        %p361 = pneg %p218
      $region38: #{transformer_forward.2} parent=11 // pred_check_branch
        %363 = sbr.rel (%p361) target = $region40
      $region39: #{transformer_forward.2} parent=11 // pred_region
        _
      $region40: #{transformer_forward.2} parent=11 // pred_fallthru
        _
      // Predicated region
      $region41: #{transformer_forward.2} parent=11 // pred_check
        %p364 = pneg %p239
      $region42: #{transformer_forward.2} parent=11 // pred_check_branch
        %366 = sbr.rel (%p364) target = $region44
      $region43: #{transformer_forward.2} parent=11 // pred_region
        _
      $region44: #{transformer_forward.2} parent=11 // pred_fallthru
        _
      // Predicated region
      $region45: #{transformer_forward.2} parent=11 // pred_check
        %p367 = pneg %p260
      $region46: #{transformer_forward.2} parent=11 // pred_check_branch
        %369 = sbr.rel (%p367) target = $region48
      $region47: #{transformer_forward.2} parent=11 // pred_region
        _
      $region48: #{transformer_forward.2} parent=11 // pred_fallthru
        _
      // Predicated region
      $region49: #{transformer_forward.2} parent=11 // pred_check
        %p370 = pneg %p281
      $region50: #{transformer_forward.2} parent=11 // pred_check_branch
        %372 = sbr.rel (%p370) target = $region52
      $region51: #{transformer_forward.2} parent=11 // pred_region
        _
      $region52: #{transformer_forward.2} parent=11 // pred_fallthru
        _
      // Predicated region
      $region53: #{transformer_forward.2} parent=11 // pred_check
        %p373 = pneg %p302
      $region54: #{transformer_forward.2} parent=11 // pred_check_branch
        %375 = sbr.rel (%p373) target = $region56
      $region55: #{transformer_forward.2} parent=11 // pred_region
        _
      $region56: #{transformer_forward.2} parent=11 // pred_fallthru
        _
    $region12: #{transformer_forward.2} parent=5 // pred_fallthru
      _
    %p376 = scmp.lt.s32.totalorder %s19, 2
    // Predicated region
    $region57: #{transformer_forward.2} parent=5 // pred_check
      %p377 = pneg %p376
    $region58: #{transformer_forward.2} parent=5 // pred_check_branch
      %379 = sbr.rel (%p377) target = $region60
    $region59: #{transformer_forward.2} parent=5 // pred_region
      // Predicated region
      $region61: #{transformer_forward.2} parent=59 // pred_check
        %p380 = pneg %p39
      $region62: #{transformer_forward.2} parent=59 // pred_check_branch
        %382 = sbr.rel (%p380) target = $region64
      $region63: #{transformer_forward.2} parent=59 // pred_region
        %p383 = scmp.lt.s32.totalorder %s19, 1
        %s384 = scalar_select %p383, %s19, 1
        %s385 = smul.addr %s384, 8
        %s386 = scalar_lea.vmem %s0, %s385
      $region64: #{transformer_forward.2} parent=59 // pred_fallthru
        _
      // Predicated region
      $region65: #{transformer_forward.2} parent=59 // pred_check
        %p387 = pneg %p65
      $region66: #{transformer_forward.2} parent=59 // pred_check_branch
        %389 = sbr.rel (%p387) target = $region68
      $region67: #{transformer_forward.2} parent=59 // pred_region
        %p390 = scmp.lt.s32.totalorder %s19, 1
        %s391 = scalar_select %p390, %s19, 1
        %s392 = scalar_lea.vmem %s1, %s391
      $region68: #{transformer_forward.2} parent=59 // pred_fallthru
        _
    $region60: #{transformer_forward.2} parent=5 // pred_fallthru
      _
    %p393 = scmp.le.s32.totalorder 1, %s19
    %p394 = scmp.lt.s32.totalorder %s19, 3
    %p395 = pnand %p393, %p394
    %p396 = pneg %p395
    // Predicated region
    $region69: #{transformer_forward.2} parent=5 // pred_check
      _
    $region70: #{transformer_forward.2} parent=5 // pred_check_branch
      %398 = sbr.rel (%p395) target = $region72
    $region71: #{transformer_forward.2} parent=5 // pred_region
      %s399 = ssub.s32 %s19, 1
      %p400 = scmp.lt.s32.totalorder %s24, 1
      %s401 = scalar_select %p400, %s24, 1
      %s402 = smul.addr %s401, 8
      %s403 = scalar_lea.vmem %s0, %s402
      %p404 = pneg %p45
      %p405 = pneg %p42
      %p406 = scmp.lt.s32.totalorder %s24, 1
      %s407 = scalar_select %p406, %s24, 1
      %s408 = scalar_lea.vmem %s1, %s407
      %p409 = pneg %p71
      %p410 = pneg %p68
      %p411 = pneg %p92
      %p412 = pneg %p89
      %p413 = pneg %p113
      %p414 = pneg %p110
      %p415 = pneg %p134
      %p416 = pneg %p131
      %p417 = pneg %p155
      %p418 = pneg %p152
      %p419 = pneg %p176
      %p420 = pneg %p173
      %p421 = pneg %p197
      %p422 = pneg %p194
      %p423 = pneg %p218
      %p424 = pneg %p215
      %p425 = pneg %p239
      %p426 = pneg %p236
      %p427 = pneg %p260
      %p428 = pneg %p257
      %p429 = pneg %p281
      %p430 = pneg %p278
      %p431 = pneg %p302
      %p432 = pneg %p299
      %p433 = pneg %p328
      %p434 = pneg %p325
      %p435 = scmp.lt.s32.totalorder %s24, 1
      %s436 = scalar_select %p435, %s24, 1
      %s437 = smul.addr %s436, 8
      %s438 = scalar_lea.vmem %s13, %s437
      %p439 = scmp.lt.s32.totalorder %s24, 1
      %s440 = scalar_select %p439, %s24, 1
      %s441 = smul.addr %s440, 8
      %s442 = scalar_lea.vmem %s0, %s441
      %p443 = scmp.lt.s32.totalorder %s24, 1
      %s444 = scalar_select %p443, %s24, 1
      %s445 = scalar_lea.vmem %s1, %s444
      %p446 = scmp.lt.s32.totalorder %s24, 1
      %s447 = scalar_select %p446, %s24, 1
      %s448 = smul.addr %s447, 8
      %s449 = scalar_lea.vmem %s13, %s448
      %v451 = vld [vmem:[%s442] sm:$0xff]
      %v452 = vld [vmem:[%s445] sm:$0x1]
      %vm453 = vcmp.gt.f32.partialorder %v452, 0.0
      %v454 = vld [vmem:[%s2] sm:$0xf]
      %v455 = vld [vmem:[%s2 + $0x4] sm:$0xf]
      %v456 = vld [vmem:[%s2 + $0x8] sm:$0xf]
      %v457 = vld [vmem:[%s2 + $0xc] sm:$0xf]
      %v458 = vld [vmem:[%s3] sm:$0xff]
      %v459 = vld [vmem:[%s3 + $0x8] sm:$0xff]
      %v460 = vld [vmem:[%s3 + $0x10] sm:$0xff]
      %v461 = vld [vmem:[%s3 + $0x18] sm:$0xff]
      %v462 = vld [vmem:[%s4] sm:$0x1]
      %v463 = vld [vmem:[%s5] sm:$0x1]
      %v464 = vld [vmem:[%s6] sm:$0x1]
      %v465 = vld [vmem:[%s7] sm:$0x1]
      %v466 = vld [vmem:[%s8] sm:$0x1]
      %v467 = vld [vmem:[%s9] sm:$0xf]
      %v468 = vld [vmem:[%s9 + $0x4] sm:$0xf]
      %v469 = vld [vmem:[%s9 + $0x8] sm:$0xf]
      %v470 = vld [vmem:[%s9 + $0xc] sm:$0xf]
      %v471 = vld [vmem:[%s10] sm:$0x1]
      %v472 = vld [vmem:[%s11] sm:$0xf]
      %v473 = vld [vmem:[%s11 + $0x4] sm:$0xf]
      %v474 = vld [vmem:[%s11 + $0x8] sm:$0xf]
      %v475 = vld [vmem:[%s11 + $0xc] sm:$0xf]
      %v476 = vld [vmem:[%s11 + $0x10] sm:$0xf]
      %v477 = vld [vmem:[%s11 + $0x14] sm:$0xf]
      %v478 = vld [vmem:[%s11 + $0x18] sm:$0xf]
      %v479 = vld [vmem:[%s11 + $0x1c] sm:$0xf]
      %v480 = vld [vmem:[%s12] sm:$0x1]
      %v481 = vpack.c.bf16 %v451, %v451
      %v486 = vunpack.c.l.b16 %v454
      %v487 = vunpack.c.l.b16 %v455
      %v488 = vunpack.c.l.b16 %v456
      %v489 = vunpack.c.l.b16 %v457
      %v490 = vpack.c.b16 %v487, %v486
      %v491 = vpack.c.b16 %v489, %v488
      %vm494 = vcmask 261120
      %v496 = vsel %vm494, %v481, 0
      %498 = vmatpush.bf16.msra.mxu0 0
      %499 = vmatpush.bf16.msra.mxu0 0
      %500 = vmatpush.bf16.msra.mxu0 0
      %501 = vmatpush.bf16.msra.mxu0 0
      %502 = vmatpush.bf16.msra.mxu0 0
      %503 = vmatpush.bf16.msra.mxu0 0
      %504 = vmatpush.bf16.msra.mxu0 %v491
      %505 = vmatpush.bf16.msra.mxu0 %v490
      %506 = vmatmul.bf16.gmra.mxu0 %v496
      %v507 = vpop.f32.mrf.mxu0
      %v508 = vadd.f32 0.0, %v507
      %v509 = vpop.f32.mrf.mxu0
      %510 = vdwg.mxu0
      %512 = vrot.lane.b32.xlu0 %v508, 96
      %v513 = vpop.permute.xlu0 %512
      %vm514 = vcmask 64512
      %v515 = vsel %vm514, %v508, 0
      %v517 = vsel %vm514, %v513, 0
      %519 = vmatpush.xpose.msra.mxu0 0.0
      %520 = vmatpush.xpose.msra.mxu0 0.0
      %521 = vmatpush.xpose.msra.mxu0 0.0
      %522 = vmatpush.xpose.msra.mxu0 0.0
      %523 = vmatpush.xpose.msra.mxu0 0.0
      %524 = vmatpush.xpose.msra.mxu0 0.0
      %525 = vmatpush.xpose.msra.mxu0 0.0
      %526 = vmatpush.xpose.msra.mxu0 0.0
      %527 = vmatpush.xpose.msra.mxu0 0.0
      %528 = vmatpush.xpose.msra.mxu0 0.0
      %529 = vmatpush.xpose.msra.mxu0 0.0
      %530 = vmatpush.xpose.msra.mxu0 0.0
      %531 = vmatpush.xpose.msra.mxu0 0.0
      %532 = vmatpush.xpose.msra.mxu0 0.0
      %533 = vmatpush.xpose.msra.mxu0 0.0
      %534 = vmatpush.xpose.msra.mxu0 %v517
      %535 = vmatmul.f32.gmra.mxu0 %v515
      %v536 = vpop.f32.mrf.mxu0
      %v537 = vadd.f32 0.0, %v536
      %538 = vdwg.mxu0
      %v539 = vsel %vm453, 1, 0
      %v540 = vperm.slane %v539, 0
      %vm541 = vcmp.eq.s32.totalorder %v540, 1
      %v542 = vsel %vm541, %v537, -1e+20
      %v543 = vsel %vm514, %v542, -inf
      %544 = vmax.xlane.f32.xlu0 %v543
      %v545 = vpop.xlane.xlu0 %544
      %v546 = vsub.f32 %v542, %v545
      %v547 = vmul.f32 %v546, 1.442695
      %v548 = vpow.pop %v547
      %v549 = vsel %vm514, %v548, 0.0
      %550 = vadd.xlane.f32.xlu0 %v549
      %v551 = vpop.xlane.xlu0 %550
      %v552 = vrcp.pop %v551
      %v553 = vmul.f32 %v548, %v552
      %554 = vrot.lane.b32.xlu0 %v508, 64
      %v555 = vpop.permute.xlu0 %554
      %v558 = vsel %vm514, %v553, 0
      %560 = vmatpush.msra.mxu0 0.0
      %561 = vmatpush.msra.mxu0 0.0
      %562 = vmatpush.msra.mxu0 0.0
      %563 = vmatpush.msra.mxu0 0.0
      %564 = vmatpush.msra.mxu0 0.0
      %565 = vmatpush.msra.mxu0 0.0
      %566 = vmatpush.msra.mxu0 0.0
      %567 = vmatpush.msra.mxu0 0.0
      %568 = vmatpush.msra.mxu0 0.0
      %569 = vmatpush.msra.mxu0 0.0
      %570 = vmatpush.msra.mxu0 0.0
      %571 = vmatpush.msra.mxu0 0.0
      %572 = vmatpush.msra.mxu0 0.0
      %573 = vmatpush.msra.mxu0 0.0
      %574 = vmatpush.msra.mxu0 0.0
      %575 = vmatpush.msra.mxu0 %v555
      %576 = vmatmul.f32.gmra.mxu0 %v558
      %v577 = vpop.f32.mrf.mxu0
      %v578 = vadd.f32 0.0, %v577
      %579 = vdwg.mxu0
      %v581 = vsel %vm514, %v578, 0
      %583 = vmatpush.msra.mxu0 0.0
      %584 = vmatpush.msra.mxu0 0.0
      %585 = vmatpush.msra.mxu0 0.0
      %586 = vmatpush.msra.mxu0 0.0
      %587 = vmatpush.msra.mxu0 0.0
      %588 = vmatpush.msra.mxu0 0.0
      %589 = vmatpush.msra.mxu0 0.0
      %590 = vmatpush.msra.mxu0 0.0
      %591 = vmatpush.msra.mxu0 0.0
      %592 = vmatpush.msra.mxu0 0.0
      %593 = vmatpush.msra.mxu0 0.0
      %594 = vmatpush.msra.mxu0 0.0
      %595 = vmatpush.msra.mxu0 0.0
      %596 = vmatpush.msra.mxu0 0.0
      %597 = vmatpush.msra.mxu0 0.0
      %598 = vmatpush.msra.mxu0 %v458
      %599 = vmatmul.f32.gmra.mxu0 %v581
      %v600 = vpop.f32.mrf.mxu0
      %v601 = vadd.f32 0.0, %v600
      %602 = vdwg.mxu0
      %v604 = vperm.slane %v462, 0
      %v606 = vadd.f32 %v604, %v601
      %607 = vrot.lane.b32.xlu0 %v508, 120
      %v608 = vpop.permute.xlu0 %607
      %609 = vrot.lane.b32.xlu0 %v508, 88
      %v610 = vpop.permute.xlu0 %609
      %v611 = vsel %vm514, %v608, 0
      %v613 = vsel %vm514, %v610, 0
      %615 = vmatpush.xpose.msra.mxu0 0.0
      %616 = vmatpush.xpose.msra.mxu0 0.0
      %617 = vmatpush.xpose.msra.mxu0 0.0
      %618 = vmatpush.xpose.msra.mxu0 0.0
      %619 = vmatpush.xpose.msra.mxu0 0.0
      %620 = vmatpush.xpose.msra.mxu0 0.0
      %621 = vmatpush.xpose.msra.mxu0 0.0
      %622 = vmatpush.xpose.msra.mxu0 0.0
      %623 = vmatpush.xpose.msra.mxu0 0.0
      %624 = vmatpush.xpose.msra.mxu0 0.0
      %625 = vmatpush.xpose.msra.mxu0 0.0
      %626 = vmatpush.xpose.msra.mxu0 0.0
      %627 = vmatpush.xpose.msra.mxu0 0.0
      %628 = vmatpush.xpose.msra.mxu0 0.0
      %629 = vmatpush.xpose.msra.mxu0 0.0
      %630 = vmatpush.xpose.msra.mxu0 %v613
      %631 = vmatmul.f32.gmra.mxu0 %v611
      %v632 = vpop.f32.mrf.mxu0
      %v633 = vadd.f32 0.0, %v632
      %634 = vdwg.mxu0
      %v635 = vsel %vm541, %v633, -1e+20
      %v636 = vsel %vm514, %v635, -inf
      %637 = vmax.xlane.f32.xlu0 %v636
      %v638 = vpop.xlane.xlu0 %637
      %v639 = vsub.f32 %v635, %v638
      %v640 = vmul.f32 %v639, 1.442695
      %v641 = vpow.pop %v640
      %v642 = vsel %vm514, %v641, 0.0
      %643 = vadd.xlane.f32.xlu0 %v642
      %v644 = vpop.xlane.xlu0 %643
      %v645 = vrcp.pop %v644
      %v646 = vmul.f32 %v641, %v645
      %647 = vrot.lane.b32.xlu0 %v508, 56
      %v648 = vpop.permute.xlu0 %647
      %v651 = vsel %vm514, %v646, 0
      %653 = vmatpush.msra.mxu0 0.0
      %654 = vmatpush.msra.mxu0 0.0
      %655 = vmatpush.msra.mxu0 0.0
      %656 = vmatpush.msra.mxu0 0.0
      %657 = vmatpush.msra.mxu0 0.0
      %658 = vmatpush.msra.mxu0 0.0
      %659 = vmatpush.msra.mxu0 0.0
      %660 = vmatpush.msra.mxu0 0.0
      %661 = vmatpush.msra.mxu0 0.0
      %662 = vmatpush.msra.mxu0 0.0
      %663 = vmatpush.msra.mxu0 0.0
      %664 = vmatpush.msra.mxu0 0.0
      %665 = vmatpush.msra.mxu0 0.0
      %666 = vmatpush.msra.mxu0 0.0
      %667 = vmatpush.msra.mxu0 0.0
      %668 = vmatpush.msra.mxu0 %v648
      %669 = vmatmul.f32.gmra.mxu0 %v651
      %v670 = vpop.f32.mrf.mxu0
      %v671 = vadd.f32 0.0, %v670
      %672 = vdwg.mxu0
      %v674 = vsel %vm514, %v671, 0
      %676 = vmatpush.msra.mxu0 0.0
      %677 = vmatpush.msra.mxu0 0.0
      %678 = vmatpush.msra.mxu0 0.0
      %679 = vmatpush.msra.mxu0 0.0
      %680 = vmatpush.msra.mxu0 0.0
      %681 = vmatpush.msra.mxu0 0.0
      %682 = vmatpush.msra.mxu0 0.0
      %683 = vmatpush.msra.mxu0 0.0
      %684 = vmatpush.msra.mxu0 0.0
      %685 = vmatpush.msra.mxu0 0.0
      %686 = vmatpush.msra.mxu0 0.0
      %687 = vmatpush.msra.mxu0 0.0
      %688 = vmatpush.msra.mxu0 0.0
      %689 = vmatpush.msra.mxu0 0.0
      %690 = vmatpush.msra.mxu0 0.0
      %691 = vmatpush.msra.mxu0 %v459
      %692 = vmatmul.f32.gmra.mxu0 %v674
      %v693 = vpop.f32.mrf.mxu0
      %v694 = vadd.f32 0.0, %v693
      %695 = vdwg.mxu0
      %v696 = vadd.f32 %v606, %v694
      %697 = vrot.lane.b32.xlu0 %v508, 112
      %v698 = vpop.permute.xlu0 %697
      %699 = vrot.lane.b32.xlu0 %v508, 80
      %v700 = vpop.permute.xlu0 %699
      %v701 = vsel %vm514, %v698, 0
      %v703 = vsel %vm514, %v700, 0
      %705 = vmatpush.xpose.msra.mxu0 0.0
      %706 = vmatpush.xpose.msra.mxu0 0.0
      %707 = vmatpush.xpose.msra.mxu0 0.0
      %708 = vmatpush.xpose.msra.mxu0 0.0
      %709 = vmatpush.xpose.msra.mxu0 0.0
      %710 = vmatpush.xpose.msra.mxu0 0.0
      %711 = vmatpush.xpose.msra.mxu0 0.0
      %712 = vmatpush.xpose.msra.mxu0 0.0
      %713 = vmatpush.xpose.msra.mxu0 0.0
      %714 = vmatpush.xpose.msra.mxu0 0.0
      %715 = vmatpush.xpose.msra.mxu0 0.0
      %716 = vmatpush.xpose.msra.mxu0 0.0
      %717 = vmatpush.xpose.msra.mxu0 0.0
      %718 = vmatpush.xpose.msra.mxu0 0.0
      %719 = vmatpush.xpose.msra.mxu0 0.0
      %720 = vmatpush.xpose.msra.mxu0 %v703
      %721 = vmatmul.f32.gmra.mxu0 %v701
      %v722 = vpop.f32.mrf.mxu0
      %v723 = vadd.f32 0.0, %v722
      %724 = vdwg.mxu0
      %v725 = vsel %vm541, %v723, -1e+20
      %v726 = vsel %vm514, %v725, -inf
      %727 = vmax.xlane.f32.xlu0 %v726
      %v728 = vpop.xlane.xlu0 %727
      %v729 = vsub.f32 %v725, %v728
      %v730 = vmul.f32 %v729, 1.442695
      %v731 = vpow.pop %v730
      %v732 = vsel %vm514, %v731, 0.0
      %733 = vadd.xlane.f32.xlu0 %v732
      %v734 = vpop.xlane.xlu0 %733
      %v735 = vrcp.pop %v734
      %v736 = vmul.f32 %v731, %v735
      %737 = vrot.lane.b32.xlu0 %v508, 48
      %v738 = vpop.permute.xlu0 %737
      %v741 = vsel %vm514, %v736, 0
      %743 = vmatpush.msra.mxu0 0.0
      %744 = vmatpush.msra.mxu0 0.0
      %745 = vmatpush.msra.mxu0 0.0
      %746 = vmatpush.msra.mxu0 0.0
      %747 = vmatpush.msra.mxu0 0.0
      %748 = vmatpush.msra.mxu0 0.0
      %749 = vmatpush.msra.mxu0 0.0
      %750 = vmatpush.msra.mxu0 0.0
      %751 = vmatpush.msra.mxu0 0.0
      %752 = vmatpush.msra.mxu0 0.0
      %753 = vmatpush.msra.mxu0 0.0
      %754 = vmatpush.msra.mxu0 0.0
      %755 = vmatpush.msra.mxu0 0.0
      %756 = vmatpush.msra.mxu0 0.0
      %757 = vmatpush.msra.mxu0 0.0
      %758 = vmatpush.msra.mxu0 %v738
      %759 = vmatmul.f32.gmra.mxu0 %v741
      %v760 = vpop.f32.mrf.mxu0
      %v761 = vadd.f32 0.0, %v760
      %762 = vdwg.mxu0
      %v764 = vsel %vm514, %v761, 0
      %766 = vmatpush.msra.mxu0 0.0
      %767 = vmatpush.msra.mxu0 0.0
      %768 = vmatpush.msra.mxu0 0.0
      %769 = vmatpush.msra.mxu0 0.0
      %770 = vmatpush.msra.mxu0 0.0
      %771 = vmatpush.msra.mxu0 0.0
      %772 = vmatpush.msra.mxu0 0.0
      %773 = vmatpush.msra.mxu0 0.0
      %774 = vmatpush.msra.mxu0 0.0
      %775 = vmatpush.msra.mxu0 0.0
      %776 = vmatpush.msra.mxu0 0.0
      %777 = vmatpush.msra.mxu0 0.0
      %778 = vmatpush.msra.mxu0 0.0
      %779 = vmatpush.msra.mxu0 0.0
      %780 = vmatpush.msra.mxu0 0.0
      %781 = vmatpush.msra.mxu0 %v460
      %782 = vmatmul.f32.gmra.mxu0 %v764
      %v783 = vpop.f32.mrf.mxu0
      %v784 = vadd.f32 0.0, %v783
      %785 = vdwg.mxu0
      %v786 = vadd.f32 %v696, %v784
      %787 = vrot.lane.b32.xlu0 %v508, 104
      %v788 = vpop.permute.xlu0 %787
      %789 = vrot.lane.b32.xlu0 %v508, 72
      %v790 = vpop.permute.xlu0 %789
      %v791 = vsel %vm514, %v788, 0
      %v793 = vsel %vm514, %v790, 0
      %795 = vmatpush.xpose.msra.mxu0 0.0
      %796 = vmatpush.xpose.msra.mxu0 0.0
      %797 = vmatpush.xpose.msra.mxu0 0.0
      %798 = vmatpush.xpose.msra.mxu0 0.0
      %799 = vmatpush.xpose.msra.mxu0 0.0
      %800 = vmatpush.xpose.msra.mxu0 0.0
      %801 = vmatpush.xpose.msra.mxu0 0.0
      %802 = vmatpush.xpose.msra.mxu0 0.0
      %803 = vmatpush.xpose.msra.mxu0 0.0
      %804 = vmatpush.xpose.msra.mxu0 0.0
      %805 = vmatpush.xpose.msra.mxu0 0.0
      %806 = vmatpush.xpose.msra.mxu0 0.0
      %807 = vmatpush.xpose.msra.mxu0 0.0
      %808 = vmatpush.xpose.msra.mxu0 0.0
      %809 = vmatpush.xpose.msra.mxu0 0.0
      %810 = vmatpush.xpose.msra.mxu0 %v793
      %811 = vmatmul.f32.gmra.mxu0 %v791
      %v812 = vpop.f32.mrf.mxu0
      %v813 = vadd.f32 0.0, %v812
      %814 = vdwg.mxu0
      %v815 = vsel %vm541, %v813, -1e+20
      %v816 = vsel %vm514, %v815, -inf
      %817 = vmax.xlane.f32.xlu0 %v816
      %v818 = vpop.xlane.xlu0 %817
      %v819 = vsub.f32 %v815, %v818
      %v820 = vmul.f32 %v819, 1.442695
      %v821 = vpow.pop %v820
      %v822 = vsel %vm514, %v821, 0.0
      %823 = vadd.xlane.f32.xlu0 %v822
      %v824 = vpop.xlane.xlu0 %823
      %v825 = vrcp.pop %v824
      %v826 = vmul.f32 %v821, %v825
      %827 = vrot.lane.b32.xlu0 %v508, 40
      %v828 = vpop.permute.xlu0 %827
      %v831 = vsel %vm514, %v826, 0
      %833 = vmatpush.msra.mxu0 0.0
      %834 = vmatpush.msra.mxu0 0.0
      %835 = vmatpush.msra.mxu0 0.0
      %836 = vmatpush.msra.mxu0 0.0
      %837 = vmatpush.msra.mxu0 0.0
      %838 = vmatpush.msra.mxu0 0.0
      %839 = vmatpush.msra.mxu0 0.0
      %840 = vmatpush.msra.mxu0 0.0
      %841 = vmatpush.msra.mxu0 0.0
      %842 = vmatpush.msra.mxu0 0.0
      %843 = vmatpush.msra.mxu0 0.0
      %844 = vmatpush.msra.mxu0 0.0
      %845 = vmatpush.msra.mxu0 0.0
      %846 = vmatpush.msra.mxu0 0.0
      %847 = vmatpush.msra.mxu0 0.0
      %848 = vmatpush.msra.mxu0 %v828
      %849 = vmatmul.f32.gmra.mxu0 %v831
      %v850 = vpop.f32.mrf.mxu0
      %v851 = vadd.f32 0.0, %v850
      %852 = vdwg.mxu0
      %v854 = vsel %vm514, %v851, 0
      %856 = vmatpush.msra.mxu0 0.0
      %857 = vmatpush.msra.mxu0 0.0
      %858 = vmatpush.msra.mxu0 0.0
      %859 = vmatpush.msra.mxu0 0.0
      %860 = vmatpush.msra.mxu0 0.0
      %861 = vmatpush.msra.mxu0 0.0
      %862 = vmatpush.msra.mxu0 0.0
      %863 = vmatpush.msra.mxu0 0.0
      %864 = vmatpush.msra.mxu0 0.0
      %865 = vmatpush.msra.mxu0 0.0
      %866 = vmatpush.msra.mxu0 0.0
      %867 = vmatpush.msra.mxu0 0.0
      %868 = vmatpush.msra.mxu0 0.0
      %869 = vmatpush.msra.mxu0 0.0
      %870 = vmatpush.msra.mxu0 0.0
      %871 = vmatpush.msra.mxu0 %v461
      %872 = vmatmul.f32.gmra.mxu0 %v854
      %v873 = vpop.f32.mrf.mxu0
      %v874 = vadd.f32 0.0, %v873
      %875 = vdwg.mxu0
      %v876 = vadd.f32 %v786, %v874
      %v877 = vadd.f32 %v876, %v451
      %v878 = vsel %vm494, %v877, 0.0
      %879 = vadd.xlane.f32.xlu0 %v878
      %v880 = vpop.xlane.xlu0 %879
      %v881 = vrcp.pop 32.0
      %v882 = vmul.f32 32.0, %v881
      %v883 = vsub.f32 1.0, %v882
      %v884 = vmul.f32 %v881, %v883
      %v885 = vadd.f32 %v881, %v884
      %vm886 = vweird.f32 %v881
      %v887 = vsel %vm886, %v881, %v885
      %v888 = vmul.f32 %v880, %v887
      %v889 = vsub.f32 %v877, %v888
      %v890 = vmul.f32 %v889, %v889
      %v891 = vsel %vm494, %v890, 0.0
      %892 = vadd.xlane.f32.xlu0 %v891
      %v893 = vpop.xlane.xlu0 %892
      %v894 = vmul.f32 %v893, %v887
      %v895 = vadd.f32 %v894, 1e-05
      %v896 = vrsqrt.pop %v895
      %v897 = vmul.f32 %v896, %v895
      %v898 = vmul.f32 %v897, %v896
      %v899 = vmul.f32 0.5, %v898
      %v900 = vsub.f32 1.5, %v899
      %v901 = vmul.f32 %v896, %v900
      %vm902 = vweird.f32 %v895
      %vm903 = vweird.f32 %v896
      %vm904 = vmor %vm902, %vm903
      %v905 = vsel %vm904, %v896, %v901
      %v906 = vmul.f32 %v889, %v905
      %v908 = vperm.slane %v463, 0
      %v910 = vmul.f32 %v906, %v908
      %v912 = vperm.slane %v464, 0
      %v914 = vadd.f32 %v910, %v912
      %v915 = vpack.c.bf16 %v914, %v914
      %v917 = vperm.slane %v471, 0
      %v923 = vunpack.c.l.b16 %v467
      %v924 = vunpack.c.l.b16 %v468
      %v925 = vunpack.c.l.b16 %v469
      %v926 = vunpack.c.l.b16 %v470
      %v927 = vpack.c.b16 %v924, %v923
      %v928 = vpack.c.b16 %v926, %v925
      %v932 = vsel %vm494, %v915, 0
      %934 = vmatpush.bf16.msra.mxu0 0
      %935 = vmatpush.bf16.msra.mxu0 0
      %936 = vmatpush.bf16.msra.mxu0 0
      %937 = vmatpush.bf16.msra.mxu0 0
      %938 = vmatpush.bf16.msra.mxu0 0
      %939 = vmatpush.bf16.msra.mxu0 0
      %940 = vmatpush.bf16.msra.mxu0 %v928
      %941 = vmatpush.bf16.msra.mxu0 %v927
      %942 = vmatmul.bf16.gmra.mxu0 %v932
      %v943 = vpop.f32.mrf.mxu0
      %v944 = vadd.f32 %v917, %v943
      %v945 = vpop.f32.mrf.mxu0
      %946 = vdwg.mxu0
      %v947 = vmax.f32 %v944, 0.0
      %v948 = vpack.c.bf16 %v947, %v947
      %v950 = vperm.slane %v480, 0
      %v960 = vunpack.c.l.b16 %v472
      %v961 = vunpack.c.l.b16 %v473
      %v962 = vunpack.c.l.b16 %v474
      %v963 = vunpack.c.l.b16 %v475
      %v964 = vunpack.c.l.b16 %v476
      %v965 = vunpack.c.l.b16 %v477
      %v966 = vunpack.c.l.b16 %v478
      %v967 = vunpack.c.l.b16 %v479
      %v968 = vpack.c.b16 %v961, %v960
      %v969 = vpack.c.b16 %v963, %v962
      %v970 = vpack.c.b16 %v965, %v964
      %v971 = vpack.c.b16 %v967, %v966
      %vm976 = vcmask 523264
      %v978 = vsel %vm976, %v948, 0
      %980 = vmatpush.bf16.msra.mxu0 0
      %981 = vmatpush.bf16.msra.mxu0 0
      %982 = vmatpush.bf16.msra.mxu0 0
      %983 = vmatpush.bf16.msra.mxu0 0
      %984 = vmatpush.bf16.msra.mxu0 %v971
      %985 = vmatpush.bf16.msra.mxu0 %v970
      %986 = vmatpush.bf16.msra.mxu0 %v969
      %987 = vmatpush.bf16.msra.mxu0 %v968
      %988 = vmatmul.bf16.gmra.mxu0 %v978
      %v989 = vpop.f32.mrf.mxu0
      %v990 = vadd.f32 %v950, %v989
      %v991 = vpop.f32.mrf.mxu0
      %992 = vdwg.mxu0
      %v993 = vadd.f32 %v990, %v914
      %v994 = vsel %vm494, %v993, 0.0
      %995 = vadd.xlane.f32.xlu0 %v994
      %v996 = vpop.xlane.xlu0 %995
      %v997 = vmul.f32 %v996, %v887
      %v998 = vsub.f32 %v993, %v997
      %v999 = vmul.f32 %v998, %v998
      %v1000 = vsel %vm494, %v999, 0.0
      %1001 = vadd.xlane.f32.xlu0 %v1000
      %v1002 = vpop.xlane.xlu0 %1001
      %v1003 = vmul.f32 %v1002, %v887
      %v1004 = vadd.f32 %v1003, 1e-05
      %v1005 = vrsqrt.pop %v1004
      %v1006 = vmul.f32 %v1005, %v1004
      %v1007 = vmul.f32 %v1006, %v1005
      %v1008 = vmul.f32 0.5, %v1007
      %v1009 = vsub.f32 1.5, %v1008
      %v1010 = vmul.f32 %v1005, %v1009
      %vm1011 = vweird.f32 %v1004
      %vm1012 = vweird.f32 %v1005
      %vm1013 = vmor %vm1011, %vm1012
      %v1014 = vsel %vm1013, %v1005, %v1010
      %v1015 = vmul.f32 %v998, %v1014
      %v1017 = vperm.slane %v465, 0
      %v1019 = vmul.f32 %v1015, %v1017
      %v1021 = vperm.slane %v466, 0
      %v1023 = vadd.f32 %v1019, %v1021
      %s1024 = scalar_lea.vmem %s2, 16
      %v1025 = vld [vmem:[%s1024] sm:$0xf]
      %v1026 = vld [vmem:[%s1024 + $0x4] sm:$0xf]
      %v1027 = vld [vmem:[%s1024 + $0x8] sm:$0xf]
      %v1028 = vld [vmem:[%s1024 + $0xc] sm:$0xf]
      %s1029 = scalar_lea.vmem %s3, 32
      %v1030 = vld [vmem:[%s1029] sm:$0xff]
      %v1031 = vld [vmem:[%s1029 + $0x8] sm:$0xff]
      %v1032 = vld [vmem:[%s1029 + $0x10] sm:$0xff]
      %v1033 = vld [vmem:[%s1029 + $0x18] sm:$0xff]
      %s1034 = scalar_lea.vmem %s4, 1
      %v1035 = vld [vmem:[%s1034] sm:$0x1]
      %s1036 = scalar_lea.vmem %s5, 1
      %v1037 = vld [vmem:[%s1036] sm:$0x1]
      %s1038 = scalar_lea.vmem %s6, 1
      %v1039 = vld [vmem:[%s1038] sm:$0x1]
      %s1040 = scalar_lea.vmem %s7, 1
      %v1041 = vld [vmem:[%s1040] sm:$0x1]
      %s1042 = scalar_lea.vmem %s8, 1
      %v1043 = vld [vmem:[%s1042] sm:$0x1]
      %s1044 = scalar_lea.vmem %s9, 16
      %v1045 = vld [vmem:[%s1044] sm:$0xf]
      %v1046 = vld [vmem:[%s1044 + $0x4] sm:$0xf]
      %v1047 = vld [vmem:[%s1044 + $0x8] sm:$0xf]
      %v1048 = vld [vmem:[%s1044 + $0xc] sm:$0xf]
      %s1049 = scalar_lea.vmem %s10, 1
      %v1050 = vld [vmem:[%s1049] sm:$0x1]
      %s1051 = scalar_lea.vmem %s11, 32
      %v1052 = vld [vmem:[%s1051] sm:$0xf]
      %v1053 = vld [vmem:[%s1051 + $0x4] sm:$0xf]
      %v1054 = vld [vmem:[%s1051 + $0x8] sm:$0xf]
      %v1055 = vld [vmem:[%s1051 + $0xc] sm:$0xf]
      %v1056 = vld [vmem:[%s1051 + $0x10] sm:$0xf]
      %v1057 = vld [vmem:[%s1051 + $0x14] sm:$0xf]
      %v1058 = vld [vmem:[%s1051 + $0x18] sm:$0xf]
      %v1059 = vld [vmem:[%s1051 + $0x1c] sm:$0xf]
      %s1060 = scalar_lea.vmem %s12, 1
      %v1061 = vld [vmem:[%s1060] sm:$0x1]
      %v1062 = vpack.c.bf16 %v1023, %v1023
      %v1067 = vunpack.c.l.b16 %v1025
      %v1068 = vunpack.c.l.b16 %v1026
      %v1069 = vunpack.c.l.b16 %v1027
      %v1070 = vunpack.c.l.b16 %v1028
      %v1071 = vpack.c.b16 %v1068, %v1067
      %v1072 = vpack.c.b16 %v1070, %v1069
      %v1076 = vsel %vm494, %v1062, 0
      %1078 = vmatpush.bf16.msra.mxu0 0
      %1079 = vmatpush.bf16.msra.mxu0 0
      %1080 = vmatpush.bf16.msra.mxu0 0
      %1081 = vmatpush.bf16.msra.mxu0 0
      %1082 = vmatpush.bf16.msra.mxu0 0
      %1083 = vmatpush.bf16.msra.mxu0 0
      %1084 = vmatpush.bf16.msra.mxu0 %v1072
      %1085 = vmatpush.bf16.msra.mxu0 %v1071
      %1086 = vmatmul.bf16.gmra.mxu0 %v1076
      %v1087 = vpop.f32.mrf.mxu0
      %v1088 = vadd.f32 0.0, %v1087
      %v1089 = vpop.f32.mrf.mxu0
      %1090 = vdwg.mxu0
      %1092 = vrot.lane.b32.xlu0 %v1088, 96
      %v1093 = vpop.permute.xlu0 %1092
      %v1094 = vsel %vm514, %v1088, 0
      %v1096 = vsel %vm514, %v1093, 0
      %1098 = vmatpush.xpose.msra.mxu0 0.0
      %1099 = vmatpush.xpose.msra.mxu0 0.0
      %1100 = vmatpush.xpose.msra.mxu0 0.0
      %1101 = vmatpush.xpose.msra.mxu0 0.0
      %1102 = vmatpush.xpose.msra.mxu0 0.0
      %1103 = vmatpush.xpose.msra.mxu0 0.0
      %1104 = vmatpush.xpose.msra.mxu0 0.0
      %1105 = vmatpush.xpose.msra.mxu0 0.0
      %1106 = vmatpush.xpose.msra.mxu0 0.0
      %1107 = vmatpush.xpose.msra.mxu0 0.0
      %1108 = vmatpush.xpose.msra.mxu0 0.0
      %1109 = vmatpush.xpose.msra.mxu0 0.0
      %1110 = vmatpush.xpose.msra.mxu0 0.0
      %1111 = vmatpush.xpose.msra.mxu0 0.0
      %1112 = vmatpush.xpose.msra.mxu0 0.0
      %1113 = vmatpush.xpose.msra.mxu0 %v1096
      %1114 = vmatmul.f32.gmra.mxu0 %v1094
      %v1115 = vpop.f32.mrf.mxu0
      %v1116 = vadd.f32 0.0, %v1115
      %1117 = vdwg.mxu0
      %v1118 = vsel %vm541, %v1116, -1e+20
      %v1119 = vsel %vm514, %v1118, -inf
      %1120 = vmax.xlane.f32.xlu0 %v1119
      %v1121 = vpop.xlane.xlu0 %1120
      %v1122 = vsub.f32 %v1118, %v1121
      %v1123 = vmul.f32 %v1122, 1.442695
      %v1124 = vpow.pop %v1123
      %v1125 = vsel %vm514, %v1124, 0.0
      %1126 = vadd.xlane.f32.xlu0 %v1125
      %v1127 = vpop.xlane.xlu0 %1126
      %v1128 = vrcp.pop %v1127
      %v1129 = vmul.f32 %v1124, %v1128
      %1130 = vrot.lane.b32.xlu0 %v1088, 64
      %v1131 = vpop.permute.xlu0 %1130
      %v1134 = vsel %vm514, %v1129, 0
      %1136 = vmatpush.msra.mxu0 0.0
      %1137 = vmatpush.msra.mxu0 0.0
      %1138 = vmatpush.msra.mxu0 0.0
      %1139 = vmatpush.msra.mxu0 0.0
      %1140 = vmatpush.msra.mxu0 0.0
      %1141 = vmatpush.msra.mxu0 0.0
      %1142 = vmatpush.msra.mxu0 0.0
      %1143 = vmatpush.msra.mxu0 0.0
      %1144 = vmatpush.msra.mxu0 0.0
      %1145 = vmatpush.msra.mxu0 0.0
      %1146 = vmatpush.msra.mxu0 0.0
      %1147 = vmatpush.msra.mxu0 0.0
      %1148 = vmatpush.msra.mxu0 0.0
      %1149 = vmatpush.msra.mxu0 0.0
      %1150 = vmatpush.msra.mxu0 0.0
      %1151 = vmatpush.msra.mxu0 %v1131
      %1152 = vmatmul.f32.gmra.mxu0 %v1134
      %v1153 = vpop.f32.mrf.mxu0
      %v1154 = vadd.f32 0.0, %v1153
      %1155 = vdwg.mxu0
      %v1157 = vsel %vm514, %v1154, 0
      %1159 = vmatpush.msra.mxu0 0.0
      %1160 = vmatpush.msra.mxu0 0.0
      %1161 = vmatpush.msra.mxu0 0.0
      %1162 = vmatpush.msra.mxu0 0.0
      %1163 = vmatpush.msra.mxu0 0.0
      %1164 = vmatpush.msra.mxu0 0.0
      %1165 = vmatpush.msra.mxu0 0.0
      %1166 = vmatpush.msra.mxu0 0.0
      %1167 = vmatpush.msra.mxu0 0.0
      %1168 = vmatpush.msra.mxu0 0.0
      %1169 = vmatpush.msra.mxu0 0.0
      %1170 = vmatpush.msra.mxu0 0.0
      %1171 = vmatpush.msra.mxu0 0.0
      %1172 = vmatpush.msra.mxu0 0.0
      %1173 = vmatpush.msra.mxu0 0.0
      %1174 = vmatpush.msra.mxu0 %v1030
      %1175 = vmatmul.f32.gmra.mxu0 %v1157
      %v1176 = vpop.f32.mrf.mxu0
      %v1177 = vadd.f32 0.0, %v1176
      %1178 = vdwg.mxu0
      %v1180 = vperm.slane %v1035, 0
      %v1182 = vadd.f32 %v1180, %v1177
      %1183 = vrot.lane.b32.xlu0 %v1088, 120
      %v1184 = vpop.permute.xlu0 %1183
      %1185 = vrot.lane.b32.xlu0 %v1088, 88
      %v1186 = vpop.permute.xlu0 %1185
      %v1187 = vsel %vm514, %v1184, 0
      %v1189 = vsel %vm514, %v1186, 0
      %1191 = vmatpush.xpose.msra.mxu0 0.0
      %1192 = vmatpush.xpose.msra.mxu0 0.0
      %1193 = vmatpush.xpose.msra.mxu0 0.0
      %1194 = vmatpush.xpose.msra.mxu0 0.0
      %1195 = vmatpush.xpose.msra.mxu0 0.0
      %1196 = vmatpush.xpose.msra.mxu0 0.0
      %1197 = vmatpush.xpose.msra.mxu0 0.0
      %1198 = vmatpush.xpose.msra.mxu0 0.0
      %1199 = vmatpush.xpose.msra.mxu0 0.0
      %1200 = vmatpush.xpose.msra.mxu0 0.0
      %1201 = vmatpush.xpose.msra.mxu0 0.0
      %1202 = vmatpush.xpose.msra.mxu0 0.0
      %1203 = vmatpush.xpose.msra.mxu0 0.0
      %1204 = vmatpush.xpose.msra.mxu0 0.0
      %1205 = vmatpush.xpose.msra.mxu0 0.0
      %1206 = vmatpush.xpose.msra.mxu0 %v1189
      %1207 = vmatmul.f32.gmra.mxu0 %v1187
      %v1208 = vpop.f32.mrf.mxu0
      %v1209 = vadd.f32 0.0, %v1208
      %1210 = vdwg.mxu0
      %v1211 = vsel %vm541, %v1209, -1e+20
      %v1212 = vsel %vm514, %v1211, -inf
      %1213 = vmax.xlane.f32.xlu0 %v1212
      %v1214 = vpop.xlane.xlu0 %1213
      %v1215 = vsub.f32 %v1211, %v1214
      %v1216 = vmul.f32 %v1215, 1.442695
      %v1217 = vpow.pop %v1216
      %v1218 = vsel %vm514, %v1217, 0.0
      %1219 = vadd.xlane.f32.xlu0 %v1218
      %v1220 = vpop.xlane.xlu0 %1219
      %v1221 = vrcp.pop %v1220
      %v1222 = vmul.f32 %v1217, %v1221
      %1223 = vrot.lane.b32.xlu0 %v1088, 56
      %v1224 = vpop.permute.xlu0 %1223
      %v1227 = vsel %vm514, %v1222, 0
      %1229 = vmatpush.msra.mxu0 0.0
      %1230 = vmatpush.msra.mxu0 0.0
      %1231 = vmatpush.msra.mxu0 0.0
      %1232 = vmatpush.msra.mxu0 0.0
      %1233 = vmatpush.msra.mxu0 0.0
      %1234 = vmatpush.msra.mxu0 0.0
      %1235 = vmatpush.msra.mxu0 0.0
      %1236 = vmatpush.msra.mxu0 0.0
      %1237 = vmatpush.msra.mxu0 0.0
      %1238 = vmatpush.msra.mxu0 0.0
      %1239 = vmatpush.msra.mxu0 0.0
      %1240 = vmatpush.msra.mxu0 0.0
      %1241 = vmatpush.msra.mxu0 0.0
      %1242 = vmatpush.msra.mxu0 0.0
      %1243 = vmatpush.msra.mxu0 0.0
      %1244 = vmatpush.msra.mxu0 %v1224
      %1245 = vmatmul.f32.gmra.mxu0 %v1227
      %v1246 = vpop.f32.mrf.mxu0
      %v1247 = vadd.f32 0.0, %v1246
      %1248 = vdwg.mxu0
      %v1250 = vsel %vm514, %v1247, 0
      %1252 = vmatpush.msra.mxu0 0.0
      %1253 = vmatpush.msra.mxu0 0.0
      %1254 = vmatpush.msra.mxu0 0.0
      %1255 = vmatpush.msra.mxu0 0.0
      %1256 = vmatpush.msra.mxu0 0.0
      %1257 = vmatpush.msra.mxu0 0.0
      %1258 = vmatpush.msra.mxu0 0.0
      %1259 = vmatpush.msra.mxu0 0.0
      %1260 = vmatpush.msra.mxu0 0.0
      %1261 = vmatpush.msra.mxu0 0.0
      %1262 = vmatpush.msra.mxu0 0.0
      %1263 = vmatpush.msra.mxu0 0.0
      %1264 = vmatpush.msra.mxu0 0.0
      %1265 = vmatpush.msra.mxu0 0.0
      %1266 = vmatpush.msra.mxu0 0.0
      %1267 = vmatpush.msra.mxu0 %v1031
      %1268 = vmatmul.f32.gmra.mxu0 %v1250
      %v1269 = vpop.f32.mrf.mxu0
      %v1270 = vadd.f32 0.0, %v1269
      %1271 = vdwg.mxu0
      %v1272 = vadd.f32 %v1182, %v1270
      %1273 = vrot.lane.b32.xlu0 %v1088, 112
      %v1274 = vpop.permute.xlu0 %1273
      %1275 = vrot.lane.b32.xlu0 %v1088, 80
      %v1276 = vpop.permute.xlu0 %1275
      %v1277 = vsel %vm514, %v1274, 0
      %v1279 = vsel %vm514, %v1276, 0
      %1281 = vmatpush.xpose.msra.mxu0 0.0
      %1282 = vmatpush.xpose.msra.mxu0 0.0
      %1283 = vmatpush.xpose.msra.mxu0 0.0
      %1284 = vmatpush.xpose.msra.mxu0 0.0
      %1285 = vmatpush.xpose.msra.mxu0 0.0
      %1286 = vmatpush.xpose.msra.mxu0 0.0
      %1287 = vmatpush.xpose.msra.mxu0 0.0
      %1288 = vmatpush.xpose.msra.mxu0 0.0
      %1289 = vmatpush.xpose.msra.mxu0 0.0
      %1290 = vmatpush.xpose.msra.mxu0 0.0
      %1291 = vmatpush.xpose.msra.mxu0 0.0
      %1292 = vmatpush.xpose.msra.mxu0 0.0
      %1293 = vmatpush.xpose.msra.mxu0 0.0
      %1294 = vmatpush.xpose.msra.mxu0 0.0
      %1295 = vmatpush.xpose.msra.mxu0 0.0
      %1296 = vmatpush.xpose.msra.mxu0 %v1279
      %1297 = vmatmul.f32.gmra.mxu0 %v1277
      %v1298 = vpop.f32.mrf.mxu0
      %v1299 = vadd.f32 0.0, %v1298
      %1300 = vdwg.mxu0
      %v1301 = vsel %vm541, %v1299, -1e+20
      %v1302 = vsel %vm514, %v1301, -inf
      %1303 = vmax.xlane.f32.xlu0 %v1302
      %v1304 = vpop.xlane.xlu0 %1303
      %v1305 = vsub.f32 %v1301, %v1304
      %v1306 = vmul.f32 %v1305, 1.442695
      %v1307 = vpow.pop %v1306
      %v1308 = vsel %vm514, %v1307, 0.0
      %1309 = vadd.xlane.f32.xlu0 %v1308
      %v1310 = vpop.xlane.xlu0 %1309
      %v1311 = vrcp.pop %v1310
      %v1312 = vmul.f32 %v1307, %v1311
      %1313 = vrot.lane.b32.xlu0 %v1088, 48
      %v1314 = vpop.permute.xlu0 %1313
      %v1317 = vsel %vm514, %v1312, 0
      %1319 = vmatpush.msra.mxu0 0.0
      %1320 = vmatpush.msra.mxu0 0.0
      %1321 = vmatpush.msra.mxu0 0.0
      %1322 = vmatpush.msra.mxu0 0.0
      %1323 = vmatpush.msra.mxu0 0.0
      %1324 = vmatpush.msra.mxu0 0.0
      %1325 = vmatpush.msra.mxu0 0.0
      %1326 = vmatpush.msra.mxu0 0.0
      %1327 = vmatpush.msra.mxu0 0.0
      %1328 = vmatpush.msra.mxu0 0.0
      %1329 = vmatpush.msra.mxu0 0.0
      %1330 = vmatpush.msra.mxu0 0.0
      %1331 = vmatpush.msra.mxu0 0.0
      %1332 = vmatpush.msra.mxu0 0.0
      %1333 = vmatpush.msra.mxu0 0.0
      %1334 = vmatpush.msra.mxu0 %v1314
      %1335 = vmatmul.f32.gmra.mxu0 %v1317
      %v1336 = vpop.f32.mrf.mxu0
      %v1337 = vadd.f32 0.0, %v1336
      %1338 = vdwg.mxu0
      %v1340 = vsel %vm514, %v1337, 0
      %1342 = vmatpush.msra.mxu0 0.0
      %1343 = vmatpush.msra.mxu0 0.0
      %1344 = vmatpush.msra.mxu0 0.0
      %1345 = vmatpush.msra.mxu0 0.0
      %1346 = vmatpush.msra.mxu0 0.0
      %1347 = vmatpush.msra.mxu0 0.0
      %1348 = vmatpush.msra.mxu0 0.0
      %1349 = vmatpush.msra.mxu0 0.0
      %1350 = vmatpush.msra.mxu0 0.0
      %1351 = vmatpush.msra.mxu0 0.0
      %1352 = vmatpush.msra.mxu0 0.0
      %1353 = vmatpush.msra.mxu0 0.0
      %1354 = vmatpush.msra.mxu0 0.0
      %1355 = vmatpush.msra.mxu0 0.0
      %1356 = vmatpush.msra.mxu0 0.0
      %1357 = vmatpush.msra.mxu0 %v1032
      %1358 = vmatmul.f32.gmra.mxu0 %v1340
      %v1359 = vpop.f32.mrf.mxu0
      %v1360 = vadd.f32 0.0, %v1359
      %1361 = vdwg.mxu0
      %v1362 = vadd.f32 %v1272, %v1360
      %1363 = vrot.lane.b32.xlu0 %v1088, 104
      %v1364 = vpop.permute.xlu0 %1363
      %1365 = vrot.lane.b32.xlu0 %v1088, 72
      %v1366 = vpop.permute.xlu0 %1365
      %v1367 = vsel %vm514, %v1364, 0
      %v1369 = vsel %vm514, %v1366, 0
      %1371 = vmatpush.xpose.msra.mxu0 0.0
      %1372 = vmatpush.xpose.msra.mxu0 0.0
      %1373 = vmatpush.xpose.msra.mxu0 0.0
      %1374 = vmatpush.xpose.msra.mxu0 0.0
      %1375 = vmatpush.xpose.msra.mxu0 0.0
      %1376 = vmatpush.xpose.msra.mxu0 0.0
      %1377 = vmatpush.xpose.msra.mxu0 0.0
      %1378 = vmatpush.xpose.msra.mxu0 0.0
      %1379 = vmatpush.xpose.msra.mxu0 0.0
      %1380 = vmatpush.xpose.msra.mxu0 0.0
      %1381 = vmatpush.xpose.msra.mxu0 0.0
      %1382 = vmatpush.xpose.msra.mxu0 0.0
      %1383 = vmatpush.xpose.msra.mxu0 0.0
      %1384 = vmatpush.xpose.msra.mxu0 0.0
      %1385 = vmatpush.xpose.msra.mxu0 0.0
      %1386 = vmatpush.xpose.msra.mxu0 %v1369
      %1387 = vmatmul.f32.gmra.mxu0 %v1367
      %v1388 = vpop.f32.mrf.mxu0
      %v1389 = vadd.f32 0.0, %v1388
      %1390 = vdwg.mxu0
      %v1391 = vsel %vm541, %v1389, -1e+20
      %v1392 = vsel %vm514, %v1391, -inf
      %1393 = vmax.xlane.f32.xlu0 %v1392
      %v1394 = vpop.xlane.xlu0 %1393
      %v1395 = vsub.f32 %v1391, %v1394
      %v1396 = vmul.f32 %v1395, 1.442695
      %v1397 = vpow.pop %v1396
      %v1398 = vsel %vm514, %v1397, 0.0
      %1399 = vadd.xlane.f32.xlu0 %v1398
      %v1400 = vpop.xlane.xlu0 %1399
      %v1401 = vrcp.pop %v1400
      %v1402 = vmul.f32 %v1397, %v1401
      %1403 = vrot.lane.b32.xlu0 %v1088, 40
      %v1404 = vpop.permute.xlu0 %1403
      %v1407 = vsel %vm514, %v1402, 0
      %1409 = vmatpush.msra.mxu0 0.0
      %1410 = vmatpush.msra.mxu0 0.0
      %1411 = vmatpush.msra.mxu0 0.0
      %1412 = vmatpush.msra.mxu0 0.0
      %1413 = vmatpush.msra.mxu0 0.0
      %1414 = vmatpush.msra.mxu0 0.0
      %1415 = vmatpush.msra.mxu0 0.0
      %1416 = vmatpush.msra.mxu0 0.0
      %1417 = vmatpush.msra.mxu0 0.0
      %1418 = vmatpush.msra.mxu0 0.0
      %1419 = vmatpush.msra.mxu0 0.0
      %1420 = vmatpush.msra.mxu0 0.0
      %1421 = vmatpush.msra.mxu0 0.0
      %1422 = vmatpush.msra.mxu0 0.0
      %1423 = vmatpush.msra.mxu0 0.0
      %1424 = vmatpush.msra.mxu0 %v1404
      %1425 = vmatmul.f32.gmra.mxu0 %v1407
      %v1426 = vpop.f32.mrf.mxu0
      %v1427 = vadd.f32 0.0, %v1426
      %1428 = vdwg.mxu0
      %v1430 = vsel %vm514, %v1427, 0
      %1432 = vmatpush.msra.mxu0 0.0
      %1433 = vmatpush.msra.mxu0 0.0
      %1434 = vmatpush.msra.mxu0 0.0
      %1435 = vmatpush.msra.mxu0 0.0
      %1436 = vmatpush.msra.mxu0 0.0
      %1437 = vmatpush.msra.mxu0 0.0
      %1438 = vmatpush.msra.mxu0 0.0
      %1439 = vmatpush.msra.mxu0 0.0
      %1440 = vmatpush.msra.mxu0 0.0
      %1441 = vmatpush.msra.mxu0 0.0
      %1442 = vmatpush.msra.mxu0 0.0
      %1443 = vmatpush.msra.mxu0 0.0
      %1444 = vmatpush.msra.mxu0 0.0
      %1445 = vmatpush.msra.mxu0 0.0
      %1446 = vmatpush.msra.mxu0 0.0
      %1447 = vmatpush.msra.mxu0 %v1033
      %1448 = vmatmul.f32.gmra.mxu0 %v1430
      %v1449 = vpop.f32.mrf.mxu0
      %v1450 = vadd.f32 0.0, %v1449
      %1451 = vdwg.mxu0
      %v1452 = vadd.f32 %v1362, %v1450
      %v1453 = vadd.f32 %v1452, %v1023
      %v1454 = vsel %vm494, %v1453, 0.0
      %1455 = vadd.xlane.f32.xlu0 %v1454
      %v1456 = vpop.xlane.xlu0 %1455
      %v1457 = vmul.f32 %v1456, %v887
      %v1458 = vsub.f32 %v1453, %v1457
      %v1459 = vmul.f32 %v1458, %v1458
      %v1460 = vsel %vm494, %v1459, 0.0
      %1461 = vadd.xlane.f32.xlu0 %v1460
      %v1462 = vpop.xlane.xlu0 %1461
      %v1463 = vmul.f32 %v1462, %v887
      %v1464 = vadd.f32 %v1463, 1e-05
      %v1465 = vrsqrt.pop %v1464
      %v1466 = vmul.f32 %v1465, %v1464
      %v1467 = vmul.f32 %v1466, %v1465
      %v1468 = vmul.f32 0.5, %v1467
      %v1469 = vsub.f32 1.5, %v1468
      %v1470 = vmul.f32 %v1465, %v1469
      %vm1471 = vweird.f32 %v1464
      %vm1472 = vweird.f32 %v1465
      %vm1473 = vmor %vm1471, %vm1472
      %v1474 = vsel %vm1473, %v1465, %v1470
      %v1475 = vmul.f32 %v1458, %v1474
      %v1477 = vperm.slane %v1037, 0
      %v1479 = vmul.f32 %v1475, %v1477
      %v1481 = vperm.slane %v1039, 0
      %v1483 = vadd.f32 %v1479, %v1481
      %v1484 = vpack.c.bf16 %v1483, %v1483
      %v1486 = vperm.slane %v1050, 0
      %v1492 = vunpack.c.l.b16 %v1045
      %v1493 = vunpack.c.l.b16 %v1046
      %v1494 = vunpack.c.l.b16 %v1047
      %v1495 = vunpack.c.l.b16 %v1048
      %v1496 = vpack.c.b16 %v1493, %v1492
      %v1497 = vpack.c.b16 %v1495, %v1494
      %v1501 = vsel %vm494, %v1484, 0
      %1503 = vmatpush.bf16.msra.mxu0 0
      %1504 = vmatpush.bf16.msra.mxu0 0
      %1505 = vmatpush.bf16.msra.mxu0 0
      %1506 = vmatpush.bf16.msra.mxu0 0
      %1507 = vmatpush.bf16.msra.mxu0 0
      %1508 = vmatpush.bf16.msra.mxu0 0
      %1509 = vmatpush.bf16.msra.mxu0 %v1497
      %1510 = vmatpush.bf16.msra.mxu0 %v1496
      %1511 = vmatmul.bf16.gmra.mxu0 %v1501
      %v1512 = vpop.f32.mrf.mxu0
      %v1513 = vadd.f32 %v1486, %v1512
      %v1514 = vpop.f32.mrf.mxu0
      %1515 = vdwg.mxu0
      %v1516 = vmax.f32 %v1513, 0.0
      %v1517 = vpack.c.bf16 %v1516, %v1516
      %v1519 = vperm.slane %v1061, 0
      %v1529 = vunpack.c.l.b16 %v1052
      %v1530 = vunpack.c.l.b16 %v1053
      %v1531 = vunpack.c.l.b16 %v1054
      %v1532 = vunpack.c.l.b16 %v1055
      %v1533 = vunpack.c.l.b16 %v1056
      %v1534 = vunpack.c.l.b16 %v1057
      %v1535 = vunpack.c.l.b16 %v1058
      %v1536 = vunpack.c.l.b16 %v1059
      %v1537 = vpack.c.b16 %v1530, %v1529
      %v1538 = vpack.c.b16 %v1532, %v1531
      %v1539 = vpack.c.b16 %v1534, %v1533
      %v1540 = vpack.c.b16 %v1536, %v1535
      %v1546 = vsel %vm976, %v1517, 0
      %1548 = vmatpush.bf16.msra.mxu0 0
      %1549 = vmatpush.bf16.msra.mxu0 0
      %1550 = vmatpush.bf16.msra.mxu0 0
      %1551 = vmatpush.bf16.msra.mxu0 0
      %1552 = vmatpush.bf16.msra.mxu0 %v1540
      %1553 = vmatpush.bf16.msra.mxu0 %v1539
      %1554 = vmatpush.bf16.msra.mxu0 %v1538
      %1555 = vmatpush.bf16.msra.mxu0 %v1537
      %1556 = vmatmul.bf16.gmra.mxu0 %v1546
      %v1557 = vpop.f32.mrf.mxu0
      %v1558 = vadd.f32 %v1519, %v1557
      %v1559 = vpop.f32.mrf.mxu0
      %1560 = vdwg.mxu0
      %v1561 = vadd.f32 %v1558, %v1483
      %v1562 = vsel %vm494, %v1561, 0.0
      %1563 = vadd.xlane.f32.xlu0 %v1562
      %v1564 = vpop.xlane.xlu0 %1563
      %v1565 = vmul.f32 %v1564, %v887
      %v1566 = vsub.f32 %v1561, %v1565
      %v1567 = vmul.f32 %v1566, %v1566
      %v1568 = vsel %vm494, %v1567, 0.0
      %1569 = vadd.xlane.f32.xlu0 %v1568
      %v1570 = vpop.xlane.xlu0 %1569
      %v1571 = vmul.f32 %v1570, %v887
      %v1572 = vadd.f32 %v1571, 1e-05
      %v1573 = vrsqrt.pop %v1572
      %v1574 = vmul.f32 %v1573, %v1572
      %v1575 = vmul.f32 %v1574, %v1573
      %v1576 = vmul.f32 0.5, %v1575
      %v1577 = vsub.f32 1.5, %v1576
      %v1578 = vmul.f32 %v1573, %v1577
      %vm1579 = vweird.f32 %v1572
      %vm1580 = vweird.f32 %v1573
      %vm1581 = vmor %vm1579, %vm1580
      %v1582 = vsel %vm1581, %v1573, %v1578
      %v1583 = vmul.f32 %v1566, %v1582
      %v1585 = vperm.slane %v1041, 0
      %v1587 = vmul.f32 %v1583, %v1585
      %v1589 = vperm.slane %v1043, 0
      %v1591 = vadd.f32 %v1587, %v1589
      %1592 = vst.msk [vmem:[%s449] sm:$0xff] %vm494, %v1591
      %p1593 = scmp.lt.s32.totalorder %s24, 1
      %s1594 = scalar_select %p1593, %s24, 1
      %s1595 = smul.addr %s1594, 8
      %s1596 = scalar_lea.vmem %s13, %s1595
      // Predicated region
      $region73: #{transformer_forward.2} parent=71 // pred_check
        %p1597 = pneg %p325
      $region74: #{transformer_forward.2} parent=71 // pred_check_branch
        %1599 = sbr.rel (%p1597) target = $region76
      $region75: #{transformer_forward.2} parent=71 // pred_region
        _
      $region76: #{transformer_forward.2} parent=71 // pred_fallthru
        _
    $region72: #{transformer_forward.2} parent=5 // pred_fallthru
      _
    %p1600 = scmp.le.s32.totalorder 2, %s19
    // Predicated region
    $region77: #{transformer_forward.2} parent=5 // pred_check
      %p1601 = pneg %p1600
    $region78: #{transformer_forward.2} parent=5 // pred_check_branch
      %1603 = sbr.rel (%p1601) target = $region80
    $region79: #{transformer_forward.2} parent=5 // pred_region
      %s1604 = ssub.s32 %s19, 2
      // Predicated region
      $region81: #{transformer_forward.2} parent=79 // pred_check
        %p1605 = pneg %p331
      $region82: #{transformer_forward.2} parent=79 // pred_check_branch
        %1607 = sbr.rel (%p1605) target = $region84
      $region83: #{transformer_forward.2} parent=79 // pred_region
        %p1608 = scmp.lt.s32.totalorder %s25, 1
        %s1609 = scalar_select %p1608, %s25, 1
        %s1610 = smul.addr %s1609, 8
        %s1611 = scalar_lea.vmem %s13, %s1610
      $region84: #{transformer_forward.2} parent=79 // pred_fallthru
        _
    $region80: #{transformer_forward.2} parent=5 // pred_fallthru
      _
  $region6: #{transformer_forward.2} parent=0 // loop_footer
    %s23 = sadd.s32 1, %s19
  $region7: #{transformer_forward.2} parent=0 // loop_footer_branch
    %18 = sbr.rel target = $region3
  $region8: #{transformer_forward.2} parent=0 // loop_exit
    _

// kernel: transformer_forward.3
$region0: #{transformer_forward.3}
  #allocation0 [shape = 'u32[]', space=smem, size = 0x4, offset = 0x4, fixed_abs, tag = 'smem constant byte address 0x4 - core index']
  #allocation1 [shape = 'u32[72,128]{1,0:T(1,128)}', space=vmem, size = 0x9000, scoped, tag = 'internal scratch']
  %s0 = inlined_call_operand.vmem [shape: f32[2,8,32], index: 0, kind: input, shape index: {}]
  %s1 = inlined_call_operand.vmem [shape: f32[2,8,32], index: 1, kind: input, shape index: {}]
  %s2 = inlined_call_operand.vmem [shape: f32[2,1,8], index: 2, kind: input, shape index: {}]
  %s3 = inlined_call_operand.vmem [shape: bf16[2,32,96], index: 3, kind: input, shape index: {}]
  %s4 = inlined_call_operand.vmem [shape: f32[2,32,32], index: 4, kind: input, shape index: {}]
  %s5 = inlined_call_operand.vmem [shape: f32[2,1,32], index: 5, kind: input, shape index: {}]
  %s6 = inlined_call_operand.vmem [shape: f32[2,1,32], index: 6, kind: input, shape index: {}]
  %s7 = inlined_call_operand.vmem [shape: f32[2,1,32], index: 7, kind: input, shape index: {}]
  %s8 = inlined_call_operand.vmem [shape: bf16[2,32,32], index: 8, kind: input, shape index: {}]
  %s9 = inlined_call_operand.vmem [shape: bf16[2,32,64], index: 9, kind: input, shape index: {}]
  %s10 = inlined_call_operand.vmem [shape: f32[2,32,32], index: 10, kind: input, shape index: {}]
  %s11 = inlined_call_operand.vmem [shape: f32[2,1,32], index: 11, kind: input, shape index: {}]
  %s12 = inlined_call_operand.vmem [shape: f32[2,1,32], index: 12, kind: input, shape index: {}]
  %s13 = inlined_call_operand.vmem [shape: f32[2,1,32], index: 13, kind: input, shape index: {}]
  %s14 = inlined_call_operand.vmem [shape: f32[2,1,32], index: 14, kind: input, shape index: {}]
  %s15 = inlined_call_operand.vmem [shape: f32[2,1,32], index: 15, kind: input, shape index: {}]
  %s16 = inlined_call_operand.vmem [shape: bf16[2,32,64], index: 16, kind: input, shape index: {}]
  %s17 = inlined_call_operand.vmem [shape: f32[2,1,64], index: 17, kind: input, shape index: {}]
  %s18 = inlined_call_operand.vmem [shape: bf16[2,64,32], index: 18, kind: input, shape index: {}]
  %s19 = inlined_call_operand.vmem [shape: f32[2,1,32], index: 19, kind: input, shape index: {}]
  %s20 = inlined_call_operand.vmem [shape: bf16[32,128], index: 20, kind: input, shape index: {}]
  %s21 = inlined_call_operand.vmem [shape: f32[1,128], index: 21, kind: input, shape index: {}]
  %s22 = inlined_call_operand.hbm [shape: f32[2,8,128], index: 22, kind: output, shape index: {}]
  %s23 = sld [smem:[#allocation0]]
  $region121: #{transformer_forward.3} parent=0
    _
  %s25 = ssub.s32 1, %s23
  %s26 = scalar_select 0, %s25, %s23
  $region1: #{transformer_forward.3} parent=0
    #allocation2 [shape = 'u8[8192]{0}', space=vmem, size = 0x2000, scoped, tag = 'output window, operand 0']
    #allocation3 [shape = 's32[2]{0}', space=sflag, size = 0x8, scoped, tag = 'scoped memory for transformer_forward.3']
    %27 = vsyncpa [#allocation3], 0
    %s28 = scalar_lea.sflag [#allocation3], 1
    %29 = vsyncpa %s28, 0
    loop: start=0, step=1, limit=4
    $region2: #{transformer_forward.3} parent=1 // loop_pre_header
      _
    $region3: #{transformer_forward.3} parent=1 // loop_header
      %s31 = sphi 0, %s35
      %p32 = scmp.ge.s32.totalorder %s31, 4
      %s41 = sphi 0, %s43
      %s44 = sphi 0, %s41
      %s45 = sphi 0, %s44
      %s61 = sphi 0, %s45
      %s67 = sphi 0, %s69
      %s70 = sphi 0, %s67
      %s71 = sphi 0, %s70
      %s87 = sphi 0, %s71
      %s93 = sphi 0, %s95
      %s96 = sphi 0, %s93
      %s97 = sphi 0, %s96
      %s113 = sphi 0, %s97
      %s117 = sphi 0, %s117
      %s119 = sphi 0, %s117
      %s120 = sphi 0, %s119
      %s134 = sphi 0, %s120
      %s138 = sphi 0, %s138
      %s140 = sphi 0, %s138
      %s141 = sphi 0, %s140
      %s155 = sphi 0, %s141
      %s159 = sphi 0, %s159
      %s161 = sphi 0, %s159
      %s162 = sphi 0, %s161
      %s176 = sphi 0, %s162
      %s180 = sphi 0, %s180
      %s182 = sphi 0, %s180
      %s183 = sphi 0, %s182
      %s197 = sphi 0, %s183
      %s201 = sphi 0, %s201
      %s203 = sphi 0, %s201
      %s204 = sphi 0, %s203
      %s218 = sphi 0, %s204
      %s222 = sphi 0, %s222
      %s224 = sphi 0, %s222
      %s225 = sphi 0, %s224
      %s239 = sphi 0, %s225
      %s243 = sphi 0, %s243
      %s245 = sphi 0, %s243
      %s246 = sphi 0, %s245
      %s260 = sphi 0, %s246
      %s264 = sphi 0, %s264
      %s266 = sphi 0, %s264
      %s267 = sphi 0, %s266
      %s281 = sphi 0, %s267
      %s285 = sphi 0, %s285
      %s287 = sphi 0, %s285
      %s288 = sphi 0, %s287
      %s302 = sphi 0, %s288
      %s306 = sphi 0, %s306
      %s308 = sphi 0, %s306
      %s309 = sphi 0, %s308
      %s323 = sphi 0, %s309
      %s327 = sphi 0, %s327
      %s329 = sphi 0, %s327
      %s330 = sphi 0, %s329
      %s344 = sphi 0, %s330
      %s348 = sphi 0, %s348
      %s350 = sphi 0, %s348
      %s351 = sphi 0, %s350
      %s365 = sphi 0, %s351
      %s369 = sphi 0, %s369
      %s371 = sphi 0, %s369
      %s372 = sphi 0, %s371
      %s386 = sphi 0, %s372
      %s390 = sphi 0, %s390
      %s392 = sphi 0, %s390
      %s393 = sphi 0, %s392
      %s407 = sphi 0, %s393
      %s411 = sphi 0, %s411
      %s413 = sphi 0, %s411
      %s414 = sphi 0, %s413
      %s428 = sphi 0, %s414
      %s432 = sphi 0, %s432
      %s434 = sphi 0, %s432
      %s435 = sphi 0, %s434
      %s449 = sphi 0, %s435
      %s453 = sphi 0, %s453
      %s455 = sphi 0, %s453
      %s456 = sphi 0, %s455
      %s470 = sphi 0, %s456
      %s474 = sphi 0, %s474
      %s476 = sphi 0, %s474
      %s477 = sphi 0, %s476
      %s491 = sphi 0, %s477
      %s495 = sphi 0, %s495
      %s497 = sphi 0, %s495
      %s498 = sphi 0, %s497
      %s512 = sphi 0, %s498
      %s518 = sphi 0, %s520
      %s521 = sphi 0, %s518
      %s522 = sphi 0, %s521
      %s538 = sphi 0, %s522
    $region4: #{transformer_forward.3} parent=1 // loop_header_branch
      %34 = sbr.rel (%p32) target = $region8
    $region5: #{transformer_forward.3} parent=1 // loop_body
      %s36 = ssub.s32 %s31, 1
      %s37 = ssub.s32 %s31, 2
      %s38 = sadd.s32 %s31, 1
      %s39 = ssub.s32 %s31, %s38
      %p40 = scmp.eq.s32.totalorder %s39, 0
      %s42 = sadd.s32 %s41, 1
      %s43 = scalar_select %p40, %s41, %s42
      %p46 = pneg %p40
      %p47 = scmp.eq.s32.totalorder %s31, 1
      %p48 = por %p46, %p47
      %p49 = scmp.ne.s32.totalorder %s41, %s44
      %p50 = scmp.eq.s32.totalorder %s31, 0
      %p51 = por %p49, %p50
      %p52 = scmp.ne.s32.totalorder %s41, %s44
      %p53 = scmp.eq.s32.totalorder %s36, 1
      %p54 = por %p52, %p53
      %p55 = scmp.ne.s32.totalorder %s44, %s45
      %p56 = scmp.eq.s32.totalorder %s36, 0
      %p57 = por %p55, %p56
      %p58 = scmp.ne.s32.totalorder %s44, %s45
      %p59 = scmp.eq.s32.totalorder %s37, 1
      %p60 = por %p58, %p59
      %p62 = scmp.ne.s32.totalorder %s45, %s61
      %p63 = scmp.eq.s32.totalorder %s37, 0
      %p64 = por %p62, %p63
      %s65 = ssub.s32 %s31, %s38
      %p66 = scmp.eq.s32.totalorder %s65, 0
      %s68 = sadd.s32 %s67, 1
      %s69 = scalar_select %p66, %s67, %s68
      %p72 = pneg %p66
      %p73 = scmp.eq.s32.totalorder %s31, 1
      %p74 = por %p72, %p73
      %p75 = scmp.ne.s32.totalorder %s67, %s70
      %p76 = scmp.eq.s32.totalorder %s31, 0
      %p77 = por %p75, %p76
      %p78 = scmp.ne.s32.totalorder %s67, %s70
      %p79 = scmp.eq.s32.totalorder %s36, 1
      %p80 = por %p78, %p79
      %p81 = scmp.ne.s32.totalorder %s70, %s71
      %p82 = scmp.eq.s32.totalorder %s36, 0
      %p83 = por %p81, %p82
      %p84 = scmp.ne.s32.totalorder %s70, %s71
      %p85 = scmp.eq.s32.totalorder %s37, 1
      %p86 = por %p84, %p85
      %p88 = scmp.ne.s32.totalorder %s71, %s87
      %p89 = scmp.eq.s32.totalorder %s37, 0
      %p90 = por %p88, %p89
      %s91 = ssub.s32 %s31, %s38
      %p92 = scmp.eq.s32.totalorder %s91, 0
      %s94 = sadd.s32 %s93, 1
      %s95 = scalar_select %p92, %s93, %s94
      %p98 = pneg %p92
      %p99 = scmp.eq.s32.totalorder %s31, 1
      %p100 = por %p98, %p99
      %p101 = scmp.ne.s32.totalorder %s93, %s96
      %p102 = scmp.eq.s32.totalorder %s31, 0
      %p103 = por %p101, %p102
      %p104 = scmp.ne.s32.totalorder %s93, %s96
      %p105 = scmp.eq.s32.totalorder %s36, 1
      %p106 = por %p104, %p105
      %p107 = scmp.ne.s32.totalorder %s96, %s97
      %p108 = scmp.eq.s32.totalorder %s36, 0
      %p109 = por %p107, %p108
      %p110 = scmp.ne.s32.totalorder %s96, %s97
      %p111 = scmp.eq.s32.totalorder %s37, 1
      %p112 = por %p110, %p111
      %p114 = scmp.ne.s32.totalorder %s97, %s113
      %p115 = scmp.eq.s32.totalorder %s37, 0
      %p116 = por %p114, %p115
      %s118 = sadd.s32 %s117, 1
      %p121 = scmp.eq.s32.totalorder %s31, 1
      %p122 = scmp.ne.s32.totalorder %s117, %s119
      %p123 = scmp.eq.s32.totalorder %s31, 0
      %p124 = por %p122, %p123
      %p125 = scmp.ne.s32.totalorder %s117, %s119
      %p126 = scmp.eq.s32.totalorder %s36, 1
      %p127 = por %p125, %p126
      %p128 = scmp.ne.s32.totalorder %s119, %s120
      %p129 = scmp.eq.s32.totalorder %s36, 0
      %p130 = por %p128, %p129
      %p131 = scmp.ne.s32.totalorder %s119, %s120
      %p132 = scmp.eq.s32.totalorder %s37, 1
      %p133 = por %p131, %p132
      %p135 = scmp.ne.s32.totalorder %s120, %s134
      %p136 = scmp.eq.s32.totalorder %s37, 0
      %p137 = por %p135, %p136
      %s139 = sadd.s32 %s138, 1
      %p142 = scmp.eq.s32.totalorder %s31, 1
      %p143 = scmp.ne.s32.totalorder %s138, %s140
      %p144 = scmp.eq.s32.totalorder %s31, 0
      %p145 = por %p143, %p144
      %p146 = scmp.ne.s32.totalorder %s138, %s140
      %p147 = scmp.eq.s32.totalorder %s36, 1
      %p148 = por %p146, %p147
      %p149 = scmp.ne.s32.totalorder %s140, %s141
      %p150 = scmp.eq.s32.totalorder %s36, 0
      %p151 = por %p149, %p150
      %p152 = scmp.ne.s32.totalorder %s140, %s141
      %p153 = scmp.eq.s32.totalorder %s37, 1
      %p154 = por %p152, %p153
      %p156 = scmp.ne.s32.totalorder %s141, %s155
      %p157 = scmp.eq.s32.totalorder %s37, 0
      %p158 = por %p156, %p157
      %s160 = sadd.s32 %s159, 1
      %p163 = scmp.eq.s32.totalorder %s31, 1
      %p164 = scmp.ne.s32.totalorder %s159, %s161
      %p165 = scmp.eq.s32.totalorder %s31, 0
      %p166 = por %p164, %p165
      %p167 = scmp.ne.s32.totalorder %s159, %s161
      %p168 = scmp.eq.s32.totalorder %s36, 1
      %p169 = por %p167, %p168
      %p170 = scmp.ne.s32.totalorder %s161, %s162
      %p171 = scmp.eq.s32.totalorder %s36, 0
      %p172 = por %p170, %p171
      %p173 = scmp.ne.s32.totalorder %s161, %s162
      %p174 = scmp.eq.s32.totalorder %s37, 1
      %p175 = por %p173, %p174
      %p177 = scmp.ne.s32.totalorder %s162, %s176
      %p178 = scmp.eq.s32.totalorder %s37, 0
      %p179 = por %p177, %p178
      %s181 = sadd.s32 %s180, 1
      %p184 = scmp.eq.s32.totalorder %s31, 1
      %p185 = scmp.ne.s32.totalorder %s180, %s182
      %p186 = scmp.eq.s32.totalorder %s31, 0
      %p187 = por %p185, %p186
      %p188 = scmp.ne.s32.totalorder %s180, %s182
      %p189 = scmp.eq.s32.totalorder %s36, 1
      %p190 = por %p188, %p189
      %p191 = scmp.ne.s32.totalorder %s182, %s183
      %p192 = scmp.eq.s32.totalorder %s36, 0
      %p193 = por %p191, %p192
      %p194 = scmp.ne.s32.totalorder %s182, %s183
      %p195 = scmp.eq.s32.totalorder %s37, 1
      %p196 = por %p194, %p195
      %p198 = scmp.ne.s32.totalorder %s183, %s197
      %p199 = scmp.eq.s32.totalorder %s37, 0
      %p200 = por %p198, %p199
      %s202 = sadd.s32 %s201, 1
      %p205 = scmp.eq.s32.totalorder %s31, 1
      %p206 = scmp.ne.s32.totalorder %s201, %s203
      %p207 = scmp.eq.s32.totalorder %s31, 0
      %p208 = por %p206, %p207
      %p209 = scmp.ne.s32.totalorder %s201, %s203
      %p210 = scmp.eq.s32.totalorder %s36, 1
      %p211 = por %p209, %p210
      %p212 = scmp.ne.s32.totalorder %s203, %s204
      %p213 = scmp.eq.s32.totalorder %s36, 0
      %p214 = por %p212, %p213
      %p215 = scmp.ne.s32.totalorder %s203, %s204
      %p216 = scmp.eq.s32.totalorder %s37, 1
      %p217 = por %p215, %p216
      %p219 = scmp.ne.s32.totalorder %s204, %s218
      %p220 = scmp.eq.s32.totalorder %s37, 0
      %p221 = por %p219, %p220
      %s223 = sadd.s32 %s222, 1
      %p226 = scmp.eq.s32.totalorder %s31, 1
      %p227 = scmp.ne.s32.totalorder %s222, %s224
      %p228 = scmp.eq.s32.totalorder %s31, 0
      %p229 = por %p227, %p228
      %p230 = scmp.ne.s32.totalorder %s222, %s224
      %p231 = scmp.eq.s32.totalorder %s36, 1
      %p232 = por %p230, %p231
      %p233 = scmp.ne.s32.totalorder %s224, %s225
      %p234 = scmp.eq.s32.totalorder %s36, 0
      %p235 = por %p233, %p234
      %p236 = scmp.ne.s32.totalorder %s224, %s225
      %p237 = scmp.eq.s32.totalorder %s37, 1
      %p238 = por %p236, %p237
      %p240 = scmp.ne.s32.totalorder %s225, %s239
      %p241 = scmp.eq.s32.totalorder %s37, 0
      %p242 = por %p240, %p241
      %s244 = sadd.s32 %s243, 1
      %p247 = scmp.eq.s32.totalorder %s31, 1
      %p248 = scmp.ne.s32.totalorder %s243, %s245
      %p249 = scmp.eq.s32.totalorder %s31, 0
      %p250 = por %p248, %p249
      %p251 = scmp.ne.s32.totalorder %s243, %s245
      %p252 = scmp.eq.s32.totalorder %s36, 1
      %p253 = por %p251, %p252
      %p254 = scmp.ne.s32.totalorder %s245, %s246
      %p255 = scmp.eq.s32.totalorder %s36, 0
      %p256 = por %p254, %p255
      %p257 = scmp.ne.s32.totalorder %s245, %s246
      %p258 = scmp.eq.s32.totalorder %s37, 1
      %p259 = por %p257, %p258
      %p261 = scmp.ne.s32.totalorder %s246, %s260
      %p262 = scmp.eq.s32.totalorder %s37, 0
      %p263 = por %p261, %p262
      %s265 = sadd.s32 %s264, 1
      %p268 = scmp.eq.s32.totalorder %s31, 1
      %p269 = scmp.ne.s32.totalorder %s264, %s266
      %p270 = scmp.eq.s32.totalorder %s31, 0
      %p271 = por %p269, %p270
      %p272 = scmp.ne.s32.totalorder %s264, %s266
      %p273 = scmp.eq.s32.totalorder %s36, 1
      %p274 = por %p272, %p273
      %p275 = scmp.ne.s32.totalorder %s266, %s267
      %p276 = scmp.eq.s32.totalorder %s36, 0
      %p277 = por %p275, %p276
      %p278 = scmp.ne.s32.totalorder %s266, %s267
      %p279 = scmp.eq.s32.totalorder %s37, 1
      %p280 = por %p278, %p279
      %p282 = scmp.ne.s32.totalorder %s267, %s281
      %p283 = scmp.eq.s32.totalorder %s37, 0
      %p284 = por %p282, %p283
      %s286 = sadd.s32 %s285, 1
      %p289 = scmp.eq.s32.totalorder %s31, 1
      %p290 = scmp.ne.s32.totalorder %s285, %s287
      %p291 = scmp.eq.s32.totalorder %s31, 0
      %p292 = por %p290, %p291
      %p293 = scmp.ne.s32.totalorder %s285, %s287
      %p294 = scmp.eq.s32.totalorder %s36, 1
      %p295 = por %p293, %p294
      %p296 = scmp.ne.s32.totalorder %s287, %s288
      %p297 = scmp.eq.s32.totalorder %s36, 0
      %p298 = por %p296, %p297
      %p299 = scmp.ne.s32.totalorder %s287, %s288
      %p300 = scmp.eq.s32.totalorder %s37, 1
      %p301 = por %p299, %p300
      %p303 = scmp.ne.s32.totalorder %s288, %s302
      %p304 = scmp.eq.s32.totalorder %s37, 0
      %p305 = por %p303, %p304
      %s307 = sadd.s32 %s306, 1
      %p310 = scmp.eq.s32.totalorder %s31, 1
      %p311 = scmp.ne.s32.totalorder %s306, %s308
      %p312 = scmp.eq.s32.totalorder %s31, 0
      %p313 = por %p311, %p312
      %p314 = scmp.ne.s32.totalorder %s306, %s308
      %p315 = scmp.eq.s32.totalorder %s36, 1
      %p316 = por %p314, %p315
      %p317 = scmp.ne.s32.totalorder %s308, %s309
      %p318 = scmp.eq.s32.totalorder %s36, 0
      %p319 = por %p317, %p318
      %p320 = scmp.ne.s32.totalorder %s308, %s309
      %p321 = scmp.eq.s32.totalorder %s37, 1
      %p322 = por %p320, %p321
      %p324 = scmp.ne.s32.totalorder %s309, %s323
      %p325 = scmp.eq.s32.totalorder %s37, 0
      %p326 = por %p324, %p325
      %s328 = sadd.s32 %s327, 1
      %p331 = scmp.eq.s32.totalorder %s31, 1
      %p332 = scmp.ne.s32.totalorder %s327, %s329
      %p333 = scmp.eq.s32.totalorder %s31, 0
      %p334 = por %p332, %p333
      %p335 = scmp.ne.s32.totalorder %s327, %s329
      %p336 = scmp.eq.s32.totalorder %s36, 1
      %p337 = por %p335, %p336
      %p338 = scmp.ne.s32.totalorder %s329, %s330
      %p339 = scmp.eq.s32.totalorder %s36, 0
      %p340 = por %p338, %p339
      %p341 = scmp.ne.s32.totalorder %s329, %s330
      %p342 = scmp.eq.s32.totalorder %s37, 1
      %p343 = por %p341, %p342
      %p345 = scmp.ne.s32.totalorder %s330, %s344
      %p346 = scmp.eq.s32.totalorder %s37, 0
      %p347 = por %p345, %p346
      %s349 = sadd.s32 %s348, 1
      %p352 = scmp.eq.s32.totalorder %s31, 1
      %p353 = scmp.ne.s32.totalorder %s348, %s350
      %p354 = scmp.eq.s32.totalorder %s31, 0
      %p355 = por %p353, %p354
      %p356 = scmp.ne.s32.totalorder %s348, %s350
      %p357 = scmp.eq.s32.totalorder %s36, 1
      %p358 = por %p356, %p357
      %p359 = scmp.ne.s32.totalorder %s350, %s351
      %p360 = scmp.eq.s32.totalorder %s36, 0
      %p361 = por %p359, %p360
      %p362 = scmp.ne.s32.totalorder %s350, %s351
      %p363 = scmp.eq.s32.totalorder %s37, 1
      %p364 = por %p362, %p363
      %p366 = scmp.ne.s32.totalorder %s351, %s365
      %p367 = scmp.eq.s32.totalorder %s37, 0
      %p368 = por %p366, %p367
      %s370 = sadd.s32 %s369, 1
      %p373 = scmp.eq.s32.totalorder %s31, 1
      %p374 = scmp.ne.s32.totalorder %s369, %s371
      %p375 = scmp.eq.s32.totalorder %s31, 0
      %p376 = por %p374, %p375
      %p377 = scmp.ne.s32.totalorder %s369, %s371
      %p378 = scmp.eq.s32.totalorder %s36, 1
      %p379 = por %p377, %p378
      %p380 = scmp.ne.s32.totalorder %s371, %s372
      %p381 = scmp.eq.s32.totalorder %s36, 0
      %p382 = por %p380, %p381
      %p383 = scmp.ne.s32.totalorder %s371, %s372
      %p384 = scmp.eq.s32.totalorder %s37, 1
      %p385 = por %p383, %p384
      %p387 = scmp.ne.s32.totalorder %s372, %s386
      %p388 = scmp.eq.s32.totalorder %s37, 0
      %p389 = por %p387, %p388
      %s391 = sadd.s32 %s390, 1
      %p394 = scmp.eq.s32.totalorder %s31, 1
      %p395 = scmp.ne.s32.totalorder %s390, %s392
      %p396 = scmp.eq.s32.totalorder %s31, 0
      %p397 = por %p395, %p396
      %p398 = scmp.ne.s32.totalorder %s390, %s392
      %p399 = scmp.eq.s32.totalorder %s36, 1
      %p400 = por %p398, %p399
      %p401 = scmp.ne.s32.totalorder %s392, %s393
      %p402 = scmp.eq.s32.totalorder %s36, 0
      %p403 = por %p401, %p402
      %p404 = scmp.ne.s32.totalorder %s392, %s393
      %p405 = scmp.eq.s32.totalorder %s37, 1
      %p406 = por %p404, %p405
      %p408 = scmp.ne.s32.totalorder %s393, %s407
      %p409 = scmp.eq.s32.totalorder %s37, 0
      %p410 = por %p408, %p409
      %s412 = sadd.s32 %s411, 1
      %p415 = scmp.eq.s32.totalorder %s31, 1
      %p416 = scmp.ne.s32.totalorder %s411, %s413
      %p417 = scmp.eq.s32.totalorder %s31, 0
      %p418 = por %p416, %p417
      %p419 = scmp.ne.s32.totalorder %s411, %s413
      %p420 = scmp.eq.s32.totalorder %s36, 1
      %p421 = por %p419, %p420
      %p422 = scmp.ne.s32.totalorder %s413, %s414
      %p423 = scmp.eq.s32.totalorder %s36, 0
      %p424 = por %p422, %p423
      %p425 = scmp.ne.s32.totalorder %s413, %s414
      %p426 = scmp.eq.s32.totalorder %s37, 1
      %p427 = por %p425, %p426
      %p429 = scmp.ne.s32.totalorder %s414, %s428
      %p430 = scmp.eq.s32.totalorder %s37, 0
      %p431 = por %p429, %p430
      %s433 = sadd.s32 %s432, 1
      %p436 = scmp.eq.s32.totalorder %s31, 1
      %p437 = scmp.ne.s32.totalorder %s432, %s434
      %p438 = scmp.eq.s32.totalorder %s31, 0
      %p439 = por %p437, %p438
      %p440 = scmp.ne.s32.totalorder %s432, %s434
      %p441 = scmp.eq.s32.totalorder %s36, 1
      %p442 = por %p440, %p441
      %p443 = scmp.ne.s32.totalorder %s434, %s435
      %p444 = scmp.eq.s32.totalorder %s36, 0
      %p445 = por %p443, %p444
      %p446 = scmp.ne.s32.totalorder %s434, %s435
      %p447 = scmp.eq.s32.totalorder %s37, 1
      %p448 = por %p446, %p447
      %p450 = scmp.ne.s32.totalorder %s435, %s449
      %p451 = scmp.eq.s32.totalorder %s37, 0
      %p452 = por %p450, %p451
      %s454 = sadd.s32 %s453, 1
      %p457 = scmp.eq.s32.totalorder %s31, 1
      %p458 = scmp.ne.s32.totalorder %s453, %s455
      %p459 = scmp.eq.s32.totalorder %s31, 0
      %p460 = por %p458, %p459
      %p461 = scmp.ne.s32.totalorder %s453, %s455
      %p462 = scmp.eq.s32.totalorder %s36, 1
      %p463 = por %p461, %p462
      %p464 = scmp.ne.s32.totalorder %s455, %s456
      %p465 = scmp.eq.s32.totalorder %s36, 0
      %p466 = por %p464, %p465
      %p467 = scmp.ne.s32.totalorder %s455, %s456
      %p468 = scmp.eq.s32.totalorder %s37, 1
      %p469 = por %p467, %p468
      %p471 = scmp.ne.s32.totalorder %s456, %s470
      %p472 = scmp.eq.s32.totalorder %s37, 0
      %p473 = por %p471, %p472
      %s475 = sadd.s32 %s474, 1
      %p478 = scmp.eq.s32.totalorder %s31, 1
      %p479 = scmp.ne.s32.totalorder %s474, %s476
      %p480 = scmp.eq.s32.totalorder %s31, 0
      %p481 = por %p479, %p480
      %p482 = scmp.ne.s32.totalorder %s474, %s476
      %p483 = scmp.eq.s32.totalorder %s36, 1
      %p484 = por %p482, %p483
      %p485 = scmp.ne.s32.totalorder %s476, %s477
      %p486 = scmp.eq.s32.totalorder %s36, 0
      %p487 = por %p485, %p486
      %p488 = scmp.ne.s32.totalorder %s476, %s477
      %p489 = scmp.eq.s32.totalorder %s37, 1
      %p490 = por %p488, %p489
      %p492 = scmp.ne.s32.totalorder %s477, %s491
      %p493 = scmp.eq.s32.totalorder %s37, 0
      %p494 = por %p492, %p493
      %s496 = sadd.s32 %s495, 1
      %p499 = scmp.eq.s32.totalorder %s31, 1
      %p500 = scmp.ne.s32.totalorder %s495, %s497
      %p501 = scmp.eq.s32.totalorder %s31, 0
      %p502 = por %p500, %p501
      %p503 = scmp.ne.s32.totalorder %s495, %s497
      %p504 = scmp.eq.s32.totalorder %s36, 1
      %p505 = por %p503, %p504
      %p506 = scmp.ne.s32.totalorder %s497, %s498
      %p507 = scmp.eq.s32.totalorder %s36, 0
      %p508 = por %p506, %p507
      %p509 = scmp.ne.s32.totalorder %s497, %s498
      %p510 = scmp.eq.s32.totalorder %s37, 1
      %p511 = por %p509, %p510
      %p513 = scmp.ne.s32.totalorder %s498, %s512
      %p514 = scmp.eq.s32.totalorder %s37, 0
      %p515 = por %p513, %p514
      %s516 = ssub.s32 %s31, %s38
      %p517 = scmp.eq.s32.totalorder %s516, 0
      %s519 = sadd.s32 %s518, 1
      %s520 = scalar_select %p517, %s518, %s519
      %p523 = pneg %p517
      %p524 = scmp.eq.s32.totalorder %s31, 1
      %p525 = por %p523, %p524
      %p526 = scmp.ne.s32.totalorder %s518, %s521
      %p527 = scmp.eq.s32.totalorder %s31, 0
      %p528 = por %p526, %p527
      %p529 = scmp.ne.s32.totalorder %s518, %s521
      %p530 = scmp.eq.s32.totalorder %s36, 1
      %p531 = por %p529, %p530
      %p532 = scmp.ne.s32.totalorder %s521, %s522
      %p533 = scmp.eq.s32.totalorder %s36, 0
      %p534 = por %p532, %p533
      %p535 = scmp.ne.s32.totalorder %s521, %s522
      %p536 = scmp.eq.s32.totalorder %s37, 1
      %p537 = por %p535, %p536
      %p539 = scmp.ne.s32.totalorder %s522, %s538
      %p540 = scmp.eq.s32.totalorder %s37, 0
      %p541 = por %p539, %p540
      %p542 = scmp.le.s32.totalorder 1, %s31
      %p543 = scmp.lt.s32.totalorder %s31, 3
      %p544 = pnand %p542, %p543
      %p545 = pneg %p544
      // Predicated region
      $region9: #{transformer_forward.3} parent=5 // pred_check
        _
      $region10: #{transformer_forward.3} parent=5 // pred_check_branch
        %547 = sbr.rel (%p544) target = $region12
      $region11: #{transformer_forward.3} parent=5 // pred_region
        %s548 = ssub.s32 %s31, 1
        // Predicated region
        $region13: #{transformer_forward.3} parent=11 // pred_check
          %p549 = pneg %p130
        $region14: #{transformer_forward.3} parent=11 // pred_check_branch
          %551 = sbr.rel (%p549) target = $region16
        $region15: #{transformer_forward.3} parent=11 // pred_region
          _
        $region16: #{transformer_forward.3} parent=11 // pred_fallthru
          _
        // Predicated region
        $region17: #{transformer_forward.3} parent=11 // pred_check
          %p552 = pneg %p151
        $region18: #{transformer_forward.3} parent=11 // pred_check_branch
          %554 = sbr.rel (%p552) target = $region20
        $region19: #{transformer_forward.3} parent=11 // pred_region
          _
        $region20: #{transformer_forward.3} parent=11 // pred_fallthru
          _
        // Predicated region
        $region21: #{transformer_forward.3} parent=11 // pred_check
          %p555 = pneg %p172
        $region22: #{transformer_forward.3} parent=11 // pred_check_branch
          %557 = sbr.rel (%p555) target = $region24
        $region23: #{transformer_forward.3} parent=11 // pred_region
          _
        $region24: #{transformer_forward.3} parent=11 // pred_fallthru
          _
        // Predicated region
        $region25: #{transformer_forward.3} parent=11 // pred_check
          %p558 = pneg %p193
        $region26: #{transformer_forward.3} parent=11 // pred_check_branch
          %560 = sbr.rel (%p558) target = $region28
        $region27: #{transformer_forward.3} parent=11 // pred_region
          _
        $region28: #{transformer_forward.3} parent=11 // pred_fallthru
          _
        // Predicated region
        $region29: #{transformer_forward.3} parent=11 // pred_check
          %p561 = pneg %p214
        $region30: #{transformer_forward.3} parent=11 // pred_check_branch
          %563 = sbr.rel (%p561) target = $region32
        $region31: #{transformer_forward.3} parent=11 // pred_region
          _
        $region32: #{transformer_forward.3} parent=11 // pred_fallthru
          _
        // Predicated region
        $region33: #{transformer_forward.3} parent=11 // pred_check
          %p564 = pneg %p235
        $region34: #{transformer_forward.3} parent=11 // pred_check_branch
          %566 = sbr.rel (%p564) target = $region36
        $region35: #{transformer_forward.3} parent=11 // pred_region
          _
        $region36: #{transformer_forward.3} parent=11 // pred_fallthru
          _
        // Predicated region
        $region37: #{transformer_forward.3} parent=11 // pred_check
          %p567 = pneg %p256
        $region38: #{transformer_forward.3} parent=11 // pred_check_branch
          %569 = sbr.rel (%p567) target = $region40
        $region39: #{transformer_forward.3} parent=11 // pred_region
          _
        $region40: #{transformer_forward.3} parent=11 // pred_fallthru
          _
        // Predicated region
        $region41: #{transformer_forward.3} parent=11 // pred_check
          %p570 = pneg %p277
        $region42: #{transformer_forward.3} parent=11 // pred_check_branch
          %572 = sbr.rel (%p570) target = $region44
        $region43: #{transformer_forward.3} parent=11 // pred_region
          _
        $region44: #{transformer_forward.3} parent=11 // pred_fallthru
          _
        // Predicated region
        $region45: #{transformer_forward.3} parent=11 // pred_check
          %p573 = pneg %p298
        $region46: #{transformer_forward.3} parent=11 // pred_check_branch
          %575 = sbr.rel (%p573) target = $region48
        $region47: #{transformer_forward.3} parent=11 // pred_region
          _
        $region48: #{transformer_forward.3} parent=11 // pred_fallthru
          _
        // Predicated region
        $region49: #{transformer_forward.3} parent=11 // pred_check
          %p576 = pneg %p319
        $region50: #{transformer_forward.3} parent=11 // pred_check_branch
          %578 = sbr.rel (%p576) target = $region52
        $region51: #{transformer_forward.3} parent=11 // pred_region
          _
        $region52: #{transformer_forward.3} parent=11 // pred_fallthru
          _
        // Predicated region
        $region53: #{transformer_forward.3} parent=11 // pred_check
          %p579 = pneg %p340
        $region54: #{transformer_forward.3} parent=11 // pred_check_branch
          %581 = sbr.rel (%p579) target = $region56
        $region55: #{transformer_forward.3} parent=11 // pred_region
          _
        $region56: #{transformer_forward.3} parent=11 // pred_fallthru
          _
        // Predicated region
        $region57: #{transformer_forward.3} parent=11 // pred_check
          %p582 = pneg %p361
        $region58: #{transformer_forward.3} parent=11 // pred_check_branch
          %584 = sbr.rel (%p582) target = $region60
        $region59: #{transformer_forward.3} parent=11 // pred_region
          _
        $region60: #{transformer_forward.3} parent=11 // pred_fallthru
          _
        // Predicated region
        $region61: #{transformer_forward.3} parent=11 // pred_check
          %p585 = pneg %p382
        $region62: #{transformer_forward.3} parent=11 // pred_check_branch
          %587 = sbr.rel (%p585) target = $region64
        $region63: #{transformer_forward.3} parent=11 // pred_region
          _
        $region64: #{transformer_forward.3} parent=11 // pred_fallthru
          _
        // Predicated region
        $region65: #{transformer_forward.3} parent=11 // pred_check
          %p588 = pneg %p403
        $region66: #{transformer_forward.3} parent=11 // pred_check_branch
          %590 = sbr.rel (%p588) target = $region68
        $region67: #{transformer_forward.3} parent=11 // pred_region
          _
        $region68: #{transformer_forward.3} parent=11 // pred_fallthru
          _
        // Predicated region
        $region69: #{transformer_forward.3} parent=11 // pred_check
          %p591 = pneg %p424
        $region70: #{transformer_forward.3} parent=11 // pred_check_branch
          %593 = sbr.rel (%p591) target = $region72
        $region71: #{transformer_forward.3} parent=11 // pred_region
          _
        $region72: #{transformer_forward.3} parent=11 // pred_fallthru
          _
        // Predicated region
        $region73: #{transformer_forward.3} parent=11 // pred_check
          %p594 = pneg %p445
        $region74: #{transformer_forward.3} parent=11 // pred_check_branch
          %596 = sbr.rel (%p594) target = $region76
        $region75: #{transformer_forward.3} parent=11 // pred_region
          _
        $region76: #{transformer_forward.3} parent=11 // pred_fallthru
          _
        // Predicated region
        $region77: #{transformer_forward.3} parent=11 // pred_check
          %p597 = pneg %p466
        $region78: #{transformer_forward.3} parent=11 // pred_check_branch
          %599 = sbr.rel (%p597) target = $region80
        $region79: #{transformer_forward.3} parent=11 // pred_region
          _
        $region80: #{transformer_forward.3} parent=11 // pred_fallthru
          _
        // Predicated region
        $region81: #{transformer_forward.3} parent=11 // pred_check
          %p600 = pneg %p487
        $region82: #{transformer_forward.3} parent=11 // pred_check_branch
          %602 = sbr.rel (%p600) target = $region84
        $region83: #{transformer_forward.3} parent=11 // pred_region
          _
        $region84: #{transformer_forward.3} parent=11 // pred_fallthru
          _
        // Predicated region
        $region85: #{transformer_forward.3} parent=11 // pred_check
          %p603 = pneg %p508
        $region86: #{transformer_forward.3} parent=11 // pred_check_branch
          %605 = sbr.rel (%p603) target = $region88
        $region87: #{transformer_forward.3} parent=11 // pred_region
          _
        $region88: #{transformer_forward.3} parent=11 // pred_fallthru
          _
      $region12: #{transformer_forward.3} parent=5 // pred_fallthru
        _
      %p606 = scmp.lt.s32.totalorder %s31, 2
      // Predicated region
      $region89: #{transformer_forward.3} parent=5 // pred_check
        %p607 = pneg %p606
      $region90: #{transformer_forward.3} parent=5 // pred_check_branch
        %609 = sbr.rel (%p607) target = $region92
      $region91: #{transformer_forward.3} parent=5 // pred_region
        // Predicated region
        $region93: #{transformer_forward.3} parent=91 // pred_check
          %p610 = pneg %p51
        $region94: #{transformer_forward.3} parent=91 // pred_check_branch
          %612 = sbr.rel (%p610) target = $region96
        $region95: #{transformer_forward.3} parent=91 // pred_region
          %p613 = scmp.lt.s32.totalorder %s31, 1
          %s614 = scalar_select %p613, %s31, 1
          %s615 = smul.addr %s614, 8
          %s616 = scalar_lea.vmem %s0, %s615
        $region96: #{transformer_forward.3} parent=91 // pred_fallthru
          _
        // Predicated region
        $region97: #{transformer_forward.3} parent=91 // pred_check
          %p617 = pneg %p77
        $region98: #{transformer_forward.3} parent=91 // pred_check_branch
          %619 = sbr.rel (%p617) target = $region100
        $region99: #{transformer_forward.3} parent=91 // pred_region
          %p620 = scmp.lt.s32.totalorder %s31, 1
          %s621 = scalar_select %p620, %s31, 1
          %s622 = smul.addr %s621, 8
          %s623 = scalar_lea.vmem %s1, %s622
        $region100: #{transformer_forward.3} parent=91 // pred_fallthru
          _
        // Predicated region
        $region101: #{transformer_forward.3} parent=91 // pred_check
          %p624 = pneg %p103
        $region102: #{transformer_forward.3} parent=91 // pred_check_branch
          %626 = sbr.rel (%p624) target = $region104
        $region103: #{transformer_forward.3} parent=91 // pred_region
          %p627 = scmp.lt.s32.totalorder %s31, 1
          %s628 = scalar_select %p627, %s31, 1
          %s629 = scalar_lea.vmem %s2, %s628
        $region104: #{transformer_forward.3} parent=91 // pred_fallthru
          _
      $region92: #{transformer_forward.3} parent=5 // pred_fallthru
        _
      %p630 = scmp.le.s32.totalorder 1, %s31
      %p631 = scmp.lt.s32.totalorder %s31, 3
      %p632 = pnand %p630, %p631
      %p633 = pneg %p632
      // Predicated region
      $region105: #{transformer_forward.3} parent=5 // pred_check
        _
      $region106: #{transformer_forward.3} parent=5 // pred_check_branch
        %635 = sbr.rel (%p632) target = $region108
      $region107: #{transformer_forward.3} parent=5 // pred_region
        %s636 = ssub.s32 %s31, 1
        %p637 = scmp.lt.s32.totalorder %s36, 1
        %s638 = scalar_select %p637, %s36, 1
        %s639 = smul.addr %s638, 8
        %s640 = scalar_lea.vmem %s0, %s639
        %p641 = pneg %p57
        %p642 = pneg %p54
        %p643 = scmp.lt.s32.totalorder %s36, 1
        %s644 = scalar_select %p643, %s36, 1
        %s645 = smul.addr %s644, 8
        %s646 = scalar_lea.vmem %s1, %s645
        %p647 = pneg %p83
        %p648 = pneg %p80
        %p649 = scmp.lt.s32.totalorder %s36, 1
        %s650 = scalar_select %p649, %s36, 1
        %s651 = scalar_lea.vmem %s2, %s650
        %p652 = pneg %p109
        %p653 = pneg %p106
        %p654 = pneg %p130
        %p655 = pneg %p127
        %p656 = pneg %p151
        %p657 = pneg %p148
        %p658 = pneg %p172
        %p659 = pneg %p169
        %p660 = pneg %p193
        %p661 = pneg %p190
        %p662 = pneg %p214
        %p663 = pneg %p211
        %p664 = pneg %p235
        %p665 = pneg %p232
        %p666 = pneg %p256
        %p667 = pneg %p253
        %p668 = pneg %p277
        %p669 = pneg %p274
        %p670 = pneg %p298
        %p671 = pneg %p295
        %p672 = pneg %p319
        %p673 = pneg %p316
        %p674 = pneg %p340
        %p675 = pneg %p337
        %p676 = pneg %p361
        %p677 = pneg %p358
        %p678 = pneg %p382
        %p679 = pneg %p379
        %p680 = pneg %p403
        %p681 = pneg %p400
        %p682 = pneg %p424
        %p683 = pneg %p421
        %p684 = pneg %p445
        %p685 = pneg %p442
        %p686 = pneg %p466
        %p687 = pneg %p463
        %p688 = pneg %p487
        %p689 = pneg %p484
        %p690 = pneg %p508
        %p691 = pneg %p505
        %p692 = pneg %p534
        %p693 = pneg %p531
        %s694 = sand.u32 %s521, 1
        %s695 = scalar_lea.sflag [#allocation3], %s694
        %s696 = sand.u32 %s521, 1
        %s697 = smul.addr %s696, 8
        %s698 = scalar_lea.vmem [#allocation2], %s697
        %p699 = scmp.lt.s32.totalorder %s36, 1
        %s700 = scalar_select %p699, %s36, 1
        %s701 = smul.addr %s700, 8
        %s702 = scalar_lea.vmem %s0, %s701
        %p703 = scmp.lt.s32.totalorder %s36, 1
        %s704 = scalar_select %p703, %s36, 1
        %s705 = smul.addr %s704, 8
        %s706 = scalar_lea.vmem %s1, %s705
        %p707 = scmp.lt.s32.totalorder %s36, 1
        %s708 = scalar_select %p707, %s36, 1
        %s709 = scalar_lea.vmem %s2, %s708
        %v711 = vld [vmem:[%s702] sm:$0xff]
        %v712 = vld [vmem:[%s706] sm:$0xff]
        %v713 = vld [vmem:[%s709] sm:$0x1]
        %vm714 = vcmp.gt.f32.partialorder %v713, 0.0
        %v715 = vlaneseq
        %v716 = vshrl.u32 %v715, 7
        %v717 = vlaneseq
        %v718 = vand.u32 %v717, 127
        %vm719 = vcmp.le.s32.totalorder %v718, %v716
        %v720 = vld [vmem:[%s3] sm:$0xf]
        %v721 = vld [vmem:[%s3 + $0x4] sm:$0xf]
        %v722 = vld [vmem:[%s3 + $0x8] sm:$0xf]
        %v723 = vld [vmem:[%s3 + $0xc] sm:$0xf]
        %v724 = vld [vmem:[%s4] sm:$0xff]
        %v725 = vld [vmem:[%s4 + $0x8] sm:$0xff]
        %v726 = vld [vmem:[%s4 + $0x10] sm:$0xff]
        %v727 = vld [vmem:[%s4 + $0x18] sm:$0xff]
        %v728 = vld [vmem:[%s5] sm:$0x1]
        %v729 = vld [vmem:[%s6] sm:$0x1]
        %v730 = vld [vmem:[%s7] sm:$0x1]
        %v731 = vpack.c.bf16 %v711, %v711
        %v736 = vunpack.c.l.b16 %v720
        %v737 = vunpack.c.l.b16 %v721
        %v738 = vunpack.c.l.b16 %v722
        %v739 = vunpack.c.l.b16 %v723
        %v740 = vpack.c.b16 %v737, %v736
        %v741 = vpack.c.b16 %v739, %v738
        %vm744 = vcmask 261120
        %v746 = vsel %vm744, %v731, 0
        %748 = vmatpush.bf16.msra.mxu0 0
        %749 = vmatpush.bf16.msra.mxu0 0
        %750 = vmatpush.bf16.msra.mxu0 0
        %751 = vmatpush.bf16.msra.mxu0 0
        %752 = vmatpush.bf16.msra.mxu0 0
        %753 = vmatpush.bf16.msra.mxu0 0
        %754 = vmatpush.bf16.msra.mxu0 %v741
        %755 = vmatpush.bf16.msra.mxu0 %v740
        %756 = vmatmul.bf16.gmra.mxu0 %v746
        %v757 = vpop.f32.mrf.mxu0
        %v758 = vadd.f32 0.0, %v757
        %v759 = vpop.f32.mrf.mxu0
        %760 = vdwg.mxu0
        %762 = vrot.lane.b32.xlu0 %v758, 96
        %v763 = vpop.permute.xlu0 %762
        %vm764 = vcmask 64512
        %v765 = vsel %vm764, %v758, 0
        %v767 = vsel %vm764, %v763, 0
        %769 = vmatpush.xpose.msra.mxu0 0.0
        %770 = vmatpush.xpose.msra.mxu0 0.0
        %771 = vmatpush.xpose.msra.mxu0 0.0
        %772 = vmatpush.xpose.msra.mxu0 0.0
        %773 = vmatpush.xpose.msra.mxu0 0.0
        %774 = vmatpush.xpose.msra.mxu0 0.0
        %775 = vmatpush.xpose.msra.mxu0 0.0
        %776 = vmatpush.xpose.msra.mxu0 0.0
        %777 = vmatpush.xpose.msra.mxu0 0.0
        %778 = vmatpush.xpose.msra.mxu0 0.0
        %779 = vmatpush.xpose.msra.mxu0 0.0
        %780 = vmatpush.xpose.msra.mxu0 0.0
        %781 = vmatpush.xpose.msra.mxu0 0.0
        %782 = vmatpush.xpose.msra.mxu0 0.0
        %783 = vmatpush.xpose.msra.mxu0 0.0
        %784 = vmatpush.xpose.msra.mxu0 %v767
        %785 = vmatmul.f32.gmra.mxu0 %v765
        %v786 = vpop.f32.mrf.mxu0
        %v787 = vadd.f32 0.0, %v786
        %788 = vdwg.mxu0
        %v789 = vsel %vm719, %v787, -1e+20
        %v790 = vsel %vm764, %v789, -inf
        %791 = vmax.xlane.f32.xlu0 %v790
        %v792 = vpop.xlane.xlu0 %791
        %v793 = vsub.f32 %v789, %v792
        %v794 = vmul.f32 %v793, 1.442695
        %v795 = vpow.pop %v794
        %v796 = vsel %vm764, %v795, 0.0
        %797 = vadd.xlane.f32.xlu0 %v796
        %v798 = vpop.xlane.xlu0 %797
        %v799 = vrcp.pop %v798
        %v800 = vmul.f32 %v795, %v799
        %801 = vrot.lane.b32.xlu0 %v758, 64
        %v802 = vpop.permute.xlu0 %801
        %v805 = vsel %vm764, %v800, 0
        %807 = vmatpush.msra.mxu0 0.0
        %808 = vmatpush.msra.mxu0 0.0
        %809 = vmatpush.msra.mxu0 0.0
        %810 = vmatpush.msra.mxu0 0.0
        %811 = vmatpush.msra.mxu0 0.0
        %812 = vmatpush.msra.mxu0 0.0
        %813 = vmatpush.msra.mxu0 0.0
        %814 = vmatpush.msra.mxu0 0.0
        %815 = vmatpush.msra.mxu0 0.0
        %816 = vmatpush.msra.mxu0 0.0
        %817 = vmatpush.msra.mxu0 0.0
        %818 = vmatpush.msra.mxu0 0.0
        %819 = vmatpush.msra.mxu0 0.0
        %820 = vmatpush.msra.mxu0 0.0
        %821 = vmatpush.msra.mxu0 0.0
        %822 = vmatpush.msra.mxu0 %v802
        %823 = vmatmul.f32.gmra.mxu0 %v805
        %v824 = vpop.f32.mrf.mxu0
        %v825 = vadd.f32 0.0, %v824
        %826 = vdwg.mxu0
        %v828 = vsel %vm764, %v825, 0
        %830 = vmatpush.msra.mxu0 0.0
        %831 = vmatpush.msra.mxu0 0.0
        %832 = vmatpush.msra.mxu0 0.0
        %833 = vmatpush.msra.mxu0 0.0
        %834 = vmatpush.msra.mxu0 0.0
        %835 = vmatpush.msra.mxu0 0.0
        %836 = vmatpush.msra.mxu0 0.0
        %837 = vmatpush.msra.mxu0 0.0
        %838 = vmatpush.msra.mxu0 0.0
        %839 = vmatpush.msra.mxu0 0.0
        %840 = vmatpush.msra.mxu0 0.0
        %841 = vmatpush.msra.mxu0 0.0
        %842 = vmatpush.msra.mxu0 0.0
        %843 = vmatpush.msra.mxu0 0.0
        %844 = vmatpush.msra.mxu0 0.0
        %845 = vmatpush.msra.mxu0 %v724
        %846 = vmatmul.f32.gmra.mxu0 %v828
        %v847 = vpop.f32.mrf.mxu0
        %v848 = vadd.f32 0.0, %v847
        %849 = vdwg.mxu0
        %v851 = vperm.slane %v728, 0
        %v853 = vadd.f32 %v851, %v848
        %854 = vrot.lane.b32.xlu0 %v758, 120
        %v855 = vpop.permute.xlu0 %854
        %856 = vrot.lane.b32.xlu0 %v758, 88
        %v857 = vpop.permute.xlu0 %856
        %v858 = vsel %vm764, %v855, 0
        %v860 = vsel %vm764, %v857, 0
        %862 = vmatpush.xpose.msra.mxu0 0.0
        %863 = vmatpush.xpose.msra.mxu0 0.0
        %864 = vmatpush.xpose.msra.mxu0 0.0
        %865 = vmatpush.xpose.msra.mxu0 0.0
        %866 = vmatpush.xpose.msra.mxu0 0.0
        %867 = vmatpush.xpose.msra.mxu0 0.0
        %868 = vmatpush.xpose.msra.mxu0 0.0
        %869 = vmatpush.xpose.msra.mxu0 0.0
        %870 = vmatpush.xpose.msra.mxu0 0.0
        %871 = vmatpush.xpose.msra.mxu0 0.0
        %872 = vmatpush.xpose.msra.mxu0 0.0
        %873 = vmatpush.xpose.msra.mxu0 0.0
        %874 = vmatpush.xpose.msra.mxu0 0.0
        %875 = vmatpush.xpose.msra.mxu0 0.0
        %876 = vmatpush.xpose.msra.mxu0 0.0
        %877 = vmatpush.xpose.msra.mxu0 %v860
        %878 = vmatmul.f32.gmra.mxu0 %v858
        %v879 = vpop.f32.mrf.mxu0
        %v880 = vadd.f32 0.0, %v879
        %881 = vdwg.mxu0
        %v882 = vsel %vm719, %v880, -1e+20
        %v883 = vsel %vm764, %v882, -inf
        %884 = vmax.xlane.f32.xlu0 %v883
        %v885 = vpop.xlane.xlu0 %884
        %v886 = vsub.f32 %v882, %v885
        %v887 = vmul.f32 %v886, 1.442695
        %v888 = vpow.pop %v887
        %v889 = vsel %vm764, %v888, 0.0
        %890 = vadd.xlane.f32.xlu0 %v889
        %v891 = vpop.xlane.xlu0 %890
        %v892 = vrcp.pop %v891
        %v893 = vmul.f32 %v888, %v892
        %894 = vrot.lane.b32.xlu0 %v758, 56
        %v895 = vpop.permute.xlu0 %894
        %v898 = vsel %vm764, %v893, 0
        %900 = vmatpush.msra.mxu0 0.0
        %901 = vmatpush.msra.mxu0 0.0
        %902 = vmatpush.msra.mxu0 0.0
        %903 = vmatpush.msra.mxu0 0.0
        %904 = vmatpush.msra.mxu0 0.0
        %905 = vmatpush.msra.mxu0 0.0
        %906 = vmatpush.msra.mxu0 0.0
        %907 = vmatpush.msra.mxu0 0.0
        %908 = vmatpush.msra.mxu0 0.0
        %909 = vmatpush.msra.mxu0 0.0
        %910 = vmatpush.msra.mxu0 0.0
        %911 = vmatpush.msra.mxu0 0.0
        %912 = vmatpush.msra.mxu0 0.0
        %913 = vmatpush.msra.mxu0 0.0
        %914 = vmatpush.msra.mxu0 0.0
        %915 = vmatpush.msra.mxu0 %v895
        %916 = vmatmul.f32.gmra.mxu0 %v898
        %v917 = vpop.f32.mrf.mxu0
        %v918 = vadd.f32 0.0, %v917
        %919 = vdwg.mxu0
        %v921 = vsel %vm764, %v918, 0
        %923 = vmatpush.msra.mxu0 0.0
        %924 = vmatpush.msra.mxu0 0.0
        %925 = vmatpush.msra.mxu0 0.0
        %926 = vmatpush.msra.mxu0 0.0
        %927 = vmatpush.msra.mxu0 0.0
        %928 = vmatpush.msra.mxu0 0.0
        %929 = vmatpush.msra.mxu0 0.0
        %930 = vmatpush.msra.mxu0 0.0
        %931 = vmatpush.msra.mxu0 0.0
        %932 = vmatpush.msra.mxu0 0.0
        %933 = vmatpush.msra.mxu0 0.0
        %934 = vmatpush.msra.mxu0 0.0
        %935 = vmatpush.msra.mxu0 0.0
        %936 = vmatpush.msra.mxu0 0.0
        %937 = vmatpush.msra.mxu0 0.0
        %938 = vmatpush.msra.mxu0 %v725
        %939 = vmatmul.f32.gmra.mxu0 %v921
        %v940 = vpop.f32.mrf.mxu0
        %v941 = vadd.f32 0.0, %v940
        %942 = vdwg.mxu0
        %v943 = vadd.f32 %v853, %v941
        %944 = vrot.lane.b32.xlu0 %v758, 112
        %v945 = vpop.permute.xlu0 %944
        %946 = vrot.lane.b32.xlu0 %v758, 80
        %v947 = vpop.permute.xlu0 %946
        %v948 = vsel %vm764, %v945, 0
        %v950 = vsel %vm764, %v947, 0
        %952 = vmatpush.xpose.msra.mxu0 0.0
        %953 = vmatpush.xpose.msra.mxu0 0.0
        %954 = vmatpush.xpose.msra.mxu0 0.0
        %955 = vmatpush.xpose.msra.mxu0 0.0
        %956 = vmatpush.xpose.msra.mxu0 0.0
        %957 = vmatpush.xpose.msra.mxu0 0.0
        %958 = vmatpush.xpose.msra.mxu0 0.0
        %959 = vmatpush.xpose.msra.mxu0 0.0
        %960 = vmatpush.xpose.msra.mxu0 0.0
        %961 = vmatpush.xpose.msra.mxu0 0.0
        %962 = vmatpush.xpose.msra.mxu0 0.0
        %963 = vmatpush.xpose.msra.mxu0 0.0
        %964 = vmatpush.xpose.msra.mxu0 0.0
        %965 = vmatpush.xpose.msra.mxu0 0.0
        %966 = vmatpush.xpose.msra.mxu0 0.0
        %967 = vmatpush.xpose.msra.mxu0 %v950
        %968 = vmatmul.f32.gmra.mxu0 %v948
        %v969 = vpop.f32.mrf.mxu0
        %v970 = vadd.f32 0.0, %v969
        %971 = vdwg.mxu0
        %v972 = vsel %vm719, %v970, -1e+20
        %v973 = vsel %vm764, %v972, -inf
        %974 = vmax.xlane.f32.xlu0 %v973
        %v975 = vpop.xlane.xlu0 %974
        %v976 = vsub.f32 %v972, %v975
        %v977 = vmul.f32 %v976, 1.442695
        %v978 = vpow.pop %v977
        %v979 = vsel %vm764, %v978, 0.0
        %980 = vadd.xlane.f32.xlu0 %v979
        %v981 = vpop.xlane.xlu0 %980
        %v982 = vrcp.pop %v981
        %v983 = vmul.f32 %v978, %v982
        %984 = vrot.lane.b32.xlu0 %v758, 48
        %v985 = vpop.permute.xlu0 %984
        %v988 = vsel %vm764, %v983, 0
        %990 = vmatpush.msra.mxu0 0.0
        %991 = vmatpush.msra.mxu0 0.0
        %992 = vmatpush.msra.mxu0 0.0
        %993 = vmatpush.msra.mxu0 0.0
        %994 = vmatpush.msra.mxu0 0.0
        %995 = vmatpush.msra.mxu0 0.0
        %996 = vmatpush.msra.mxu0 0.0
        %997 = vmatpush.msra.mxu0 0.0
        %998 = vmatpush.msra.mxu0 0.0
        %999 = vmatpush.msra.mxu0 0.0
        %1000 = vmatpush.msra.mxu0 0.0
        %1001 = vmatpush.msra.mxu0 0.0
        %1002 = vmatpush.msra.mxu0 0.0
        %1003 = vmatpush.msra.mxu0 0.0
        %1004 = vmatpush.msra.mxu0 0.0
        %1005 = vmatpush.msra.mxu0 %v985
        %1006 = vmatmul.f32.gmra.mxu0 %v988
        %v1007 = vpop.f32.mrf.mxu0
        %v1008 = vadd.f32 0.0, %v1007
        %1009 = vdwg.mxu0
        %v1011 = vsel %vm764, %v1008, 0
        %1013 = vmatpush.msra.mxu0 0.0
        %1014 = vmatpush.msra.mxu0 0.0
        %1015 = vmatpush.msra.mxu0 0.0
        %1016 = vmatpush.msra.mxu0 0.0
        %1017 = vmatpush.msra.mxu0 0.0
        %1018 = vmatpush.msra.mxu0 0.0
        %1019 = vmatpush.msra.mxu0 0.0
        %1020 = vmatpush.msra.mxu0 0.0
        %1021 = vmatpush.msra.mxu0 0.0
        %1022 = vmatpush.msra.mxu0 0.0
        %1023 = vmatpush.msra.mxu0 0.0
        %1024 = vmatpush.msra.mxu0 0.0
        %1025 = vmatpush.msra.mxu0 0.0
        %1026 = vmatpush.msra.mxu0 0.0
        %1027 = vmatpush.msra.mxu0 0.0
        %1028 = vmatpush.msra.mxu0 %v726
        %1029 = vmatmul.f32.gmra.mxu0 %v1011
        %v1030 = vpop.f32.mrf.mxu0
        %v1031 = vadd.f32 0.0, %v1030
        %1032 = vdwg.mxu0
        %v1033 = vadd.f32 %v943, %v1031
        %1034 = vrot.lane.b32.xlu0 %v758, 104
        %v1035 = vpop.permute.xlu0 %1034
        %1036 = vrot.lane.b32.xlu0 %v758, 72
        %v1037 = vpop.permute.xlu0 %1036
        %v1038 = vsel %vm764, %v1035, 0
        %v1040 = vsel %vm764, %v1037, 0
        %1042 = vmatpush.xpose.msra.mxu0 0.0
        %1043 = vmatpush.xpose.msra.mxu0 0.0
        %1044 = vmatpush.xpose.msra.mxu0 0.0
        %1045 = vmatpush.xpose.msra.mxu0 0.0
        %1046 = vmatpush.xpose.msra.mxu0 0.0
        %1047 = vmatpush.xpose.msra.mxu0 0.0
        %1048 = vmatpush.xpose.msra.mxu0 0.0
        %1049 = vmatpush.xpose.msra.mxu0 0.0
        %1050 = vmatpush.xpose.msra.mxu0 0.0
        %1051 = vmatpush.xpose.msra.mxu0 0.0
        %1052 = vmatpush.xpose.msra.mxu0 0.0
        %1053 = vmatpush.xpose.msra.mxu0 0.0
        %1054 = vmatpush.xpose.msra.mxu0 0.0
        %1055 = vmatpush.xpose.msra.mxu0 0.0
        %1056 = vmatpush.xpose.msra.mxu0 0.0
        %1057 = vmatpush.xpose.msra.mxu0 %v1040
        %1058 = vmatmul.f32.gmra.mxu0 %v1038
        %v1059 = vpop.f32.mrf.mxu0
        %v1060 = vadd.f32 0.0, %v1059
        %1061 = vdwg.mxu0
        %v1062 = vsel %vm719, %v1060, -1e+20
        %v1063 = vsel %vm764, %v1062, -inf
        %1064 = vmax.xlane.f32.xlu0 %v1063
        %v1065 = vpop.xlane.xlu0 %1064
        %v1066 = vsub.f32 %v1062, %v1065
        %v1067 = vmul.f32 %v1066, 1.442695
        %v1068 = vpow.pop %v1067
        %v1069 = vsel %vm764, %v1068, 0.0
        %1070 = vadd.xlane.f32.xlu0 %v1069
        %v1071 = vpop.xlane.xlu0 %1070
        %v1072 = vrcp.pop %v1071
        %v1073 = vmul.f32 %v1068, %v1072
        %1074 = vrot.lane.b32.xlu0 %v758, 40
        %v1075 = vpop.permute.xlu0 %1074
        %v1078 = vsel %vm764, %v1073, 0
        %1080 = vmatpush.msra.mxu0 0.0
        %1081 = vmatpush.msra.mxu0 0.0
        %1082 = vmatpush.msra.mxu0 0.0
        %1083 = vmatpush.msra.mxu0 0.0
        %1084 = vmatpush.msra.mxu0 0.0
        %1085 = vmatpush.msra.mxu0 0.0
        %1086 = vmatpush.msra.mxu0 0.0
        %1087 = vmatpush.msra.mxu0 0.0
        %1088 = vmatpush.msra.mxu0 0.0
        %1089 = vmatpush.msra.mxu0 0.0
        %1090 = vmatpush.msra.mxu0 0.0
        %1091 = vmatpush.msra.mxu0 0.0
        %1092 = vmatpush.msra.mxu0 0.0
        %1093 = vmatpush.msra.mxu0 0.0
        %1094 = vmatpush.msra.mxu0 0.0
        %1095 = vmatpush.msra.mxu0 %v1075
        %1096 = vmatmul.f32.gmra.mxu0 %v1078
        %v1097 = vpop.f32.mrf.mxu0
        %v1098 = vadd.f32 0.0, %v1097
        %1099 = vdwg.mxu0
        %v1101 = vsel %vm764, %v1098, 0
        %1103 = vmatpush.msra.mxu0 0.0
        %1104 = vmatpush.msra.mxu0 0.0
        %1105 = vmatpush.msra.mxu0 0.0
        %1106 = vmatpush.msra.mxu0 0.0
        %1107 = vmatpush.msra.mxu0 0.0
        %1108 = vmatpush.msra.mxu0 0.0
        %1109 = vmatpush.msra.mxu0 0.0
        %1110 = vmatpush.msra.mxu0 0.0
        %1111 = vmatpush.msra.mxu0 0.0
        %1112 = vmatpush.msra.mxu0 0.0
        %1113 = vmatpush.msra.mxu0 0.0
        %1114 = vmatpush.msra.mxu0 0.0
        %1115 = vmatpush.msra.mxu0 0.0
        %1116 = vmatpush.msra.mxu0 0.0
        %1117 = vmatpush.msra.mxu0 0.0
        %1118 = vmatpush.msra.mxu0 %v727
        %1119 = vmatmul.f32.gmra.mxu0 %v1101
        %v1120 = vpop.f32.mrf.mxu0
        %v1121 = vadd.f32 0.0, %v1120
        %1122 = vdwg.mxu0
        %v1123 = vadd.f32 %v1033, %v1121
        %v1124 = vadd.f32 %v1123, %v711
        %v1125 = vsel %vm744, %v1124, 0.0
        %1126 = vadd.xlane.f32.xlu0 %v1125
        %v1127 = vpop.xlane.xlu0 %1126
        %v1128 = vrcp.pop 32.0
        %v1129 = vmul.f32 32.0, %v1128
        %v1130 = vsub.f32 1.0, %v1129
        %v1131 = vmul.f32 %v1128, %v1130
        %v1132 = vadd.f32 %v1128, %v1131
        %vm1133 = vweird.f32 %v1128
        %v1134 = vsel %vm1133, %v1128, %v1132
        %v1135 = vmul.f32 %v1127, %v1134
        %v1136 = vsub.f32 %v1124, %v1135
        %v1137 = vmul.f32 %v1136, %v1136
        %v1138 = vsel %vm744, %v1137, 0.0
        %1139 = vadd.xlane.f32.xlu0 %v1138
        %v1140 = vpop.xlane.xlu0 %1139
        %v1141 = vmul.f32 %v1140, %v1134
        %v1142 = vadd.f32 %v1141, 1e-05
        %v1143 = vrsqrt.pop %v1142
        %v1144 = vmul.f32 %v1143, %v1142
        %v1145 = vmul.f32 %v1144, %v1143
        %v1146 = vmul.f32 0.5, %v1145
        %v1147 = vsub.f32 1.5, %v1146
        %v1148 = vmul.f32 %v1143, %v1147
        %vm1149 = vweird.f32 %v1142
        %vm1150 = vweird.f32 %v1143
        %vm1151 = vmor %vm1149, %vm1150
        %v1152 = vsel %vm1151, %v1143, %v1148
        %v1153 = vmul.f32 %v1136, %v1152
        %v1155 = vperm.slane %v729, 0
        %v1157 = vmul.f32 %v1153, %v1155
        %v1159 = vperm.slane %v730, 0
        %v1161 = vadd.f32 %v1157, %v1159
        %v1162 = vld [vmem:[%s8] sm:$0xf]
        %v1163 = vld [vmem:[%s8 + $0x4] sm:$0xf]
        %v1164 = vld [vmem:[%s8 + $0x8] sm:$0xf]
        %v1165 = vld [vmem:[%s8 + $0xc] sm:$0xf]
        %v1166 = vld [vmem:[%s9] sm:$0xf]
        %v1167 = vld [vmem:[%s9 + $0x4] sm:$0xf]
        %v1168 = vld [vmem:[%s9 + $0x8] sm:$0xf]
        %v1169 = vld [vmem:[%s9 + $0xc] sm:$0xf]
        %v1170 = vld [vmem:[%s10] sm:$0xff]
        %v1171 = vld [vmem:[%s10 + $0x8] sm:$0xff]
        %v1172 = vld [vmem:[%s10 + $0x10] sm:$0xff]
        %v1173 = vld [vmem:[%s10 + $0x18] sm:$0xff]
        %v1174 = vld [vmem:[%s11] sm:$0x1]
        %v1175 = vld [vmem:[%s12] sm:$0x1]
        %v1176 = vld [vmem:[%s13] sm:$0x1]
        %v1177 = vld [vmem:[%s14] sm:$0x1]
        %v1178 = vld [vmem:[%s15] sm:$0x1]
        %v1179 = vld [vmem:[%s16] sm:$0xf]
        %v1180 = vld [vmem:[%s16 + $0x4] sm:$0xf]
        %v1181 = vld [vmem:[%s16 + $0x8] sm:$0xf]
        %v1182 = vld [vmem:[%s16 + $0xc] sm:$0xf]
        %v1183 = vld [vmem:[%s17] sm:$0x1]
        %v1184 = vld [vmem:[%s18] sm:$0xf]
        %v1185 = vld [vmem:[%s18 + $0x4] sm:$0xf]
        %v1186 = vld [vmem:[%s18 + $0x8] sm:$0xf]
        %v1187 = vld [vmem:[%s18 + $0xc] sm:$0xf]
        %v1188 = vld [vmem:[%s18 + $0x10] sm:$0xf]
        %v1189 = vld [vmem:[%s18 + $0x14] sm:$0xf]
        %v1190 = vld [vmem:[%s18 + $0x18] sm:$0xf]
        %v1191 = vld [vmem:[%s18 + $0x1c] sm:$0xf]
        %v1192 = vld [vmem:[%s19] sm:$0x1]
        %v1193 = vpack.c.bf16 %v1161, %v1161
        %v1198 = vunpack.c.l.b16 %v1162
        %v1199 = vunpack.c.l.b16 %v1163
        %v1200 = vunpack.c.l.b16 %v1164
        %v1201 = vunpack.c.l.b16 %v1165
        %v1202 = vpack.c.b16 %v1199, %v1198
        %v1203 = vpack.c.b16 %v1201, %v1200
        %v1207 = vsel %vm744, %v1193, 0
        %1209 = vmatpush.bf16.msra.mxu0 0
        %1210 = vmatpush.bf16.msra.mxu0 0
        %1211 = vmatpush.bf16.msra.mxu0 0
        %1212 = vmatpush.bf16.msra.mxu0 0
        %1213 = vmatpush.bf16.msra.mxu0 0
        %1214 = vmatpush.bf16.msra.mxu0 0
        %1215 = vmatpush.bf16.msra.mxu0 %v1203
        %1216 = vmatpush.bf16.msra.mxu0 %v1202
        %1217 = vmatmul.bf16.gmra.mxu0 %v1207
        %v1218 = vpop.f32.mrf.mxu0
        %v1219 = vadd.f32 0.0, %v1218
        %v1220 = vpop.f32.mrf.mxu0
        %1221 = vdwg.mxu0
        %v1222 = vpack.c.bf16 %v712, %v712
        %v1227 = vunpack.c.l.b16 %v1166
        %v1228 = vunpack.c.l.b16 %v1167
        %v1229 = vunpack.c.l.b16 %v1168
        %v1230 = vunpack.c.l.b16 %v1169
        %v1231 = vpack.c.b16 %v1228, %v1227
        %v1232 = vpack.c.b16 %v1230, %v1229
        %v1236 = vsel %vm744, %v1222, 0
        %1238 = vmatpush.bf16.msra.mxu0 0
        %1239 = vmatpush.bf16.msra.mxu0 0
        %1240 = vmatpush.bf16.msra.mxu0 0
        %1241 = vmatpush.bf16.msra.mxu0 0
        %1242 = vmatpush.bf16.msra.mxu0 0
        %1243 = vmatpush.bf16.msra.mxu0 0
        %1244 = vmatpush.bf16.msra.mxu0 %v1232
        %1245 = vmatpush.bf16.msra.mxu0 %v1231
        %1246 = vmatmul.bf16.gmra.mxu0 %v1236
        %v1247 = vpop.f32.mrf.mxu0
        %v1248 = vadd.f32 0.0, %v1247
        %v1249 = vpop.f32.mrf.mxu0
        %1250 = vdwg.mxu0
        %v1252 = vsel %vm764, %v1219, 0
        %v1255 = vsel %vm764, %v1248, 0
        %1257 = vmatpush.xpose.msra.mxu0 0.0
        %1258 = vmatpush.xpose.msra.mxu0 0.0
        %1259 = vmatpush.xpose.msra.mxu0 0.0
        %1260 = vmatpush.xpose.msra.mxu0 0.0
        %1261 = vmatpush.xpose.msra.mxu0 0.0
        %1262 = vmatpush.xpose.msra.mxu0 0.0
        %1263 = vmatpush.xpose.msra.mxu0 0.0
        %1264 = vmatpush.xpose.msra.mxu0 0.0
        %1265 = vmatpush.xpose.msra.mxu0 0.0
        %1266 = vmatpush.xpose.msra.mxu0 0.0
        %1267 = vmatpush.xpose.msra.mxu0 0.0
        %1268 = vmatpush.xpose.msra.mxu0 0.0
        %1269 = vmatpush.xpose.msra.mxu0 0.0
        %1270 = vmatpush.xpose.msra.mxu0 0.0
        %1271 = vmatpush.xpose.msra.mxu0 0.0
        %1272 = vmatpush.xpose.msra.mxu0 %v1255
        %1273 = vmatmul.f32.gmra.mxu0 %v1252
        %v1274 = vpop.f32.mrf.mxu0
        %v1275 = vadd.f32 0.0, %v1274
        %1276 = vdwg.mxu0
        %v1277 = vsel %vm714, 1, 0
        %v1278 = vperm.slane %v1277, 0
        %vm1279 = vcmp.eq.s32.totalorder %v1278, 1
        %v1280 = vsel %vm1279, %v1275, -1e+20
        %v1281 = vsel %vm764, %v1280, -inf
        %1282 = vmax.xlane.f32.xlu0 %v1281
        %v1283 = vpop.xlane.xlu0 %1282
        %v1284 = vsub.f32 %v1280, %v1283
        %v1285 = vmul.f32 %v1284, 1.442695
        %v1286 = vpow.pop %v1285
        %v1287 = vsel %vm764, %v1286, 0.0
        %1288 = vadd.xlane.f32.xlu0 %v1287
        %v1289 = vpop.xlane.xlu0 %1288
        %v1290 = vrcp.pop %v1289
        %v1291 = vmul.f32 %v1286, %v1290
        %1292 = vrot.lane.b32.xlu0 %v1248, 96
        %v1293 = vpop.permute.xlu0 %1292
        %v1296 = vsel %vm764, %v1291, 0
        %1298 = vmatpush.msra.mxu0 0.0
        %1299 = vmatpush.msra.mxu0 0.0
        %1300 = vmatpush.msra.mxu0 0.0
        %1301 = vmatpush.msra.mxu0 0.0
        %1302 = vmatpush.msra.mxu0 0.0
        %1303 = vmatpush.msra.mxu0 0.0
        %1304 = vmatpush.msra.mxu0 0.0
        %1305 = vmatpush.msra.mxu0 0.0
        %1306 = vmatpush.msra.mxu0 0.0
        %1307 = vmatpush.msra.mxu0 0.0
        %1308 = vmatpush.msra.mxu0 0.0
        %1309 = vmatpush.msra.mxu0 0.0
        %1310 = vmatpush.msra.mxu0 0.0
        %1311 = vmatpush.msra.mxu0 0.0
        %1312 = vmatpush.msra.mxu0 0.0
        %1313 = vmatpush.msra.mxu0 %v1293
        %1314 = vmatmul.f32.gmra.mxu0 %v1296
        %v1315 = vpop.f32.mrf.mxu0
        %v1316 = vadd.f32 0.0, %v1315
        %1317 = vdwg.mxu0
        %v1319 = vsel %vm764, %v1316, 0
        %1321 = vmatpush.msra.mxu0 0.0
        %1322 = vmatpush.msra.mxu0 0.0
        %1323 = vmatpush.msra.mxu0 0.0
        %1324 = vmatpush.msra.mxu0 0.0
        %1325 = vmatpush.msra.mxu0 0.0
        %1326 = vmatpush.msra.mxu0 0.0
        %1327 = vmatpush.msra.mxu0 0.0
        %1328 = vmatpush.msra.mxu0 0.0
        %1329 = vmatpush.msra.mxu0 0.0
        %1330 = vmatpush.msra.mxu0 0.0
        %1331 = vmatpush.msra.mxu0 0.0
        %1332 = vmatpush.msra.mxu0 0.0
        %1333 = vmatpush.msra.mxu0 0.0
        %1334 = vmatpush.msra.mxu0 0.0
        %1335 = vmatpush.msra.mxu0 0.0
        %1336 = vmatpush.msra.mxu0 %v1170
        %1337 = vmatmul.f32.gmra.mxu0 %v1319
        %v1338 = vpop.f32.mrf.mxu0
        %v1339 = vadd.f32 0.0, %v1338
        %1340 = vdwg.mxu0
        %v1342 = vperm.slane %v1174, 0
        %v1344 = vadd.f32 %v1342, %v1339
        %1345 = vrot.lane.b32.xlu0 %v1219, 120
        %v1346 = vpop.permute.xlu0 %1345
        %1347 = vrot.lane.b32.xlu0 %v1248, 120
        %v1348 = vpop.permute.xlu0 %1347
        %v1349 = vsel %vm764, %v1346, 0
        %v1351 = vsel %vm764, %v1348, 0
        %1353 = vmatpush.xpose.msra.mxu0 0.0
        %1354 = vmatpush.xpose.msra.mxu0 0.0
        %1355 = vmatpush.xpose.msra.mxu0 0.0
        %1356 = vmatpush.xpose.msra.mxu0 0.0
        %1357 = vmatpush.xpose.msra.mxu0 0.0
        %1358 = vmatpush.xpose.msra.mxu0 0.0
        %1359 = vmatpush.xpose.msra.mxu0 0.0
        %1360 = vmatpush.xpose.msra.mxu0 0.0
        %1361 = vmatpush.xpose.msra.mxu0 0.0
        %1362 = vmatpush.xpose.msra.mxu0 0.0
        %1363 = vmatpush.xpose.msra.mxu0 0.0
        %1364 = vmatpush.xpose.msra.mxu0 0.0
        %1365 = vmatpush.xpose.msra.mxu0 0.0
        %1366 = vmatpush.xpose.msra.mxu0 0.0
        %1367 = vmatpush.xpose.msra.mxu0 0.0
        %1368 = vmatpush.xpose.msra.mxu0 %v1351
        %1369 = vmatmul.f32.gmra.mxu0 %v1349
        %v1370 = vpop.f32.mrf.mxu0
        %v1371 = vadd.f32 0.0, %v1370
        %1372 = vdwg.mxu0
        %v1373 = vsel %vm1279, %v1371, -1e+20
        %v1374 = vsel %vm764, %v1373, -inf
        %1375 = vmax.xlane.f32.xlu0 %v1374
        %v1376 = vpop.xlane.xlu0 %1375
        %v1377 = vsub.f32 %v1373, %v1376
        %v1378 = vmul.f32 %v1377, 1.442695
        %v1379 = vpow.pop %v1378
        %v1380 = vsel %vm764, %v1379, 0.0
        %1381 = vadd.xlane.f32.xlu0 %v1380
        %v1382 = vpop.xlane.xlu0 %1381
        %v1383 = vrcp.pop %v1382
        %v1384 = vmul.f32 %v1379, %v1383
        %1385 = vrot.lane.b32.xlu0 %v1248, 88
        %v1386 = vpop.permute.xlu0 %1385
        %v1389 = vsel %vm764, %v1384, 0
        %1391 = vmatpush.msra.mxu0 0.0
        %1392 = vmatpush.msra.mxu0 0.0
        %1393 = vmatpush.msra.mxu0 0.0
        %1394 = vmatpush.msra.mxu0 0.0
        %1395 = vmatpush.msra.mxu0 0.0
        %1396 = vmatpush.msra.mxu0 0.0
        %1397 = vmatpush.msra.mxu0 0.0
        %1398 = vmatpush.msra.mxu0 0.0
        %1399 = vmatpush.msra.mxu0 0.0
        %1400 = vmatpush.msra.mxu0 0.0
        %1401 = vmatpush.msra.mxu0 0.0
        %1402 = vmatpush.msra.mxu0 0.0
        %1403 = vmatpush.msra.mxu0 0.0
        %1404 = vmatpush.msra.mxu0 0.0
        %1405 = vmatpush.msra.mxu0 0.0
        %1406 = vmatpush.msra.mxu0 %v1386
        %1407 = vmatmul.f32.gmra.mxu0 %v1389
        %v1408 = vpop.f32.mrf.mxu0
        %v1409 = vadd.f32 0.0, %v1408
        %1410 = vdwg.mxu0
        %v1412 = vsel %vm764, %v1409, 0
        %1414 = vmatpush.msra.mxu0 0.0
        %1415 = vmatpush.msra.mxu0 0.0
        %1416 = vmatpush.msra.mxu0 0.0
        %1417 = vmatpush.msra.mxu0 0.0
        %1418 = vmatpush.msra.mxu0 0.0
        %1419 = vmatpush.msra.mxu0 0.0
        %1420 = vmatpush.msra.mxu0 0.0
        %1421 = vmatpush.msra.mxu0 0.0
        %1422 = vmatpush.msra.mxu0 0.0
        %1423 = vmatpush.msra.mxu0 0.0
        %1424 = vmatpush.msra.mxu0 0.0
        %1425 = vmatpush.msra.mxu0 0.0
        %1426 = vmatpush.msra.mxu0 0.0
        %1427 = vmatpush.msra.mxu0 0.0
        %1428 = vmatpush.msra.mxu0 0.0
        %1429 = vmatpush.msra.mxu0 %v1171
        %1430 = vmatmul.f32.gmra.mxu0 %v1412
        %v1431 = vpop.f32.mrf.mxu0
        %v1432 = vadd.f32 0.0, %v1431
        %1433 = vdwg.mxu0
        %v1434 = vadd.f32 %v1344, %v1432
        %1435 = vrot.lane.b32.xlu0 %v1219, 112
        %v1436 = vpop.permute.xlu0 %1435
        %1437 = vrot.lane.b32.xlu0 %v1248, 112
        %v1438 = vpop.permute.xlu0 %1437
        %v1439 = vsel %vm764, %v1436, 0
        %v1441 = vsel %vm764, %v1438, 0
        %1443 = vmatpush.xpose.msra.mxu0 0.0
        %1444 = vmatpush.xpose.msra.mxu0 0.0
        %1445 = vmatpush.xpose.msra.mxu0 0.0
        %1446 = vmatpush.xpose.msra.mxu0 0.0
        %1447 = vmatpush.xpose.msra.mxu0 0.0
        %1448 = vmatpush.xpose.msra.mxu0 0.0
        %1449 = vmatpush.xpose.msra.mxu0 0.0
        %1450 = vmatpush.xpose.msra.mxu0 0.0
        %1451 = vmatpush.xpose.msra.mxu0 0.0
        %1452 = vmatpush.xpose.msra.mxu0 0.0
        %1453 = vmatpush.xpose.msra.mxu0 0.0
        %1454 = vmatpush.xpose.msra.mxu0 0.0
        %1455 = vmatpush.xpose.msra.mxu0 0.0
        %1456 = vmatpush.xpose.msra.mxu0 0.0
        %1457 = vmatpush.xpose.msra.mxu0 0.0
        %1458 = vmatpush.xpose.msra.mxu0 %v1441
        %1459 = vmatmul.f32.gmra.mxu0 %v1439
        %v1460 = vpop.f32.mrf.mxu0
        %v1461 = vadd.f32 0.0, %v1460
        %1462 = vdwg.mxu0
        %v1463 = vsel %vm1279, %v1461, -1e+20
        %v1464 = vsel %vm764, %v1463, -inf
        %1465 = vmax.xlane.f32.xlu0 %v1464
        %v1466 = vpop.xlane.xlu0 %1465
        %v1467 = vsub.f32 %v1463, %v1466
        %v1468 = vmul.f32 %v1467, 1.442695
        %v1469 = vpow.pop %v1468
        %v1470 = vsel %vm764, %v1469, 0.0
        %1471 = vadd.xlane.f32.xlu0 %v1470
        %v1472 = vpop.xlane.xlu0 %1471
        %v1473 = vrcp.pop %v1472
        %v1474 = vmul.f32 %v1469, %v1473
        %1475 = vrot.lane.b32.xlu0 %v1248, 80
        %v1476 = vpop.permute.xlu0 %1475
        %v1479 = vsel %vm764, %v1474, 0
        %1481 = vmatpush.msra.mxu0 0.0
        %1482 = vmatpush.msra.mxu0 0.0
        %1483 = vmatpush.msra.mxu0 0.0
        %1484 = vmatpush.msra.mxu0 0.0
        %1485 = vmatpush.msra.mxu0 0.0
        %1486 = vmatpush.msra.mxu0 0.0
        %1487 = vmatpush.msra.mxu0 0.0
        %1488 = vmatpush.msra.mxu0 0.0
        %1489 = vmatpush.msra.mxu0 0.0
        %1490 = vmatpush.msra.mxu0 0.0
        %1491 = vmatpush.msra.mxu0 0.0
        %1492 = vmatpush.msra.mxu0 0.0
        %1493 = vmatpush.msra.mxu0 0.0
        %1494 = vmatpush.msra.mxu0 0.0
        %1495 = vmatpush.msra.mxu0 0.0
        %1496 = vmatpush.msra.mxu0 %v1476
        %1497 = vmatmul.f32.gmra.mxu0 %v1479
        %v1498 = vpop.f32.mrf.mxu0
        %v1499 = vadd.f32 0.0, %v1498
        %1500 = vdwg.mxu0
        %v1502 = vsel %vm764, %v1499, 0
        %1504 = vmatpush.msra.mxu0 0.0
        %1505 = vmatpush.msra.mxu0 0.0
        %1506 = vmatpush.msra.mxu0 0.0
        %1507 = vmatpush.msra.mxu0 0.0
        %1508 = vmatpush.msra.mxu0 0.0
        %1509 = vmatpush.msra.mxu0 0.0
        %1510 = vmatpush.msra.mxu0 0.0
        %1511 = vmatpush.msra.mxu0 0.0
        %1512 = vmatpush.msra.mxu0 0.0
        %1513 = vmatpush.msra.mxu0 0.0
        %1514 = vmatpush.msra.mxu0 0.0
        %1515 = vmatpush.msra.mxu0 0.0
        %1516 = vmatpush.msra.mxu0 0.0
        %1517 = vmatpush.msra.mxu0 0.0
        %1518 = vmatpush.msra.mxu0 0.0
        %1519 = vmatpush.msra.mxu0 %v1172
        %1520 = vmatmul.f32.gmra.mxu0 %v1502
        %v1521 = vpop.f32.mrf.mxu0
        %v1522 = vadd.f32 0.0, %v1521
        %1523 = vdwg.mxu0
        %v1524 = vadd.f32 %v1434, %v1522
        %1525 = vrot.lane.b32.xlu0 %v1219, 104
        %v1526 = vpop.permute.xlu0 %1525
        %1527 = vrot.lane.b32.xlu0 %v1248, 104
        %v1528 = vpop.permute.xlu0 %1527
        %v1529 = vsel %vm764, %v1526, 0
        %v1531 = vsel %vm764, %v1528, 0
        %1533 = vmatpush.xpose.msra.mxu0 0.0
        %1534 = vmatpush.xpose.msra.mxu0 0.0
        %1535 = vmatpush.xpose.msra.mxu0 0.0
        %1536 = vmatpush.xpose.msra.mxu0 0.0
        %1537 = vmatpush.xpose.msra.mxu0 0.0
        %1538 = vmatpush.xpose.msra.mxu0 0.0
        %1539 = vmatpush.xpose.msra.mxu0 0.0
        %1540 = vmatpush.xpose.msra.mxu0 0.0
        %1541 = vmatpush.xpose.msra.mxu0 0.0
        %1542 = vmatpush.xpose.msra.mxu0 0.0
        %1543 = vmatpush.xpose.msra.mxu0 0.0
        %1544 = vmatpush.xpose.msra.mxu0 0.0
        %1545 = vmatpush.xpose.msra.mxu0 0.0
        %1546 = vmatpush.xpose.msra.mxu0 0.0
        %1547 = vmatpush.xpose.msra.mxu0 0.0
        %1548 = vmatpush.xpose.msra.mxu0 %v1531
        %1549 = vmatmul.f32.gmra.mxu0 %v1529
        %v1550 = vpop.f32.mrf.mxu0
        %v1551 = vadd.f32 0.0, %v1550
        %1552 = vdwg.mxu0
        %v1553 = vsel %vm1279, %v1551, -1e+20
        %v1554 = vsel %vm764, %v1553, -inf
        %1555 = vmax.xlane.f32.xlu0 %v1554
        %v1556 = vpop.xlane.xlu0 %1555
        %v1557 = vsub.f32 %v1553, %v1556
        %v1558 = vmul.f32 %v1557, 1.442695
        %v1559 = vpow.pop %v1558
        %v1560 = vsel %vm764, %v1559, 0.0
        %1561 = vadd.xlane.f32.xlu0 %v1560
        %v1562 = vpop.xlane.xlu0 %1561
        %v1563 = vrcp.pop %v1562
        %v1564 = vmul.f32 %v1559, %v1563
        %1565 = vrot.lane.b32.xlu0 %v1248, 72
        %v1566 = vpop.permute.xlu0 %1565
        %v1569 = vsel %vm764, %v1564, 0
        %1571 = vmatpush.msra.mxu0 0.0
        %1572 = vmatpush.msra.mxu0 0.0
        %1573 = vmatpush.msra.mxu0 0.0
        %1574 = vmatpush.msra.mxu0 0.0
        %1575 = vmatpush.msra.mxu0 0.0
        %1576 = vmatpush.msra.mxu0 0.0
        %1577 = vmatpush.msra.mxu0 0.0
        %1578 = vmatpush.msra.mxu0 0.0
        %1579 = vmatpush.msra.mxu0 0.0
        %1580 = vmatpush.msra.mxu0 0.0
        %1581 = vmatpush.msra.mxu0 0.0
        %1582 = vmatpush.msra.mxu0 0.0
        %1583 = vmatpush.msra.mxu0 0.0
        %1584 = vmatpush.msra.mxu0 0.0
        %1585 = vmatpush.msra.mxu0 0.0
        %1586 = vmatpush.msra.mxu0 %v1566
        %1587 = vmatmul.f32.gmra.mxu0 %v1569
        %v1588 = vpop.f32.mrf.mxu0
        %v1589 = vadd.f32 0.0, %v1588
        %1590 = vdwg.mxu0
        %v1592 = vsel %vm764, %v1589, 0
        %1594 = vmatpush.msra.mxu0 0.0
        %1595 = vmatpush.msra.mxu0 0.0
        %1596 = vmatpush.msra.mxu0 0.0
        %1597 = vmatpush.msra.mxu0 0.0
        %1598 = vmatpush.msra.mxu0 0.0
        %1599 = vmatpush.msra.mxu0 0.0
        %1600 = vmatpush.msra.mxu0 0.0
        %1601 = vmatpush.msra.mxu0 0.0
        %1602 = vmatpush.msra.mxu0 0.0
        %1603 = vmatpush.msra.mxu0 0.0
        %1604 = vmatpush.msra.mxu0 0.0
        %1605 = vmatpush.msra.mxu0 0.0
        %1606 = vmatpush.msra.mxu0 0.0
        %1607 = vmatpush.msra.mxu0 0.0
        %1608 = vmatpush.msra.mxu0 0.0
        %1609 = vmatpush.msra.mxu0 %v1173
        %1610 = vmatmul.f32.gmra.mxu0 %v1592
        %v1611 = vpop.f32.mrf.mxu0
        %v1612 = vadd.f32 0.0, %v1611
        %1613 = vdwg.mxu0
        %v1614 = vadd.f32 %v1524, %v1612
        %v1615 = vadd.f32 %v1614, %v1161
        %v1616 = vsel %vm744, %v1615, 0.0
        %1617 = vadd.xlane.f32.xlu0 %v1616
        %v1618 = vpop.xlane.xlu0 %1617
        %v1619 = vmul.f32 %v1618, %v1134
        %v1620 = vsub.f32 %v1615, %v1619
        %v1621 = vmul.f32 %v1620, %v1620
        %v1622 = vsel %vm744, %v1621, 0.0
        %1623 = vadd.xlane.f32.xlu0 %v1622
        %v1624 = vpop.xlane.xlu0 %1623
        %v1625 = vmul.f32 %v1624, %v1134
        %v1626 = vadd.f32 %v1625, 1e-05
        %v1627 = vrsqrt.pop %v1626
        %v1628 = vmul.f32 %v1627, %v1626
        %v1629 = vmul.f32 %v1628, %v1627
        %v1630 = vmul.f32 0.5, %v1629
        %v1631 = vsub.f32 1.5, %v1630
        %v1632 = vmul.f32 %v1627, %v1631
        %vm1633 = vweird.f32 %v1626
        %vm1634 = vweird.f32 %v1627
        %vm1635 = vmor %vm1633, %vm1634
        %v1636 = vsel %vm1635, %v1627, %v1632
        %v1637 = vmul.f32 %v1620, %v1636
        %v1639 = vperm.slane %v1175, 0
        %v1641 = vmul.f32 %v1637, %v1639
        %v1643 = vperm.slane %v1176, 0
        %v1645 = vadd.f32 %v1641, %v1643
        %v1646 = vpack.c.bf16 %v1645, %v1645
        %v1648 = vperm.slane %v1183, 0
        %v1654 = vunpack.c.l.b16 %v1179
        %v1655 = vunpack.c.l.b16 %v1180
        %v1656 = vunpack.c.l.b16 %v1181
        %v1657 = vunpack.c.l.b16 %v1182
        %v1658 = vpack.c.b16 %v1655, %v1654
        %v1659 = vpack.c.b16 %v1657, %v1656
        %v1663 = vsel %vm744, %v1646, 0
        %1665 = vmatpush.bf16.msra.mxu0 0
        %1666 = vmatpush.bf16.msra.mxu0 0
        %1667 = vmatpush.bf16.msra.mxu0 0
        %1668 = vmatpush.bf16.msra.mxu0 0
        %1669 = vmatpush.bf16.msra.mxu0 0
        %1670 = vmatpush.bf16.msra.mxu0 0
        %1671 = vmatpush.bf16.msra.mxu0 %v1659
        %1672 = vmatpush.bf16.msra.mxu0 %v1658
        %1673 = vmatmul.bf16.gmra.mxu0 %v1663
        %v1674 = vpop.f32.mrf.mxu0
        %v1675 = vadd.f32 %v1648, %v1674
        %v1676 = vpop.f32.mrf.mxu0
        %1677 = vdwg.mxu0
        %v1678 = vmax.f32 %v1675, 0.0
        %v1679 = vpack.c.bf16 %v1678, %v1678
        %v1681 = vperm.slane %v1192, 0
        %v1691 = vunpack.c.l.b16 %v1184
        %v1692 = vunpack.c.l.b16 %v1185
        %v1693 = vunpack.c.l.b16 %v1186
        %v1694 = vunpack.c.l.b16 %v1187
        %v1695 = vunpack.c.l.b16 %v1188
        %v1696 = vunpack.c.l.b16 %v1189
        %v1697 = vunpack.c.l.b16 %v1190
        %v1698 = vunpack.c.l.b16 %v1191
        %v1699 = vpack.c.b16 %v1692, %v1691
        %v1700 = vpack.c.b16 %v1694, %v1693
        %v1701 = vpack.c.b16 %v1696, %v1695
        %v1702 = vpack.c.b16 %v1698, %v1697
        %vm1707 = vcmask 523264
        %v1709 = vsel %vm1707, %v1679, 0
        %1711 = vmatpush.bf16.msra.mxu0 0
        %1712 = vmatpush.bf16.msra.mxu0 0
        %1713 = vmatpush.bf16.msra.mxu0 0
        %1714 = vmatpush.bf16.msra.mxu0 0
        %1715 = vmatpush.bf16.msra.mxu0 %v1702
        %1716 = vmatpush.bf16.msra.mxu0 %v1701
        %1717 = vmatpush.bf16.msra.mxu0 %v1700
        %1718 = vmatpush.bf16.msra.mxu0 %v1699
        %1719 = vmatmul.bf16.gmra.mxu0 %v1709
        %v1720 = vpop.f32.mrf.mxu0
        %v1721 = vadd.f32 %v1681, %v1720
        %v1722 = vpop.f32.mrf.mxu0
        %1723 = vdwg.mxu0
        %v1724 = vadd.f32 %v1721, %v1645
        %v1725 = vsel %vm744, %v1724, 0.0
        %1726 = vadd.xlane.f32.xlu0 %v1725
        %v1727 = vpop.xlane.xlu0 %1726
        %v1728 = vmul.f32 %v1727, %v1134
        %v1729 = vsub.f32 %v1724, %v1728
        %v1730 = vmul.f32 %v1729, %v1729
        %v1731 = vsel %vm744, %v1730, 0.0
        %1732 = vadd.xlane.f32.xlu0 %v1731
        %v1733 = vpop.xlane.xlu0 %1732
        %v1734 = vmul.f32 %v1733, %v1134
        %v1735 = vadd.f32 %v1734, 1e-05
        %v1736 = vrsqrt.pop %v1735
        %v1737 = vmul.f32 %v1736, %v1735
        %v1738 = vmul.f32 %v1737, %v1736
        %v1739 = vmul.f32 0.5, %v1738
        %v1740 = vsub.f32 1.5, %v1739
        %v1741 = vmul.f32 %v1736, %v1740
        %vm1742 = vweird.f32 %v1735
        %vm1743 = vweird.f32 %v1736
        %vm1744 = vmor %vm1742, %vm1743
        %v1745 = vsel %vm1744, %v1736, %v1741
        %v1746 = vmul.f32 %v1729, %v1745
        %v1748 = vperm.slane %v1177, 0
        %v1750 = vmul.f32 %v1746, %v1748
        %v1752 = vperm.slane %v1178, 0
        %v1754 = vadd.f32 %v1750, %v1752
        %s1755 = scalar_lea.vmem %s3, 16
        %v1756 = vld [vmem:[%s1755] sm:$0xf]
        %v1757 = vld [vmem:[%s1755 + $0x4] sm:$0xf]
        %v1758 = vld [vmem:[%s1755 + $0x8] sm:$0xf]
        %v1759 = vld [vmem:[%s1755 + $0xc] sm:$0xf]
        %s1760 = scalar_lea.vmem %s4, 32
        %v1761 = vld [vmem:[%s1760] sm:$0xff]
        %v1762 = vld [vmem:[%s1760 + $0x8] sm:$0xff]
        %v1763 = vld [vmem:[%s1760 + $0x10] sm:$0xff]
        %v1764 = vld [vmem:[%s1760 + $0x18] sm:$0xff]
        %s1765 = scalar_lea.vmem %s5, 1
        %v1766 = vld [vmem:[%s1765] sm:$0x1]
        %s1767 = scalar_lea.vmem %s6, 1
        %v1768 = vld [vmem:[%s1767] sm:$0x1]
        %s1769 = scalar_lea.vmem %s7, 1
        %v1770 = vld [vmem:[%s1769] sm:$0x1]
        %v1771 = vpack.c.bf16 %v1754, %v1754
        %v1776 = vunpack.c.l.b16 %v1756
        %v1777 = vunpack.c.l.b16 %v1757
        %v1778 = vunpack.c.l.b16 %v1758
        %v1779 = vunpack.c.l.b16 %v1759
        %v1780 = vpack.c.b16 %v1777, %v1776
        %v1781 = vpack.c.b16 %v1779, %v1778
        %v1785 = vsel %vm744, %v1771, 0
        %1787 = vmatpush.bf16.msra.mxu0 0
        %1788 = vmatpush.bf16.msra.mxu0 0
        %1789 = vmatpush.bf16.msra.mxu0 0
        %1790 = vmatpush.bf16.msra.mxu0 0
        %1791 = vmatpush.bf16.msra.mxu0 0
        %1792 = vmatpush.bf16.msra.mxu0 0
        %1793 = vmatpush.bf16.msra.mxu0 %v1781
        %1794 = vmatpush.bf16.msra.mxu0 %v1780
        %1795 = vmatmul.bf16.gmra.mxu0 %v1785
        %v1796 = vpop.f32.mrf.mxu0
        %v1797 = vadd.f32 0.0, %v1796
        %v1798 = vpop.f32.mrf.mxu0
        %1799 = vdwg.mxu0
        %1801 = vrot.lane.b32.xlu0 %v1797, 96
        %v1802 = vpop.permute.xlu0 %1801
        %v1803 = vsel %vm764, %v1797, 0
        %v1805 = vsel %vm764, %v1802, 0
        %1807 = vmatpush.xpose.msra.mxu0 0.0
        %1808 = vmatpush.xpose.msra.mxu0 0.0
        %1809 = vmatpush.xpose.msra.mxu0 0.0
        %1810 = vmatpush.xpose.msra.mxu0 0.0
        %1811 = vmatpush.xpose.msra.mxu0 0.0
        %1812 = vmatpush.xpose.msra.mxu0 0.0
        %1813 = vmatpush.xpose.msra.mxu0 0.0
        %1814 = vmatpush.xpose.msra.mxu0 0.0
        %1815 = vmatpush.xpose.msra.mxu0 0.0
        %1816 = vmatpush.xpose.msra.mxu0 0.0
        %1817 = vmatpush.xpose.msra.mxu0 0.0
        %1818 = vmatpush.xpose.msra.mxu0 0.0
        %1819 = vmatpush.xpose.msra.mxu0 0.0
        %1820 = vmatpush.xpose.msra.mxu0 0.0
        %1821 = vmatpush.xpose.msra.mxu0 0.0
        %1822 = vmatpush.xpose.msra.mxu0 %v1805
        %1823 = vmatmul.f32.gmra.mxu0 %v1803
        %v1824 = vpop.f32.mrf.mxu0
        %v1825 = vadd.f32 0.0, %v1824
        %1826 = vdwg.mxu0
        %v1827 = vsel %vm719, %v1825, -1e+20
        %v1828 = vsel %vm764, %v1827, -inf
        %1829 = vmax.xlane.f32.xlu0 %v1828
        %v1830 = vpop.xlane.xlu0 %1829
        %v1831 = vsub.f32 %v1827, %v1830
        %v1832 = vmul.f32 %v1831, 1.442695
        %v1833 = vpow.pop %v1832
        %v1834 = vsel %vm764, %v1833, 0.0
        %1835 = vadd.xlane.f32.xlu0 %v1834
        %v1836 = vpop.xlane.xlu0 %1835
        %v1837 = vrcp.pop %v1836
        %v1838 = vmul.f32 %v1833, %v1837
        %1839 = vrot.lane.b32.xlu0 %v1797, 64
        %v1840 = vpop.permute.xlu0 %1839
        %v1843 = vsel %vm764, %v1838, 0
        %1845 = vmatpush.msra.mxu0 0.0
        %1846 = vmatpush.msra.mxu0 0.0
        %1847 = vmatpush.msra.mxu0 0.0
        %1848 = vmatpush.msra.mxu0 0.0
        %1849 = vmatpush.msra.mxu0 0.0
        %1850 = vmatpush.msra.mxu0 0.0
        %1851 = vmatpush.msra.mxu0 0.0
        %1852 = vmatpush.msra.mxu0 0.0
        %1853 = vmatpush.msra.mxu0 0.0
        %1854 = vmatpush.msra.mxu0 0.0
        %1855 = vmatpush.msra.mxu0 0.0
        %1856 = vmatpush.msra.mxu0 0.0
        %1857 = vmatpush.msra.mxu0 0.0
        %1858 = vmatpush.msra.mxu0 0.0
        %1859 = vmatpush.msra.mxu0 0.0
        %1860 = vmatpush.msra.mxu0 %v1840
        %1861 = vmatmul.f32.gmra.mxu0 %v1843
        %v1862 = vpop.f32.mrf.mxu0
        %v1863 = vadd.f32 0.0, %v1862
        %1864 = vdwg.mxu0
        %v1866 = vsel %vm764, %v1863, 0
        %1868 = vmatpush.msra.mxu0 0.0
        %1869 = vmatpush.msra.mxu0 0.0
        %1870 = vmatpush.msra.mxu0 0.0
        %1871 = vmatpush.msra.mxu0 0.0
        %1872 = vmatpush.msra.mxu0 0.0
        %1873 = vmatpush.msra.mxu0 0.0
        %1874 = vmatpush.msra.mxu0 0.0
        %1875 = vmatpush.msra.mxu0 0.0
        %1876 = vmatpush.msra.mxu0 0.0
        %1877 = vmatpush.msra.mxu0 0.0
        %1878 = vmatpush.msra.mxu0 0.0
        %1879 = vmatpush.msra.mxu0 0.0
        %1880 = vmatpush.msra.mxu0 0.0
        %1881 = vmatpush.msra.mxu0 0.0
        %1882 = vmatpush.msra.mxu0 0.0
        %1883 = vmatpush.msra.mxu0 %v1761
        %1884 = vmatmul.f32.gmra.mxu0 %v1866
        %v1885 = vpop.f32.mrf.mxu0
        %v1886 = vadd.f32 0.0, %v1885
        %1887 = vdwg.mxu0
        %v1889 = vperm.slane %v1766, 0
        %v1891 = vadd.f32 %v1889, %v1886
        %1892 = vrot.lane.b32.xlu0 %v1797, 120
        %v1893 = vpop.permute.xlu0 %1892
        %1894 = vrot.lane.b32.xlu0 %v1797, 88
        %v1895 = vpop.permute.xlu0 %1894
        %v1896 = vsel %vm764, %v1893, 0
        %v1898 = vsel %vm764, %v1895, 0
        %1900 = vmatpush.xpose.msra.mxu0 0.0
        %1901 = vmatpush.xpose.msra.mxu0 0.0
        %1902 = vmatpush.xpose.msra.mxu0 0.0
        %1903 = vmatpush.xpose.msra.mxu0 0.0
        %1904 = vmatpush.xpose.msra.mxu0 0.0
        %1905 = vmatpush.xpose.msra.mxu0 0.0
        %1906 = vmatpush.xpose.msra.mxu0 0.0
        %1907 = vmatpush.xpose.msra.mxu0 0.0
        %1908 = vmatpush.xpose.msra.mxu0 0.0
        %1909 = vmatpush.xpose.msra.mxu0 0.0
        %1910 = vmatpush.xpose.msra.mxu0 0.0
        %1911 = vmatpush.xpose.msra.mxu0 0.0
        %1912 = vmatpush.xpose.msra.mxu0 0.0
        %1913 = vmatpush.xpose.msra.mxu0 0.0
        %1914 = vmatpush.xpose.msra.mxu0 0.0
        %1915 = vmatpush.xpose.msra.mxu0 %v1898
        %1916 = vmatmul.f32.gmra.mxu0 %v1896
        %v1917 = vpop.f32.mrf.mxu0
        %v1918 = vadd.f32 0.0, %v1917
        %1919 = vdwg.mxu0
        %v1920 = vsel %vm719, %v1918, -1e+20
        %v1921 = vsel %vm764, %v1920, -inf
        %1922 = vmax.xlane.f32.xlu0 %v1921
        %v1923 = vpop.xlane.xlu0 %1922
        %v1924 = vsub.f32 %v1920, %v1923
        %v1925 = vmul.f32 %v1924, 1.442695
        %v1926 = vpow.pop %v1925
        %v1927 = vsel %vm764, %v1926, 0.0
        %1928 = vadd.xlane.f32.xlu0 %v1927
        %v1929 = vpop.xlane.xlu0 %1928
        %v1930 = vrcp.pop %v1929
        %v1931 = vmul.f32 %v1926, %v1930
        %1932 = vrot.lane.b32.xlu0 %v1797, 56
        %v1933 = vpop.permute.xlu0 %1932
        %v1936 = vsel %vm764, %v1931, 0
        %1938 = vmatpush.msra.mxu0 0.0
        %1939 = vmatpush.msra.mxu0 0.0
        %1940 = vmatpush.msra.mxu0 0.0
        %1941 = vmatpush.msra.mxu0 0.0
        %1942 = vmatpush.msra.mxu0 0.0
        %1943 = vmatpush.msra.mxu0 0.0
        %1944 = vmatpush.msra.mxu0 0.0
        %1945 = vmatpush.msra.mxu0 0.0
        %1946 = vmatpush.msra.mxu0 0.0
        %1947 = vmatpush.msra.mxu0 0.0
        %1948 = vmatpush.msra.mxu0 0.0
        %1949 = vmatpush.msra.mxu0 0.0
        %1950 = vmatpush.msra.mxu0 0.0
        %1951 = vmatpush.msra.mxu0 0.0
        %1952 = vmatpush.msra.mxu0 0.0
        %1953 = vmatpush.msra.mxu0 %v1933
        %1954 = vmatmul.f32.gmra.mxu0 %v1936
        %v1955 = vpop.f32.mrf.mxu0
        %v1956 = vadd.f32 0.0, %v1955
        %1957 = vdwg.mxu0
        %v1959 = vsel %vm764, %v1956, 0
        %1961 = vmatpush.msra.mxu0 0.0
        %1962 = vmatpush.msra.mxu0 0.0
        %1963 = vmatpush.msra.mxu0 0.0
        %1964 = vmatpush.msra.mxu0 0.0
        %1965 = vmatpush.msra.mxu0 0.0
        %1966 = vmatpush.msra.mxu0 0.0
        %1967 = vmatpush.msra.mxu0 0.0
        %1968 = vmatpush.msra.mxu0 0.0
        %1969 = vmatpush.msra.mxu0 0.0
        %1970 = vmatpush.msra.mxu0 0.0
        %1971 = vmatpush.msra.mxu0 0.0
        %1972 = vmatpush.msra.mxu0 0.0
        %1973 = vmatpush.msra.mxu0 0.0
        %1974 = vmatpush.msra.mxu0 0.0
        %1975 = vmatpush.msra.mxu0 0.0
        %1976 = vmatpush.msra.mxu0 %v1762
        %1977 = vmatmul.f32.gmra.mxu0 %v1959
        %v1978 = vpop.f32.mrf.mxu0
        %v1979 = vadd.f32 0.0, %v1978
        %1980 = vdwg.mxu0
        %v1981 = vadd.f32 %v1891, %v1979
        %1982 = vrot.lane.b32.xlu0 %v1797, 112
        %v1983 = vpop.permute.xlu0 %1982
        %1984 = vrot.lane.b32.xlu0 %v1797, 80
        %v1985 = vpop.permute.xlu0 %1984
        %v1986 = vsel %vm764, %v1983, 0
        %v1988 = vsel %vm764, %v1985, 0
        %1990 = vmatpush.xpose.msra.mxu0 0.0
        %1991 = vmatpush.xpose.msra.mxu0 0.0
        %1992 = vmatpush.xpose.msra.mxu0 0.0
        %1993 = vmatpush.xpose.msra.mxu0 0.0
        %1994 = vmatpush.xpose.msra.mxu0 0.0
        %1995 = vmatpush.xpose.msra.mxu0 0.0
        %1996 = vmatpush.xpose.msra.mxu0 0.0
        %1997 = vmatpush.xpose.msra.mxu0 0.0
        %1998 = vmatpush.xpose.msra.mxu0 0.0
        %1999 = vmatpush.xpose.msra.mxu0 0.0
        %2000 = vmatpush.xpose.msra.mxu0 0.0
        %2001 = vmatpush.xpose.msra.mxu0 0.0
        %2002 = vmatpush.xpose.msra.mxu0 0.0
        %2003 = vmatpush.xpose.msra.mxu0 0.0
        %2004 = vmatpush.xpose.msra.mxu0 0.0
        %2005 = vmatpush.xpose.msra.mxu0 %v1988
        %2006 = vmatmul.f32.gmra.mxu0 %v1986
        %v2007 = vpop.f32.mrf.mxu0
        %v2008 = vadd.f32 0.0, %v2007
        %2009 = vdwg.mxu0
        %v2010 = vsel %vm719, %v2008, -1e+20
        %v2011 = vsel %vm764, %v2010, -inf
        %2012 = vmax.xlane.f32.xlu0 %v2011
        %v2013 = vpop.xlane.xlu0 %2012
        %v2014 = vsub.f32 %v2010, %v2013
        %v2015 = vmul.f32 %v2014, 1.442695
        %v2016 = vpow.pop %v2015
        %v2017 = vsel %vm764, %v2016, 0.0
        %2018 = vadd.xlane.f32.xlu0 %v2017
        %v2019 = vpop.xlane.xlu0 %2018
        %v2020 = vrcp.pop %v2019
        %v2021 = vmul.f32 %v2016, %v2020
        %2022 = vrot.lane.b32.xlu0 %v1797, 48
        %v2023 = vpop.permute.xlu0 %2022
        %v2026 = vsel %vm764, %v2021, 0
        %2028 = vmatpush.msra.mxu0 0.0
        %2029 = vmatpush.msra.mxu0 0.0
        %2030 = vmatpush.msra.mxu0 0.0
        %2031 = vmatpush.msra.mxu0 0.0
        %2032 = vmatpush.msra.mxu0 0.0
        %2033 = vmatpush.msra.mxu0 0.0
        %2034 = vmatpush.msra.mxu0 0.0
        %2035 = vmatpush.msra.mxu0 0.0
        %2036 = vmatpush.msra.mxu0 0.0
        %2037 = vmatpush.msra.mxu0 0.0
        %2038 = vmatpush.msra.mxu0 0.0
        %2039 = vmatpush.msra.mxu0 0.0
        %2040 = vmatpush.msra.mxu0 0.0
        %2041 = vmatpush.msra.mxu0 0.0
        %2042 = vmatpush.msra.mxu0 0.0
        %2043 = vmatpush.msra.mxu0 %v2023
        %2044 = vmatmul.f32.gmra.mxu0 %v2026
        %v2045 = vpop.f32.mrf.mxu0
        %v2046 = vadd.f32 0.0, %v2045
        %2047 = vdwg.mxu0
        %v2049 = vsel %vm764, %v2046, 0
        %2051 = vmatpush.msra.mxu0 0.0
        %2052 = vmatpush.msra.mxu0 0.0
        %2053 = vmatpush.msra.mxu0 0.0
        %2054 = vmatpush.msra.mxu0 0.0
        %2055 = vmatpush.msra.mxu0 0.0
        %2056 = vmatpush.msra.mxu0 0.0
        %2057 = vmatpush.msra.mxu0 0.0
        %2058 = vmatpush.msra.mxu0 0.0
        %2059 = vmatpush.msra.mxu0 0.0
        %2060 = vmatpush.msra.mxu0 0.0
        %2061 = vmatpush.msra.mxu0 0.0
        %2062 = vmatpush.msra.mxu0 0.0
        %2063 = vmatpush.msra.mxu0 0.0
        %2064 = vmatpush.msra.mxu0 0.0
        %2065 = vmatpush.msra.mxu0 0.0
        %2066 = vmatpush.msra.mxu0 %v1763
        %2067 = vmatmul.f32.gmra.mxu0 %v2049
        %v2068 = vpop.f32.mrf.mxu0
        %v2069 = vadd.f32 0.0, %v2068
        %2070 = vdwg.mxu0
        %v2071 = vadd.f32 %v1981, %v2069
        %2072 = vrot.lane.b32.xlu0 %v1797, 104
        %v2073 = vpop.permute.xlu0 %2072
        %2074 = vrot.lane.b32.xlu0 %v1797, 72
        %v2075 = vpop.permute.xlu0 %2074
        %v2076 = vsel %vm764, %v2073, 0
        %v2078 = vsel %vm764, %v2075, 0
        %2080 = vmatpush.xpose.msra.mxu0 0.0
        %2081 = vmatpush.xpose.msra.mxu0 0.0
        %2082 = vmatpush.xpose.msra.mxu0 0.0
        %2083 = vmatpush.xpose.msra.mxu0 0.0
        %2084 = vmatpush.xpose.msra.mxu0 0.0
        %2085 = vmatpush.xpose.msra.mxu0 0.0
        %2086 = vmatpush.xpose.msra.mxu0 0.0
        %2087 = vmatpush.xpose.msra.mxu0 0.0
        %2088 = vmatpush.xpose.msra.mxu0 0.0
        %2089 = vmatpush.xpose.msra.mxu0 0.0
        %2090 = vmatpush.xpose.msra.mxu0 0.0
        %2091 = vmatpush.xpose.msra.mxu0 0.0
        %2092 = vmatpush.xpose.msra.mxu0 0.0
        %2093 = vmatpush.xpose.msra.mxu0 0.0
        %2094 = vmatpush.xpose.msra.mxu0 0.0
        %2095 = vmatpush.xpose.msra.mxu0 %v2078
        %2096 = vmatmul.f32.gmra.mxu0 %v2076
        %v2097 = vpop.f32.mrf.mxu0
        %v2098 = vadd.f32 0.0, %v2097
        %2099 = vdwg.mxu0
        %v2100 = vsel %vm719, %v2098, -1e+20
        %v2101 = vsel %vm764, %v2100, -inf
        %2102 = vmax.xlane.f32.xlu0 %v2101
        %v2103 = vpop.xlane.xlu0 %2102
        %v2104 = vsub.f32 %v2100, %v2103
        %v2105 = vmul.f32 %v2104, 1.442695
        %v2106 = vpow.pop %v2105
        %v2107 = vsel %vm764, %v2106, 0.0
        %2108 = vadd.xlane.f32.xlu0 %v2107
        %v2109 = vpop.xlane.xlu0 %2108
        %v2110 = vrcp.pop %v2109
        %v2111 = vmul.f32 %v2106, %v2110
        %2112 = vrot.lane.b32.xlu0 %v1797, 40
        %v2113 = vpop.permute.xlu0 %2112
        %v2116 = vsel %vm764, %v2111, 0
        %2118 = vmatpush.msra.mxu0 0.0
        %2119 = vmatpush.msra.mxu0 0.0
        %2120 = vmatpush.msra.mxu0 0.0
        %2121 = vmatpush.msra.mxu0 0.0
        %2122 = vmatpush.msra.mxu0 0.0
        %2123 = vmatpush.msra.mxu0 0.0
        %2124 = vmatpush.msra.mxu0 0.0
        %2125 = vmatpush.msra.mxu0 0.0
        %2126 = vmatpush.msra.mxu0 0.0
        %2127 = vmatpush.msra.mxu0 0.0
        %2128 = vmatpush.msra.mxu0 0.0
        %2129 = vmatpush.msra.mxu0 0.0
        %2130 = vmatpush.msra.mxu0 0.0
        %2131 = vmatpush.msra.mxu0 0.0
        %2132 = vmatpush.msra.mxu0 0.0
        %2133 = vmatpush.msra.mxu0 %v2113
        %2134 = vmatmul.f32.gmra.mxu0 %v2116
        %v2135 = vpop.f32.mrf.mxu0
        %v2136 = vadd.f32 0.0, %v2135
        %2137 = vdwg.mxu0
        %v2139 = vsel %vm764, %v2136, 0
        %2141 = vmatpush.msra.mxu0 0.0
        %2142 = vmatpush.msra.mxu0 0.0
        %2143 = vmatpush.msra.mxu0 0.0
        %2144 = vmatpush.msra.mxu0 0.0
        %2145 = vmatpush.msra.mxu0 0.0
        %2146 = vmatpush.msra.mxu0 0.0
        %2147 = vmatpush.msra.mxu0 0.0
        %2148 = vmatpush.msra.mxu0 0.0
        %2149 = vmatpush.msra.mxu0 0.0
        %2150 = vmatpush.msra.mxu0 0.0
        %2151 = vmatpush.msra.mxu0 0.0
        %2152 = vmatpush.msra.mxu0 0.0
        %2153 = vmatpush.msra.mxu0 0.0
        %2154 = vmatpush.msra.mxu0 0.0
        %2155 = vmatpush.msra.mxu0 0.0
        %2156 = vmatpush.msra.mxu0 %v1764
        %2157 = vmatmul.f32.gmra.mxu0 %v2139
        %v2158 = vpop.f32.mrf.mxu0
        %v2159 = vadd.f32 0.0, %v2158
        %2160 = vdwg.mxu0
        %v2161 = vadd.f32 %v2071, %v2159
        %v2162 = vadd.f32 %v2161, %v1754
        %v2163 = vsel %vm744, %v2162, 0.0
        %2164 = vadd.xlane.f32.xlu0 %v2163
        %v2165 = vpop.xlane.xlu0 %2164
        %v2166 = vmul.f32 %v2165, %v1134
        %v2167 = vsub.f32 %v2162, %v2166
        %v2168 = vmul.f32 %v2167, %v2167
        %v2169 = vsel %vm744, %v2168, 0.0
        %2170 = vadd.xlane.f32.xlu0 %v2169
        %v2171 = vpop.xlane.xlu0 %2170
        %v2172 = vmul.f32 %v2171, %v1134
        %v2173 = vadd.f32 %v2172, 1e-05
        %v2174 = vrsqrt.pop %v2173
        %v2175 = vmul.f32 %v2174, %v2173
        %v2176 = vmul.f32 %v2175, %v2174
        %v2177 = vmul.f32 0.5, %v2176
        %v2178 = vsub.f32 1.5, %v2177
        %v2179 = vmul.f32 %v2174, %v2178
        %vm2180 = vweird.f32 %v2173
        %vm2181 = vweird.f32 %v2174
        %vm2182 = vmor %vm2180, %vm2181
        %v2183 = vsel %vm2182, %v2174, %v2179
        %v2184 = vmul.f32 %v2167, %v2183
        %v2186 = vperm.slane %v1768, 0
        %v2188 = vmul.f32 %v2184, %v2186
        %v2190 = vperm.slane %v1770, 0
        %v2192 = vadd.f32 %v2188, %v2190
        %s2193 = scalar_lea.vmem %s8, 16
        %v2194 = vld [vmem:[%s2193] sm:$0xf]
        %v2195 = vld [vmem:[%s2193 + $0x4] sm:$0xf]
        %v2196 = vld [vmem:[%s2193 + $0x8] sm:$0xf]
        %v2197 = vld [vmem:[%s2193 + $0xc] sm:$0xf]
        %s2198 = scalar_lea.vmem %s9, 16
        %v2199 = vld [vmem:[%s2198] sm:$0xf]
        %v2200 = vld [vmem:[%s2198 + $0x4] sm:$0xf]
        %v2201 = vld [vmem:[%s2198 + $0x8] sm:$0xf]
        %v2202 = vld [vmem:[%s2198 + $0xc] sm:$0xf]
        %s2203 = scalar_lea.vmem %s10, 32
        %v2204 = vld [vmem:[%s2203] sm:$0xff]
        %v2205 = vld [vmem:[%s2203 + $0x8] sm:$0xff]
        %v2206 = vld [vmem:[%s2203 + $0x10] sm:$0xff]
        %v2207 = vld [vmem:[%s2203 + $0x18] sm:$0xff]
        %s2208 = scalar_lea.vmem %s11, 1
        %v2209 = vld [vmem:[%s2208] sm:$0x1]
        %s2210 = scalar_lea.vmem %s12, 1
        %v2211 = vld [vmem:[%s2210] sm:$0x1]
        %s2212 = scalar_lea.vmem %s13, 1
        %v2213 = vld [vmem:[%s2212] sm:$0x1]
        %s2214 = scalar_lea.vmem %s14, 1
        %v2215 = vld [vmem:[%s2214] sm:$0x1]
        %s2216 = scalar_lea.vmem %s15, 1
        %v2217 = vld [vmem:[%s2216] sm:$0x1]
        %s2218 = scalar_lea.vmem %s16, 16
        %v2219 = vld [vmem:[%s2218] sm:$0xf]
        %v2220 = vld [vmem:[%s2218 + $0x4] sm:$0xf]
        %v2221 = vld [vmem:[%s2218 + $0x8] sm:$0xf]
        %v2222 = vld [vmem:[%s2218 + $0xc] sm:$0xf]
        %s2223 = scalar_lea.vmem %s17, 1
        %v2224 = vld [vmem:[%s2223] sm:$0x1]
        %s2225 = scalar_lea.vmem %s18, 32
        %v2226 = vld [vmem:[%s2225] sm:$0xf]
        %v2227 = vld [vmem:[%s2225 + $0x4] sm:$0xf]
        %v2228 = vld [vmem:[%s2225 + $0x8] sm:$0xf]
        %v2229 = vld [vmem:[%s2225 + $0xc] sm:$0xf]
        %v2230 = vld [vmem:[%s2225 + $0x10] sm:$0xf]
        %v2231 = vld [vmem:[%s2225 + $0x14] sm:$0xf]
        %v2232 = vld [vmem:[%s2225 + $0x18] sm:$0xf]
        %v2233 = vld [vmem:[%s2225 + $0x1c] sm:$0xf]
        %s2234 = scalar_lea.vmem %s19, 1
        %v2235 = vld [vmem:[%s2234] sm:$0x1]
        %v2236 = vpack.c.bf16 %v2192, %v2192
        %v2241 = vunpack.c.l.b16 %v2194
        %v2242 = vunpack.c.l.b16 %v2195
        %v2243 = vunpack.c.l.b16 %v2196
        %v2244 = vunpack.c.l.b16 %v2197
        %v2245 = vpack.c.b16 %v2242, %v2241
        %v2246 = vpack.c.b16 %v2244, %v2243
        %v2250 = vsel %vm744, %v2236, 0
        %2252 = vmatpush.bf16.msra.mxu0 0
        %2253 = vmatpush.bf16.msra.mxu0 0
        %2254 = vmatpush.bf16.msra.mxu0 0
        %2255 = vmatpush.bf16.msra.mxu0 0
        %2256 = vmatpush.bf16.msra.mxu0 0
        %2257 = vmatpush.bf16.msra.mxu0 0
        %2258 = vmatpush.bf16.msra.mxu0 %v2246
        %2259 = vmatpush.bf16.msra.mxu0 %v2245
        %2260 = vmatmul.bf16.gmra.mxu0 %v2250
        %v2261 = vpop.f32.mrf.mxu0
        %v2262 = vadd.f32 0.0, %v2261
        %v2263 = vpop.f32.mrf.mxu0
        %2264 = vdwg.mxu0
        %v2269 = vunpack.c.l.b16 %v2199
        %v2270 = vunpack.c.l.b16 %v2200
        %v2271 = vunpack.c.l.b16 %v2201
        %v2272 = vunpack.c.l.b16 %v2202
        %v2273 = vpack.c.b16 %v2270, %v2269
        %v2274 = vpack.c.b16 %v2272, %v2271
        %2277 = vmatpush.bf16.msra.mxu0 0
        %2278 = vmatpush.bf16.msra.mxu0 0
        %2279 = vmatpush.bf16.msra.mxu0 0
        %2280 = vmatpush.bf16.msra.mxu0 0
        %2281 = vmatpush.bf16.msra.mxu0 0
        %2282 = vmatpush.bf16.msra.mxu0 0
        %2283 = vmatpush.bf16.msra.mxu0 %v2274
        %2284 = vmatpush.bf16.msra.mxu0 %v2273
        %2285 = vmatmul.bf16.gmra.mxu0 %v1236
        %v2286 = vpop.f32.mrf.mxu0
        %v2287 = vadd.f32 0.0, %v2286
        %v2288 = vpop.f32.mrf.mxu0
        %2289 = vdwg.mxu0
        %v2291 = vsel %vm764, %v2262, 0
        %v2294 = vsel %vm764, %v2287, 0
        %2296 = vmatpush.xpose.msra.mxu0 0.0
        %2297 = vmatpush.xpose.msra.mxu0 0.0
        %2298 = vmatpush.xpose.msra.mxu0 0.0
        %2299 = vmatpush.xpose.msra.mxu0 0.0
        %2300 = vmatpush.xpose.msra.mxu0 0.0
        %2301 = vmatpush.xpose.msra.mxu0 0.0
        %2302 = vmatpush.xpose.msra.mxu0 0.0
        %2303 = vmatpush.xpose.msra.mxu0 0.0
        %2304 = vmatpush.xpose.msra.mxu0 0.0
        %2305 = vmatpush.xpose.msra.mxu0 0.0
        %2306 = vmatpush.xpose.msra.mxu0 0.0
        %2307 = vmatpush.xpose.msra.mxu0 0.0
        %2308 = vmatpush.xpose.msra.mxu0 0.0
        %2309 = vmatpush.xpose.msra.mxu0 0.0
        %2310 = vmatpush.xpose.msra.mxu0 0.0
        %2311 = vmatpush.xpose.msra.mxu0 %v2294
        %2312 = vmatmul.f32.gmra.mxu0 %v2291
        %v2313 = vpop.f32.mrf.mxu0
        %v2314 = vadd.f32 0.0, %v2313
        %2315 = vdwg.mxu0
        %v2316 = vsel %vm1279, %v2314, -1e+20
        %v2317 = vsel %vm764, %v2316, -inf
        %2318 = vmax.xlane.f32.xlu0 %v2317
        %v2319 = vpop.xlane.xlu0 %2318
        %v2320 = vsub.f32 %v2316, %v2319
        %v2321 = vmul.f32 %v2320, 1.442695
        %v2322 = vpow.pop %v2321
        %v2323 = vsel %vm764, %v2322, 0.0
        %2324 = vadd.xlane.f32.xlu0 %v2323
        %v2325 = vpop.xlane.xlu0 %2324
        %v2326 = vrcp.pop %v2325
        %v2327 = vmul.f32 %v2322, %v2326
        %2328 = vrot.lane.b32.xlu0 %v2287, 96
        %v2329 = vpop.permute.xlu0 %2328
        %v2332 = vsel %vm764, %v2327, 0
        %2334 = vmatpush.msra.mxu0 0.0
        %2335 = vmatpush.msra.mxu0 0.0
        %2336 = vmatpush.msra.mxu0 0.0
        %2337 = vmatpush.msra.mxu0 0.0
        %2338 = vmatpush.msra.mxu0 0.0
        %2339 = vmatpush.msra.mxu0 0.0
        %2340 = vmatpush.msra.mxu0 0.0
        %2341 = vmatpush.msra.mxu0 0.0
        %2342 = vmatpush.msra.mxu0 0.0
        %2343 = vmatpush.msra.mxu0 0.0
        %2344 = vmatpush.msra.mxu0 0.0
        %2345 = vmatpush.msra.mxu0 0.0
        %2346 = vmatpush.msra.mxu0 0.0
        %2347 = vmatpush.msra.mxu0 0.0
        %2348 = vmatpush.msra.mxu0 0.0
        %2349 = vmatpush.msra.mxu0 %v2329
        %2350 = vmatmul.f32.gmra.mxu0 %v2332
        %v2351 = vpop.f32.mrf.mxu0
        %v2352 = vadd.f32 0.0, %v2351
        %2353 = vdwg.mxu0
        %v2355 = vsel %vm764, %v2352, 0
        %2357 = vmatpush.msra.mxu0 0.0
        %2358 = vmatpush.msra.mxu0 0.0
        %2359 = vmatpush.msra.mxu0 0.0
        %2360 = vmatpush.msra.mxu0 0.0
        %2361 = vmatpush.msra.mxu0 0.0
        %2362 = vmatpush.msra.mxu0 0.0
        %2363 = vmatpush.msra.mxu0 0.0
        %2364 = vmatpush.msra.mxu0 0.0
        %2365 = vmatpush.msra.mxu0 0.0
        %2366 = vmatpush.msra.mxu0 0.0
        %2367 = vmatpush.msra.mxu0 0.0
        %2368 = vmatpush.msra.mxu0 0.0
        %2369 = vmatpush.msra.mxu0 0.0
        %2370 = vmatpush.msra.mxu0 0.0
        %2371 = vmatpush.msra.mxu0 0.0
        %2372 = vmatpush.msra.mxu0 %v2204
        %2373 = vmatmul.f32.gmra.mxu0 %v2355
        %v2374 = vpop.f32.mrf.mxu0
        %v2375 = vadd.f32 0.0, %v2374
        %2376 = vdwg.mxu0
        %v2378 = vperm.slane %v2209, 0
        %v2380 = vadd.f32 %v2378, %v2375
        %2381 = vrot.lane.b32.xlu0 %v2262, 120
        %v2382 = vpop.permute.xlu0 %2381
        %2383 = vrot.lane.b32.xlu0 %v2287, 120
        %v2384 = vpop.permute.xlu0 %2383
        %v2385 = vsel %vm764, %v2382, 0
        %v2387 = vsel %vm764, %v2384, 0
        %2389 = vmatpush.xpose.msra.mxu0 0.0
        %2390 = vmatpush.xpose.msra.mxu0 0.0
        %2391 = vmatpush.xpose.msra.mxu0 0.0
        %2392 = vmatpush.xpose.msra.mxu0 0.0
        %2393 = vmatpush.xpose.msra.mxu0 0.0
        %2394 = vmatpush.xpose.msra.mxu0 0.0
        %2395 = vmatpush.xpose.msra.mxu0 0.0
        %2396 = vmatpush.xpose.msra.mxu0 0.0
        %2397 = vmatpush.xpose.msra.mxu0 0.0
        %2398 = vmatpush.xpose.msra.mxu0 0.0
        %2399 = vmatpush.xpose.msra.mxu0 0.0
        %2400 = vmatpush.xpose.msra.mxu0 0.0
        %2401 = vmatpush.xpose.msra.mxu0 0.0
        %2402 = vmatpush.xpose.msra.mxu0 0.0
        %2403 = vmatpush.xpose.msra.mxu0 0.0
        %2404 = vmatpush.xpose.msra.mxu0 %v2387
        %2405 = vmatmul.f32.gmra.mxu0 %v2385
        %v2406 = vpop.f32.mrf.mxu0
        %v2407 = vadd.f32 0.0, %v2406
        %2408 = vdwg.mxu0
        %v2409 = vsel %vm1279, %v2407, -1e+20
        %v2410 = vsel %vm764, %v2409, -inf
        %2411 = vmax.xlane.f32.xlu0 %v2410
        %v2412 = vpop.xlane.xlu0 %2411
        %v2413 = vsub.f32 %v2409, %v2412
        %v2414 = vmul.f32 %v2413, 1.442695
        %v2415 = vpow.pop %v2414
        %v2416 = vsel %vm764, %v2415, 0.0
        %2417 = vadd.xlane.f32.xlu0 %v2416
        %v2418 = vpop.xlane.xlu0 %2417
        %v2419 = vrcp.pop %v2418
        %v2420 = vmul.f32 %v2415, %v2419
        %2421 = vrot.lane.b32.xlu0 %v2287, 88
        %v2422 = vpop.permute.xlu0 %2421
        %v2425 = vsel %vm764, %v2420, 0
        %2427 = vmatpush.msra.mxu0 0.0
        %2428 = vmatpush.msra.mxu0 0.0
        %2429 = vmatpush.msra.mxu0 0.0
        %2430 = vmatpush.msra.mxu0 0.0
        %2431 = vmatpush.msra.mxu0 0.0
        %2432 = vmatpush.msra.mxu0 0.0
        %2433 = vmatpush.msra.mxu0 0.0
        %2434 = vmatpush.msra.mxu0 0.0
        %2435 = vmatpush.msra.mxu0 0.0
        %2436 = vmatpush.msra.mxu0 0.0
        %2437 = vmatpush.msra.mxu0 0.0
        %2438 = vmatpush.msra.mxu0 0.0
        %2439 = vmatpush.msra.mxu0 0.0
        %2440 = vmatpush.msra.mxu0 0.0
        %2441 = vmatpush.msra.mxu0 0.0
        %2442 = vmatpush.msra.mxu0 %v2422
        %2443 = vmatmul.f32.gmra.mxu0 %v2425
        %v2444 = vpop.f32.mrf.mxu0
        %v2445 = vadd.f32 0.0, %v2444
        %2446 = vdwg.mxu0
        %v2448 = vsel %vm764, %v2445, 0
        %2450 = vmatpush.msra.mxu0 0.0
        %2451 = vmatpush.msra.mxu0 0.0
        %2452 = vmatpush.msra.mxu0 0.0
        %2453 = vmatpush.msra.mxu0 0.0
        %2454 = vmatpush.msra.mxu0 0.0
        %2455 = vmatpush.msra.mxu0 0.0
        %2456 = vmatpush.msra.mxu0 0.0
        %2457 = vmatpush.msra.mxu0 0.0
        %2458 = vmatpush.msra.mxu0 0.0
        %2459 = vmatpush.msra.mxu0 0.0
        %2460 = vmatpush.msra.mxu0 0.0
        %2461 = vmatpush.msra.mxu0 0.0
        %2462 = vmatpush.msra.mxu0 0.0
        %2463 = vmatpush.msra.mxu0 0.0
        %2464 = vmatpush.msra.mxu0 0.0
        %2465 = vmatpush.msra.mxu0 %v2205
        %2466 = vmatmul.f32.gmra.mxu0 %v2448
        %v2467 = vpop.f32.mrf.mxu0
        %v2468 = vadd.f32 0.0, %v2467
        %2469 = vdwg.mxu0
        %v2470 = vadd.f32 %v2380, %v2468
        %2471 = vrot.lane.b32.xlu0 %v2262, 112
        %v2472 = vpop.permute.xlu0 %2471
        %2473 = vrot.lane.b32.xlu0 %v2287, 112
        %v2474 = vpop.permute.xlu0 %2473
        %v2475 = vsel %vm764, %v2472, 0
        %v2477 = vsel %vm764, %v2474, 0
        %2479 = vmatpush.xpose.msra.mxu0 0.0
        %2480 = vmatpush.xpose.msra.mxu0 0.0
        %2481 = vmatpush.xpose.msra.mxu0 0.0
        %2482 = vmatpush.xpose.msra.mxu0 0.0
        %2483 = vmatpush.xpose.msra.mxu0 0.0
        %2484 = vmatpush.xpose.msra.mxu0 0.0
        %2485 = vmatpush.xpose.msra.mxu0 0.0
        %2486 = vmatpush.xpose.msra.mxu0 0.0
        %2487 = vmatpush.xpose.msra.mxu0 0.0
        %2488 = vmatpush.xpose.msra.mxu0 0.0
        %2489 = vmatpush.xpose.msra.mxu0 0.0
        %2490 = vmatpush.xpose.msra.mxu0 0.0
        %2491 = vmatpush.xpose.msra.mxu0 0.0
        %2492 = vmatpush.xpose.msra.mxu0 0.0
        %2493 = vmatpush.xpose.msra.mxu0 0.0
        %2494 = vmatpush.xpose.msra.mxu0 %v2477
        %2495 = vmatmul.f32.gmra.mxu0 %v2475
        %v2496 = vpop.f32.mrf.mxu0
        %v2497 = vadd.f32 0.0, %v2496
        %2498 = vdwg.mxu0
        %v2499 = vsel %vm1279, %v2497, -1e+20
        %v2500 = vsel %vm764, %v2499, -inf
        %2501 = vmax.xlane.f32.xlu0 %v2500
        %v2502 = vpop.xlane.xlu0 %2501
        %v2503 = vsub.f32 %v2499, %v2502
        %v2504 = vmul.f32 %v2503, 1.442695
        %v2505 = vpow.pop %v2504
        %v2506 = vsel %vm764, %v2505, 0.0
        %2507 = vadd.xlane.f32.xlu0 %v2506
        %v2508 = vpop.xlane.xlu0 %2507
        %v2509 = vrcp.pop %v2508
        %v2510 = vmul.f32 %v2505, %v2509
        %2511 = vrot.lane.b32.xlu0 %v2287, 80
        %v2512 = vpop.permute.xlu0 %2511
        %v2515 = vsel %vm764, %v2510, 0
        %2517 = vmatpush.msra.mxu0 0.0
        %2518 = vmatpush.msra.mxu0 0.0
        %2519 = vmatpush.msra.mxu0 0.0
        %2520 = vmatpush.msra.mxu0 0.0
        %2521 = vmatpush.msra.mxu0 0.0
        %2522 = vmatpush.msra.mxu0 0.0
        %2523 = vmatpush.msra.mxu0 0.0
        %2524 = vmatpush.msra.mxu0 0.0
        %2525 = vmatpush.msra.mxu0 0.0
        %2526 = vmatpush.msra.mxu0 0.0
        %2527 = vmatpush.msra.mxu0 0.0
        %2528 = vmatpush.msra.mxu0 0.0
        %2529 = vmatpush.msra.mxu0 0.0
        %2530 = vmatpush.msra.mxu0 0.0
        %2531 = vmatpush.msra.mxu0 0.0
        %2532 = vmatpush.msra.mxu0 %v2512
        %2533 = vmatmul.f32.gmra.mxu0 %v2515
        %v2534 = vpop.f32.mrf.mxu0
        %v2535 = vadd.f32 0.0, %v2534
        %2536 = vdwg.mxu0
        %v2538 = vsel %vm764, %v2535, 0
        %2540 = vmatpush.msra.mxu0 0.0
        %2541 = vmatpush.msra.mxu0 0.0
        %2542 = vmatpush.msra.mxu0 0.0
        %2543 = vmatpush.msra.mxu0 0.0
        %2544 = vmatpush.msra.mxu0 0.0
        %2545 = vmatpush.msra.mxu0 0.0
        %2546 = vmatpush.msra.mxu0 0.0
        %2547 = vmatpush.msra.mxu0 0.0
        %2548 = vmatpush.msra.mxu0 0.0
        %2549 = vmatpush.msra.mxu0 0.0
        %2550 = vmatpush.msra.mxu0 0.0
        %2551 = vmatpush.msra.mxu0 0.0
        %2552 = vmatpush.msra.mxu0 0.0
        %2553 = vmatpush.msra.mxu0 0.0
        %2554 = vmatpush.msra.mxu0 0.0
        %2555 = vmatpush.msra.mxu0 %v2206
        %2556 = vmatmul.f32.gmra.mxu0 %v2538
        %v2557 = vpop.f32.mrf.mxu0
        %v2558 = vadd.f32 0.0, %v2557
        %2559 = vdwg.mxu0
        %v2560 = vadd.f32 %v2470, %v2558
        %2561 = vrot.lane.b32.xlu0 %v2262, 104
        %v2562 = vpop.permute.xlu0 %2561
        %2563 = vrot.lane.b32.xlu0 %v2287, 104
        %v2564 = vpop.permute.xlu0 %2563
        %v2565 = vsel %vm764, %v2562, 0
        %v2567 = vsel %vm764, %v2564, 0
        %2569 = vmatpush.xpose.msra.mxu0 0.0
        %2570 = vmatpush.xpose.msra.mxu0 0.0
        %2571 = vmatpush.xpose.msra.mxu0 0.0
        %2572 = vmatpush.xpose.msra.mxu0 0.0
        %2573 = vmatpush.xpose.msra.mxu0 0.0
        %2574 = vmatpush.xpose.msra.mxu0 0.0
        %2575 = vmatpush.xpose.msra.mxu0 0.0
        %2576 = vmatpush.xpose.msra.mxu0 0.0
        %2577 = vmatpush.xpose.msra.mxu0 0.0
        %2578 = vmatpush.xpose.msra.mxu0 0.0
        %2579 = vmatpush.xpose.msra.mxu0 0.0
        %2580 = vmatpush.xpose.msra.mxu0 0.0
        %2581 = vmatpush.xpose.msra.mxu0 0.0
        %2582 = vmatpush.xpose.msra.mxu0 0.0
        %2583 = vmatpush.xpose.msra.mxu0 0.0
        %2584 = vmatpush.xpose.msra.mxu0 %v2567
        %2585 = vmatmul.f32.gmra.mxu0 %v2565
        %v2586 = vpop.f32.mrf.mxu0
        %v2587 = vadd.f32 0.0, %v2586
        %2588 = vdwg.mxu0
        %v2589 = vsel %vm1279, %v2587, -1e+20
        %v2590 = vsel %vm764, %v2589, -inf
        %2591 = vmax.xlane.f32.xlu0 %v2590
        %v2592 = vpop.xlane.xlu0 %2591
        %v2593 = vsub.f32 %v2589, %v2592
        %v2594 = vmul.f32 %v2593, 1.442695
        %v2595 = vpow.pop %v2594
        %v2596 = vsel %vm764, %v2595, 0.0
        %2597 = vadd.xlane.f32.xlu0 %v2596
        %v2598 = vpop.xlane.xlu0 %2597
        %v2599 = vrcp.pop %v2598
        %v2600 = vmul.f32 %v2595, %v2599
        %2601 = vrot.lane.b32.xlu0 %v2287, 72
        %v2602 = vpop.permute.xlu0 %2601
        %v2605 = vsel %vm764, %v2600, 0
        %2607 = vmatpush.msra.mxu0 0.0
        %2608 = vmatpush.msra.mxu0 0.0
        %2609 = vmatpush.msra.mxu0 0.0
        %2610 = vmatpush.msra.mxu0 0.0
        %2611 = vmatpush.msra.mxu0 0.0
        %2612 = vmatpush.msra.mxu0 0.0
        %2613 = vmatpush.msra.mxu0 0.0
        %2614 = vmatpush.msra.mxu0 0.0
        %2615 = vmatpush.msra.mxu0 0.0
        %2616 = vmatpush.msra.mxu0 0.0
        %2617 = vmatpush.msra.mxu0 0.0
        %2618 = vmatpush.msra.mxu0 0.0
        %2619 = vmatpush.msra.mxu0 0.0
        %2620 = vmatpush.msra.mxu0 0.0
        %2621 = vmatpush.msra.mxu0 0.0
        %2622 = vmatpush.msra.mxu0 %v2602
        %2623 = vmatmul.f32.gmra.mxu0 %v2605
        %v2624 = vpop.f32.mrf.mxu0
        %v2625 = vadd.f32 0.0, %v2624
        %2626 = vdwg.mxu0
        %v2628 = vsel %vm764, %v2625, 0
        %2630 = vmatpush.msra.mxu0 0.0
        %2631 = vmatpush.msra.mxu0 0.0
        %2632 = vmatpush.msra.mxu0 0.0
        %2633 = vmatpush.msra.mxu0 0.0
        %2634 = vmatpush.msra.mxu0 0.0
        %2635 = vmatpush.msra.mxu0 0.0
        %2636 = vmatpush.msra.mxu0 0.0
        %2637 = vmatpush.msra.mxu0 0.0
        %2638 = vmatpush.msra.mxu0 0.0
        %2639 = vmatpush.msra.mxu0 0.0
        %2640 = vmatpush.msra.mxu0 0.0
        %2641 = vmatpush.msra.mxu0 0.0
        %2642 = vmatpush.msra.mxu0 0.0
        %2643 = vmatpush.msra.mxu0 0.0
        %2644 = vmatpush.msra.mxu0 0.0
        %2645 = vmatpush.msra.mxu0 %v2207
        %2646 = vmatmul.f32.gmra.mxu0 %v2628
        %v2647 = vpop.f32.mrf.mxu0
        %v2648 = vadd.f32 0.0, %v2647
        %2649 = vdwg.mxu0
        %v2650 = vadd.f32 %v2560, %v2648
        %v2651 = vadd.f32 %v2650, %v2192
        %v2652 = vsel %vm744, %v2651, 0.0
        %2653 = vadd.xlane.f32.xlu0 %v2652
        %v2654 = vpop.xlane.xlu0 %2653
        %v2655 = vmul.f32 %v2654, %v1134
        %v2656 = vsub.f32 %v2651, %v2655
        %v2657 = vmul.f32 %v2656, %v2656
        %v2658 = vsel %vm744, %v2657, 0.0
        %2659 = vadd.xlane.f32.xlu0 %v2658
        %v2660 = vpop.xlane.xlu0 %2659
        %v2661 = vmul.f32 %v2660, %v1134
        %v2662 = vadd.f32 %v2661, 1e-05
        %v2663 = vrsqrt.pop %v2662
        %v2664 = vmul.f32 %v2663, %v2662
        %v2665 = vmul.f32 %v2664, %v2663
        %v2666 = vmul.f32 0.5, %v2665
        %v2667 = vsub.f32 1.5, %v2666
        %v2668 = vmul.f32 %v2663, %v2667
        %vm2669 = vweird.f32 %v2662
        %vm2670 = vweird.f32 %v2663
        %vm2671 = vmor %vm2669, %vm2670
        %v2672 = vsel %vm2671, %v2663, %v2668
        %v2673 = vmul.f32 %v2656, %v2672
        %v2675 = vperm.slane %v2211, 0
        %v2677 = vmul.f32 %v2673, %v2675
        %v2679 = vperm.slane %v2213, 0
        %v2681 = vadd.f32 %v2677, %v2679
        %v2682 = vpack.c.bf16 %v2681, %v2681
        %v2684 = vperm.slane %v2224, 0
        %v2690 = vunpack.c.l.b16 %v2219
        %v2691 = vunpack.c.l.b16 %v2220
        %v2692 = vunpack.c.l.b16 %v2221
        %v2693 = vunpack.c.l.b16 %v2222
        %v2694 = vpack.c.b16 %v2691, %v2690
        %v2695 = vpack.c.b16 %v2693, %v2692
        %v2699 = vsel %vm744, %v2682, 0
        %2701 = vmatpush.bf16.msra.mxu0 0
        %2702 = vmatpush.bf16.msra.mxu0 0
        %2703 = vmatpush.bf16.msra.mxu0 0
        %2704 = vmatpush.bf16.msra.mxu0 0
        %2705 = vmatpush.bf16.msra.mxu0 0
        %2706 = vmatpush.bf16.msra.mxu0 0
        %2707 = vmatpush.bf16.msra.mxu0 %v2695
        %2708 = vmatpush.bf16.msra.mxu0 %v2694
        %2709 = vmatmul.bf16.gmra.mxu0 %v2699
        %v2710 = vpop.f32.mrf.mxu0
        %v2711 = vadd.f32 %v2684, %v2710
        %v2712 = vpop.f32.mrf.mxu0
        %2713 = vdwg.mxu0
        %v2714 = vmax.f32 %v2711, 0.0
        %v2715 = vpack.c.bf16 %v2714, %v2714
        %v2717 = vperm.slane %v2235, 0
        %v2727 = vunpack.c.l.b16 %v2226
        %v2728 = vunpack.c.l.b16 %v2227
        %v2729 = vunpack.c.l.b16 %v2228
        %v2730 = vunpack.c.l.b16 %v2229
        %v2731 = vunpack.c.l.b16 %v2230
        %v2732 = vunpack.c.l.b16 %v2231
        %v2733 = vunpack.c.l.b16 %v2232
        %v2734 = vunpack.c.l.b16 %v2233
        %v2735 = vpack.c.b16 %v2728, %v2727
        %v2736 = vpack.c.b16 %v2730, %v2729
        %v2737 = vpack.c.b16 %v2732, %v2731
        %v2738 = vpack.c.b16 %v2734, %v2733
        %v2744 = vsel %vm1707, %v2715, 0
        %2746 = vmatpush.bf16.msra.mxu0 0
        %2747 = vmatpush.bf16.msra.mxu0 0
        %2748 = vmatpush.bf16.msra.mxu0 0
        %2749 = vmatpush.bf16.msra.mxu0 0
        %2750 = vmatpush.bf16.msra.mxu0 %v2738
        %2751 = vmatpush.bf16.msra.mxu0 %v2737
        %2752 = vmatpush.bf16.msra.mxu0 %v2736
        %2753 = vmatpush.bf16.msra.mxu0 %v2735
        %2754 = vmatmul.bf16.gmra.mxu0 %v2744
        %v2755 = vpop.f32.mrf.mxu0
        %v2756 = vadd.f32 %v2717, %v2755
        %v2757 = vpop.f32.mrf.mxu0
        %2758 = vdwg.mxu0
        %v2759 = vadd.f32 %v2756, %v2681
        %v2760 = vsel %vm744, %v2759, 0.0
        %2761 = vadd.xlane.f32.xlu0 %v2760
        %v2762 = vpop.xlane.xlu0 %2761
        %v2763 = vmul.f32 %v2762, %v1134
        %v2764 = vsub.f32 %v2759, %v2763
        %v2765 = vmul.f32 %v2764, %v2764
        %v2766 = vsel %vm744, %v2765, 0.0
        %2767 = vadd.xlane.f32.xlu0 %v2766
        %v2768 = vpop.xlane.xlu0 %2767
        %v2769 = vmul.f32 %v2768, %v1134
        %v2770 = vadd.f32 %v2769, 1e-05
        %v2771 = vrsqrt.pop %v2770
        %v2772 = vmul.f32 %v2771, %v2770
        %v2773 = vmul.f32 %v2772, %v2771
        %v2774 = vmul.f32 0.5, %v2773
        %v2775 = vsub.f32 1.5, %v2774
        %v2776 = vmul.f32 %v2771, %v2775
        %vm2777 = vweird.f32 %v2770
        %vm2778 = vweird.f32 %v2771
        %vm2779 = vmor %vm2777, %vm2778
        %v2780 = vsel %vm2779, %v2771, %v2776
        %v2781 = vmul.f32 %v2764, %v2780
        %v2783 = vperm.slane %v2215, 0
        %v2785 = vmul.f32 %v2781, %v2783
        %v2787 = vperm.slane %v2217, 0
        %v2789 = vadd.f32 %v2785, %v2787
        %v2790 = vpack.c.bf16 %v2789, %v2789
        %v2791 = vld [vmem:[%s20] sm:$0xf]
        %v2792 = vld [vmem:[%s20 + $0x4] sm:$0xf]
        %v2793 = vld [vmem:[%s20 + $0x8] sm:$0xf]
        %v2794 = vld [vmem:[%s20 + $0xc] sm:$0xf]
        %v2795 = vld [vmem:[%s21] sm:$0x1]
        %v2797 = vperm.slane %v2795, 0
        %v2803 = vunpack.c.l.b16 %v2791
        %v2804 = vunpack.c.l.b16 %v2792
        %v2805 = vunpack.c.l.b16 %v2793
        %v2806 = vunpack.c.l.b16 %v2794
        %v2807 = vpack.c.b16 %v2804, %v2803
        %v2808 = vpack.c.b16 %v2806, %v2805
        %v2812 = vsel %vm744, %v2790, 0
        %2814 = vmatpush.bf16.msra.mxu0 0
        %2815 = vmatpush.bf16.msra.mxu0 0
        %2816 = vmatpush.bf16.msra.mxu0 0
        %2817 = vmatpush.bf16.msra.mxu0 0
        %2818 = vmatpush.bf16.msra.mxu0 0
        %2819 = vmatpush.bf16.msra.mxu0 0
        %2820 = vmatpush.bf16.msra.mxu0 %v2808
        %2821 = vmatpush.bf16.msra.mxu0 %v2807
        %2822 = vmatmul.bf16.gmra.mxu0 %v2812
        %v2823 = vpop.f32.mrf.mxu0
        %v2824 = vadd.f32 %v2797, %v2823
        %v2825 = vpop.f32.mrf.mxu0
        %2826 = vdwg.mxu0
        %2827 = vst [vmem:[%s698] sm:$0xff] %v2824
        %s2828 = sand.u32 %s521, 1
        %s2829 = scalar_lea.sflag [#allocation3], %s2828
        %s2830 = sand.u32 %s521, 1
        %s2831 = smul.addr %s2830, 8
        %s2832 = scalar_lea.vmem [#allocation2], %s2831
        // Predicated region
        $region109: #{transformer_forward.3} parent=107 // pred_check
          %p2833 = pneg %p531
        $region110: #{transformer_forward.3} parent=107 // pred_check_branch
          %2835 = sbr.rel (%p2833) target = $region112
        $region111: #{transformer_forward.3} parent=107 // pred_region
          %2837 = vsyncadd %s2829, 0
          %s2838 = smul.addr %s36, 8
          %s2839 = scalar_lea.hbm %s22, %s2838
          %s2841 = sshll.u32 %s2832, 4
          %s2842 = int_to_ptr.vmem [resolvable:$true] %s2841
          %s2843 = sshll.u32 %s2839, 4
          %s2844 = int_to_ptr.hbm [resolvable:$true] %s2843
          %2846 = dma.vmem_to_hbm [thread:$0]  %s2842, 128, %s2844, %s2829
        $region112: #{transformer_forward.3} parent=107 // pred_fallthru
          _
      $region108: #{transformer_forward.3} parent=5 // pred_fallthru
        _
      %p2847 = scmp.le.s32.totalorder 2, %s31
      // Predicated region
      $region113: #{transformer_forward.3} parent=5 // pred_check
        %p2848 = pneg %p2847
      $region114: #{transformer_forward.3} parent=5 // pred_check_branch
        %2850 = sbr.rel (%p2848) target = $region116
      $region115: #{transformer_forward.3} parent=5 // pred_region
        %s2851 = ssub.s32 %s31, 2
        // Predicated region
        $region117: #{transformer_forward.3} parent=115 // pred_check
          %p2852 = pneg %p537
        $region118: #{transformer_forward.3} parent=115 // pred_check_branch
          %2854 = sbr.rel (%p2852) target = $region120
        $region119: #{transformer_forward.3} parent=115 // pred_region
          %s2855 = sand.u32 %s522, 1
          %s2856 = scalar_lea.sflag [#allocation3], %s2855
          %s2857 = sand.u32 %s522, 1
          %s2858 = smul.addr %s2857, 8
          %s2859 = scalar_lea.vmem [#allocation2], %s2858
          %2861 = dma.done %s2856, 128
        $region120: #{transformer_forward.3} parent=115 // pred_fallthru
          _
      $region116: #{transformer_forward.3} parent=5 // pred_fallthru
        _
    $region6: #{transformer_forward.3} parent=1 // loop_footer
      %s35 = sadd.s32 1, %s31
    $region7: #{transformer_forward.3} parent=1 // loop_footer_branch
      %30 = sbr.rel target = $region3
    $region8: #{transformer_forward.3} parent=1 // loop_exit
      _
    %2862 = vsyncpa [#allocation3], 1
    %s2863 = scalar_lea.sflag [#allocation3], 1
    %2864 = vsyncpa %s2863, 1

</llo_original>
